<compile_context>
chip_gen: v7x
topology: tpu7x:2x2x1
jax: 0.10.0
libtpu: 0.0.40
codegen_flags: <defaults>
</compile_context>

<pallas_src>
import numpy as np
import jax
import jax.numpy as jnp
from jax.experimental import pallas as pl
from jax.experimental.pallas import tpu as pltpu


# --------------------------------------------------------------------------
# Fused Pallas kernel: whole CNN forward for one batch tile, all in VMEM.
# --------------------------------------------------------------------------

def _cnn_fused_kernel(x_ref, t1_ref, b1_ref, t2_ref, b2_ref,
                      w1_ref, fb1_ref, w2_ref, fb2_ref, o_ref):
    """Layouts (lane dim last, lane-dense):

      x_ref : [28, bB, 28]   bf16  image rows leading, batch on sublanes
      t1_ref: [5, 28, 240]   bf16  conv1 row-Toeplitz; lanes = (pool_col, c1, col)
      b1_ref: [1, 1, 120]    f32   conv1 bias broadcast over (c1, col) lanes
      t2_ref: [5, 120, 160]  bf16  conv2 row-Toeplitz; lanes = (pool_col, c2, col)
      b2_ref: [1, 1, 80]     f32
      w1_ref: [4, 80, 50]    bf16  fc1 split per pooled row (no in-kernel flatten)
      fb1_ref:[1, 50]        f32
      w2_ref: [50, 10]       bf16
      fb2_ref:[1, 10]        f32
      o_ref : [bB, 10]       f32   log-softmax output
    """
    x = x_ref[...]
    bB = x.shape[1]

    # ---- conv1 (5x5, 1->10): 5 batched matmuls over the column (lane) dim.
    # The Toeplitz RHS folds the column half of the 2x2 max-pool by writing
    # even/odd output columns into lane halves [0:120] / [120:240].
    z1 = None
    for kr in range(5):
        lhs = x[kr:kr + 24]                                       # [24,bB,28]
        rhs = jnp.broadcast_to(t1_ref[kr], (24, 28, 240))
        term = jnp.einsum('hbw,hwf->hbf', lhs, rhs,
                          preferred_element_type=jnp.float32)     # [24,bB,240]
        z1 = term if z1 is None else z1 + term
    z1 = z1.reshape(12, 2, bB, 240)        # conv rows -> (pooled row, phase)
    m1 = jnp.maximum(jnp.maximum(z1[:, 0, :, 0:120], z1[:, 0, :, 120:240]),
                     jnp.maximum(z1[:, 1, :, 0:120], z1[:, 1, :, 120:240]))
    h1 = jnp.maximum(m1 + b1_ref[...], 0.0).astype(jnp.bfloat16)  # [12,bB,120]

    # ---- conv2 (5x5, 10->20): same trick; the lane contraction also performs
    # the 10-channel sum.  Dropout2d is identity in eval mode.
    z2 = None
    for kr in range(5):
        lhs = h1[kr:kr + 8]                                       # [8,bB,120]
        rhs = jnp.broadcast_to(t2_ref[kr], (8, 120, 160))
        term = jnp.einsum('hbw,hwf->hbf', lhs, rhs,
                          preferred_element_type=jnp.float32)     # [8,bB,160]
        z2 = term if z2 is None else z2 + term
    z2 = z2.reshape(4, 2, bB, 160)
    m2 = jnp.maximum(jnp.maximum(z2[:, 0, :, 0:80], z2[:, 0, :, 80:160]),
                     jnp.maximum(z2[:, 1, :, 0:80], z2[:, 1, :, 80:160]))
    h2 = jnp.maximum(m2 + b2_ref[...], 0.0).astype(jnp.bfloat16)  # [4,bB,80]

    # ---- fc1 (320->50) as a sum of 4 [bB,80]@[80,50] matmuls (one per pooled
    # row, so no flatten/relayout is needed), ReLU (F.dropout = identity in
    # eval), fc2 (50->10), log_softmax.
    acc = None
    for r in range(4):
        part = jnp.dot(h2[r], w1_ref[r], preferred_element_type=jnp.float32)
        acc = part if acc is None else acc + part
    hfc = jnp.maximum(acc + fb1_ref[...], 0.0).astype(jnp.bfloat16)
    logits = jnp.dot(hfc, w2_ref[...],
                     preferred_element_type=jnp.float32) + fb2_ref[...]
    s = logits - jnp.max(logits, axis=-1, keepdims=True)
    o_ref[...] = s - jnp.log(jnp.sum(jnp.exp(s), axis=-1, keepdims=True))


# --------------------------------------------------------------------------
# Wrapper: grid over batch tiles, weights resident in VMEM.
# --------------------------------------------------------------------------

def _pick_block(batch, max_block=32):
    if batch < 8:
        return batch                      # block dim == full array dim is legal
    return max(8, min(max_block, (batch // 8) * 8))


def cnn_forward(p, x_nchw, *, block_b=32):
    assert x_nchw.shape[1:] == (1, 28, 28), x_nchw.shape
    B = x_nchw.shape[0]
    # [B,1,28,28] -> [28(H leading), B(sublanes), 28(lanes)]
    x = jnp.transpose(x_nchw[:, 0, :, :], (1, 0, 2)).astype(jnp.bfloat16)

    bb = _pick_block(B, block_b)
    Bp = -(-B // bb) * bb
    if Bp != B:
        x = jnp.pad(x, ((0, 0), (0, Bp - B), (0, 0)))

    out = pl.pallas_call(
        _cnn_fused_kernel,
        out_shape=jax.ShapeDtypeStruct((Bp, 10), jnp.float32),
        grid=(Bp // bb,),
        in_specs=[
            pl.BlockSpec((28, bb, 28), lambda i: (0, i, 0)),       # input tile
            pl.BlockSpec((5, 28, 240), lambda i: (0, 0, 0)),       # conv1 Toeplitz
            pl.BlockSpec((1, 1, 120), lambda i: (0, 0, 0)),        # conv1 bias
            pl.BlockSpec((5, 120, 160), lambda i: (0, 0, 0)),      # conv2 Toeplitz
            pl.BlockSpec((1, 1, 80), lambda i: (0, 0, 0)),         # conv2 bias
            pl.BlockSpec((4, 80, 50), lambda i: (0, 0, 0)),        # fc1 blocks
            pl.BlockSpec((1, 50), lambda i: (0, 0)),               # fc1 bias
            pl.BlockSpec((50, 10), lambda i: (0, 0)),              # fc2 weight
            pl.BlockSpec((1, 10), lambda i: (0, 0)),               # fc2 bias
        ],
        out_specs=pl.BlockSpec((bb, 10), lambda i: (i, 0)),
        compiler_params=pltpu.CompilerParams(
            dimension_semantics=("parallel",)),
    )(x, p["t1"], p["b1"], p["t2"], p["b2"],
      p["w1b"], p["fb1"], p["w2"], p["fb2"])
    return out[:B]


# --------------------------------------------------------------------------
# Parameters (PyTorch layout) + one-time host-side conversion to kernel form.
# --------------------------------------------------------------------------

def init_params(key):
    ks = jax.random.split(key, 8)
    return {
        "conv1_w": 0.20 * jax.random.normal(ks[0], (10, 1, 5, 5), jnp.float32),
        "conv1_b": 0.10 * jax.random.normal(ks[1], (10,), jnp.float32),
        "conv2_w": 0.08 * jax.random.normal(ks[2], (20, 10, 5, 5), jnp.float32),
        "conv2_b": 0.10 * jax.random.normal(ks[3], (20,), jnp.float32),
        "fc1_w": 0.08 * jax.random.normal(ks[4], (50, 320), jnp.float32),
        "fc1_b": 0.10 * jax.random.normal(ks[5], (50,), jnp.float32),
        "fc2_w": 0.20 * jax.random.normal(ks[6], (10, 50), jnp.float32),
        "fc2_b": 0.10 * jax.random.normal(ks[7], (10,), jnp.float32),
    }


def prepare_params(params):
    """Hoisted one-time conversion of PyTorch weights into kernel layout."""
    w1 = np.asarray(params["conv1_w"], np.float32)   # [10,1,5,5]
    b1 = np.asarray(params["conv1_b"], np.float32)
    w2 = np.asarray(params["conv2_w"], np.float32)   # [20,10,5,5]
    b2 = np.asarray(params["conv2_b"], np.float32)
    f1w = np.asarray(params["fc1_w"], np.float32)    # [50,320]
    f1b = np.asarray(params["fc1_b"], np.float32)
    f2w = np.asarray(params["fc2_w"], np.float32)    # [10,50]
    f2b = np.asarray(params["fc2_b"], np.float32)

    # conv1 row-Toeplitz: t1[kr, w, dc*120 + c*12 + v] = w1[c,0,kr, w-(2v+dc)]
    t1 = np.zeros((5, 28, 240), np.float32)
    for kr in range(5):
        for dc in range(2):
            for c in range(10):
                for v in range(12):
                    f = dc * 120 + c * 12 + v
                    for kc in range(5):
                        t1[kr, 2 * v + dc + kc, f] = w1[c, 0, kr, kc]

    # conv2 row-Toeplitz (channel sum folded into the lane contraction):
    # t2[kr, ci*12 + x, dc*80 + co*4 + u] = w2[co,ci,kr, x-(2u+dc)]
    t2 = np.zeros((5, 120, 160), np.float32)
    for kr in range(5):
        for dc in range(2):
            for co in range(20):
                for u in range(4):
                    f = dc * 80 + co * 4 + u
                    for ci in range(10):
                        for kc in range(5):
                            t2[kr, ci * 12 + 2 * u + dc + kc, f] = w2[co, ci, kr, kc]

    b1l = np.zeros((1, 1, 120), np.float32)
    for c in range(10):
        b1l[0, 0, c * 12:(c + 1) * 12] = b1[c]
    b2l = np.zeros((1, 1, 80), np.float32)
    for co in range(20):
        b2l[0, 0, co * 4:(co + 1) * 4] = b2[co]

    # fc1 split into 4 row blocks consuming the (co, u) lane layout of h2;
    # PyTorch x.view(-1, 320) flattens NCHW as co*16 + row*4 + col.
    w1b = np.zeros((4, 80, 50), np.float32)
    for r in range(4):
        for co in range(20):
            for u in range(4):
                w1b[r, co * 4 + u, :] = f1w[:, co * 16 + r * 4 + u]

    return {
        "t1": jnp.asarray(t1, jnp.bfloat16),
        "b1": jnp.asarray(b1l, jnp.float32),
        "t2": jnp.asarray(t2, jnp.bfloat16),
        "b2": jnp.asarray(b2l, jnp.float32),
        "w1b": jnp.asarray(w1b, jnp.bfloat16),
        "fb1": jnp.asarray(f1b.reshape(1, 50), jnp.float32),
        "w2": jnp.asarray(f2w.T, jnp.bfloat16),      # [50,10]
        "fb2": jnp.asarray(f2b.reshape(1, 10), jnp.float32),
    }


# --------------------------------------------------------------------------
# Pure-JAX (XLA, f32) reference of the PyTorch forward, for parity checking.
# --------------------------------------------------------------------------

def cnn_reference(params, x_nchw):
    def conv(x, w, b):
        y = jax.lax.conv_general_dilated(
            x, w, (1, 1), "VALID",
            dimension_numbers=("NCHW", "OIHW", "NCHW"))
        return y + b.reshape(1, -1, 1, 1)

    def pool2(x):
        b, c, h, w = x.shape
        return jnp.max(x.reshape(b, c, h // 2, 2, w // 2, 2), axis=(3, 5))

    x = x_nchw.astype(jnp.float32)
    y = jax.nn.relu(pool2(conv(x, params["conv1_w"], params["conv1_b"])))
    y = jax.nn.relu(pool2(conv(y, params["conv2_w"], params["conv2_b"])))
    y = y.reshape(y.shape[0], -1)                                  # [B, 320]
    y = jax.nn.relu(y @ params["fc1_w"].T + params["fc1_b"])
    y = y @ params["fc2_w"].T + params["fc2_b"]
    return jax.nn.log_softmax(y, axis=1)


# --------------------------------------------------------------------------

if __name__ == "__main__":
    key = jax.random.PRNGKey(0)
    k_x, k_p = jax.random.split(key)

    params = init_params(k_p)
    prepped = prepare_params(params)

    fwd = jax.jit(cnn_forward)
    ref = jax.jit(cnn_reference)

    # fc1 = Linear(320, 50) forces 28x28 single-channel inputs (MNIST shape).
    # B=2 exercises the full-dim batch block; B=18 exercises multi-step grid
    # (two "parallel" steps) plus batch padding.
    for B in (2, 18):
        x = jax.random.normal(jax.random.fold_in(k_x, B),
                              (B, 1, 28, 28), jnp.float32)
        out = jax.block_until_ready(fwd(prepped, x))
        assert out.shape == (B, 10), out.shape
        assert bool(jnp.all(jnp.isfinite(out)))
        row_sums = jnp.sum(jnp.exp(out), axis=1)
        assert bool(jnp.all(jnp.abs(row_sums - 1.0) < 1e-3)), row_sums
        expect = jax.block_until_ready(ref(params, x))
        err = float(jnp.max(jnp.abs(out - expect)))
        assert err < 5e-2, err           # bf16 MXU vs f32 XLA reference

    print("KERNEL_OK")
</pallas_src>

<mosaic_0001>
module attributes {stable_mosaic.version = 11 : i64} {
  func.func @_cnn_fused_kernel(%arg0: i32, %arg1: memref<28x2x28xbf16, #tpu.memory_space<vmem>>, %arg2: memref<5x28x240xbf16, #tpu.memory_space<vmem>>, %arg3: memref<1x1x120xf32, #tpu.memory_space<vmem>>, %arg4: memref<5x120x160xbf16, #tpu.memory_space<vmem>>, %arg5: memref<1x1x80xf32, #tpu.memory_space<vmem>>, %arg6: memref<4x80x50xbf16, #tpu.memory_space<vmem>>, %arg7: memref<1x50xf32, #tpu.memory_space<vmem>>, %arg8: memref<50x10xbf16, #tpu.memory_space<vmem>>, %arg9: memref<1x10xf32, #tpu.memory_space<vmem>>, %arg10: memref<2x10xf32, #tpu.memory_space<vmem>>) attributes {dimension_semantics = [#tpu.dimension_semantics<parallel>], iteration_bounds = array<i64: 1>, scalar_prefetch = 0 : i64, scratch_operands = 0 : i64, tpu.core_type = #tpu.core_type<tc>, window_params = [{transform_indices = @transform_0, window_bounds = array<i64: 28, 2, 28>}, {pipeline_mode = #tpu.pipeline_mode<synchronous>, transform_indices = @transform_1, window_bounds = array<i64: 5, 28, 240>}, {pipeline_mode = #tpu.pipeline_mode<synchronous>, transform_indices = @transform_2, window_bounds = array<i64: 1, 1, 120>}, {pipeline_mode = #tpu.pipeline_mode<synchronous>, transform_indices = @transform_3, window_bounds = array<i64: 5, 120, 160>}, {pipeline_mode = #tpu.pipeline_mode<synchronous>, transform_indices = @transform_4, window_bounds = array<i64: 1, 1, 80>}, {pipeline_mode = #tpu.pipeline_mode<synchronous>, transform_indices = @transform_5, window_bounds = array<i64: 4, 80, 50>}, {pipeline_mode = #tpu.pipeline_mode<synchronous>, transform_indices = @transform_6, window_bounds = array<i64: 1, 50>}, {pipeline_mode = #tpu.pipeline_mode<synchronous>, transform_indices = @transform_7, window_bounds = array<i64: 50, 10>}, {pipeline_mode = #tpu.pipeline_mode<synchronous>, transform_indices = @transform_8, window_bounds = array<i64: 1, 10>}, {transform_indices = @transform_9, window_bounds = array<i64: 2, 10>}]} {
    %c0 = arith.constant 0 : index
    %c0_0 = arith.constant 0 : index
    %c0_1 = arith.constant 0 : index
    %0 = vector.load %arg1[%c0, %c0_0, %c0_1] : memref<28x2x28xbf16, #tpu.memory_space<vmem>>, vector<28x2x28xbf16>
    %1 = vector.extract_strided_slice %0 {offsets = [0, 0, 0], sizes = [24, 2, 28], strides = [1, 1, 1]} : vector<28x2x28xbf16> to vector<24x2x28xbf16>
    %c0_2 = arith.constant 0 : index
    %c0_3 = arith.constant 0 : index
    %c0_4 = arith.constant 0 : index
    %2 = vector.load %arg2[%c0_2, %c0_3, %c0_4] : memref<5x28x240xbf16, #tpu.memory_space<vmem>>, vector<1x28x240xbf16>
    %3 = vector.shape_cast %2 : vector<1x28x240xbf16> to vector<28x240xbf16>
    %4 = vector.shape_cast %3 : vector<28x240xbf16> to vector<1x28x240xbf16>
    %5 = vector.broadcast %4 : vector<1x28x240xbf16> to vector<24x28x240xbf16>
    "tpu.trace_start"() <{level = 10 : i32, message = "hbw,hwf->hbf"}> : () -> ()
    %cst = arith.constant dense<0.000000e+00> : vector<24x2x240xf32>
    %6 = tpu.matmul %1, %5, %cst {dimension_numbers = #tpu.dot_dimension_numbers<[2], [1], [1], [2], [0, 0, 0, 1, 1, 2], [0], [0]>} : vector<24x2x28xbf16>, vector<24x28x240xbf16>, vector<24x2x240xf32> -> vector<24x2x240xf32>
    "tpu.trace_stop"() : () -> ()
    %7 = vector.extract_strided_slice %0 {offsets = [1, 0, 0], sizes = [24, 2, 28], strides = [1, 1, 1]} : vector<28x2x28xbf16> to vector<24x2x28xbf16>
    %c1 = arith.constant 1 : index
    %c0_5 = arith.constant 0 : index
    %c0_6 = arith.constant 0 : index
    %8 = vector.load %arg2[%c1, %c0_5, %c0_6] : memref<5x28x240xbf16, #tpu.memory_space<vmem>>, vector<1x28x240xbf16>
    %9 = vector.shape_cast %8 : vector<1x28x240xbf16> to vector<28x240xbf16>
    %10 = vector.shape_cast %9 : vector<28x240xbf16> to vector<1x28x240xbf16>
    %11 = vector.broadcast %10 : vector<1x28x240xbf16> to vector<24x28x240xbf16>
    "tpu.trace_start"() <{level = 10 : i32, message = "hbw,hwf->hbf"}> : () -> ()
    %cst_7 = arith.constant dense<0.000000e+00> : vector<24x2x240xf32>
    %12 = tpu.matmul %7, %11, %cst_7 {dimension_numbers = #tpu.dot_dimension_numbers<[2], [1], [1], [2], [0, 0, 0, 1, 1, 2], [0], [0]>} : vector<24x2x28xbf16>, vector<24x28x240xbf16>, vector<24x2x240xf32> -> vector<24x2x240xf32>
    "tpu.trace_stop"() : () -> ()
    %13 = arith.addf %6, %12 : vector<24x2x240xf32>
    %14 = vector.extract_strided_slice %0 {offsets = [2, 0, 0], sizes = [24, 2, 28], strides = [1, 1, 1]} : vector<28x2x28xbf16> to vector<24x2x28xbf16>
    %c2 = arith.constant 2 : index
    %c0_8 = arith.constant 0 : index
    %c0_9 = arith.constant 0 : index
    %15 = vector.load %arg2[%c2, %c0_8, %c0_9] : memref<5x28x240xbf16, #tpu.memory_space<vmem>>, vector<1x28x240xbf16>
    %16 = vector.shape_cast %15 : vector<1x28x240xbf16> to vector<28x240xbf16>
    %17 = vector.shape_cast %16 : vector<28x240xbf16> to vector<1x28x240xbf16>
    %18 = vector.broadcast %17 : vector<1x28x240xbf16> to vector<24x28x240xbf16>
    "tpu.trace_start"() <{level = 10 : i32, message = "hbw,hwf->hbf"}> : () -> ()
    %cst_10 = arith.constant dense<0.000000e+00> : vector<24x2x240xf32>
    %19 = tpu.matmul %14, %18, %cst_10 {dimension_numbers = #tpu.dot_dimension_numbers<[2], [1], [1], [2], [0, 0, 0, 1, 1, 2], [0], [0]>} : vector<24x2x28xbf16>, vector<24x28x240xbf16>, vector<24x2x240xf32> -> vector<24x2x240xf32>
    "tpu.trace_stop"() : () -> ()
    %20 = arith.addf %13, %19 : vector<24x2x240xf32>
    %21 = vector.extract_strided_slice %0 {offsets = [3, 0, 0], sizes = [24, 2, 28], strides = [1, 1, 1]} : vector<28x2x28xbf16> to vector<24x2x28xbf16>
    %c3 = arith.constant 3 : index
    %c0_11 = arith.constant 0 : index
    %c0_12 = arith.constant 0 : index
    %22 = vector.load %arg2[%c3, %c0_11, %c0_12] : memref<5x28x240xbf16, #tpu.memory_space<vmem>>, vector<1x28x240xbf16>
    %23 = vector.shape_cast %22 : vector<1x28x240xbf16> to vector<28x240xbf16>
    %24 = vector.shape_cast %23 : vector<28x240xbf16> to vector<1x28x240xbf16>
    %25 = vector.broadcast %24 : vector<1x28x240xbf16> to vector<24x28x240xbf16>
    "tpu.trace_start"() <{level = 10 : i32, message = "hbw,hwf->hbf"}> : () -> ()
    %cst_13 = arith.constant dense<0.000000e+00> : vector<24x2x240xf32>
    %26 = tpu.matmul %21, %25, %cst_13 {dimension_numbers = #tpu.dot_dimension_numbers<[2], [1], [1], [2], [0, 0, 0, 1, 1, 2], [0], [0]>} : vector<24x2x28xbf16>, vector<24x28x240xbf16>, vector<24x2x240xf32> -> vector<24x2x240xf32>
    "tpu.trace_stop"() : () -> ()
    %27 = arith.addf %20, %26 : vector<24x2x240xf32>
    %28 = vector.extract_strided_slice %0 {offsets = [4, 0, 0], sizes = [24, 2, 28], strides = [1, 1, 1]} : vector<28x2x28xbf16> to vector<24x2x28xbf16>
    %c4 = arith.constant 4 : index
    %c0_14 = arith.constant 0 : index
    %c0_15 = arith.constant 0 : index
    %29 = vector.load %arg2[%c4, %c0_14, %c0_15] : memref<5x28x240xbf16, #tpu.memory_space<vmem>>, vector<1x28x240xbf16>
    %30 = vector.shape_cast %29 : vector<1x28x240xbf16> to vector<28x240xbf16>
    %31 = vector.shape_cast %30 : vector<28x240xbf16> to vector<1x28x240xbf16>
    %32 = vector.broadcast %31 : vector<1x28x240xbf16> to vector<24x28x240xbf16>
    "tpu.trace_start"() <{level = 10 : i32, message = "hbw,hwf->hbf"}> : () -> ()
    %cst_16 = arith.constant dense<0.000000e+00> : vector<24x2x240xf32>
    %33 = tpu.matmul %28, %32, %cst_16 {dimension_numbers = #tpu.dot_dimension_numbers<[2], [1], [1], [2], [0, 0, 0, 1, 1, 2], [0], [0]>} : vector<24x2x28xbf16>, vector<24x28x240xbf16>, vector<24x2x240xf32> -> vector<24x2x240xf32>
    "tpu.trace_stop"() : () -> ()
    %34 = arith.addf %27, %33 : vector<24x2x240xf32>
    %35 = vector.shape_cast %34 : vector<24x2x240xf32> to vector<12x2x2x240xf32>
    %36 = vector.extract_strided_slice %35 {offsets = [0, 0, 0, 0], sizes = [12, 1, 2, 120], strides = [1, 1, 1, 1]} : vector<12x2x2x240xf32> to vector<12x1x2x120xf32>
    %37 = vector.shape_cast %36 : vector<12x1x2x120xf32> to vector<12x2x120xf32>
    %38 = vector.extract_strided_slice %35 {offsets = [0, 0, 0, 120], sizes = [12, 1, 2, 120], strides = [1, 1, 1, 1]} : vector<12x2x2x240xf32> to vector<12x1x2x120xf32>
    %39 = vector.shape_cast %38 : vector<12x1x2x120xf32> to vector<12x2x120xf32>
    %40 = arith.maximumf %37, %39 : vector<12x2x120xf32>
    %41 = vector.extract_strided_slice %35 {offsets = [0, 1, 0, 0], sizes = [12, 1, 2, 120], strides = [1, 1, 1, 1]} : vector<12x2x2x240xf32> to vector<12x1x2x120xf32>
    %42 = vector.shape_cast %41 : vector<12x1x2x120xf32> to vector<12x2x120xf32>
    %43 = vector.extract_strided_slice %35 {offsets = [0, 1, 0, 120], sizes = [12, 1, 2, 120], strides = [1, 1, 1, 1]} : vector<12x2x2x240xf32> to vector<12x1x2x120xf32>
    %44 = vector.shape_cast %43 : vector<12x1x2x120xf32> to vector<12x2x120xf32>
    %45 = arith.maximumf %42, %44 : vector<12x2x120xf32>
    %46 = arith.maximumf %40, %45 : vector<12x2x120xf32>
    %c0_17 = arith.constant 0 : index
    %c0_18 = arith.constant 0 : index
    %c0_19 = arith.constant 0 : index
    %47 = vector.load %arg3[%c0_17, %c0_18, %c0_19] : memref<1x1x120xf32, #tpu.memory_space<vmem>>, vector<1x1x120xf32>
    %48 = vector.broadcast %47 : vector<1x1x120xf32> to vector<12x2x120xf32>
    %49 = arith.addf %46, %48 : vector<12x2x120xf32>
    %cst_20 = arith.constant 0.000000e+00 : f32
    %50 = vector.broadcast %cst_20 : f32 to vector<12x2x120xf32>
    %51 = arith.maximumf %49, %50 : vector<12x2x120xf32>
    %52 = arith.truncf %51 : vector<12x2x120xf32> to vector<12x2x120xbf16>
    %53 = vector.extract_strided_slice %52 {offsets = [0, 0, 0], sizes = [8, 2, 120], strides = [1, 1, 1]} : vector<12x2x120xbf16> to vector<8x2x120xbf16>
    %c0_21 = arith.constant 0 : index
    %c0_22 = arith.constant 0 : index
    %c0_23 = arith.constant 0 : index
    %54 = vector.load %arg4[%c0_21, %c0_22, %c0_23] : memref<5x120x160xbf16, #tpu.memory_space<vmem>>, vector<1x120x160xbf16>
    %55 = vector.shape_cast %54 : vector<1x120x160xbf16> to vector<120x160xbf16>
    %56 = vector.shape_cast %55 : vector<120x160xbf16> to vector<1x120x160xbf16>
    %57 = vector.broadcast %56 : vector<1x120x160xbf16> to vector<8x120x160xbf16>
    "tpu.trace_start"() <{level = 10 : i32, message = "hbw,hwf->hbf"}> : () -> ()
    %cst_24 = arith.constant dense<0.000000e+00> : vector<8x2x160xf32>
    %58 = tpu.matmul %53, %57, %cst_24 {dimension_numbers = #tpu.dot_dimension_numbers<[2], [1], [1], [2], [0, 0, 0, 1, 1, 2], [0], [0]>} : vector<8x2x120xbf16>, vector<8x120x160xbf16>, vector<8x2x160xf32> -> vector<8x2x160xf32>
    "tpu.trace_stop"() : () -> ()
    %59 = vector.extract_strided_slice %52 {offsets = [1, 0, 0], sizes = [8, 2, 120], strides = [1, 1, 1]} : vector<12x2x120xbf16> to vector<8x2x120xbf16>
    %c1_25 = arith.constant 1 : index
    %c0_26 = arith.constant 0 : index
    %c0_27 = arith.constant 0 : index
    %60 = vector.load %arg4[%c1_25, %c0_26, %c0_27] : memref<5x120x160xbf16, #tpu.memory_space<vmem>>, vector<1x120x160xbf16>
    %61 = vector.shape_cast %60 : vector<1x120x160xbf16> to vector<120x160xbf16>
    %62 = vector.shape_cast %61 : vector<120x160xbf16> to vector<1x120x160xbf16>
    %63 = vector.broadcast %62 : vector<1x120x160xbf16> to vector<8x120x160xbf16>
    "tpu.trace_start"() <{level = 10 : i32, message = "hbw,hwf->hbf"}> : () -> ()
    %cst_28 = arith.constant dense<0.000000e+00> : vector<8x2x160xf32>
    %64 = tpu.matmul %59, %63, %cst_28 {dimension_numbers = #tpu.dot_dimension_numbers<[2], [1], [1], [2], [0, 0, 0, 1, 1, 2], [0], [0]>} : vector<8x2x120xbf16>, vector<8x120x160xbf16>, vector<8x2x160xf32> -> vector<8x2x160xf32>
    "tpu.trace_stop"() : () -> ()
    %65 = arith.addf %58, %64 : vector<8x2x160xf32>
    %66 = vector.extract_strided_slice %52 {offsets = [2, 0, 0], sizes = [8, 2, 120], strides = [1, 1, 1]} : vector<12x2x120xbf16> to vector<8x2x120xbf16>
    %c2_29 = arith.constant 2 : index
    %c0_30 = arith.constant 0 : index
    %c0_31 = arith.constant 0 : index
    %67 = vector.load %arg4[%c2_29, %c0_30, %c0_31] : memref<5x120x160xbf16, #tpu.memory_space<vmem>>, vector<1x120x160xbf16>
    %68 = vector.shape_cast %67 : vector<1x120x160xbf16> to vector<120x160xbf16>
    %69 = vector.shape_cast %68 : vector<120x160xbf16> to vector<1x120x160xbf16>
    %70 = vector.broadcast %69 : vector<1x120x160xbf16> to vector<8x120x160xbf16>
    "tpu.trace_start"() <{level = 10 : i32, message = "hbw,hwf->hbf"}> : () -> ()
    %cst_32 = arith.constant dense<0.000000e+00> : vector<8x2x160xf32>
    %71 = tpu.matmul %66, %70, %cst_32 {dimension_numbers = #tpu.dot_dimension_numbers<[2], [1], [1], [2], [0, 0, 0, 1, 1, 2], [0], [0]>} : vector<8x2x120xbf16>, vector<8x120x160xbf16>, vector<8x2x160xf32> -> vector<8x2x160xf32>
    "tpu.trace_stop"() : () -> ()
    %72 = arith.addf %65, %71 : vector<8x2x160xf32>
    %73 = vector.extract_strided_slice %52 {offsets = [3, 0, 0], sizes = [8, 2, 120], strides = [1, 1, 1]} : vector<12x2x120xbf16> to vector<8x2x120xbf16>
    %c3_33 = arith.constant 3 : index
    %c0_34 = arith.constant 0 : index
    %c0_35 = arith.constant 0 : index
    %74 = vector.load %arg4[%c3_33, %c0_34, %c0_35] : memref<5x120x160xbf16, #tpu.memory_space<vmem>>, vector<1x120x160xbf16>
    %75 = vector.shape_cast %74 : vector<1x120x160xbf16> to vector<120x160xbf16>
    %76 = vector.shape_cast %75 : vector<120x160xbf16> to vector<1x120x160xbf16>
    %77 = vector.broadcast %76 : vector<1x120x160xbf16> to vector<8x120x160xbf16>
    "tpu.trace_start"() <{level = 10 : i32, message = "hbw,hwf->hbf"}> : () -> ()
    %cst_36 = arith.constant dense<0.000000e+00> : vector<8x2x160xf32>
    %78 = tpu.matmul %73, %77, %cst_36 {dimension_numbers = #tpu.dot_dimension_numbers<[2], [1], [1], [2], [0, 0, 0, 1, 1, 2], [0], [0]>} : vector<8x2x120xbf16>, vector<8x120x160xbf16>, vector<8x2x160xf32> -> vector<8x2x160xf32>
    "tpu.trace_stop"() : () -> ()
    %79 = arith.addf %72, %78 : vector<8x2x160xf32>
    %80 = vector.extract_strided_slice %52 {offsets = [4, 0, 0], sizes = [8, 2, 120], strides = [1, 1, 1]} : vector<12x2x120xbf16> to vector<8x2x120xbf16>
    %c4_37 = arith.constant 4 : index
    %c0_38 = arith.constant 0 : index
    %c0_39 = arith.constant 0 : index
    %81 = vector.load %arg4[%c4_37, %c0_38, %c0_39] : memref<5x120x160xbf16, #tpu.memory_space<vmem>>, vector<1x120x160xbf16>
    %82 = vector.shape_cast %81 : vector<1x120x160xbf16> to vector<120x160xbf16>
    %83 = vector.shape_cast %82 : vector<120x160xbf16> to vector<1x120x160xbf16>
    %84 = vector.broadcast %83 : vector<1x120x160xbf16> to vector<8x120x160xbf16>
    "tpu.trace_start"() <{level = 10 : i32, message = "hbw,hwf->hbf"}> : () -> ()
    %cst_40 = arith.constant dense<0.000000e+00> : vector<8x2x160xf32>
    %85 = tpu.matmul %80, %84, %cst_40 {dimension_numbers = #tpu.dot_dimension_numbers<[2], [1], [1], [2], [0, 0, 0, 1, 1, 2], [0], [0]>} : vector<8x2x120xbf16>, vector<8x120x160xbf16>, vector<8x2x160xf32> -> vector<8x2x160xf32>
    "tpu.trace_stop"() : () -> ()
    %86 = arith.addf %79, %85 : vector<8x2x160xf32>
    %87 = vector.shape_cast %86 : vector<8x2x160xf32> to vector<4x2x2x160xf32>
    %88 = vector.extract_strided_slice %87 {offsets = [0, 0, 0, 0], sizes = [4, 1, 2, 80], strides = [1, 1, 1, 1]} : vector<4x2x2x160xf32> to vector<4x1x2x80xf32>
    %89 = vector.shape_cast %88 : vector<4x1x2x80xf32> to vector<4x2x80xf32>
    %90 = vector.extract_strided_slice %87 {offsets = [0, 0, 0, 80], sizes = [4, 1, 2, 80], strides = [1, 1, 1, 1]} : vector<4x2x2x160xf32> to vector<4x1x2x80xf32>
    %91 = vector.shape_cast %90 : vector<4x1x2x80xf32> to vector<4x2x80xf32>
    %92 = arith.maximumf %89, %91 : vector<4x2x80xf32>
    %93 = vector.extract_strided_slice %87 {offsets = [0, 1, 0, 0], sizes = [4, 1, 2, 80], strides = [1, 1, 1, 1]} : vector<4x2x2x160xf32> to vector<4x1x2x80xf32>
    %94 = vector.shape_cast %93 : vector<4x1x2x80xf32> to vector<4x2x80xf32>
    %95 = vector.extract_strided_slice %87 {offsets = [0, 1, 0, 80], sizes = [4, 1, 2, 80], strides = [1, 1, 1, 1]} : vector<4x2x2x160xf32> to vector<4x1x2x80xf32>
    %96 = vector.shape_cast %95 : vector<4x1x2x80xf32> to vector<4x2x80xf32>
    %97 = arith.maximumf %94, %96 : vector<4x2x80xf32>
    %98 = arith.maximumf %92, %97 : vector<4x2x80xf32>
    %c0_41 = arith.constant 0 : index
    %c0_42 = arith.constant 0 : index
    %c0_43 = arith.constant 0 : index
    %99 = vector.load %arg5[%c0_41, %c0_42, %c0_43] : memref<1x1x80xf32, #tpu.memory_space<vmem>>, vector<1x1x80xf32>
    %100 = vector.broadcast %99 : vector<1x1x80xf32> to vector<4x2x80xf32>
    %101 = arith.addf %98, %100 : vector<4x2x80xf32>
    %cst_44 = arith.constant 0.000000e+00 : f32
    %102 = vector.broadcast %cst_44 : f32 to vector<4x2x80xf32>
    %103 = arith.maximumf %101, %102 : vector<4x2x80xf32>
    %104 = arith.truncf %103 : vector<4x2x80xf32> to vector<4x2x80xbf16>
    %105 = vector.extract_strided_slice %104 {offsets = [0, 0, 0], sizes = [1, 2, 80], strides = [1, 1, 1]} : vector<4x2x80xbf16> to vector<1x2x80xbf16>
    %106 = vector.shape_cast %105 : vector<1x2x80xbf16> to vector<2x80xbf16>
    %c0_45 = arith.constant 0 : index
    %c0_46 = arith.constant 0 : index
    %c0_47 = arith.constant 0 : index
    %107 = vector.load %arg6[%c0_45, %c0_46, %c0_47] : memref<4x80x50xbf16, #tpu.memory_space<vmem>>, vector<1x80x50xbf16>
    %108 = vector.shape_cast %107 : vector<1x80x50xbf16> to vector<80x50xbf16>
    %cst_48 = arith.constant dense<0.000000e+00> : vector<2x50xf32>
    %109 = tpu.matmul %106, %108, %cst_48 {dimension_numbers = #tpu.dot_dimension_numbers<[1], [0], [0], [1], [0, 0, 1, 1], [], []>} : vector<2x80xbf16>, vector<80x50xbf16>, vector<2x50xf32> -> vector<2x50xf32>
    %110 = vector.extract_strided_slice %104 {offsets = [1, 0, 0], sizes = [1, 2, 80], strides = [1, 1, 1]} : vector<4x2x80xbf16> to vector<1x2x80xbf16>
    %111 = vector.shape_cast %110 : vector<1x2x80xbf16> to vector<2x80xbf16>
    %c1_49 = arith.constant 1 : index
    %c0_50 = arith.constant 0 : index
    %c0_51 = arith.constant 0 : index
    %112 = vector.load %arg6[%c1_49, %c0_50, %c0_51] : memref<4x80x50xbf16, #tpu.memory_space<vmem>>, vector<1x80x50xbf16>
    %113 = vector.shape_cast %112 : vector<1x80x50xbf16> to vector<80x50xbf16>
    %cst_52 = arith.constant dense<0.000000e+00> : vector<2x50xf32>
    %114 = tpu.matmul %111, %113, %cst_52 {dimension_numbers = #tpu.dot_dimension_numbers<[1], [0], [0], [1], [0, 0, 1, 1], [], []>} : vector<2x80xbf16>, vector<80x50xbf16>, vector<2x50xf32> -> vector<2x50xf32>
    %115 = arith.addf %109, %114 : vector<2x50xf32>
    %116 = vector.extract_strided_slice %104 {offsets = [2, 0, 0], sizes = [1, 2, 80], strides = [1, 1, 1]} : vector<4x2x80xbf16> to vector<1x2x80xbf16>
    %117 = vector.shape_cast %116 : vector<1x2x80xbf16> to vector<2x80xbf16>
    %c2_53 = arith.constant 2 : index
    %c0_54 = arith.constant 0 : index
    %c0_55 = arith.constant 0 : index
    %118 = vector.load %arg6[%c2_53, %c0_54, %c0_55] : memref<4x80x50xbf16, #tpu.memory_space<vmem>>, vector<1x80x50xbf16>
    %119 = vector.shape_cast %118 : vector<1x80x50xbf16> to vector<80x50xbf16>
    %cst_56 = arith.constant dense<0.000000e+00> : vector<2x50xf32>
    %120 = tpu.matmul %117, %119, %cst_56 {dimension_numbers = #tpu.dot_dimension_numbers<[1], [0], [0], [1], [0, 0, 1, 1], [], []>} : vector<2x80xbf16>, vector<80x50xbf16>, vector<2x50xf32> -> vector<2x50xf32>
    %121 = arith.addf %115, %120 : vector<2x50xf32>
    %122 = vector.extract_strided_slice %104 {offsets = [3, 0, 0], sizes = [1, 2, 80], strides = [1, 1, 1]} : vector<4x2x80xbf16> to vector<1x2x80xbf16>
    %123 = vector.shape_cast %122 : vector<1x2x80xbf16> to vector<2x80xbf16>
    %c3_57 = arith.constant 3 : index
    %c0_58 = arith.constant 0 : index
    %c0_59 = arith.constant 0 : index
    %124 = vector.load %arg6[%c3_57, %c0_58, %c0_59] : memref<4x80x50xbf16, #tpu.memory_space<vmem>>, vector<1x80x50xbf16>
    %125 = vector.shape_cast %124 : vector<1x80x50xbf16> to vector<80x50xbf16>
    %cst_60 = arith.constant dense<0.000000e+00> : vector<2x50xf32>
    %126 = tpu.matmul %123, %125, %cst_60 {dimension_numbers = #tpu.dot_dimension_numbers<[1], [0], [0], [1], [0, 0, 1, 1], [], []>} : vector<2x80xbf16>, vector<80x50xbf16>, vector<2x50xf32> -> vector<2x50xf32>
    %127 = arith.addf %121, %126 : vector<2x50xf32>
    %c0_61 = arith.constant 0 : index
    %c0_62 = arith.constant 0 : index
    %128 = vector.load %arg7[%c0_61, %c0_62] : memref<1x50xf32, #tpu.memory_space<vmem>>, vector<1x50xf32>
    %129 = vector.broadcast %128 : vector<1x50xf32> to vector<2x50xf32>
    %130 = arith.addf %127, %129 : vector<2x50xf32>
    %cst_63 = arith.constant 0.000000e+00 : f32
    %131 = vector.broadcast %cst_63 : f32 to vector<2x50xf32>
    %132 = arith.maximumf %130, %131 : vector<2x50xf32>
    %133 = arith.truncf %132 : vector<2x50xf32> to vector<2x50xbf16>
    %c0_64 = arith.constant 0 : index
    %c0_65 = arith.constant 0 : index
    %134 = vector.load %arg8[%c0_64, %c0_65] : memref<50x10xbf16, #tpu.memory_space<vmem>>, vector<50x10xbf16>
    %cst_66 = arith.constant dense<0.000000e+00> : vector<2x10xf32>
    %135 = tpu.matmul %133, %134, %cst_66 {dimension_numbers = #tpu.dot_dimension_numbers<[1], [0], [0], [1], [0, 0, 1, 1], [], []>} : vector<2x50xbf16>, vector<50x10xbf16>, vector<2x10xf32> -> vector<2x10xf32>
    %c0_67 = arith.constant 0 : index
    %c0_68 = arith.constant 0 : index
    %136 = vector.load %arg9[%c0_67, %c0_68] : memref<1x10xf32, #tpu.memory_space<vmem>>, vector<1x10xf32>
    %137 = vector.broadcast %136 : vector<1x10xf32> to vector<2x10xf32>
    %138 = arith.addf %135, %137 : vector<2x10xf32>
    %cst_69 = arith.constant dense<0xFF800000> : vector<2xf32>
    %139 = vector.multi_reduction <maximumf>, %138, %cst_69 [1] : vector<2x10xf32> to vector<2xf32>
    %140 = vector.shape_cast %139 : vector<2xf32> to vector<2x1xf32>
    %141 = vector.broadcast %140 : vector<2x1xf32> to vector<2x10xf32>
    %142 = arith.subf %138, %141 : vector<2x10xf32>
    %143 = math.exp %142 : vector<2x10xf32>
    %cst_70 = arith.constant dense<0.000000e+00> : vector<2xf32>
    %144 = vector.multi_reduction <add>, %143, %cst_70 [1] : vector<2x10xf32> to vector<2xf32>
    %145 = vector.shape_cast %144 : vector<2xf32> to vector<2x1xf32>
    %146 = math.log %145 : vector<2x1xf32>
    %147 = vector.broadcast %146 : vector<2x1xf32> to vector<2x10xf32>
    %148 = arith.subf %142, %147 : vector<2x10xf32>
    %c0_71 = arith.constant 0 : index
    %c0_72 = arith.constant 0 : index
    %149 = vector.load %arg10[%c0_71, %c0_72] : memref<2x10xf32, #tpu.memory_space<vmem>>, vector<2x10xf32>
    tpu.vector_store %arg10[%c0_71, %c0_72], %148 {strides = array<i32>} : memref<2x10xf32, #tpu.memory_space<vmem>>, vector<2x10xf32>,
    return
  }
  func.func @transform_0(%arg0: i32) -> (i32, i32, i32) {
    %c0_i32 = arith.constant 0 : i32
    %c0_i32_0 = arith.constant 0 : i32
    %c0_i32_1 = arith.constant 0 : i32
    return %c0_i32, %arg0, %c0_i32_0 : i32, i32, i32
  }
  func.func @transform_1(%arg0: i32) -> (i32, i32, i32) {
    %c0_i32 = arith.constant 0 : i32
    %c0_i32_0 = arith.constant 0 : i32
    %c0_i32_1 = arith.constant 0 : i32
    %c0_i32_2 = arith.constant 0 : i32
    return %c0_i32, %c0_i32_0, %c0_i32_1 : i32, i32, i32
  }
  func.func @transform_2(%arg0: i32) -> (i32, i32, i32) {
    %c0_i32 = arith.constant 0 : i32
    %c0_i32_0 = arith.constant 0 : i32
    %c0_i32_1 = arith.constant 0 : i32
    %c0_i32_2 = arith.constant 0 : i32
    return %c0_i32, %c0_i32_0, %c0_i32_1 : i32, i32, i32
  }
  func.func @transform_3(%arg0: i32) -> (i32, i32, i32) {
    %c0_i32 = arith.constant 0 : i32
    %c0_i32_0 = arith.constant 0 : i32
    %c0_i32_1 = arith.constant 0 : i32
    %c0_i32_2 = arith.constant 0 : i32
    return %c0_i32, %c0_i32_0, %c0_i32_1 : i32, i32, i32
  }
  func.func @transform_4(%arg0: i32) -> (i32, i32, i32) {
    %c0_i32 = arith.constant 0 : i32
    %c0_i32_0 = arith.constant 0 : i32
    %c0_i32_1 = arith.constant 0 : i32
    %c0_i32_2 = arith.constant 0 : i32
    return %c0_i32, %c0_i32_0, %c0_i32_1 : i32, i32, i32
  }
  func.func @transform_5(%arg0: i32) -> (i32, i32, i32) {
    %c0_i32 = arith.constant 0 : i32
    %c0_i32_0 = arith.constant 0 : i32
    %c0_i32_1 = arith.constant 0 : i32
    %c0_i32_2 = arith.constant 0 : i32
    return %c0_i32, %c0_i32_0, %c0_i32_1 : i32, i32, i32
  }
  func.func @transform_6(%arg0: i32) -> (i32, i32) {
    %c0_i32 = arith.constant 0 : i32
    %c0_i32_0 = arith.constant 0 : i32
    %c0_i32_1 = arith.constant 0 : i32
    return %c0_i32, %c0_i32_0 : i32, i32
  }
  func.func @transform_7(%arg0: i32) -> (i32, i32) {
    %c0_i32 = arith.constant 0 : i32
    %c0_i32_0 = arith.constant 0 : i32
    %c0_i32_1 = arith.constant 0 : i32
    return %c0_i32, %c0_i32_0 : i32, i32
  }
  func.func @transform_8(%arg0: i32) -> (i32, i32) {
    %c0_i32 = arith.constant 0 : i32
    %c0_i32_0 = arith.constant 0 : i32
    %c0_i32_1 = arith.constant 0 : i32
    return %c0_i32, %c0_i32_0 : i32, i32
  }
  func.func @transform_9(%arg0: i32) -> (i32, i32) {
    %c0_i32 = arith.constant 0 : i32
    %c0_i32_0 = arith.constant 0 : i32
    return %arg0, %c0_i32 : i32, i32
  }
}

</mosaic_0001>

<llo_original>
// kernel: cnn_forward.1
$region0: #{cnn_forward.1}
  #allocation0 [shape = 'u32[]', space=smem, size = 0x4, offset = 0x4, fixed_abs, tag = 'smem constant byte address 0x4 - core index']
  #allocation1 [shape = 'u32[144,128]{1,0:T(1,128)}', space=vmem, size = 0x12000, scoped, tag = 'internal scratch']
  %s0 = inlined_call_operand.vmem [shape: bf16[28,2,28], index: 0, kind: input, shape index: {}]
  %s1 = inlined_call_operand.vmem [shape: bf16[5,28,240], index: 1, kind: input, shape index: {}]
  %s2 = inlined_call_operand.vmem [shape: f32[1,1,120], index: 2, kind: input, shape index: {}]
  %s3 = inlined_call_operand.vmem [shape: bf16[5,120,160], index: 3, kind: input, shape index: {}]
  %s4 = inlined_call_operand.vmem [shape: f32[1,1,80], index: 4, kind: input, shape index: {}]
  %s5 = inlined_call_operand.vmem [shape: bf16[4,80,50], index: 5, kind: input, shape index: {}]
  %s6 = inlined_call_operand.vmem [shape: f32[1,50], index: 6, kind: input, shape index: {}]
  %s7 = inlined_call_operand.vmem [shape: bf16[50,10], index: 7, kind: input, shape index: {}]
  %s8 = inlined_call_operand.vmem [shape: f32[1,10], index: 8, kind: input, shape index: {}]
  %s9 = inlined_call_operand.hbm [shape: f32[2,10], index: 9, kind: output, shape index: {}]
  %s10 = sld [smem:[#allocation0]]
  $region46: #{cnn_forward.1} parent=0
    _
  %s12 = ssub.s32 1, %s10
  %s13 = scalar_select 0, %s12, %s10
  $region1: #{cnn_forward.1} parent=0
    #allocation2 [shape = 'u8[1024]{0}', space=vmem, size = 0x400, scoped, tag = 'output window, operand 0, single buffered']
    #allocation3 [shape = 's32[1]{0}', space=sflag, size = 0x4, scoped, tag = 'scoped memory for cnn_forward.1']
    %14 = vsyncpa [#allocation3], 0
    // Predicated region
    $region2: #{cnn_forward.1} parent=1 // pred_check
      _
    $region3: #{cnn_forward.1} parent=1 // pred_check_branch
      %16 = sbr.rel (0) target = $region5
    $region4: #{cnn_forward.1} parent=1 // pred_region
      _
    $region5: #{cnn_forward.1} parent=1 // pred_fallthru
      _
    // Predicated region
    $region6: #{cnn_forward.1} parent=1 // pred_check
      _
    $region7: #{cnn_forward.1} parent=1 // pred_check_branch
      %18 = sbr.rel (0) target = $region9
    $region8: #{cnn_forward.1} parent=1 // pred_region
      _
    $region9: #{cnn_forward.1} parent=1 // pred_fallthru
      _
    // Predicated region
    $region10: #{cnn_forward.1} parent=1 // pred_check
      _
    $region11: #{cnn_forward.1} parent=1 // pred_check_branch
      %20 = sbr.rel (0) target = $region13
    $region12: #{cnn_forward.1} parent=1 // pred_region
      _
    $region13: #{cnn_forward.1} parent=1 // pred_fallthru
      _
    // Predicated region
    $region14: #{cnn_forward.1} parent=1 // pred_check
      _
    $region15: #{cnn_forward.1} parent=1 // pred_check_branch
      %22 = sbr.rel (0) target = $region17
    $region16: #{cnn_forward.1} parent=1 // pred_region
      _
    $region17: #{cnn_forward.1} parent=1 // pred_fallthru
      _
    // Predicated region
    $region18: #{cnn_forward.1} parent=1 // pred_check
      _
    $region19: #{cnn_forward.1} parent=1 // pred_check_branch
      %24 = sbr.rel (0) target = $region21
    $region20: #{cnn_forward.1} parent=1 // pred_region
      _
    $region21: #{cnn_forward.1} parent=1 // pred_fallthru
      _
    // Predicated region
    $region22: #{cnn_forward.1} parent=1 // pred_check
      _
    $region23: #{cnn_forward.1} parent=1 // pred_check_branch
      %26 = sbr.rel (0) target = $region25
    $region24: #{cnn_forward.1} parent=1 // pred_region
      _
    $region25: #{cnn_forward.1} parent=1 // pred_fallthru
      _
    // Predicated region
    $region26: #{cnn_forward.1} parent=1 // pred_check
      _
    $region27: #{cnn_forward.1} parent=1 // pred_check_branch
      %28 = sbr.rel (0) target = $region29
    $region28: #{cnn_forward.1} parent=1 // pred_region
      _
    $region29: #{cnn_forward.1} parent=1 // pred_fallthru
      _
    // Predicated region
    $region30: #{cnn_forward.1} parent=1 // pred_check
      _
    $region31: #{cnn_forward.1} parent=1 // pred_check_branch
      %30 = sbr.rel (0) target = $region33
    $region32: #{cnn_forward.1} parent=1 // pred_region
      _
    $region33: #{cnn_forward.1} parent=1 // pred_fallthru
      _
    // Predicated region
    $region34: #{cnn_forward.1} parent=1 // pred_check
      _
    $region35: #{cnn_forward.1} parent=1 // pred_check_branch
      %32 = sbr.rel (0) target = $region37
    $region36: #{cnn_forward.1} parent=1 // pred_region
      _
    $region37: #{cnn_forward.1} parent=1 // pred_fallthru
      _
    %v34 = vld [vmem:[%s0] sm:$0x1]
    %v35 = vld [vmem:[%s0 + $0x1] sm:$0x1]
    %v36 = vld [vmem:[%s0 + $0x2] sm:$0x1]
    %v37 = vld [vmem:[%s0 + $0x3] sm:$0x1]
    %v38 = vld [vmem:[%s0 + $0x4] sm:$0x1]
    %v39 = vld [vmem:[%s0 + $0x5] sm:$0x1]
    %v40 = vld [vmem:[%s0 + $0x6] sm:$0x1]
    %v41 = vld [vmem:[%s0 + $0x7] sm:$0x1]
    %v42 = vld [vmem:[%s0 + $0x8] sm:$0x1]
    %v43 = vld [vmem:[%s0 + $0x9] sm:$0x1]
    %v44 = vld [vmem:[%s0 + $0xa] sm:$0x1]
    %v45 = vld [vmem:[%s0 + $0xb] sm:$0x1]
    %v46 = vld [vmem:[%s0 + $0xc] sm:$0x1]
    %v47 = vld [vmem:[%s0 + $0xd] sm:$0x1]
    %v48 = vld [vmem:[%s0 + $0xe] sm:$0x1]
    %v49 = vld [vmem:[%s0 + $0xf] sm:$0x1]
    %v50 = vld [vmem:[%s0 + $0x10] sm:$0x1]
    %v51 = vld [vmem:[%s0 + $0x11] sm:$0x1]
    %v52 = vld [vmem:[%s0 + $0x12] sm:$0x1]
    %v53 = vld [vmem:[%s0 + $0x13] sm:$0x1]
    %v54 = vld [vmem:[%s0 + $0x14] sm:$0x1]
    %v55 = vld [vmem:[%s0 + $0x15] sm:$0x1]
    %v56 = vld [vmem:[%s0 + $0x16] sm:$0x1]
    %v57 = vld [vmem:[%s0 + $0x17] sm:$0x1]
    %v58 = vld [vmem:[%s0 + $0x18] sm:$0x1]
    %v59 = vld [vmem:[%s0 + $0x19] sm:$0x1]
    %v60 = vld [vmem:[%s0 + $0x1a] sm:$0x1]
    %v61 = vld [vmem:[%s0 + $0x1b] sm:$0x1]
    %v62 = vld [vmem:[%s1] sm:$0xff]
    %v63 = vld [vmem:[%s1 + $0x8] sm:$0xff]
    %v64 = vld [vmem:[%s1 + $0x10] sm:$0xff]
    %v65 = vld [vmem:[%s1 + $0x18] sm:$0x33]
    %s66 = scalar_lea.vmem %s1, 32
    %v67 = vld [vmem:[%s66] sm:$0xff]
    %v68 = vld [vmem:[%s66 + $0x8] sm:$0xff]
    %v69 = vld [vmem:[%s66 + $0x10] sm:$0xff]
    %v70 = vld [vmem:[%s66 + $0x18] sm:$0x33]
    %v75 = vunpack.c.l.b16 %v67
    %v76 = vunpack.c.h.b16 %v67
    %v77 = vunpack.c.l.b16 %v68
    %v78 = vunpack.c.h.b16 %v68
    %v79 = vunpack.c.l.b16 %v69
    %v80 = vunpack.c.h.b16 %v69
    %v81 = vunpack.c.l.b16 %v70
    %v82 = vunpack.c.h.b16 %v70
    %v83 = vpack.c.b16 %v77, %v75
    %v84 = vpack.c.b16 %v78, %v76
    %v85 = vpack.c.b16 %v81, %v79
    %v86 = vpack.c.b16 %v82, %v80
    %vm89 = vcmask 228352
    %v91 = vsel %vm89, %v35, 0
    %vm93 = vcmask 1045504
    %v95 = vsel %vm93, %v85, 0
    %v98 = vsel %vm93, %v86, 0
    %100 = vmatprep.subr.bf16.mxu0 %v84
    %101 = vmatpush1.bf16.msra.mxu0 %v83
    %102 = vmatprep.subr.bf16.mxu0 %v98
    %103 = vmatpush1.bf16.msra.mxu0 %v95
    %104 = vmatprep.subr.bf16.mxu0 0
    %105 = vmatpush1.bf16.msra.mxu0 0
    %106 = vmatprep.subr.bf16.mxu0 0
    %107 = vmatpush1.bf16.msra.mxu0 0
    %108 = vmatprep.subr.bf16.mxu0 0
    %109 = vmatpush1.bf16.msra.mxu0 0
    %110 = vmatprep.subr.bf16.mxu0 0
    %111 = vmatpush1.bf16.msra.mxu0 0
    %112 = vmatprep.subr.bf16.mxu0 0
    %113 = vmatpush1.bf16.msra.mxu0 0
    %114 = vmatprep.subr.bf16.mxu0 0
    %115 = vmatpush1.bf16.msra.mxu0 0
    %116 = vmatprep.subr.bf16.mxu0 0
    %117 = vmatpush1.bf16.msra.mxu0 0
    %118 = vmatprep.subr.bf16.mxu0 0
    %119 = vmatpush1.bf16.msra.mxu0 0
    %120 = vmatprep.subr.bf16.mxu0 0
    %121 = vmatpush1.bf16.msra.mxu0 0
    %122 = vmatprep.subr.bf16.mxu0 0
    %123 = vmatpush1.bf16.msra.mxu0 0
    %124 = vmatprep.subr.bf16.mxu0 0
    %125 = vmatpush1.bf16.msra.mxu0 0
    %126 = vmatprep.subr.bf16.mxu0 0
    %127 = vmatpush1.bf16.msra.mxu0 0
    %128 = vmatprep.subr.bf16.mxu0 0
    %129 = vmatpush1.bf16.msra.mxu0 0
    %130 = vmatprep.subr.bf16.mxu0 0
    %131 = vmatpush1.bf16.msra.mxu0 0
    %132 = vmatprep.mubr.bf16.mxu0 0
    %133 = vmatmul.mubr.bf16.gmra.mrb[0].mxu0 %v91
    %v134 = vpop.f32.mrb[0].mxu0
    %v135 = vadd.f32 0.0, %v134
    %v136 = vpop.f32.mrb[0].mxu0
    %v137 = vadd.f32 0.0, %v136
    %v138 = vpop.f32.mrb[0].mxu0
    %v139 = vpop.f32.mrb[0].mxu0
    %140 = vdwg.mxu0
    %v142 = vsel %vm89, %v36, 0
    %144 = vmatprep.subr.bf16.mxu0 %v84
    %145 = vmatpush1.bf16.msra.mxu0 %v83
    %146 = vmatprep.subr.bf16.mxu0 %v98
    %147 = vmatpush1.bf16.msra.mxu0 %v95
    %148 = vmatprep.subr.bf16.mxu0 0
    %149 = vmatpush1.bf16.msra.mxu0 0
    %150 = vmatprep.subr.bf16.mxu0 0
    %151 = vmatpush1.bf16.msra.mxu0 0
    %152 = vmatprep.subr.bf16.mxu0 0
    %153 = vmatpush1.bf16.msra.mxu0 0
    %154 = vmatprep.subr.bf16.mxu0 0
    %155 = vmatpush1.bf16.msra.mxu0 0
    %156 = vmatprep.subr.bf16.mxu0 0
    %157 = vmatpush1.bf16.msra.mxu0 0
    %158 = vmatprep.subr.bf16.mxu0 0
    %159 = vmatpush1.bf16.msra.mxu0 0
    %160 = vmatprep.subr.bf16.mxu0 0
    %161 = vmatpush1.bf16.msra.mxu0 0
    %162 = vmatprep.subr.bf16.mxu0 0
    %163 = vmatpush1.bf16.msra.mxu0 0
    %164 = vmatprep.subr.bf16.mxu0 0
    %165 = vmatpush1.bf16.msra.mxu0 0
    %166 = vmatprep.subr.bf16.mxu0 0
    %167 = vmatpush1.bf16.msra.mxu0 0
    %168 = vmatprep.subr.bf16.mxu0 0
    %169 = vmatpush1.bf16.msra.mxu0 0
    %170 = vmatprep.subr.bf16.mxu0 0
    %171 = vmatpush1.bf16.msra.mxu0 0
    %172 = vmatprep.subr.bf16.mxu0 0
    %173 = vmatpush1.bf16.msra.mxu0 0
    %174 = vmatprep.subr.bf16.mxu0 0
    %175 = vmatpush1.bf16.msra.mxu0 0
    %176 = vmatprep.mubr.bf16.mxu0 0
    %177 = vmatmul.mubr.bf16.gmra.mrb[0].mxu0 %v142
    %v178 = vpop.f32.mrb[0].mxu0
    %v179 = vadd.f32 0.0, %v178
    %v180 = vpop.f32.mrb[0].mxu0
    %v181 = vadd.f32 0.0, %v180
    %v182 = vpop.f32.mrb[0].mxu0
    %v183 = vpop.f32.mrb[0].mxu0
    %184 = vdwg.mxu0
    %v186 = vsel %vm89, %v37, 0
    %188 = vmatprep.subr.bf16.mxu0 %v84
    %189 = vmatpush1.bf16.msra.mxu0 %v83
    %190 = vmatprep.subr.bf16.mxu0 %v98
    %191 = vmatpush1.bf16.msra.mxu0 %v95
    %192 = vmatprep.subr.bf16.mxu0 0
    %193 = vmatpush1.bf16.msra.mxu0 0
    %194 = vmatprep.subr.bf16.mxu0 0
    %195 = vmatpush1.bf16.msra.mxu0 0
    %196 = vmatprep.subr.bf16.mxu0 0
    %197 = vmatpush1.bf16.msra.mxu0 0
    %198 = vmatprep.subr.bf16.mxu0 0
    %199 = vmatpush1.bf16.msra.mxu0 0
    %200 = vmatprep.subr.bf16.mxu0 0
    %201 = vmatpush1.bf16.msra.mxu0 0
    %202 = vmatprep.subr.bf16.mxu0 0
    %203 = vmatpush1.bf16.msra.mxu0 0
    %204 = vmatprep.subr.bf16.mxu0 0
    %205 = vmatpush1.bf16.msra.mxu0 0
    %206 = vmatprep.subr.bf16.mxu0 0
    %207 = vmatpush1.bf16.msra.mxu0 0
    %208 = vmatprep.subr.bf16.mxu0 0
    %209 = vmatpush1.bf16.msra.mxu0 0
    %210 = vmatprep.subr.bf16.mxu0 0
    %211 = vmatpush1.bf16.msra.mxu0 0
    %212 = vmatprep.subr.bf16.mxu0 0
    %213 = vmatpush1.bf16.msra.mxu0 0
    %214 = vmatprep.subr.bf16.mxu0 0
    %215 = vmatpush1.bf16.msra.mxu0 0
    %216 = vmatprep.subr.bf16.mxu0 0
    %217 = vmatpush1.bf16.msra.mxu0 0
    %218 = vmatprep.subr.bf16.mxu0 0
    %219 = vmatpush1.bf16.msra.mxu0 0
    %220 = vmatprep.mubr.bf16.mxu0 0
    %221 = vmatmul.mubr.bf16.gmra.mrb[0].mxu0 %v186
    %v222 = vpop.f32.mrb[0].mxu0
    %v223 = vadd.f32 0.0, %v222
    %v224 = vpop.f32.mrb[0].mxu0
    %v225 = vadd.f32 0.0, %v224
    %v226 = vpop.f32.mrb[0].mxu0
    %v227 = vpop.f32.mrb[0].mxu0
    %228 = vdwg.mxu0
    %v230 = vsel %vm89, %v38, 0
    %232 = vmatprep.subr.bf16.mxu0 %v84
    %233 = vmatpush1.bf16.msra.mxu0 %v83
    %234 = vmatprep.subr.bf16.mxu0 %v98
    %235 = vmatpush1.bf16.msra.mxu0 %v95
    %236 = vmatprep.subr.bf16.mxu0 0
    %237 = vmatpush1.bf16.msra.mxu0 0
    %238 = vmatprep.subr.bf16.mxu0 0
    %239 = vmatpush1.bf16.msra.mxu0 0
    %240 = vmatprep.subr.bf16.mxu0 0
    %241 = vmatpush1.bf16.msra.mxu0 0
    %242 = vmatprep.subr.bf16.mxu0 0
    %243 = vmatpush1.bf16.msra.mxu0 0
    %244 = vmatprep.subr.bf16.mxu0 0
    %245 = vmatpush1.bf16.msra.mxu0 0
    %246 = vmatprep.subr.bf16.mxu0 0
    %247 = vmatpush1.bf16.msra.mxu0 0
    %248 = vmatprep.subr.bf16.mxu0 0
    %249 = vmatpush1.bf16.msra.mxu0 0
    %250 = vmatprep.subr.bf16.mxu0 0
    %251 = vmatpush1.bf16.msra.mxu0 0
    %252 = vmatprep.subr.bf16.mxu0 0
    %253 = vmatpush1.bf16.msra.mxu0 0
    %254 = vmatprep.subr.bf16.mxu0 0
    %255 = vmatpush1.bf16.msra.mxu0 0
    %256 = vmatprep.subr.bf16.mxu0 0
    %257 = vmatpush1.bf16.msra.mxu0 0
    %258 = vmatprep.subr.bf16.mxu0 0
    %259 = vmatpush1.bf16.msra.mxu0 0
    %260 = vmatprep.subr.bf16.mxu0 0
    %261 = vmatpush1.bf16.msra.mxu0 0
    %262 = vmatprep.subr.bf16.mxu0 0
    %263 = vmatpush1.bf16.msra.mxu0 0
    %264 = vmatprep.mubr.bf16.mxu0 0
    %265 = vmatmul.mubr.bf16.gmra.mrb[0].mxu0 %v230
    %v266 = vpop.f32.mrb[0].mxu0
    %v267 = vadd.f32 0.0, %v266
    %v268 = vpop.f32.mrb[0].mxu0
    %v269 = vadd.f32 0.0, %v268
    %v270 = vpop.f32.mrb[0].mxu0
    %v271 = vpop.f32.mrb[0].mxu0
    %272 = vdwg.mxu0
    %v274 = vsel %vm89, %v39, 0
    %276 = vmatprep.subr.bf16.mxu0 %v84
    %277 = vmatpush1.bf16.msra.mxu0 %v83
    %278 = vmatprep.subr.bf16.mxu0 %v98
    %279 = vmatpush1.bf16.msra.mxu0 %v95
    %280 = vmatprep.subr.bf16.mxu0 0
    %281 = vmatpush1.bf16.msra.mxu0 0
    %282 = vmatprep.subr.bf16.mxu0 0
    %283 = vmatpush1.bf16.msra.mxu0 0
    %284 = vmatprep.subr.bf16.mxu0 0
    %285 = vmatpush1.bf16.msra.mxu0 0
    %286 = vmatprep.subr.bf16.mxu0 0
    %287 = vmatpush1.bf16.msra.mxu0 0
    %288 = vmatprep.subr.bf16.mxu0 0
    %289 = vmatpush1.bf16.msra.mxu0 0
    %290 = vmatprep.subr.bf16.mxu0 0
    %291 = vmatpush1.bf16.msra.mxu0 0
    %292 = vmatprep.subr.bf16.mxu0 0
    %293 = vmatpush1.bf16.msra.mxu0 0
    %294 = vmatprep.subr.bf16.mxu0 0
    %295 = vmatpush1.bf16.msra.mxu0 0
    %296 = vmatprep.subr.bf16.mxu0 0
    %297 = vmatpush1.bf16.msra.mxu0 0
    %298 = vmatprep.subr.bf16.mxu0 0
    %299 = vmatpush1.bf16.msra.mxu0 0
    %300 = vmatprep.subr.bf16.mxu0 0
    %301 = vmatpush1.bf16.msra.mxu0 0
    %302 = vmatprep.subr.bf16.mxu0 0
    %303 = vmatpush1.bf16.msra.mxu0 0
    %304 = vmatprep.subr.bf16.mxu0 0
    %305 = vmatpush1.bf16.msra.mxu0 0
    %306 = vmatprep.subr.bf16.mxu0 0
    %307 = vmatpush1.bf16.msra.mxu0 0
    %308 = vmatprep.mubr.bf16.mxu0 0
    %309 = vmatmul.mubr.bf16.gmra.mrb[0].mxu0 %v274
    %v310 = vpop.f32.mrb[0].mxu0
    %v311 = vadd.f32 0.0, %v310
    %v312 = vpop.f32.mrb[0].mxu0
    %v313 = vadd.f32 0.0, %v312
    %v314 = vpop.f32.mrb[0].mxu0
    %v315 = vpop.f32.mrb[0].mxu0
    %316 = vdwg.mxu0
    %v318 = vsel %vm89, %v40, 0
    %320 = vmatprep.subr.bf16.mxu0 %v84
    %321 = vmatpush1.bf16.msra.mxu0 %v83
    %322 = vmatprep.subr.bf16.mxu0 %v98
    %323 = vmatpush1.bf16.msra.mxu0 %v95
    %324 = vmatprep.subr.bf16.mxu0 0
    %325 = vmatpush1.bf16.msra.mxu0 0
    %326 = vmatprep.subr.bf16.mxu0 0
    %327 = vmatpush1.bf16.msra.mxu0 0
    %328 = vmatprep.subr.bf16.mxu0 0
    %329 = vmatpush1.bf16.msra.mxu0 0
    %330 = vmatprep.subr.bf16.mxu0 0
    %331 = vmatpush1.bf16.msra.mxu0 0
    %332 = vmatprep.subr.bf16.mxu0 0
    %333 = vmatpush1.bf16.msra.mxu0 0
    %334 = vmatprep.subr.bf16.mxu0 0
    %335 = vmatpush1.bf16.msra.mxu0 0
    %336 = vmatprep.subr.bf16.mxu0 0
    %337 = vmatpush1.bf16.msra.mxu0 0
    %338 = vmatprep.subr.bf16.mxu0 0
    %339 = vmatpush1.bf16.msra.mxu0 0
    %340 = vmatprep.subr.bf16.mxu0 0
    %341 = vmatpush1.bf16.msra.mxu0 0
    %342 = vmatprep.subr.bf16.mxu0 0
    %343 = vmatpush1.bf16.msra.mxu0 0
    %344 = vmatprep.subr.bf16.mxu0 0
    %345 = vmatpush1.bf16.msra.mxu0 0
    %346 = vmatprep.subr.bf16.mxu0 0
    %347 = vmatpush1.bf16.msra.mxu0 0
    %348 = vmatprep.subr.bf16.mxu0 0
    %349 = vmatpush1.bf16.msra.mxu0 0
    %350 = vmatprep.subr.bf16.mxu0 0
    %351 = vmatpush1.bf16.msra.mxu0 0
    %352 = vmatprep.mubr.bf16.mxu0 0
    %353 = vmatmul.mubr.bf16.gmra.mrb[0].mxu0 %v318
    %v354 = vpop.f32.mrb[0].mxu0
    %v355 = vadd.f32 0.0, %v354
    %v356 = vpop.f32.mrb[0].mxu0
    %v357 = vadd.f32 0.0, %v356
    %v358 = vpop.f32.mrb[0].mxu0
    %v359 = vpop.f32.mrb[0].mxu0
    %360 = vdwg.mxu0
    %v362 = vsel %vm89, %v41, 0
    %364 = vmatprep.subr.bf16.mxu0 %v84
    %365 = vmatpush1.bf16.msra.mxu0 %v83
    %366 = vmatprep.subr.bf16.mxu0 %v98
    %367 = vmatpush1.bf16.msra.mxu0 %v95
    %368 = vmatprep.subr.bf16.mxu0 0
    %369 = vmatpush1.bf16.msra.mxu0 0
    %370 = vmatprep.subr.bf16.mxu0 0
    %371 = vmatpush1.bf16.msra.mxu0 0
    %372 = vmatprep.subr.bf16.mxu0 0
    %373 = vmatpush1.bf16.msra.mxu0 0
    %374 = vmatprep.subr.bf16.mxu0 0
    %375 = vmatpush1.bf16.msra.mxu0 0
    %376 = vmatprep.subr.bf16.mxu0 0
    %377 = vmatpush1.bf16.msra.mxu0 0
    %378 = vmatprep.subr.bf16.mxu0 0
    %379 = vmatpush1.bf16.msra.mxu0 0
    %380 = vmatprep.subr.bf16.mxu0 0
    %381 = vmatpush1.bf16.msra.mxu0 0
    %382 = vmatprep.subr.bf16.mxu0 0
    %383 = vmatpush1.bf16.msra.mxu0 0
    %384 = vmatprep.subr.bf16.mxu0 0
    %385 = vmatpush1.bf16.msra.mxu0 0
    %386 = vmatprep.subr.bf16.mxu0 0
    %387 = vmatpush1.bf16.msra.mxu0 0
    %388 = vmatprep.subr.bf16.mxu0 0
    %389 = vmatpush1.bf16.msra.mxu0 0
    %390 = vmatprep.subr.bf16.mxu0 0
    %391 = vmatpush1.bf16.msra.mxu0 0
    %392 = vmatprep.subr.bf16.mxu0 0
    %393 = vmatpush1.bf16.msra.mxu0 0
    %394 = vmatprep.subr.bf16.mxu0 0
    %395 = vmatpush1.bf16.msra.mxu0 0
    %396 = vmatprep.mubr.bf16.mxu0 0
    %397 = vmatmul.mubr.bf16.gmra.mrb[0].mxu0 %v362
    %v398 = vpop.f32.mrb[0].mxu0
    %v399 = vadd.f32 0.0, %v398
    %v400 = vpop.f32.mrb[0].mxu0
    %v401 = vadd.f32 0.0, %v400
    %v402 = vpop.f32.mrb[0].mxu0
    %v403 = vpop.f32.mrb[0].mxu0
    %404 = vdwg.mxu0
    %v406 = vsel %vm89, %v42, 0
    %408 = vmatprep.subr.bf16.mxu0 %v84
    %409 = vmatpush1.bf16.msra.mxu0 %v83
    %410 = vmatprep.subr.bf16.mxu0 %v98
    %411 = vmatpush1.bf16.msra.mxu0 %v95
    %412 = vmatprep.subr.bf16.mxu0 0
    %413 = vmatpush1.bf16.msra.mxu0 0
    %414 = vmatprep.subr.bf16.mxu0 0
    %415 = vmatpush1.bf16.msra.mxu0 0
    %416 = vmatprep.subr.bf16.mxu0 0
    %417 = vmatpush1.bf16.msra.mxu0 0
    %418 = vmatprep.subr.bf16.mxu0 0
    %419 = vmatpush1.bf16.msra.mxu0 0
    %420 = vmatprep.subr.bf16.mxu0 0
    %421 = vmatpush1.bf16.msra.mxu0 0
    %422 = vmatprep.subr.bf16.mxu0 0
    %423 = vmatpush1.bf16.msra.mxu0 0
    %424 = vmatprep.subr.bf16.mxu0 0
    %425 = vmatpush1.bf16.msra.mxu0 0
    %426 = vmatprep.subr.bf16.mxu0 0
    %427 = vmatpush1.bf16.msra.mxu0 0
    %428 = vmatprep.subr.bf16.mxu0 0
    %429 = vmatpush1.bf16.msra.mxu0 0
    %430 = vmatprep.subr.bf16.mxu0 0
    %431 = vmatpush1.bf16.msra.mxu0 0
    %432 = vmatprep.subr.bf16.mxu0 0
    %433 = vmatpush1.bf16.msra.mxu0 0
    %434 = vmatprep.subr.bf16.mxu0 0
    %435 = vmatpush1.bf16.msra.mxu0 0
    %436 = vmatprep.subr.bf16.mxu0 0
    %437 = vmatpush1.bf16.msra.mxu0 0
    %438 = vmatprep.subr.bf16.mxu0 0
    %439 = vmatpush1.bf16.msra.mxu0 0
    %440 = vmatprep.mubr.bf16.mxu0 0
    %441 = vmatmul.mubr.bf16.gmra.mrb[0].mxu0 %v406
    %v442 = vpop.f32.mrb[0].mxu0
    %v443 = vadd.f32 0.0, %v442
    %v444 = vpop.f32.mrb[0].mxu0
    %v445 = vadd.f32 0.0, %v444
    %v446 = vpop.f32.mrb[0].mxu0
    %v447 = vpop.f32.mrb[0].mxu0
    %448 = vdwg.mxu0
    %v450 = vsel %vm89, %v43, 0
    %452 = vmatprep.subr.bf16.mxu0 %v84
    %453 = vmatpush1.bf16.msra.mxu0 %v83
    %454 = vmatprep.subr.bf16.mxu0 %v98
    %455 = vmatpush1.bf16.msra.mxu0 %v95
    %456 = vmatprep.subr.bf16.mxu0 0
    %457 = vmatpush1.bf16.msra.mxu0 0
    %458 = vmatprep.subr.bf16.mxu0 0
    %459 = vmatpush1.bf16.msra.mxu0 0
    %460 = vmatprep.subr.bf16.mxu0 0
    %461 = vmatpush1.bf16.msra.mxu0 0
    %462 = vmatprep.subr.bf16.mxu0 0
    %463 = vmatpush1.bf16.msra.mxu0 0
    %464 = vmatprep.subr.bf16.mxu0 0
    %465 = vmatpush1.bf16.msra.mxu0 0
    %466 = vmatprep.subr.bf16.mxu0 0
    %467 = vmatpush1.bf16.msra.mxu0 0
    %468 = vmatprep.subr.bf16.mxu0 0
    %469 = vmatpush1.bf16.msra.mxu0 0
    %470 = vmatprep.subr.bf16.mxu0 0
    %471 = vmatpush1.bf16.msra.mxu0 0
    %472 = vmatprep.subr.bf16.mxu0 0
    %473 = vmatpush1.bf16.msra.mxu0 0
    %474 = vmatprep.subr.bf16.mxu0 0
    %475 = vmatpush1.bf16.msra.mxu0 0
    %476 = vmatprep.subr.bf16.mxu0 0
    %477 = vmatpush1.bf16.msra.mxu0 0
    %478 = vmatprep.subr.bf16.mxu0 0
    %479 = vmatpush1.bf16.msra.mxu0 0
    %480 = vmatprep.subr.bf16.mxu0 0
    %481 = vmatpush1.bf16.msra.mxu0 0
    %482 = vmatprep.subr.bf16.mxu0 0
    %483 = vmatpush1.bf16.msra.mxu0 0
    %484 = vmatprep.mubr.bf16.mxu0 0
    %485 = vmatmul.mubr.bf16.gmra.mrb[0].mxu0 %v450
    %v486 = vpop.f32.mrb[0].mxu0
    %v487 = vadd.f32 0.0, %v486
    %v488 = vpop.f32.mrb[0].mxu0
    %v489 = vadd.f32 0.0, %v488
    %v490 = vpop.f32.mrb[0].mxu0
    %v491 = vpop.f32.mrb[0].mxu0
    %492 = vdwg.mxu0
    %v494 = vsel %vm89, %v44, 0
    %496 = vmatprep.subr.bf16.mxu0 %v84
    %497 = vmatpush1.bf16.msra.mxu0 %v83
    %498 = vmatprep.subr.bf16.mxu0 %v98
    %499 = vmatpush1.bf16.msra.mxu0 %v95
    %500 = vmatprep.subr.bf16.mxu0 0
    %501 = vmatpush1.bf16.msra.mxu0 0
    %502 = vmatprep.subr.bf16.mxu0 0
    %503 = vmatpush1.bf16.msra.mxu0 0
    %504 = vmatprep.subr.bf16.mxu0 0
    %505 = vmatpush1.bf16.msra.mxu0 0
    %506 = vmatprep.subr.bf16.mxu0 0
    %507 = vmatpush1.bf16.msra.mxu0 0
    %508 = vmatprep.subr.bf16.mxu0 0
    %509 = vmatpush1.bf16.msra.mxu0 0
    %510 = vmatprep.subr.bf16.mxu0 0
    %511 = vmatpush1.bf16.msra.mxu0 0
    %512 = vmatprep.subr.bf16.mxu0 0
    %513 = vmatpush1.bf16.msra.mxu0 0
    %514 = vmatprep.subr.bf16.mxu0 0
    %515 = vmatpush1.bf16.msra.mxu0 0
    %516 = vmatprep.subr.bf16.mxu0 0
    %517 = vmatpush1.bf16.msra.mxu0 0
    %518 = vmatprep.subr.bf16.mxu0 0
    %519 = vmatpush1.bf16.msra.mxu0 0
    %520 = vmatprep.subr.bf16.mxu0 0
    %521 = vmatpush1.bf16.msra.mxu0 0
    %522 = vmatprep.subr.bf16.mxu0 0
    %523 = vmatpush1.bf16.msra.mxu0 0
    %524 = vmatprep.subr.bf16.mxu0 0
    %525 = vmatpush1.bf16.msra.mxu0 0
    %526 = vmatprep.subr.bf16.mxu0 0
    %527 = vmatpush1.bf16.msra.mxu0 0
    %528 = vmatprep.mubr.bf16.mxu0 0
    %529 = vmatmul.mubr.bf16.gmra.mrb[0].mxu0 %v494
    %v530 = vpop.f32.mrb[0].mxu0
    %v531 = vadd.f32 0.0, %v530
    %v532 = vpop.f32.mrb[0].mxu0
    %v533 = vadd.f32 0.0, %v532
    %v534 = vpop.f32.mrb[0].mxu0
    %v535 = vpop.f32.mrb[0].mxu0
    %536 = vdwg.mxu0
    %v538 = vsel %vm89, %v45, 0
    %540 = vmatprep.subr.bf16.mxu0 %v84
    %541 = vmatpush1.bf16.msra.mxu0 %v83
    %542 = vmatprep.subr.bf16.mxu0 %v98
    %543 = vmatpush1.bf16.msra.mxu0 %v95
    %544 = vmatprep.subr.bf16.mxu0 0
    %545 = vmatpush1.bf16.msra.mxu0 0
    %546 = vmatprep.subr.bf16.mxu0 0
    %547 = vmatpush1.bf16.msra.mxu0 0
    %548 = vmatprep.subr.bf16.mxu0 0
    %549 = vmatpush1.bf16.msra.mxu0 0
    %550 = vmatprep.subr.bf16.mxu0 0
    %551 = vmatpush1.bf16.msra.mxu0 0
    %552 = vmatprep.subr.bf16.mxu0 0
    %553 = vmatpush1.bf16.msra.mxu0 0
    %554 = vmatprep.subr.bf16.mxu0 0
    %555 = vmatpush1.bf16.msra.mxu0 0
    %556 = vmatprep.subr.bf16.mxu0 0
    %557 = vmatpush1.bf16.msra.mxu0 0
    %558 = vmatprep.subr.bf16.mxu0 0
    %559 = vmatpush1.bf16.msra.mxu0 0
    %560 = vmatprep.subr.bf16.mxu0 0
    %561 = vmatpush1.bf16.msra.mxu0 0
    %562 = vmatprep.subr.bf16.mxu0 0
    %563 = vmatpush1.bf16.msra.mxu0 0
    %564 = vmatprep.subr.bf16.mxu0 0
    %565 = vmatpush1.bf16.msra.mxu0 0
    %566 = vmatprep.subr.bf16.mxu0 0
    %567 = vmatpush1.bf16.msra.mxu0 0
    %568 = vmatprep.subr.bf16.mxu0 0
    %569 = vmatpush1.bf16.msra.mxu0 0
    %570 = vmatprep.subr.bf16.mxu0 0
    %571 = vmatpush1.bf16.msra.mxu0 0
    %572 = vmatprep.mubr.bf16.mxu0 0
    %573 = vmatmul.mubr.bf16.gmra.mrb[0].mxu0 %v538
    %v574 = vpop.f32.mrb[0].mxu0
    %v575 = vadd.f32 0.0, %v574
    %v576 = vpop.f32.mrb[0].mxu0
    %v577 = vadd.f32 0.0, %v576
    %v578 = vpop.f32.mrb[0].mxu0
    %v579 = vpop.f32.mrb[0].mxu0
    %580 = vdwg.mxu0
    %v582 = vsel %vm89, %v46, 0
    %584 = vmatprep.subr.bf16.mxu0 %v84
    %585 = vmatpush1.bf16.msra.mxu0 %v83
    %586 = vmatprep.subr.bf16.mxu0 %v98
    %587 = vmatpush1.bf16.msra.mxu0 %v95
    %588 = vmatprep.subr.bf16.mxu0 0
    %589 = vmatpush1.bf16.msra.mxu0 0
    %590 = vmatprep.subr.bf16.mxu0 0
    %591 = vmatpush1.bf16.msra.mxu0 0
    %592 = vmatprep.subr.bf16.mxu0 0
    %593 = vmatpush1.bf16.msra.mxu0 0
    %594 = vmatprep.subr.bf16.mxu0 0
    %595 = vmatpush1.bf16.msra.mxu0 0
    %596 = vmatprep.subr.bf16.mxu0 0
    %597 = vmatpush1.bf16.msra.mxu0 0
    %598 = vmatprep.subr.bf16.mxu0 0
    %599 = vmatpush1.bf16.msra.mxu0 0
    %600 = vmatprep.subr.bf16.mxu0 0
    %601 = vmatpush1.bf16.msra.mxu0 0
    %602 = vmatprep.subr.bf16.mxu0 0
    %603 = vmatpush1.bf16.msra.mxu0 0
    %604 = vmatprep.subr.bf16.mxu0 0
    %605 = vmatpush1.bf16.msra.mxu0 0
    %606 = vmatprep.subr.bf16.mxu0 0
    %607 = vmatpush1.bf16.msra.mxu0 0
    %608 = vmatprep.subr.bf16.mxu0 0
    %609 = vmatpush1.bf16.msra.mxu0 0
    %610 = vmatprep.subr.bf16.mxu0 0
    %611 = vmatpush1.bf16.msra.mxu0 0
    %612 = vmatprep.subr.bf16.mxu0 0
    %613 = vmatpush1.bf16.msra.mxu0 0
    %614 = vmatprep.subr.bf16.mxu0 0
    %615 = vmatpush1.bf16.msra.mxu0 0
    %616 = vmatprep.mubr.bf16.mxu0 0
    %617 = vmatmul.mubr.bf16.gmra.mrb[0].mxu0 %v582
    %v618 = vpop.f32.mrb[0].mxu0
    %v619 = vadd.f32 0.0, %v618
    %v620 = vpop.f32.mrb[0].mxu0
    %v621 = vadd.f32 0.0, %v620
    %v622 = vpop.f32.mrb[0].mxu0
    %v623 = vpop.f32.mrb[0].mxu0
    %624 = vdwg.mxu0
    %v626 = vsel %vm89, %v47, 0
    %628 = vmatprep.subr.bf16.mxu0 %v84
    %629 = vmatpush1.bf16.msra.mxu0 %v83
    %630 = vmatprep.subr.bf16.mxu0 %v98
    %631 = vmatpush1.bf16.msra.mxu0 %v95
    %632 = vmatprep.subr.bf16.mxu0 0
    %633 = vmatpush1.bf16.msra.mxu0 0
    %634 = vmatprep.subr.bf16.mxu0 0
    %635 = vmatpush1.bf16.msra.mxu0 0
    %636 = vmatprep.subr.bf16.mxu0 0
    %637 = vmatpush1.bf16.msra.mxu0 0
    %638 = vmatprep.subr.bf16.mxu0 0
    %639 = vmatpush1.bf16.msra.mxu0 0
    %640 = vmatprep.subr.bf16.mxu0 0
    %641 = vmatpush1.bf16.msra.mxu0 0
    %642 = vmatprep.subr.bf16.mxu0 0
    %643 = vmatpush1.bf16.msra.mxu0 0
    %644 = vmatprep.subr.bf16.mxu0 0
    %645 = vmatpush1.bf16.msra.mxu0 0
    %646 = vmatprep.subr.bf16.mxu0 0
    %647 = vmatpush1.bf16.msra.mxu0 0
    %648 = vmatprep.subr.bf16.mxu0 0
    %649 = vmatpush1.bf16.msra.mxu0 0
    %650 = vmatprep.subr.bf16.mxu0 0
    %651 = vmatpush1.bf16.msra.mxu0 0
    %652 = vmatprep.subr.bf16.mxu0 0
    %653 = vmatpush1.bf16.msra.mxu0 0
    %654 = vmatprep.subr.bf16.mxu0 0
    %655 = vmatpush1.bf16.msra.mxu0 0
    %656 = vmatprep.subr.bf16.mxu0 0
    %657 = vmatpush1.bf16.msra.mxu0 0
    %658 = vmatprep.subr.bf16.mxu0 0
    %659 = vmatpush1.bf16.msra.mxu0 0
    %660 = vmatprep.mubr.bf16.mxu0 0
    %661 = vmatmul.mubr.bf16.gmra.mrb[0].mxu0 %v626
    %v662 = vpop.f32.mrb[0].mxu0
    %v663 = vadd.f32 0.0, %v662
    %v664 = vpop.f32.mrb[0].mxu0
    %v665 = vadd.f32 0.0, %v664
    %v666 = vpop.f32.mrb[0].mxu0
    %v667 = vpop.f32.mrb[0].mxu0
    %668 = vdwg.mxu0
    %v670 = vsel %vm89, %v48, 0
    %672 = vmatprep.subr.bf16.mxu0 %v84
    %673 = vmatpush1.bf16.msra.mxu0 %v83
    %674 = vmatprep.subr.bf16.mxu0 %v98
    %675 = vmatpush1.bf16.msra.mxu0 %v95
    %676 = vmatprep.subr.bf16.mxu0 0
    %677 = vmatpush1.bf16.msra.mxu0 0
    %678 = vmatprep.subr.bf16.mxu0 0
    %679 = vmatpush1.bf16.msra.mxu0 0
    %680 = vmatprep.subr.bf16.mxu0 0
    %681 = vmatpush1.bf16.msra.mxu0 0
    %682 = vmatprep.subr.bf16.mxu0 0
    %683 = vmatpush1.bf16.msra.mxu0 0
    %684 = vmatprep.subr.bf16.mxu0 0
    %685 = vmatpush1.bf16.msra.mxu0 0
    %686 = vmatprep.subr.bf16.mxu0 0
    %687 = vmatpush1.bf16.msra.mxu0 0
    %688 = vmatprep.subr.bf16.mxu0 0
    %689 = vmatpush1.bf16.msra.mxu0 0
    %690 = vmatprep.subr.bf16.mxu0 0
    %691 = vmatpush1.bf16.msra.mxu0 0
    %692 = vmatprep.subr.bf16.mxu0 0
    %693 = vmatpush1.bf16.msra.mxu0 0
    %694 = vmatprep.subr.bf16.mxu0 0
    %695 = vmatpush1.bf16.msra.mxu0 0
    %696 = vmatprep.subr.bf16.mxu0 0
    %697 = vmatpush1.bf16.msra.mxu0 0
    %698 = vmatprep.subr.bf16.mxu0 0
    %699 = vmatpush1.bf16.msra.mxu0 0
    %700 = vmatprep.subr.bf16.mxu0 0
    %701 = vmatpush1.bf16.msra.mxu0 0
    %702 = vmatprep.subr.bf16.mxu0 0
    %703 = vmatpush1.bf16.msra.mxu0 0
    %704 = vmatprep.mubr.bf16.mxu0 0
    %705 = vmatmul.mubr.bf16.gmra.mrb[0].mxu0 %v670
    %v706 = vpop.f32.mrb[0].mxu0
    %v707 = vadd.f32 0.0, %v706
    %v708 = vpop.f32.mrb[0].mxu0
    %v709 = vadd.f32 0.0, %v708
    %v710 = vpop.f32.mrb[0].mxu0
    %v711 = vpop.f32.mrb[0].mxu0
    %712 = vdwg.mxu0
    %v714 = vsel %vm89, %v49, 0
    %716 = vmatprep.subr.bf16.mxu0 %v84
    %717 = vmatpush1.bf16.msra.mxu0 %v83
    %718 = vmatprep.subr.bf16.mxu0 %v98
    %719 = vmatpush1.bf16.msra.mxu0 %v95
    %720 = vmatprep.subr.bf16.mxu0 0
    %721 = vmatpush1.bf16.msra.mxu0 0
    %722 = vmatprep.subr.bf16.mxu0 0
    %723 = vmatpush1.bf16.msra.mxu0 0
    %724 = vmatprep.subr.bf16.mxu0 0
    %725 = vmatpush1.bf16.msra.mxu0 0
    %726 = vmatprep.subr.bf16.mxu0 0
    %727 = vmatpush1.bf16.msra.mxu0 0
    %728 = vmatprep.subr.bf16.mxu0 0
    %729 = vmatpush1.bf16.msra.mxu0 0
    %730 = vmatprep.subr.bf16.mxu0 0
    %731 = vmatpush1.bf16.msra.mxu0 0
    %732 = vmatprep.subr.bf16.mxu0 0
    %733 = vmatpush1.bf16.msra.mxu0 0
    %734 = vmatprep.subr.bf16.mxu0 0
    %735 = vmatpush1.bf16.msra.mxu0 0
    %736 = vmatprep.subr.bf16.mxu0 0
    %737 = vmatpush1.bf16.msra.mxu0 0
    %738 = vmatprep.subr.bf16.mxu0 0
    %739 = vmatpush1.bf16.msra.mxu0 0
    %740 = vmatprep.subr.bf16.mxu0 0
    %741 = vmatpush1.bf16.msra.mxu0 0
    %742 = vmatprep.subr.bf16.mxu0 0
    %743 = vmatpush1.bf16.msra.mxu0 0
    %744 = vmatprep.subr.bf16.mxu0 0
    %745 = vmatpush1.bf16.msra.mxu0 0
    %746 = vmatprep.subr.bf16.mxu0 0
    %747 = vmatpush1.bf16.msra.mxu0 0
    %748 = vmatprep.mubr.bf16.mxu0 0
    %749 = vmatmul.mubr.bf16.gmra.mrb[0].mxu0 %v714
    %v750 = vpop.f32.mrb[0].mxu0
    %v751 = vadd.f32 0.0, %v750
    %v752 = vpop.f32.mrb[0].mxu0
    %v753 = vadd.f32 0.0, %v752
    %v754 = vpop.f32.mrb[0].mxu0
    %v755 = vpop.f32.mrb[0].mxu0
    %756 = vdwg.mxu0
    %v758 = vsel %vm89, %v50, 0
    %760 = vmatprep.subr.bf16.mxu0 %v84
    %761 = vmatpush1.bf16.msra.mxu0 %v83
    %762 = vmatprep.subr.bf16.mxu0 %v98
    %763 = vmatpush1.bf16.msra.mxu0 %v95
    %764 = vmatprep.subr.bf16.mxu0 0
    %765 = vmatpush1.bf16.msra.mxu0 0
    %766 = vmatprep.subr.bf16.mxu0 0
    %767 = vmatpush1.bf16.msra.mxu0 0
    %768 = vmatprep.subr.bf16.mxu0 0
    %769 = vmatpush1.bf16.msra.mxu0 0
    %770 = vmatprep.subr.bf16.mxu0 0
    %771 = vmatpush1.bf16.msra.mxu0 0
    %772 = vmatprep.subr.bf16.mxu0 0
    %773 = vmatpush1.bf16.msra.mxu0 0
    %774 = vmatprep.subr.bf16.mxu0 0
    %775 = vmatpush1.bf16.msra.mxu0 0
    %776 = vmatprep.subr.bf16.mxu0 0
    %777 = vmatpush1.bf16.msra.mxu0 0
    %778 = vmatprep.subr.bf16.mxu0 0
    %779 = vmatpush1.bf16.msra.mxu0 0
    %780 = vmatprep.subr.bf16.mxu0 0
    %781 = vmatpush1.bf16.msra.mxu0 0
    %782 = vmatprep.subr.bf16.mxu0 0
    %783 = vmatpush1.bf16.msra.mxu0 0
    %784 = vmatprep.subr.bf16.mxu0 0
    %785 = vmatpush1.bf16.msra.mxu0 0
    %786 = vmatprep.subr.bf16.mxu0 0
    %787 = vmatpush1.bf16.msra.mxu0 0
    %788 = vmatprep.subr.bf16.mxu0 0
    %789 = vmatpush1.bf16.msra.mxu0 0
    %790 = vmatprep.subr.bf16.mxu0 0
    %791 = vmatpush1.bf16.msra.mxu0 0
    %792 = vmatprep.mubr.bf16.mxu0 0
    %793 = vmatmul.mubr.bf16.gmra.mrb[0].mxu0 %v758
    %v794 = vpop.f32.mrb[0].mxu0
    %v795 = vadd.f32 0.0, %v794
    %v796 = vpop.f32.mrb[0].mxu0
    %v797 = vadd.f32 0.0, %v796
    %v798 = vpop.f32.mrb[0].mxu0
    %v799 = vpop.f32.mrb[0].mxu0
    %800 = vdwg.mxu0
    %v802 = vsel %vm89, %v51, 0
    %804 = vmatprep.subr.bf16.mxu0 %v84
    %805 = vmatpush1.bf16.msra.mxu0 %v83
    %806 = vmatprep.subr.bf16.mxu0 %v98
    %807 = vmatpush1.bf16.msra.mxu0 %v95
    %808 = vmatprep.subr.bf16.mxu0 0
    %809 = vmatpush1.bf16.msra.mxu0 0
    %810 = vmatprep.subr.bf16.mxu0 0
    %811 = vmatpush1.bf16.msra.mxu0 0
    %812 = vmatprep.subr.bf16.mxu0 0
    %813 = vmatpush1.bf16.msra.mxu0 0
    %814 = vmatprep.subr.bf16.mxu0 0
    %815 = vmatpush1.bf16.msra.mxu0 0
    %816 = vmatprep.subr.bf16.mxu0 0
    %817 = vmatpush1.bf16.msra.mxu0 0
    %818 = vmatprep.subr.bf16.mxu0 0
    %819 = vmatpush1.bf16.msra.mxu0 0
    %820 = vmatprep.subr.bf16.mxu0 0
    %821 = vmatpush1.bf16.msra.mxu0 0
    %822 = vmatprep.subr.bf16.mxu0 0
    %823 = vmatpush1.bf16.msra.mxu0 0
    %824 = vmatprep.subr.bf16.mxu0 0
    %825 = vmatpush1.bf16.msra.mxu0 0
    %826 = vmatprep.subr.bf16.mxu0 0
    %827 = vmatpush1.bf16.msra.mxu0 0
    %828 = vmatprep.subr.bf16.mxu0 0
    %829 = vmatpush1.bf16.msra.mxu0 0
    %830 = vmatprep.subr.bf16.mxu0 0
    %831 = vmatpush1.bf16.msra.mxu0 0
    %832 = vmatprep.subr.bf16.mxu0 0
    %833 = vmatpush1.bf16.msra.mxu0 0
    %834 = vmatprep.subr.bf16.mxu0 0
    %835 = vmatpush1.bf16.msra.mxu0 0
    %836 = vmatprep.mubr.bf16.mxu0 0
    %837 = vmatmul.mubr.bf16.gmra.mrb[0].mxu0 %v802
    %v838 = vpop.f32.mrb[0].mxu0
    %v839 = vadd.f32 0.0, %v838
    %v840 = vpop.f32.mrb[0].mxu0
    %v841 = vadd.f32 0.0, %v840
    %v842 = vpop.f32.mrb[0].mxu0
    %v843 = vpop.f32.mrb[0].mxu0
    %844 = vdwg.mxu0
    %v846 = vsel %vm89, %v52, 0
    %848 = vmatprep.subr.bf16.mxu0 %v84
    %849 = vmatpush1.bf16.msra.mxu0 %v83
    %850 = vmatprep.subr.bf16.mxu0 %v98
    %851 = vmatpush1.bf16.msra.mxu0 %v95
    %852 = vmatprep.subr.bf16.mxu0 0
    %853 = vmatpush1.bf16.msra.mxu0 0
    %854 = vmatprep.subr.bf16.mxu0 0
    %855 = vmatpush1.bf16.msra.mxu0 0
    %856 = vmatprep.subr.bf16.mxu0 0
    %857 = vmatpush1.bf16.msra.mxu0 0
    %858 = vmatprep.subr.bf16.mxu0 0
    %859 = vmatpush1.bf16.msra.mxu0 0
    %860 = vmatprep.subr.bf16.mxu0 0
    %861 = vmatpush1.bf16.msra.mxu0 0
    %862 = vmatprep.subr.bf16.mxu0 0
    %863 = vmatpush1.bf16.msra.mxu0 0
    %864 = vmatprep.subr.bf16.mxu0 0
    %865 = vmatpush1.bf16.msra.mxu0 0
    %866 = vmatprep.subr.bf16.mxu0 0
    %867 = vmatpush1.bf16.msra.mxu0 0
    %868 = vmatprep.subr.bf16.mxu0 0
    %869 = vmatpush1.bf16.msra.mxu0 0
    %870 = vmatprep.subr.bf16.mxu0 0
    %871 = vmatpush1.bf16.msra.mxu0 0
    %872 = vmatprep.subr.bf16.mxu0 0
    %873 = vmatpush1.bf16.msra.mxu0 0
    %874 = vmatprep.subr.bf16.mxu0 0
    %875 = vmatpush1.bf16.msra.mxu0 0
    %876 = vmatprep.subr.bf16.mxu0 0
    %877 = vmatpush1.bf16.msra.mxu0 0
    %878 = vmatprep.subr.bf16.mxu0 0
    %879 = vmatpush1.bf16.msra.mxu0 0
    %880 = vmatprep.mubr.bf16.mxu0 0
    %881 = vmatmul.mubr.bf16.gmra.mrb[0].mxu0 %v846
    %v882 = vpop.f32.mrb[0].mxu0
    %v883 = vadd.f32 0.0, %v882
    %v884 = vpop.f32.mrb[0].mxu0
    %v885 = vadd.f32 0.0, %v884
    %v886 = vpop.f32.mrb[0].mxu0
    %v887 = vpop.f32.mrb[0].mxu0
    %888 = vdwg.mxu0
    %v890 = vsel %vm89, %v53, 0
    %892 = vmatprep.subr.bf16.mxu0 %v84
    %893 = vmatpush1.bf16.msra.mxu0 %v83
    %894 = vmatprep.subr.bf16.mxu0 %v98
    %895 = vmatpush1.bf16.msra.mxu0 %v95
    %896 = vmatprep.subr.bf16.mxu0 0
    %897 = vmatpush1.bf16.msra.mxu0 0
    %898 = vmatprep.subr.bf16.mxu0 0
    %899 = vmatpush1.bf16.msra.mxu0 0
    %900 = vmatprep.subr.bf16.mxu0 0
    %901 = vmatpush1.bf16.msra.mxu0 0
    %902 = vmatprep.subr.bf16.mxu0 0
    %903 = vmatpush1.bf16.msra.mxu0 0
    %904 = vmatprep.subr.bf16.mxu0 0
    %905 = vmatpush1.bf16.msra.mxu0 0
    %906 = vmatprep.subr.bf16.mxu0 0
    %907 = vmatpush1.bf16.msra.mxu0 0
    %908 = vmatprep.subr.bf16.mxu0 0
    %909 = vmatpush1.bf16.msra.mxu0 0
    %910 = vmatprep.subr.bf16.mxu0 0
    %911 = vmatpush1.bf16.msra.mxu0 0
    %912 = vmatprep.subr.bf16.mxu0 0
    %913 = vmatpush1.bf16.msra.mxu0 0
    %914 = vmatprep.subr.bf16.mxu0 0
    %915 = vmatpush1.bf16.msra.mxu0 0
    %916 = vmatprep.subr.bf16.mxu0 0
    %917 = vmatpush1.bf16.msra.mxu0 0
    %918 = vmatprep.subr.bf16.mxu0 0
    %919 = vmatpush1.bf16.msra.mxu0 0
    %920 = vmatprep.subr.bf16.mxu0 0
    %921 = vmatpush1.bf16.msra.mxu0 0
    %922 = vmatprep.subr.bf16.mxu0 0
    %923 = vmatpush1.bf16.msra.mxu0 0
    %924 = vmatprep.mubr.bf16.mxu0 0
    %925 = vmatmul.mubr.bf16.gmra.mrb[0].mxu0 %v890
    %v926 = vpop.f32.mrb[0].mxu0
    %v927 = vadd.f32 0.0, %v926
    %v928 = vpop.f32.mrb[0].mxu0
    %v929 = vadd.f32 0.0, %v928
    %v930 = vpop.f32.mrb[0].mxu0
    %v931 = vpop.f32.mrb[0].mxu0
    %932 = vdwg.mxu0
    %v934 = vsel %vm89, %v54, 0
    %936 = vmatprep.subr.bf16.mxu0 %v84
    %937 = vmatpush1.bf16.msra.mxu0 %v83
    %938 = vmatprep.subr.bf16.mxu0 %v98
    %939 = vmatpush1.bf16.msra.mxu0 %v95
    %940 = vmatprep.subr.bf16.mxu0 0
    %941 = vmatpush1.bf16.msra.mxu0 0
    %942 = vmatprep.subr.bf16.mxu0 0
    %943 = vmatpush1.bf16.msra.mxu0 0
    %944 = vmatprep.subr.bf16.mxu0 0
    %945 = vmatpush1.bf16.msra.mxu0 0
    %946 = vmatprep.subr.bf16.mxu0 0
    %947 = vmatpush1.bf16.msra.mxu0 0
    %948 = vmatprep.subr.bf16.mxu0 0
    %949 = vmatpush1.bf16.msra.mxu0 0
    %950 = vmatprep.subr.bf16.mxu0 0
    %951 = vmatpush1.bf16.msra.mxu0 0
    %952 = vmatprep.subr.bf16.mxu0 0
    %953 = vmatpush1.bf16.msra.mxu0 0
    %954 = vmatprep.subr.bf16.mxu0 0
    %955 = vmatpush1.bf16.msra.mxu0 0
    %956 = vmatprep.subr.bf16.mxu0 0
    %957 = vmatpush1.bf16.msra.mxu0 0
    %958 = vmatprep.subr.bf16.mxu0 0
    %959 = vmatpush1.bf16.msra.mxu0 0
    %960 = vmatprep.subr.bf16.mxu0 0
    %961 = vmatpush1.bf16.msra.mxu0 0
    %962 = vmatprep.subr.bf16.mxu0 0
    %963 = vmatpush1.bf16.msra.mxu0 0
    %964 = vmatprep.subr.bf16.mxu0 0
    %965 = vmatpush1.bf16.msra.mxu0 0
    %966 = vmatprep.subr.bf16.mxu0 0
    %967 = vmatpush1.bf16.msra.mxu0 0
    %968 = vmatprep.mubr.bf16.mxu0 0
    %969 = vmatmul.mubr.bf16.gmra.mrb[0].mxu0 %v934
    %v970 = vpop.f32.mrb[0].mxu0
    %v971 = vadd.f32 0.0, %v970
    %v972 = vpop.f32.mrb[0].mxu0
    %v973 = vadd.f32 0.0, %v972
    %v974 = vpop.f32.mrb[0].mxu0
    %v975 = vpop.f32.mrb[0].mxu0
    %976 = vdwg.mxu0
    %v978 = vsel %vm89, %v55, 0
    %980 = vmatprep.subr.bf16.mxu0 %v84
    %981 = vmatpush1.bf16.msra.mxu0 %v83
    %982 = vmatprep.subr.bf16.mxu0 %v98
    %983 = vmatpush1.bf16.msra.mxu0 %v95
    %984 = vmatprep.subr.bf16.mxu0 0
    %985 = vmatpush1.bf16.msra.mxu0 0
    %986 = vmatprep.subr.bf16.mxu0 0
    %987 = vmatpush1.bf16.msra.mxu0 0
    %988 = vmatprep.subr.bf16.mxu0 0
    %989 = vmatpush1.bf16.msra.mxu0 0
    %990 = vmatprep.subr.bf16.mxu0 0
    %991 = vmatpush1.bf16.msra.mxu0 0
    %992 = vmatprep.subr.bf16.mxu0 0
    %993 = vmatpush1.bf16.msra.mxu0 0
    %994 = vmatprep.subr.bf16.mxu0 0
    %995 = vmatpush1.bf16.msra.mxu0 0
    %996 = vmatprep.subr.bf16.mxu0 0
    %997 = vmatpush1.bf16.msra.mxu0 0
    %998 = vmatprep.subr.bf16.mxu0 0
    %999 = vmatpush1.bf16.msra.mxu0 0
    %1000 = vmatprep.subr.bf16.mxu0 0
    %1001 = vmatpush1.bf16.msra.mxu0 0
    %1002 = vmatprep.subr.bf16.mxu0 0
    %1003 = vmatpush1.bf16.msra.mxu0 0
    %1004 = vmatprep.subr.bf16.mxu0 0
    %1005 = vmatpush1.bf16.msra.mxu0 0
    %1006 = vmatprep.subr.bf16.mxu0 0
    %1007 = vmatpush1.bf16.msra.mxu0 0
    %1008 = vmatprep.subr.bf16.mxu0 0
    %1009 = vmatpush1.bf16.msra.mxu0 0
    %1010 = vmatprep.subr.bf16.mxu0 0
    %1011 = vmatpush1.bf16.msra.mxu0 0
    %1012 = vmatprep.mubr.bf16.mxu0 0
    %1013 = vmatmul.mubr.bf16.gmra.mrb[0].mxu0 %v978
    %v1014 = vpop.f32.mrb[0].mxu0
    %v1015 = vadd.f32 0.0, %v1014
    %v1016 = vpop.f32.mrb[0].mxu0
    %v1017 = vadd.f32 0.0, %v1016
    %v1018 = vpop.f32.mrb[0].mxu0
    %v1019 = vpop.f32.mrb[0].mxu0
    %1020 = vdwg.mxu0
    %v1022 = vsel %vm89, %v56, 0
    %1024 = vmatprep.subr.bf16.mxu0 %v84
    %1025 = vmatpush1.bf16.msra.mxu0 %v83
    %1026 = vmatprep.subr.bf16.mxu0 %v98
    %1027 = vmatpush1.bf16.msra.mxu0 %v95
    %1028 = vmatprep.subr.bf16.mxu0 0
    %1029 = vmatpush1.bf16.msra.mxu0 0
    %1030 = vmatprep.subr.bf16.mxu0 0
    %1031 = vmatpush1.bf16.msra.mxu0 0
    %1032 = vmatprep.subr.bf16.mxu0 0
    %1033 = vmatpush1.bf16.msra.mxu0 0
    %1034 = vmatprep.subr.bf16.mxu0 0
    %1035 = vmatpush1.bf16.msra.mxu0 0
    %1036 = vmatprep.subr.bf16.mxu0 0
    %1037 = vmatpush1.bf16.msra.mxu0 0
    %1038 = vmatprep.subr.bf16.mxu0 0
    %1039 = vmatpush1.bf16.msra.mxu0 0
    %1040 = vmatprep.subr.bf16.mxu0 0
    %1041 = vmatpush1.bf16.msra.mxu0 0
    %1042 = vmatprep.subr.bf16.mxu0 0
    %1043 = vmatpush1.bf16.msra.mxu0 0
    %1044 = vmatprep.subr.bf16.mxu0 0
    %1045 = vmatpush1.bf16.msra.mxu0 0
    %1046 = vmatprep.subr.bf16.mxu0 0
    %1047 = vmatpush1.bf16.msra.mxu0 0
    %1048 = vmatprep.subr.bf16.mxu0 0
    %1049 = vmatpush1.bf16.msra.mxu0 0
    %1050 = vmatprep.subr.bf16.mxu0 0
    %1051 = vmatpush1.bf16.msra.mxu0 0
    %1052 = vmatprep.subr.bf16.mxu0 0
    %1053 = vmatpush1.bf16.msra.mxu0 0
    %1054 = vmatprep.subr.bf16.mxu0 0
    %1055 = vmatpush1.bf16.msra.mxu0 0
    %1056 = vmatprep.mubr.bf16.mxu0 0
    %1057 = vmatmul.mubr.bf16.gmra.mrb[0].mxu0 %v1022
    %v1058 = vpop.f32.mrb[0].mxu0
    %v1059 = vadd.f32 0.0, %v1058
    %v1060 = vpop.f32.mrb[0].mxu0
    %v1061 = vadd.f32 0.0, %v1060
    %v1062 = vpop.f32.mrb[0].mxu0
    %v1063 = vpop.f32.mrb[0].mxu0
    %1064 = vdwg.mxu0
    %v1066 = vsel %vm89, %v57, 0
    %1068 = vmatprep.subr.bf16.mxu0 %v84
    %1069 = vmatpush1.bf16.msra.mxu0 %v83
    %1070 = vmatprep.subr.bf16.mxu0 %v98
    %1071 = vmatpush1.bf16.msra.mxu0 %v95
    %1072 = vmatprep.subr.bf16.mxu0 0
    %1073 = vmatpush1.bf16.msra.mxu0 0
    %1074 = vmatprep.subr.bf16.mxu0 0
    %1075 = vmatpush1.bf16.msra.mxu0 0
    %1076 = vmatprep.subr.bf16.mxu0 0
    %1077 = vmatpush1.bf16.msra.mxu0 0
    %1078 = vmatprep.subr.bf16.mxu0 0
    %1079 = vmatpush1.bf16.msra.mxu0 0
    %1080 = vmatprep.subr.bf16.mxu0 0
    %1081 = vmatpush1.bf16.msra.mxu0 0
    %1082 = vmatprep.subr.bf16.mxu0 0
    %1083 = vmatpush1.bf16.msra.mxu0 0
    %1084 = vmatprep.subr.bf16.mxu0 0
    %1085 = vmatpush1.bf16.msra.mxu0 0
    %1086 = vmatprep.subr.bf16.mxu0 0
    %1087 = vmatpush1.bf16.msra.mxu0 0
    %1088 = vmatprep.subr.bf16.mxu0 0
    %1089 = vmatpush1.bf16.msra.mxu0 0
    %1090 = vmatprep.subr.bf16.mxu0 0
    %1091 = vmatpush1.bf16.msra.mxu0 0
    %1092 = vmatprep.subr.bf16.mxu0 0
    %1093 = vmatpush1.bf16.msra.mxu0 0
    %1094 = vmatprep.subr.bf16.mxu0 0
    %1095 = vmatpush1.bf16.msra.mxu0 0
    %1096 = vmatprep.subr.bf16.mxu0 0
    %1097 = vmatpush1.bf16.msra.mxu0 0
    %1098 = vmatprep.subr.bf16.mxu0 0
    %1099 = vmatpush1.bf16.msra.mxu0 0
    %1100 = vmatprep.mubr.bf16.mxu0 0
    %1101 = vmatmul.mubr.bf16.gmra.mrb[0].mxu0 %v1066
    %v1102 = vpop.f32.mrb[0].mxu0
    %v1103 = vadd.f32 0.0, %v1102
    %v1104 = vpop.f32.mrb[0].mxu0
    %v1105 = vadd.f32 0.0, %v1104
    %v1106 = vpop.f32.mrb[0].mxu0
    %v1107 = vpop.f32.mrb[0].mxu0
    %1108 = vdwg.mxu0
    %v1110 = vsel %vm89, %v58, 0
    %1112 = vmatprep.subr.bf16.mxu0 %v84
    %1113 = vmatpush1.bf16.msra.mxu0 %v83
    %1114 = vmatprep.subr.bf16.mxu0 %v98
    %1115 = vmatpush1.bf16.msra.mxu0 %v95
    %1116 = vmatprep.subr.bf16.mxu0 0
    %1117 = vmatpush1.bf16.msra.mxu0 0
    %1118 = vmatprep.subr.bf16.mxu0 0
    %1119 = vmatpush1.bf16.msra.mxu0 0
    %1120 = vmatprep.subr.bf16.mxu0 0
    %1121 = vmatpush1.bf16.msra.mxu0 0
    %1122 = vmatprep.subr.bf16.mxu0 0
    %1123 = vmatpush1.bf16.msra.mxu0 0
    %1124 = vmatprep.subr.bf16.mxu0 0
    %1125 = vmatpush1.bf16.msra.mxu0 0
    %1126 = vmatprep.subr.bf16.mxu0 0
    %1127 = vmatpush1.bf16.msra.mxu0 0
    %1128 = vmatprep.subr.bf16.mxu0 0
    %1129 = vmatpush1.bf16.msra.mxu0 0
    %1130 = vmatprep.subr.bf16.mxu0 0
    %1131 = vmatpush1.bf16.msra.mxu0 0
    %1132 = vmatprep.subr.bf16.mxu0 0
    %1133 = vmatpush1.bf16.msra.mxu0 0
    %1134 = vmatprep.subr.bf16.mxu0 0
    %1135 = vmatpush1.bf16.msra.mxu0 0
    %1136 = vmatprep.subr.bf16.mxu0 0
    %1137 = vmatpush1.bf16.msra.mxu0 0
    %1138 = vmatprep.subr.bf16.mxu0 0
    %1139 = vmatpush1.bf16.msra.mxu0 0
    %1140 = vmatprep.subr.bf16.mxu0 0
    %1141 = vmatpush1.bf16.msra.mxu0 0
    %1142 = vmatprep.subr.bf16.mxu0 0
    %1143 = vmatpush1.bf16.msra.mxu0 0
    %1144 = vmatprep.mubr.bf16.mxu0 0
    %1145 = vmatmul.mubr.bf16.gmra.mrb[0].mxu0 %v1110
    %v1146 = vpop.f32.mrb[0].mxu0
    %v1147 = vadd.f32 0.0, %v1146
    %v1148 = vpop.f32.mrb[0].mxu0
    %v1149 = vadd.f32 0.0, %v1148
    %v1150 = vpop.f32.mrb[0].mxu0
    %v1151 = vpop.f32.mrb[0].mxu0
    %1152 = vdwg.mxu0
    %v1157 = vunpack.c.l.b16 %v62
    %v1158 = vunpack.c.h.b16 %v62
    %v1159 = vunpack.c.l.b16 %v63
    %v1160 = vunpack.c.h.b16 %v63
    %v1161 = vunpack.c.l.b16 %v64
    %v1162 = vunpack.c.h.b16 %v64
    %v1163 = vunpack.c.l.b16 %v65
    %v1164 = vunpack.c.h.b16 %v65
    %v1165 = vpack.c.b16 %v1159, %v1157
    %v1166 = vpack.c.b16 %v1160, %v1158
    %v1167 = vpack.c.b16 %v1163, %v1161
    %v1168 = vpack.c.b16 %v1164, %v1162
    %v1172 = vsel %vm89, %v34, 0
    %v1175 = vsel %vm93, %v1167, 0
    %v1178 = vsel %vm93, %v1168, 0
    %1180 = vmatprep.subr.bf16.mxu0 %v1166
    %1181 = vmatpush1.bf16.msra.mxu0 %v1165
    %1182 = vmatprep.subr.bf16.mxu0 %v1178
    %1183 = vmatpush1.bf16.msra.mxu0 %v1175
    %1184 = vmatprep.subr.bf16.mxu0 0
    %1185 = vmatpush1.bf16.msra.mxu0 0
    %1186 = vmatprep.subr.bf16.mxu0 0
    %1187 = vmatpush1.bf16.msra.mxu0 0
    %1188 = vmatprep.subr.bf16.mxu0 0
    %1189 = vmatpush1.bf16.msra.mxu0 0
    %1190 = vmatprep.subr.bf16.mxu0 0
    %1191 = vmatpush1.bf16.msra.mxu0 0
    %1192 = vmatprep.subr.bf16.mxu0 0
    %1193 = vmatpush1.bf16.msra.mxu0 0
    %1194 = vmatprep.subr.bf16.mxu0 0
    %1195 = vmatpush1.bf16.msra.mxu0 0
    %1196 = vmatprep.subr.bf16.mxu0 0
    %1197 = vmatpush1.bf16.msra.mxu0 0
    %1198 = vmatprep.subr.bf16.mxu0 0
    %1199 = vmatpush1.bf16.msra.mxu0 0
    %1200 = vmatprep.subr.bf16.mxu0 0
    %1201 = vmatpush1.bf16.msra.mxu0 0
    %1202 = vmatprep.subr.bf16.mxu0 0
    %1203 = vmatpush1.bf16.msra.mxu0 0
    %1204 = vmatprep.subr.bf16.mxu0 0
    %1205 = vmatpush1.bf16.msra.mxu0 0
    %1206 = vmatprep.subr.bf16.mxu0 0
    %1207 = vmatpush1.bf16.msra.mxu0 0
    %1208 = vmatprep.subr.bf16.mxu0 0
    %1209 = vmatpush1.bf16.msra.mxu0 0
    %1210 = vmatprep.subr.bf16.mxu0 0
    %1211 = vmatpush1.bf16.msra.mxu0 0
    %1212 = vmatprep.mubr.bf16.mxu0 0
    %1213 = vmatmul.mubr.bf16.gmra.mrb[0].mxu0 %v1172
    %v1214 = vpop.f32.mrb[0].mxu0
    %v1215 = vadd.f32 %v135, %v1214
    %v1216 = vpop.f32.mrb[0].mxu0
    %v1217 = vadd.f32 %v137, %v1216
    %v1218 = vpop.f32.mrb[0].mxu0
    %v1219 = vpop.f32.mrb[0].mxu0
    %1220 = vdwg.mxu0
    %1221 = vmatprep.subr.bf16.mxu0 %v1166
    %1222 = vmatpush1.bf16.msra.mxu0 %v1165
    %1223 = vmatprep.subr.bf16.mxu0 %v1178
    %1224 = vmatpush1.bf16.msra.mxu0 %v1175
    %1225 = vmatprep.subr.bf16.mxu0 0
    %1226 = vmatpush1.bf16.msra.mxu0 0
    %1227 = vmatprep.subr.bf16.mxu0 0
    %1228 = vmatpush1.bf16.msra.mxu0 0
    %1229 = vmatprep.subr.bf16.mxu0 0
    %1230 = vmatpush1.bf16.msra.mxu0 0
    %1231 = vmatprep.subr.bf16.mxu0 0
    %1232 = vmatpush1.bf16.msra.mxu0 0
    %1233 = vmatprep.subr.bf16.mxu0 0
    %1234 = vmatpush1.bf16.msra.mxu0 0
    %1235 = vmatprep.subr.bf16.mxu0 0
    %1236 = vmatpush1.bf16.msra.mxu0 0
    %1237 = vmatprep.subr.bf16.mxu0 0
    %1238 = vmatpush1.bf16.msra.mxu0 0
    %1239 = vmatprep.subr.bf16.mxu0 0
    %1240 = vmatpush1.bf16.msra.mxu0 0
    %1241 = vmatprep.subr.bf16.mxu0 0
    %1242 = vmatpush1.bf16.msra.mxu0 0
    %1243 = vmatprep.subr.bf16.mxu0 0
    %1244 = vmatpush1.bf16.msra.mxu0 0
    %1245 = vmatprep.subr.bf16.mxu0 0
    %1246 = vmatpush1.bf16.msra.mxu0 0
    %1247 = vmatprep.subr.bf16.mxu0 0
    %1248 = vmatpush1.bf16.msra.mxu0 0
    %1249 = vmatprep.subr.bf16.mxu0 0
    %1250 = vmatpush1.bf16.msra.mxu0 0
    %1251 = vmatprep.subr.bf16.mxu0 0
    %1252 = vmatpush1.bf16.msra.mxu0 0
    %1253 = vmatprep.mubr.bf16.mxu0 0
    %1254 = vmatmul.mubr.bf16.gmra.mrb[0].mxu0 %v91
    %v1255 = vpop.f32.mrb[0].mxu0
    %v1256 = vadd.f32 %v179, %v1255
    %v1257 = vpop.f32.mrb[0].mxu0
    %v1258 = vadd.f32 %v181, %v1257
    %v1259 = vpop.f32.mrb[0].mxu0
    %v1260 = vpop.f32.mrb[0].mxu0
    %1261 = vdwg.mxu0
    %1262 = vmatprep.subr.bf16.mxu0 %v1166
    %1263 = vmatpush1.bf16.msra.mxu0 %v1165
    %1264 = vmatprep.subr.bf16.mxu0 %v1178
    %1265 = vmatpush1.bf16.msra.mxu0 %v1175
    %1266 = vmatprep.subr.bf16.mxu0 0
    %1267 = vmatpush1.bf16.msra.mxu0 0
    %1268 = vmatprep.subr.bf16.mxu0 0
    %1269 = vmatpush1.bf16.msra.mxu0 0
    %1270 = vmatprep.subr.bf16.mxu0 0
    %1271 = vmatpush1.bf16.msra.mxu0 0
    %1272 = vmatprep.subr.bf16.mxu0 0
    %1273 = vmatpush1.bf16.msra.mxu0 0
    %1274 = vmatprep.subr.bf16.mxu0 0
    %1275 = vmatpush1.bf16.msra.mxu0 0
    %1276 = vmatprep.subr.bf16.mxu0 0
    %1277 = vmatpush1.bf16.msra.mxu0 0
    %1278 = vmatprep.subr.bf16.mxu0 0
    %1279 = vmatpush1.bf16.msra.mxu0 0
    %1280 = vmatprep.subr.bf16.mxu0 0
    %1281 = vmatpush1.bf16.msra.mxu0 0
    %1282 = vmatprep.subr.bf16.mxu0 0
    %1283 = vmatpush1.bf16.msra.mxu0 0
    %1284 = vmatprep.subr.bf16.mxu0 0
    %1285 = vmatpush1.bf16.msra.mxu0 0
    %1286 = vmatprep.subr.bf16.mxu0 0
    %1287 = vmatpush1.bf16.msra.mxu0 0
    %1288 = vmatprep.subr.bf16.mxu0 0
    %1289 = vmatpush1.bf16.msra.mxu0 0
    %1290 = vmatprep.subr.bf16.mxu0 0
    %1291 = vmatpush1.bf16.msra.mxu0 0
    %1292 = vmatprep.subr.bf16.mxu0 0
    %1293 = vmatpush1.bf16.msra.mxu0 0
    %1294 = vmatprep.mubr.bf16.mxu0 0
    %1295 = vmatmul.mubr.bf16.gmra.mrb[0].mxu0 %v142
    %v1296 = vpop.f32.mrb[0].mxu0
    %v1297 = vadd.f32 %v223, %v1296
    %v1298 = vpop.f32.mrb[0].mxu0
    %v1299 = vadd.f32 %v225, %v1298
    %v1300 = vpop.f32.mrb[0].mxu0
    %v1301 = vpop.f32.mrb[0].mxu0
    %1302 = vdwg.mxu0
    %1303 = vmatprep.subr.bf16.mxu0 %v1166
    %1304 = vmatpush1.bf16.msra.mxu0 %v1165
    %1305 = vmatprep.subr.bf16.mxu0 %v1178
    %1306 = vmatpush1.bf16.msra.mxu0 %v1175
    %1307 = vmatprep.subr.bf16.mxu0 0
    %1308 = vmatpush1.bf16.msra.mxu0 0
    %1309 = vmatprep.subr.bf16.mxu0 0
    %1310 = vmatpush1.bf16.msra.mxu0 0
    %1311 = vmatprep.subr.bf16.mxu0 0
    %1312 = vmatpush1.bf16.msra.mxu0 0
    %1313 = vmatprep.subr.bf16.mxu0 0
    %1314 = vmatpush1.bf16.msra.mxu0 0
    %1315 = vmatprep.subr.bf16.mxu0 0
    %1316 = vmatpush1.bf16.msra.mxu0 0
    %1317 = vmatprep.subr.bf16.mxu0 0
    %1318 = vmatpush1.bf16.msra.mxu0 0
    %1319 = vmatprep.subr.bf16.mxu0 0
    %1320 = vmatpush1.bf16.msra.mxu0 0
    %1321 = vmatprep.subr.bf16.mxu0 0
    %1322 = vmatpush1.bf16.msra.mxu0 0
    %1323 = vmatprep.subr.bf16.mxu0 0
    %1324 = vmatpush1.bf16.msra.mxu0 0
    %1325 = vmatprep.subr.bf16.mxu0 0
    %1326 = vmatpush1.bf16.msra.mxu0 0
    %1327 = vmatprep.subr.bf16.mxu0 0
    %1328 = vmatpush1.bf16.msra.mxu0 0
    %1329 = vmatprep.subr.bf16.mxu0 0
    %1330 = vmatpush1.bf16.msra.mxu0 0
    %1331 = vmatprep.subr.bf16.mxu0 0
    %1332 = vmatpush1.bf16.msra.mxu0 0
    %1333 = vmatprep.subr.bf16.mxu0 0
    %1334 = vmatpush1.bf16.msra.mxu0 0
    %1335 = vmatprep.mubr.bf16.mxu0 0
    %1336 = vmatmul.mubr.bf16.gmra.mrb[0].mxu0 %v186
    %v1337 = vpop.f32.mrb[0].mxu0
    %v1338 = vadd.f32 %v267, %v1337
    %v1339 = vpop.f32.mrb[0].mxu0
    %v1340 = vadd.f32 %v269, %v1339
    %v1341 = vpop.f32.mrb[0].mxu0
    %v1342 = vpop.f32.mrb[0].mxu0
    %1343 = vdwg.mxu0
    %1344 = vmatprep.subr.bf16.mxu0 %v1166
    %1345 = vmatpush1.bf16.msra.mxu0 %v1165
    %1346 = vmatprep.subr.bf16.mxu0 %v1178
    %1347 = vmatpush1.bf16.msra.mxu0 %v1175
    %1348 = vmatprep.subr.bf16.mxu0 0
    %1349 = vmatpush1.bf16.msra.mxu0 0
    %1350 = vmatprep.subr.bf16.mxu0 0
    %1351 = vmatpush1.bf16.msra.mxu0 0
    %1352 = vmatprep.subr.bf16.mxu0 0
    %1353 = vmatpush1.bf16.msra.mxu0 0
    %1354 = vmatprep.subr.bf16.mxu0 0
    %1355 = vmatpush1.bf16.msra.mxu0 0
    %1356 = vmatprep.subr.bf16.mxu0 0
    %1357 = vmatpush1.bf16.msra.mxu0 0
    %1358 = vmatprep.subr.bf16.mxu0 0
    %1359 = vmatpush1.bf16.msra.mxu0 0
    %1360 = vmatprep.subr.bf16.mxu0 0
    %1361 = vmatpush1.bf16.msra.mxu0 0
    %1362 = vmatprep.subr.bf16.mxu0 0
    %1363 = vmatpush1.bf16.msra.mxu0 0
    %1364 = vmatprep.subr.bf16.mxu0 0
    %1365 = vmatpush1.bf16.msra.mxu0 0
    %1366 = vmatprep.subr.bf16.mxu0 0
    %1367 = vmatpush1.bf16.msra.mxu0 0
    %1368 = vmatprep.subr.bf16.mxu0 0
    %1369 = vmatpush1.bf16.msra.mxu0 0
    %1370 = vmatprep.subr.bf16.mxu0 0
    %1371 = vmatpush1.bf16.msra.mxu0 0
    %1372 = vmatprep.subr.bf16.mxu0 0
    %1373 = vmatpush1.bf16.msra.mxu0 0
    %1374 = vmatprep.subr.bf16.mxu0 0
    %1375 = vmatpush1.bf16.msra.mxu0 0
    %1376 = vmatprep.mubr.bf16.mxu0 0
    %1377 = vmatmul.mubr.bf16.gmra.mrb[0].mxu0 %v230
    %v1378 = vpop.f32.mrb[0].mxu0
    %v1379 = vadd.f32 %v311, %v1378
    %v1380 = vpop.f32.mrb[0].mxu0
    %v1381 = vadd.f32 %v313, %v1380
    %v1382 = vpop.f32.mrb[0].mxu0
    %v1383 = vpop.f32.mrb[0].mxu0
    %1384 = vdwg.mxu0
    %1385 = vmatprep.subr.bf16.mxu0 %v1166
    %1386 = vmatpush1.bf16.msra.mxu0 %v1165
    %1387 = vmatprep.subr.bf16.mxu0 %v1178
    %1388 = vmatpush1.bf16.msra.mxu0 %v1175
    %1389 = vmatprep.subr.bf16.mxu0 0
    %1390 = vmatpush1.bf16.msra.mxu0 0
    %1391 = vmatprep.subr.bf16.mxu0 0
    %1392 = vmatpush1.bf16.msra.mxu0 0
    %1393 = vmatprep.subr.bf16.mxu0 0
    %1394 = vmatpush1.bf16.msra.mxu0 0
    %1395 = vmatprep.subr.bf16.mxu0 0
    %1396 = vmatpush1.bf16.msra.mxu0 0
    %1397 = vmatprep.subr.bf16.mxu0 0
    %1398 = vmatpush1.bf16.msra.mxu0 0
    %1399 = vmatprep.subr.bf16.mxu0 0
    %1400 = vmatpush1.bf16.msra.mxu0 0
    %1401 = vmatprep.subr.bf16.mxu0 0
    %1402 = vmatpush1.bf16.msra.mxu0 0
    %1403 = vmatprep.subr.bf16.mxu0 0
    %1404 = vmatpush1.bf16.msra.mxu0 0
    %1405 = vmatprep.subr.bf16.mxu0 0
    %1406 = vmatpush1.bf16.msra.mxu0 0
    %1407 = vmatprep.subr.bf16.mxu0 0
    %1408 = vmatpush1.bf16.msra.mxu0 0
    %1409 = vmatprep.subr.bf16.mxu0 0
    %1410 = vmatpush1.bf16.msra.mxu0 0
    %1411 = vmatprep.subr.bf16.mxu0 0
    %1412 = vmatpush1.bf16.msra.mxu0 0
    %1413 = vmatprep.subr.bf16.mxu0 0
    %1414 = vmatpush1.bf16.msra.mxu0 0
    %1415 = vmatprep.subr.bf16.mxu0 0
    %1416 = vmatpush1.bf16.msra.mxu0 0
    %1417 = vmatprep.mubr.bf16.mxu0 0
    %1418 = vmatmul.mubr.bf16.gmra.mrb[0].mxu0 %v274
    %v1419 = vpop.f32.mrb[0].mxu0
    %v1420 = vadd.f32 %v355, %v1419
    %v1421 = vpop.f32.mrb[0].mxu0
    %v1422 = vadd.f32 %v357, %v1421
    %v1423 = vpop.f32.mrb[0].mxu0
    %v1424 = vpop.f32.mrb[0].mxu0
    %1425 = vdwg.mxu0
    %1426 = vmatprep.subr.bf16.mxu0 %v1166
    %1427 = vmatpush1.bf16.msra.mxu0 %v1165
    %1428 = vmatprep.subr.bf16.mxu0 %v1178
    %1429 = vmatpush1.bf16.msra.mxu0 %v1175
    %1430 = vmatprep.subr.bf16.mxu0 0
    %1431 = vmatpush1.bf16.msra.mxu0 0
    %1432 = vmatprep.subr.bf16.mxu0 0
    %1433 = vmatpush1.bf16.msra.mxu0 0
    %1434 = vmatprep.subr.bf16.mxu0 0
    %1435 = vmatpush1.bf16.msra.mxu0 0
    %1436 = vmatprep.subr.bf16.mxu0 0
    %1437 = vmatpush1.bf16.msra.mxu0 0
    %1438 = vmatprep.subr.bf16.mxu0 0
    %1439 = vmatpush1.bf16.msra.mxu0 0
    %1440 = vmatprep.subr.bf16.mxu0 0
    %1441 = vmatpush1.bf16.msra.mxu0 0
    %1442 = vmatprep.subr.bf16.mxu0 0
    %1443 = vmatpush1.bf16.msra.mxu0 0
    %1444 = vmatprep.subr.bf16.mxu0 0
    %1445 = vmatpush1.bf16.msra.mxu0 0
    %1446 = vmatprep.subr.bf16.mxu0 0
    %1447 = vmatpush1.bf16.msra.mxu0 0
    %1448 = vmatprep.subr.bf16.mxu0 0
    %1449 = vmatpush1.bf16.msra.mxu0 0
    %1450 = vmatprep.subr.bf16.mxu0 0
    %1451 = vmatpush1.bf16.msra.mxu0 0
    %1452 = vmatprep.subr.bf16.mxu0 0
    %1453 = vmatpush1.bf16.msra.mxu0 0
    %1454 = vmatprep.subr.bf16.mxu0 0
    %1455 = vmatpush1.bf16.msra.mxu0 0
    %1456 = vmatprep.subr.bf16.mxu0 0
    %1457 = vmatpush1.bf16.msra.mxu0 0
    %1458 = vmatprep.mubr.bf16.mxu0 0
    %1459 = vmatmul.mubr.bf16.gmra.mrb[0].mxu0 %v318
    %v1460 = vpop.f32.mrb[0].mxu0
    %v1461 = vadd.f32 %v399, %v1460
    %v1462 = vpop.f32.mrb[0].mxu0
    %v1463 = vadd.f32 %v401, %v1462
    %v1464 = vpop.f32.mrb[0].mxu0
    %v1465 = vpop.f32.mrb[0].mxu0
    %1466 = vdwg.mxu0
    %1467 = vmatprep.subr.bf16.mxu0 %v1166
    %1468 = vmatpush1.bf16.msra.mxu0 %v1165
    %1469 = vmatprep.subr.bf16.mxu0 %v1178
    %1470 = vmatpush1.bf16.msra.mxu0 %v1175
    %1471 = vmatprep.subr.bf16.mxu0 0
    %1472 = vmatpush1.bf16.msra.mxu0 0
    %1473 = vmatprep.subr.bf16.mxu0 0
    %1474 = vmatpush1.bf16.msra.mxu0 0
    %1475 = vmatprep.subr.bf16.mxu0 0
    %1476 = vmatpush1.bf16.msra.mxu0 0
    %1477 = vmatprep.subr.bf16.mxu0 0
    %1478 = vmatpush1.bf16.msra.mxu0 0
    %1479 = vmatprep.subr.bf16.mxu0 0
    %1480 = vmatpush1.bf16.msra.mxu0 0
    %1481 = vmatprep.subr.bf16.mxu0 0
    %1482 = vmatpush1.bf16.msra.mxu0 0
    %1483 = vmatprep.subr.bf16.mxu0 0
    %1484 = vmatpush1.bf16.msra.mxu0 0
    %1485 = vmatprep.subr.bf16.mxu0 0
    %1486 = vmatpush1.bf16.msra.mxu0 0
    %1487 = vmatprep.subr.bf16.mxu0 0
    %1488 = vmatpush1.bf16.msra.mxu0 0
    %1489 = vmatprep.subr.bf16.mxu0 0
    %1490 = vmatpush1.bf16.msra.mxu0 0
    %1491 = vmatprep.subr.bf16.mxu0 0
    %1492 = vmatpush1.bf16.msra.mxu0 0
    %1493 = vmatprep.subr.bf16.mxu0 0
    %1494 = vmatpush1.bf16.msra.mxu0 0
    %1495 = vmatprep.subr.bf16.mxu0 0
    %1496 = vmatpush1.bf16.msra.mxu0 0
    %1497 = vmatprep.subr.bf16.mxu0 0
    %1498 = vmatpush1.bf16.msra.mxu0 0
    %1499 = vmatprep.mubr.bf16.mxu0 0
    %1500 = vmatmul.mubr.bf16.gmra.mrb[0].mxu0 %v362
    %v1501 = vpop.f32.mrb[0].mxu0
    %v1502 = vadd.f32 %v443, %v1501
    %v1503 = vpop.f32.mrb[0].mxu0
    %v1504 = vadd.f32 %v445, %v1503
    %v1505 = vpop.f32.mrb[0].mxu0
    %v1506 = vpop.f32.mrb[0].mxu0
    %1507 = vdwg.mxu0
    %1508 = vmatprep.subr.bf16.mxu0 %v1166
    %1509 = vmatpush1.bf16.msra.mxu0 %v1165
    %1510 = vmatprep.subr.bf16.mxu0 %v1178
    %1511 = vmatpush1.bf16.msra.mxu0 %v1175
    %1512 = vmatprep.subr.bf16.mxu0 0
    %1513 = vmatpush1.bf16.msra.mxu0 0
    %1514 = vmatprep.subr.bf16.mxu0 0
    %1515 = vmatpush1.bf16.msra.mxu0 0
    %1516 = vmatprep.subr.bf16.mxu0 0
    %1517 = vmatpush1.bf16.msra.mxu0 0
    %1518 = vmatprep.subr.bf16.mxu0 0
    %1519 = vmatpush1.bf16.msra.mxu0 0
    %1520 = vmatprep.subr.bf16.mxu0 0
    %1521 = vmatpush1.bf16.msra.mxu0 0
    %1522 = vmatprep.subr.bf16.mxu0 0
    %1523 = vmatpush1.bf16.msra.mxu0 0
    %1524 = vmatprep.subr.bf16.mxu0 0
    %1525 = vmatpush1.bf16.msra.mxu0 0
    %1526 = vmatprep.subr.bf16.mxu0 0
    %1527 = vmatpush1.bf16.msra.mxu0 0
    %1528 = vmatprep.subr.bf16.mxu0 0
    %1529 = vmatpush1.bf16.msra.mxu0 0
    %1530 = vmatprep.subr.bf16.mxu0 0
    %1531 = vmatpush1.bf16.msra.mxu0 0
    %1532 = vmatprep.subr.bf16.mxu0 0
    %1533 = vmatpush1.bf16.msra.mxu0 0
    %1534 = vmatprep.subr.bf16.mxu0 0
    %1535 = vmatpush1.bf16.msra.mxu0 0
    %1536 = vmatprep.subr.bf16.mxu0 0
    %1537 = vmatpush1.bf16.msra.mxu0 0
    %1538 = vmatprep.subr.bf16.mxu0 0
    %1539 = vmatpush1.bf16.msra.mxu0 0
    %1540 = vmatprep.mubr.bf16.mxu0 0
    %1541 = vmatmul.mubr.bf16.gmra.mrb[0].mxu0 %v406
    %v1542 = vpop.f32.mrb[0].mxu0
    %v1543 = vadd.f32 %v487, %v1542
    %v1544 = vpop.f32.mrb[0].mxu0
    %v1545 = vadd.f32 %v489, %v1544
    %v1546 = vpop.f32.mrb[0].mxu0
    %v1547 = vpop.f32.mrb[0].mxu0
    %1548 = vdwg.mxu0
    %1549 = vmatprep.subr.bf16.mxu0 %v1166
    %1550 = vmatpush1.bf16.msra.mxu0 %v1165
    %1551 = vmatprep.subr.bf16.mxu0 %v1178
    %1552 = vmatpush1.bf16.msra.mxu0 %v1175
    %1553 = vmatprep.subr.bf16.mxu0 0
    %1554 = vmatpush1.bf16.msra.mxu0 0
    %1555 = vmatprep.subr.bf16.mxu0 0
    %1556 = vmatpush1.bf16.msra.mxu0 0
    %1557 = vmatprep.subr.bf16.mxu0 0
    %1558 = vmatpush1.bf16.msra.mxu0 0
    %1559 = vmatprep.subr.bf16.mxu0 0
    %1560 = vmatpush1.bf16.msra.mxu0 0
    %1561 = vmatprep.subr.bf16.mxu0 0
    %1562 = vmatpush1.bf16.msra.mxu0 0
    %1563 = vmatprep.subr.bf16.mxu0 0
    %1564 = vmatpush1.bf16.msra.mxu0 0
    %1565 = vmatprep.subr.bf16.mxu0 0
    %1566 = vmatpush1.bf16.msra.mxu0 0
    %1567 = vmatprep.subr.bf16.mxu0 0
    %1568 = vmatpush1.bf16.msra.mxu0 0
    %1569 = vmatprep.subr.bf16.mxu0 0
    %1570 = vmatpush1.bf16.msra.mxu0 0
    %1571 = vmatprep.subr.bf16.mxu0 0
    %1572 = vmatpush1.bf16.msra.mxu0 0
    %1573 = vmatprep.subr.bf16.mxu0 0
    %1574 = vmatpush1.bf16.msra.mxu0 0
    %1575 = vmatprep.subr.bf16.mxu0 0
    %1576 = vmatpush1.bf16.msra.mxu0 0
    %1577 = vmatprep.subr.bf16.mxu0 0
    %1578 = vmatpush1.bf16.msra.mxu0 0
    %1579 = vmatprep.subr.bf16.mxu0 0
    %1580 = vmatpush1.bf16.msra.mxu0 0
    %1581 = vmatprep.mubr.bf16.mxu0 0
    %1582 = vmatmul.mubr.bf16.gmra.mrb[0].mxu0 %v450
    %v1583 = vpop.f32.mrb[0].mxu0
    %v1584 = vadd.f32 %v531, %v1583
    %v1585 = vpop.f32.mrb[0].mxu0
    %v1586 = vadd.f32 %v533, %v1585
    %v1587 = vpop.f32.mrb[0].mxu0
    %v1588 = vpop.f32.mrb[0].mxu0
    %1589 = vdwg.mxu0
    %1590 = vmatprep.subr.bf16.mxu0 %v1166
    %1591 = vmatpush1.bf16.msra.mxu0 %v1165
    %1592 = vmatprep.subr.bf16.mxu0 %v1178
    %1593 = vmatpush1.bf16.msra.mxu0 %v1175
    %1594 = vmatprep.subr.bf16.mxu0 0
    %1595 = vmatpush1.bf16.msra.mxu0 0
    %1596 = vmatprep.subr.bf16.mxu0 0
    %1597 = vmatpush1.bf16.msra.mxu0 0
    %1598 = vmatprep.subr.bf16.mxu0 0
    %1599 = vmatpush1.bf16.msra.mxu0 0
    %1600 = vmatprep.subr.bf16.mxu0 0
    %1601 = vmatpush1.bf16.msra.mxu0 0
    %1602 = vmatprep.subr.bf16.mxu0 0
    %1603 = vmatpush1.bf16.msra.mxu0 0
    %1604 = vmatprep.subr.bf16.mxu0 0
    %1605 = vmatpush1.bf16.msra.mxu0 0
    %1606 = vmatprep.subr.bf16.mxu0 0
    %1607 = vmatpush1.bf16.msra.mxu0 0
    %1608 = vmatprep.subr.bf16.mxu0 0
    %1609 = vmatpush1.bf16.msra.mxu0 0
    %1610 = vmatprep.subr.bf16.mxu0 0
    %1611 = vmatpush1.bf16.msra.mxu0 0
    %1612 = vmatprep.subr.bf16.mxu0 0
    %1613 = vmatpush1.bf16.msra.mxu0 0
    %1614 = vmatprep.subr.bf16.mxu0 0
    %1615 = vmatpush1.bf16.msra.mxu0 0
    %1616 = vmatprep.subr.bf16.mxu0 0
    %1617 = vmatpush1.bf16.msra.mxu0 0
    %1618 = vmatprep.subr.bf16.mxu0 0
    %1619 = vmatpush1.bf16.msra.mxu0 0
    %1620 = vmatprep.subr.bf16.mxu0 0
    %1621 = vmatpush1.bf16.msra.mxu0 0
    %1622 = vmatprep.mubr.bf16.mxu0 0
    %1623 = vmatmul.mubr.bf16.gmra.mrb[0].mxu0 %v494
    %v1624 = vpop.f32.mrb[0].mxu0
    %v1625 = vadd.f32 %v575, %v1624
    %v1626 = vpop.f32.mrb[0].mxu0
    %v1627 = vadd.f32 %v577, %v1626
    %v1628 = vpop.f32.mrb[0].mxu0
    %v1629 = vpop.f32.mrb[0].mxu0
    %1630 = vdwg.mxu0
    %1631 = vmatprep.subr.bf16.mxu0 %v1166
    %1632 = vmatpush1.bf16.msra.mxu0 %v1165
    %1633 = vmatprep.subr.bf16.mxu0 %v1178
    %1634 = vmatpush1.bf16.msra.mxu0 %v1175
    %1635 = vmatprep.subr.bf16.mxu0 0
    %1636 = vmatpush1.bf16.msra.mxu0 0
    %1637 = vmatprep.subr.bf16.mxu0 0
    %1638 = vmatpush1.bf16.msra.mxu0 0
    %1639 = vmatprep.subr.bf16.mxu0 0
    %1640 = vmatpush1.bf16.msra.mxu0 0
    %1641 = vmatprep.subr.bf16.mxu0 0
    %1642 = vmatpush1.bf16.msra.mxu0 0
    %1643 = vmatprep.subr.bf16.mxu0 0
    %1644 = vmatpush1.bf16.msra.mxu0 0
    %1645 = vmatprep.subr.bf16.mxu0 0
    %1646 = vmatpush1.bf16.msra.mxu0 0
    %1647 = vmatprep.subr.bf16.mxu0 0
    %1648 = vmatpush1.bf16.msra.mxu0 0
    %1649 = vmatprep.subr.bf16.mxu0 0
    %1650 = vmatpush1.bf16.msra.mxu0 0
    %1651 = vmatprep.subr.bf16.mxu0 0
    %1652 = vmatpush1.bf16.msra.mxu0 0
    %1653 = vmatprep.subr.bf16.mxu0 0
    %1654 = vmatpush1.bf16.msra.mxu0 0
    %1655 = vmatprep.subr.bf16.mxu0 0
    %1656 = vmatpush1.bf16.msra.mxu0 0
    %1657 = vmatprep.subr.bf16.mxu0 0
    %1658 = vmatpush1.bf16.msra.mxu0 0
    %1659 = vmatprep.subr.bf16.mxu0 0
    %1660 = vmatpush1.bf16.msra.mxu0 0
    %1661 = vmatprep.subr.bf16.mxu0 0
    %1662 = vmatpush1.bf16.msra.mxu0 0
    %1663 = vmatprep.mubr.bf16.mxu0 0
    %1664 = vmatmul.mubr.bf16.gmra.mrb[0].mxu0 %v538
    %v1665 = vpop.f32.mrb[0].mxu0
    %v1666 = vadd.f32 %v619, %v1665
    %v1667 = vpop.f32.mrb[0].mxu0
    %v1668 = vadd.f32 %v621, %v1667
    %v1669 = vpop.f32.mrb[0].mxu0
    %v1670 = vpop.f32.mrb[0].mxu0
    %1671 = vdwg.mxu0
    %1672 = vmatprep.subr.bf16.mxu0 %v1166
    %1673 = vmatpush1.bf16.msra.mxu0 %v1165
    %1674 = vmatprep.subr.bf16.mxu0 %v1178
    %1675 = vmatpush1.bf16.msra.mxu0 %v1175
    %1676 = vmatprep.subr.bf16.mxu0 0
    %1677 = vmatpush1.bf16.msra.mxu0 0
    %1678 = vmatprep.subr.bf16.mxu0 0
    %1679 = vmatpush1.bf16.msra.mxu0 0
    %1680 = vmatprep.subr.bf16.mxu0 0
    %1681 = vmatpush1.bf16.msra.mxu0 0
    %1682 = vmatprep.subr.bf16.mxu0 0
    %1683 = vmatpush1.bf16.msra.mxu0 0
    %1684 = vmatprep.subr.bf16.mxu0 0
    %1685 = vmatpush1.bf16.msra.mxu0 0
    %1686 = vmatprep.subr.bf16.mxu0 0
    %1687 = vmatpush1.bf16.msra.mxu0 0
    %1688 = vmatprep.subr.bf16.mxu0 0
    %1689 = vmatpush1.bf16.msra.mxu0 0
    %1690 = vmatprep.subr.bf16.mxu0 0
    %1691 = vmatpush1.bf16.msra.mxu0 0
    %1692 = vmatprep.subr.bf16.mxu0 0
    %1693 = vmatpush1.bf16.msra.mxu0 0
    %1694 = vmatprep.subr.bf16.mxu0 0
    %1695 = vmatpush1.bf16.msra.mxu0 0
    %1696 = vmatprep.subr.bf16.mxu0 0
    %1697 = vmatpush1.bf16.msra.mxu0 0
    %1698 = vmatprep.subr.bf16.mxu0 0
    %1699 = vmatpush1.bf16.msra.mxu0 0
    %1700 = vmatprep.subr.bf16.mxu0 0
    %1701 = vmatpush1.bf16.msra.mxu0 0
    %1702 = vmatprep.subr.bf16.mxu0 0
    %1703 = vmatpush1.bf16.msra.mxu0 0
    %1704 = vmatprep.mubr.bf16.mxu0 0
    %1705 = vmatmul.mubr.bf16.gmra.mrb[0].mxu0 %v582
    %v1706 = vpop.f32.mrb[0].mxu0
    %v1707 = vadd.f32 %v663, %v1706
    %v1708 = vpop.f32.mrb[0].mxu0
    %v1709 = vadd.f32 %v665, %v1708
    %v1710 = vpop.f32.mrb[0].mxu0
    %v1711 = vpop.f32.mrb[0].mxu0
    %1712 = vdwg.mxu0
    %1713 = vmatprep.subr.bf16.mxu0 %v1166
    %1714 = vmatpush1.bf16.msra.mxu0 %v1165
    %1715 = vmatprep.subr.bf16.mxu0 %v1178
    %1716 = vmatpush1.bf16.msra.mxu0 %v1175
    %1717 = vmatprep.subr.bf16.mxu0 0
    %1718 = vmatpush1.bf16.msra.mxu0 0
    %1719 = vmatprep.subr.bf16.mxu0 0
    %1720 = vmatpush1.bf16.msra.mxu0 0
    %1721 = vmatprep.subr.bf16.mxu0 0
    %1722 = vmatpush1.bf16.msra.mxu0 0
    %1723 = vmatprep.subr.bf16.mxu0 0
    %1724 = vmatpush1.bf16.msra.mxu0 0
    %1725 = vmatprep.subr.bf16.mxu0 0
    %1726 = vmatpush1.bf16.msra.mxu0 0
    %1727 = vmatprep.subr.bf16.mxu0 0
    %1728 = vmatpush1.bf16.msra.mxu0 0
    %1729 = vmatprep.subr.bf16.mxu0 0
    %1730 = vmatpush1.bf16.msra.mxu0 0
    %1731 = vmatprep.subr.bf16.mxu0 0
    %1732 = vmatpush1.bf16.msra.mxu0 0
    %1733 = vmatprep.subr.bf16.mxu0 0
    %1734 = vmatpush1.bf16.msra.mxu0 0
    %1735 = vmatprep.subr.bf16.mxu0 0
    %1736 = vmatpush1.bf16.msra.mxu0 0
    %1737 = vmatprep.subr.bf16.mxu0 0
    %1738 = vmatpush1.bf16.msra.mxu0 0
    %1739 = vmatprep.subr.bf16.mxu0 0
    %1740 = vmatpush1.bf16.msra.mxu0 0
    %1741 = vmatprep.subr.bf16.mxu0 0
    %1742 = vmatpush1.bf16.msra.mxu0 0
    %1743 = vmatprep.subr.bf16.mxu0 0
    %1744 = vmatpush1.bf16.msra.mxu0 0
    %1745 = vmatprep.mubr.bf16.mxu0 0
    %1746 = vmatmul.mubr.bf16.gmra.mrb[0].mxu0 %v626
    %v1747 = vpop.f32.mrb[0].mxu0
    %v1748 = vadd.f32 %v707, %v1747
    %v1749 = vpop.f32.mrb[0].mxu0
    %v1750 = vadd.f32 %v709, %v1749
    %v1751 = vpop.f32.mrb[0].mxu0
    %v1752 = vpop.f32.mrb[0].mxu0
    %1753 = vdwg.mxu0
    %1754 = vmatprep.subr.bf16.mxu0 %v1166
    %1755 = vmatpush1.bf16.msra.mxu0 %v1165
    %1756 = vmatprep.subr.bf16.mxu0 %v1178
    %1757 = vmatpush1.bf16.msra.mxu0 %v1175
    %1758 = vmatprep.subr.bf16.mxu0 0
    %1759 = vmatpush1.bf16.msra.mxu0 0
    %1760 = vmatprep.subr.bf16.mxu0 0
    %1761 = vmatpush1.bf16.msra.mxu0 0
    %1762 = vmatprep.subr.bf16.mxu0 0
    %1763 = vmatpush1.bf16.msra.mxu0 0
    %1764 = vmatprep.subr.bf16.mxu0 0
    %1765 = vmatpush1.bf16.msra.mxu0 0
    %1766 = vmatprep.subr.bf16.mxu0 0
    %1767 = vmatpush1.bf16.msra.mxu0 0
    %1768 = vmatprep.subr.bf16.mxu0 0
    %1769 = vmatpush1.bf16.msra.mxu0 0
    %1770 = vmatprep.subr.bf16.mxu0 0
    %1771 = vmatpush1.bf16.msra.mxu0 0
    %1772 = vmatprep.subr.bf16.mxu0 0
    %1773 = vmatpush1.bf16.msra.mxu0 0
    %1774 = vmatprep.subr.bf16.mxu0 0
    %1775 = vmatpush1.bf16.msra.mxu0 0
    %1776 = vmatprep.subr.bf16.mxu0 0
    %1777 = vmatpush1.bf16.msra.mxu0 0
    %1778 = vmatprep.subr.bf16.mxu0 0
    %1779 = vmatpush1.bf16.msra.mxu0 0
    %1780 = vmatprep.subr.bf16.mxu0 0
    %1781 = vmatpush1.bf16.msra.mxu0 0
    %1782 = vmatprep.subr.bf16.mxu0 0
    %1783 = vmatpush1.bf16.msra.mxu0 0
    %1784 = vmatprep.subr.bf16.mxu0 0
    %1785 = vmatpush1.bf16.msra.mxu0 0
    %1786 = vmatprep.mubr.bf16.mxu0 0
    %1787 = vmatmul.mubr.bf16.gmra.mrb[0].mxu0 %v670
    %v1788 = vpop.f32.mrb[0].mxu0
    %v1789 = vadd.f32 %v751, %v1788
    %v1790 = vpop.f32.mrb[0].mxu0
    %v1791 = vadd.f32 %v753, %v1790
    %v1792 = vpop.f32.mrb[0].mxu0
    %v1793 = vpop.f32.mrb[0].mxu0
    %1794 = vdwg.mxu0
    %1795 = vmatprep.subr.bf16.mxu0 %v1166
    %1796 = vmatpush1.bf16.msra.mxu0 %v1165
    %1797 = vmatprep.subr.bf16.mxu0 %v1178
    %1798 = vmatpush1.bf16.msra.mxu0 %v1175
    %1799 = vmatprep.subr.bf16.mxu0 0
    %1800 = vmatpush1.bf16.msra.mxu0 0
    %1801 = vmatprep.subr.bf16.mxu0 0
    %1802 = vmatpush1.bf16.msra.mxu0 0
    %1803 = vmatprep.subr.bf16.mxu0 0
    %1804 = vmatpush1.bf16.msra.mxu0 0
    %1805 = vmatprep.subr.bf16.mxu0 0
    %1806 = vmatpush1.bf16.msra.mxu0 0
    %1807 = vmatprep.subr.bf16.mxu0 0
    %1808 = vmatpush1.bf16.msra.mxu0 0
    %1809 = vmatprep.subr.bf16.mxu0 0
    %1810 = vmatpush1.bf16.msra.mxu0 0
    %1811 = vmatprep.subr.bf16.mxu0 0
    %1812 = vmatpush1.bf16.msra.mxu0 0
    %1813 = vmatprep.subr.bf16.mxu0 0
    %1814 = vmatpush1.bf16.msra.mxu0 0
    %1815 = vmatprep.subr.bf16.mxu0 0
    %1816 = vmatpush1.bf16.msra.mxu0 0
    %1817 = vmatprep.subr.bf16.mxu0 0
    %1818 = vmatpush1.bf16.msra.mxu0 0
    %1819 = vmatprep.subr.bf16.mxu0 0
    %1820 = vmatpush1.bf16.msra.mxu0 0
    %1821 = vmatprep.subr.bf16.mxu0 0
    %1822 = vmatpush1.bf16.msra.mxu0 0
    %1823 = vmatprep.subr.bf16.mxu0 0
    %1824 = vmatpush1.bf16.msra.mxu0 0
    %1825 = vmatprep.subr.bf16.mxu0 0
    %1826 = vmatpush1.bf16.msra.mxu0 0
    %1827 = vmatprep.mubr.bf16.mxu0 0
    %1828 = vmatmul.mubr.bf16.gmra.mrb[0].mxu0 %v714
    %v1829 = vpop.f32.mrb[0].mxu0
    %v1830 = vadd.f32 %v795, %v1829
    %v1831 = vpop.f32.mrb[0].mxu0
    %v1832 = vadd.f32 %v797, %v1831
    %v1833 = vpop.f32.mrb[0].mxu0
    %v1834 = vpop.f32.mrb[0].mxu0
    %1835 = vdwg.mxu0
    %1836 = vmatprep.subr.bf16.mxu0 %v1166
    %1837 = vmatpush1.bf16.msra.mxu0 %v1165
    %1838 = vmatprep.subr.bf16.mxu0 %v1178
    %1839 = vmatpush1.bf16.msra.mxu0 %v1175
    %1840 = vmatprep.subr.bf16.mxu0 0
    %1841 = vmatpush1.bf16.msra.mxu0 0
    %1842 = vmatprep.subr.bf16.mxu0 0
    %1843 = vmatpush1.bf16.msra.mxu0 0
    %1844 = vmatprep.subr.bf16.mxu0 0
    %1845 = vmatpush1.bf16.msra.mxu0 0
    %1846 = vmatprep.subr.bf16.mxu0 0
    %1847 = vmatpush1.bf16.msra.mxu0 0
    %1848 = vmatprep.subr.bf16.mxu0 0
    %1849 = vmatpush1.bf16.msra.mxu0 0
    %1850 = vmatprep.subr.bf16.mxu0 0
    %1851 = vmatpush1.bf16.msra.mxu0 0
    %1852 = vmatprep.subr.bf16.mxu0 0
    %1853 = vmatpush1.bf16.msra.mxu0 0
    %1854 = vmatprep.subr.bf16.mxu0 0
    %1855 = vmatpush1.bf16.msra.mxu0 0
    %1856 = vmatprep.subr.bf16.mxu0 0
    %1857 = vmatpush1.bf16.msra.mxu0 0
    %1858 = vmatprep.subr.bf16.mxu0 0
    %1859 = vmatpush1.bf16.msra.mxu0 0
    %1860 = vmatprep.subr.bf16.mxu0 0
    %1861 = vmatpush1.bf16.msra.mxu0 0
    %1862 = vmatprep.subr.bf16.mxu0 0
    %1863 = vmatpush1.bf16.msra.mxu0 0
    %1864 = vmatprep.subr.bf16.mxu0 0
    %1865 = vmatpush1.bf16.msra.mxu0 0
    %1866 = vmatprep.subr.bf16.mxu0 0
    %1867 = vmatpush1.bf16.msra.mxu0 0
    %1868 = vmatprep.mubr.bf16.mxu0 0
    %1869 = vmatmul.mubr.bf16.gmra.mrb[0].mxu0 %v758
    %v1870 = vpop.f32.mrb[0].mxu0
    %v1871 = vadd.f32 %v839, %v1870
    %v1872 = vpop.f32.mrb[0].mxu0
    %v1873 = vadd.f32 %v841, %v1872
    %v1874 = vpop.f32.mrb[0].mxu0
    %v1875 = vpop.f32.mrb[0].mxu0
    %1876 = vdwg.mxu0
    %1877 = vmatprep.subr.bf16.mxu0 %v1166
    %1878 = vmatpush1.bf16.msra.mxu0 %v1165
    %1879 = vmatprep.subr.bf16.mxu0 %v1178
    %1880 = vmatpush1.bf16.msra.mxu0 %v1175
    %1881 = vmatprep.subr.bf16.mxu0 0
    %1882 = vmatpush1.bf16.msra.mxu0 0
    %1883 = vmatprep.subr.bf16.mxu0 0
    %1884 = vmatpush1.bf16.msra.mxu0 0
    %1885 = vmatprep.subr.bf16.mxu0 0
    %1886 = vmatpush1.bf16.msra.mxu0 0
    %1887 = vmatprep.subr.bf16.mxu0 0
    %1888 = vmatpush1.bf16.msra.mxu0 0
    %1889 = vmatprep.subr.bf16.mxu0 0
    %1890 = vmatpush1.bf16.msra.mxu0 0
    %1891 = vmatprep.subr.bf16.mxu0 0
    %1892 = vmatpush1.bf16.msra.mxu0 0
    %1893 = vmatprep.subr.bf16.mxu0 0
    %1894 = vmatpush1.bf16.msra.mxu0 0
    %1895 = vmatprep.subr.bf16.mxu0 0
    %1896 = vmatpush1.bf16.msra.mxu0 0
    %1897 = vmatprep.subr.bf16.mxu0 0
    %1898 = vmatpush1.bf16.msra.mxu0 0
    %1899 = vmatprep.subr.bf16.mxu0 0
    %1900 = vmatpush1.bf16.msra.mxu0 0
    %1901 = vmatprep.subr.bf16.mxu0 0
    %1902 = vmatpush1.bf16.msra.mxu0 0
    %1903 = vmatprep.subr.bf16.mxu0 0
    %1904 = vmatpush1.bf16.msra.mxu0 0
    %1905 = vmatprep.subr.bf16.mxu0 0
    %1906 = vmatpush1.bf16.msra.mxu0 0
    %1907 = vmatprep.subr.bf16.mxu0 0
    %1908 = vmatpush1.bf16.msra.mxu0 0
    %1909 = vmatprep.mubr.bf16.mxu0 0
    %1910 = vmatmul.mubr.bf16.gmra.mrb[0].mxu0 %v802
    %v1911 = vpop.f32.mrb[0].mxu0
    %v1912 = vadd.f32 %v883, %v1911
    %v1913 = vpop.f32.mrb[0].mxu0
    %v1914 = vadd.f32 %v885, %v1913
    %v1915 = vpop.f32.mrb[0].mxu0
    %v1916 = vpop.f32.mrb[0].mxu0
    %1917 = vdwg.mxu0
    %1918 = vmatprep.subr.bf16.mxu0 %v1166
    %1919 = vmatpush1.bf16.msra.mxu0 %v1165
    %1920 = vmatprep.subr.bf16.mxu0 %v1178
    %1921 = vmatpush1.bf16.msra.mxu0 %v1175
    %1922 = vmatprep.subr.bf16.mxu0 0
    %1923 = vmatpush1.bf16.msra.mxu0 0
    %1924 = vmatprep.subr.bf16.mxu0 0
    %1925 = vmatpush1.bf16.msra.mxu0 0
    %1926 = vmatprep.subr.bf16.mxu0 0
    %1927 = vmatpush1.bf16.msra.mxu0 0
    %1928 = vmatprep.subr.bf16.mxu0 0
    %1929 = vmatpush1.bf16.msra.mxu0 0
    %1930 = vmatprep.subr.bf16.mxu0 0
    %1931 = vmatpush1.bf16.msra.mxu0 0
    %1932 = vmatprep.subr.bf16.mxu0 0
    %1933 = vmatpush1.bf16.msra.mxu0 0
    %1934 = vmatprep.subr.bf16.mxu0 0
    %1935 = vmatpush1.bf16.msra.mxu0 0
    %1936 = vmatprep.subr.bf16.mxu0 0
    %1937 = vmatpush1.bf16.msra.mxu0 0
    %1938 = vmatprep.subr.bf16.mxu0 0
    %1939 = vmatpush1.bf16.msra.mxu0 0
    %1940 = vmatprep.subr.bf16.mxu0 0
    %1941 = vmatpush1.bf16.msra.mxu0 0
    %1942 = vmatprep.subr.bf16.mxu0 0
    %1943 = vmatpush1.bf16.msra.mxu0 0
    %1944 = vmatprep.subr.bf16.mxu0 0
    %1945 = vmatpush1.bf16.msra.mxu0 0
    %1946 = vmatprep.subr.bf16.mxu0 0
    %1947 = vmatpush1.bf16.msra.mxu0 0
    %1948 = vmatprep.subr.bf16.mxu0 0
    %1949 = vmatpush1.bf16.msra.mxu0 0
    %1950 = vmatprep.mubr.bf16.mxu0 0
    %1951 = vmatmul.mubr.bf16.gmra.mrb[0].mxu0 %v846
    %v1952 = vpop.f32.mrb[0].mxu0
    %v1953 = vadd.f32 %v927, %v1952
    %v1954 = vpop.f32.mrb[0].mxu0
    %v1955 = vadd.f32 %v929, %v1954
    %v1956 = vpop.f32.mrb[0].mxu0
    %v1957 = vpop.f32.mrb[0].mxu0
    %1958 = vdwg.mxu0
    %1959 = vmatprep.subr.bf16.mxu0 %v1166
    %1960 = vmatpush1.bf16.msra.mxu0 %v1165
    %1961 = vmatprep.subr.bf16.mxu0 %v1178
    %1962 = vmatpush1.bf16.msra.mxu0 %v1175
    %1963 = vmatprep.subr.bf16.mxu0 0
    %1964 = vmatpush1.bf16.msra.mxu0 0
    %1965 = vmatprep.subr.bf16.mxu0 0
    %1966 = vmatpush1.bf16.msra.mxu0 0
    %1967 = vmatprep.subr.bf16.mxu0 0
    %1968 = vmatpush1.bf16.msra.mxu0 0
    %1969 = vmatprep.subr.bf16.mxu0 0
    %1970 = vmatpush1.bf16.msra.mxu0 0
    %1971 = vmatprep.subr.bf16.mxu0 0
    %1972 = vmatpush1.bf16.msra.mxu0 0
    %1973 = vmatprep.subr.bf16.mxu0 0
    %1974 = vmatpush1.bf16.msra.mxu0 0
    %1975 = vmatprep.subr.bf16.mxu0 0
    %1976 = vmatpush1.bf16.msra.mxu0 0
    %1977 = vmatprep.subr.bf16.mxu0 0
    %1978 = vmatpush1.bf16.msra.mxu0 0
    %1979 = vmatprep.subr.bf16.mxu0 0
    %1980 = vmatpush1.bf16.msra.mxu0 0
    %1981 = vmatprep.subr.bf16.mxu0 0
    %1982 = vmatpush1.bf16.msra.mxu0 0
    %1983 = vmatprep.subr.bf16.mxu0 0
    %1984 = vmatpush1.bf16.msra.mxu0 0
    %1985 = vmatprep.subr.bf16.mxu0 0
    %1986 = vmatpush1.bf16.msra.mxu0 0
    %1987 = vmatprep.subr.bf16.mxu0 0
    %1988 = vmatpush1.bf16.msra.mxu0 0
    %1989 = vmatprep.subr.bf16.mxu0 0
    %1990 = vmatpush1.bf16.msra.mxu0 0
    %1991 = vmatprep.mubr.bf16.mxu0 0
    %1992 = vmatmul.mubr.bf16.gmra.mrb[0].mxu0 %v890
    %v1993 = vpop.f32.mrb[0].mxu0
    %v1994 = vadd.f32 %v971, %v1993
    %v1995 = vpop.f32.mrb[0].mxu0
    %v1996 = vadd.f32 %v973, %v1995
    %v1997 = vpop.f32.mrb[0].mxu0
    %v1998 = vpop.f32.mrb[0].mxu0
    %1999 = vdwg.mxu0
    %2000 = vmatprep.subr.bf16.mxu0 %v1166
    %2001 = vmatpush1.bf16.msra.mxu0 %v1165
    %2002 = vmatprep.subr.bf16.mxu0 %v1178
    %2003 = vmatpush1.bf16.msra.mxu0 %v1175
    %2004 = vmatprep.subr.bf16.mxu0 0
    %2005 = vmatpush1.bf16.msra.mxu0 0
    %2006 = vmatprep.subr.bf16.mxu0 0
    %2007 = vmatpush1.bf16.msra.mxu0 0
    %2008 = vmatprep.subr.bf16.mxu0 0
    %2009 = vmatpush1.bf16.msra.mxu0 0
    %2010 = vmatprep.subr.bf16.mxu0 0
    %2011 = vmatpush1.bf16.msra.mxu0 0
    %2012 = vmatprep.subr.bf16.mxu0 0
    %2013 = vmatpush1.bf16.msra.mxu0 0
    %2014 = vmatprep.subr.bf16.mxu0 0
    %2015 = vmatpush1.bf16.msra.mxu0 0
    %2016 = vmatprep.subr.bf16.mxu0 0
    %2017 = vmatpush1.bf16.msra.mxu0 0
    %2018 = vmatprep.subr.bf16.mxu0 0
    %2019 = vmatpush1.bf16.msra.mxu0 0
    %2020 = vmatprep.subr.bf16.mxu0 0
    %2021 = vmatpush1.bf16.msra.mxu0 0
    %2022 = vmatprep.subr.bf16.mxu0 0
    %2023 = vmatpush1.bf16.msra.mxu0 0
    %2024 = vmatprep.subr.bf16.mxu0 0
    %2025 = vmatpush1.bf16.msra.mxu0 0
    %2026 = vmatprep.subr.bf16.mxu0 0
    %2027 = vmatpush1.bf16.msra.mxu0 0
    %2028 = vmatprep.subr.bf16.mxu0 0
    %2029 = vmatpush1.bf16.msra.mxu0 0
    %2030 = vmatprep.subr.bf16.mxu0 0
    %2031 = vmatpush1.bf16.msra.mxu0 0
    %2032 = vmatprep.mubr.bf16.mxu0 0
    %2033 = vmatmul.mubr.bf16.gmra.mrb[0].mxu0 %v934
    %v2034 = vpop.f32.mrb[0].mxu0
    %v2035 = vadd.f32 %v1015, %v2034
    %v2036 = vpop.f32.mrb[0].mxu0
    %v2037 = vadd.f32 %v1017, %v2036
    %v2038 = vpop.f32.mrb[0].mxu0
    %v2039 = vpop.f32.mrb[0].mxu0
    %2040 = vdwg.mxu0
    %2041 = vmatprep.subr.bf16.mxu0 %v1166
    %2042 = vmatpush1.bf16.msra.mxu0 %v1165
    %2043 = vmatprep.subr.bf16.mxu0 %v1178
    %2044 = vmatpush1.bf16.msra.mxu0 %v1175
    %2045 = vmatprep.subr.bf16.mxu0 0
    %2046 = vmatpush1.bf16.msra.mxu0 0
    %2047 = vmatprep.subr.bf16.mxu0 0
    %2048 = vmatpush1.bf16.msra.mxu0 0
    %2049 = vmatprep.subr.bf16.mxu0 0
    %2050 = vmatpush1.bf16.msra.mxu0 0
    %2051 = vmatprep.subr.bf16.mxu0 0
    %2052 = vmatpush1.bf16.msra.mxu0 0
    %2053 = vmatprep.subr.bf16.mxu0 0
    %2054 = vmatpush1.bf16.msra.mxu0 0
    %2055 = vmatprep.subr.bf16.mxu0 0
    %2056 = vmatpush1.bf16.msra.mxu0 0
    %2057 = vmatprep.subr.bf16.mxu0 0
    %2058 = vmatpush1.bf16.msra.mxu0 0
    %2059 = vmatprep.subr.bf16.mxu0 0
    %2060 = vmatpush1.bf16.msra.mxu0 0
    %2061 = vmatprep.subr.bf16.mxu0 0
    %2062 = vmatpush1.bf16.msra.mxu0 0
    %2063 = vmatprep.subr.bf16.mxu0 0
    %2064 = vmatpush1.bf16.msra.mxu0 0
    %2065 = vmatprep.subr.bf16.mxu0 0
    %2066 = vmatpush1.bf16.msra.mxu0 0
    %2067 = vmatprep.subr.bf16.mxu0 0
    %2068 = vmatpush1.bf16.msra.mxu0 0
    %2069 = vmatprep.subr.bf16.mxu0 0
    %2070 = vmatpush1.bf16.msra.mxu0 0
    %2071 = vmatprep.subr.bf16.mxu0 0
    %2072 = vmatpush1.bf16.msra.mxu0 0
    %2073 = vmatprep.mubr.bf16.mxu0 0
    %2074 = vmatmul.mubr.bf16.gmra.mrb[0].mxu0 %v978
    %v2075 = vpop.f32.mrb[0].mxu0
    %v2076 = vadd.f32 %v1059, %v2075
    %v2077 = vpop.f32.mrb[0].mxu0
    %v2078 = vadd.f32 %v1061, %v2077
    %v2079 = vpop.f32.mrb[0].mxu0
    %v2080 = vpop.f32.mrb[0].mxu0
    %2081 = vdwg.mxu0
    %2082 = vmatprep.subr.bf16.mxu0 %v1166
    %2083 = vmatpush1.bf16.msra.mxu0 %v1165
    %2084 = vmatprep.subr.bf16.mxu0 %v1178
    %2085 = vmatpush1.bf16.msra.mxu0 %v1175
    %2086 = vmatprep.subr.bf16.mxu0 0
    %2087 = vmatpush1.bf16.msra.mxu0 0
    %2088 = vmatprep.subr.bf16.mxu0 0
    %2089 = vmatpush1.bf16.msra.mxu0 0
    %2090 = vmatprep.subr.bf16.mxu0 0
    %2091 = vmatpush1.bf16.msra.mxu0 0
    %2092 = vmatprep.subr.bf16.mxu0 0
    %2093 = vmatpush1.bf16.msra.mxu0 0
    %2094 = vmatprep.subr.bf16.mxu0 0
    %2095 = vmatpush1.bf16.msra.mxu0 0
    %2096 = vmatprep.subr.bf16.mxu0 0
    %2097 = vmatpush1.bf16.msra.mxu0 0
    %2098 = vmatprep.subr.bf16.mxu0 0
    %2099 = vmatpush1.bf16.msra.mxu0 0
    %2100 = vmatprep.subr.bf16.mxu0 0
    %2101 = vmatpush1.bf16.msra.mxu0 0
    %2102 = vmatprep.subr.bf16.mxu0 0
    %2103 = vmatpush1.bf16.msra.mxu0 0
    %2104 = vmatprep.subr.bf16.mxu0 0
    %2105 = vmatpush1.bf16.msra.mxu0 0
    %2106 = vmatprep.subr.bf16.mxu0 0
    %2107 = vmatpush1.bf16.msra.mxu0 0
    %2108 = vmatprep.subr.bf16.mxu0 0
    %2109 = vmatpush1.bf16.msra.mxu0 0
    %2110 = vmatprep.subr.bf16.mxu0 0
    %2111 = vmatpush1.bf16.msra.mxu0 0
    %2112 = vmatprep.subr.bf16.mxu0 0
    %2113 = vmatpush1.bf16.msra.mxu0 0
    %2114 = vmatprep.mubr.bf16.mxu0 0
    %2115 = vmatmul.mubr.bf16.gmra.mrb[0].mxu0 %v1022
    %v2116 = vpop.f32.mrb[0].mxu0
    %v2117 = vadd.f32 %v1103, %v2116
    %v2118 = vpop.f32.mrb[0].mxu0
    %v2119 = vadd.f32 %v1105, %v2118
    %v2120 = vpop.f32.mrb[0].mxu0
    %v2121 = vpop.f32.mrb[0].mxu0
    %2122 = vdwg.mxu0
    %2123 = vmatprep.subr.bf16.mxu0 %v1166
    %2124 = vmatpush1.bf16.msra.mxu0 %v1165
    %2125 = vmatprep.subr.bf16.mxu0 %v1178
    %2126 = vmatpush1.bf16.msra.mxu0 %v1175
    %2127 = vmatprep.subr.bf16.mxu0 0
    %2128 = vmatpush1.bf16.msra.mxu0 0
    %2129 = vmatprep.subr.bf16.mxu0 0
    %2130 = vmatpush1.bf16.msra.mxu0 0
    %2131 = vmatprep.subr.bf16.mxu0 0
    %2132 = vmatpush1.bf16.msra.mxu0 0
    %2133 = vmatprep.subr.bf16.mxu0 0
    %2134 = vmatpush1.bf16.msra.mxu0 0
    %2135 = vmatprep.subr.bf16.mxu0 0
    %2136 = vmatpush1.bf16.msra.mxu0 0
    %2137 = vmatprep.subr.bf16.mxu0 0
    %2138 = vmatpush1.bf16.msra.mxu0 0
    %2139 = vmatprep.subr.bf16.mxu0 0
    %2140 = vmatpush1.bf16.msra.mxu0 0
    %2141 = vmatprep.subr.bf16.mxu0 0
    %2142 = vmatpush1.bf16.msra.mxu0 0
    %2143 = vmatprep.subr.bf16.mxu0 0
    %2144 = vmatpush1.bf16.msra.mxu0 0
    %2145 = vmatprep.subr.bf16.mxu0 0
    %2146 = vmatpush1.bf16.msra.mxu0 0
    %2147 = vmatprep.subr.bf16.mxu0 0
    %2148 = vmatpush1.bf16.msra.mxu0 0
    %2149 = vmatprep.subr.bf16.mxu0 0
    %2150 = vmatpush1.bf16.msra.mxu0 0
    %2151 = vmatprep.subr.bf16.mxu0 0
    %2152 = vmatpush1.bf16.msra.mxu0 0
    %2153 = vmatprep.subr.bf16.mxu0 0
    %2154 = vmatpush1.bf16.msra.mxu0 0
    %2155 = vmatprep.mubr.bf16.mxu0 0
    %2156 = vmatmul.mubr.bf16.gmra.mrb[0].mxu0 %v1066
    %v2157 = vpop.f32.mrb[0].mxu0
    %v2158 = vadd.f32 %v1147, %v2157
    %v2159 = vpop.f32.mrb[0].mxu0
    %v2160 = vadd.f32 %v1149, %v2159
    %v2161 = vpop.f32.mrb[0].mxu0
    %v2162 = vpop.f32.mrb[0].mxu0
    %2163 = vdwg.mxu0
    %s2164 = scalar_lea.vmem %s1, 64
    %v2165 = vld [vmem:[%s2164] sm:$0xff]
    %v2166 = vld [vmem:[%s2164 + $0x8] sm:$0xff]
    %v2167 = vld [vmem:[%s2164 + $0x10] sm:$0xff]
    %v2168 = vld [vmem:[%s2164 + $0x18] sm:$0x33]
    %v2173 = vunpack.c.l.b16 %v2165
    %v2174 = vunpack.c.h.b16 %v2165
    %v2175 = vunpack.c.l.b16 %v2166
    %v2176 = vunpack.c.h.b16 %v2166
    %v2177 = vunpack.c.l.b16 %v2167
    %v2178 = vunpack.c.h.b16 %v2167
    %v2179 = vunpack.c.l.b16 %v2168
    %v2180 = vunpack.c.h.b16 %v2168
    %v2181 = vpack.c.b16 %v2175, %v2173
    %v2182 = vpack.c.b16 %v2176, %v2174
    %v2183 = vpack.c.b16 %v2179, %v2177
    %v2184 = vpack.c.b16 %v2180, %v2178
    %v2188 = vsel %vm93, %v2183, 0
    %v2191 = vsel %vm93, %v2184, 0
    %2193 = vmatprep.subr.bf16.mxu0 %v2182
    %2194 = vmatpush1.bf16.msra.mxu0 %v2181
    %2195 = vmatprep.subr.bf16.mxu0 %v2191
    %2196 = vmatpush1.bf16.msra.mxu0 %v2188
    %2197 = vmatprep.subr.bf16.mxu0 0
    %2198 = vmatpush1.bf16.msra.mxu0 0
    %2199 = vmatprep.subr.bf16.mxu0 0
    %2200 = vmatpush1.bf16.msra.mxu0 0
    %2201 = vmatprep.subr.bf16.mxu0 0
    %2202 = vmatpush1.bf16.msra.mxu0 0
    %2203 = vmatprep.subr.bf16.mxu0 0
    %2204 = vmatpush1.bf16.msra.mxu0 0
    %2205 = vmatprep.subr.bf16.mxu0 0
    %2206 = vmatpush1.bf16.msra.mxu0 0
    %2207 = vmatprep.subr.bf16.mxu0 0
    %2208 = vmatpush1.bf16.msra.mxu0 0
    %2209 = vmatprep.subr.bf16.mxu0 0
    %2210 = vmatpush1.bf16.msra.mxu0 0
    %2211 = vmatprep.subr.bf16.mxu0 0
    %2212 = vmatpush1.bf16.msra.mxu0 0
    %2213 = vmatprep.subr.bf16.mxu0 0
    %2214 = vmatpush1.bf16.msra.mxu0 0
    %2215 = vmatprep.subr.bf16.mxu0 0
    %2216 = vmatpush1.bf16.msra.mxu0 0
    %2217 = vmatprep.subr.bf16.mxu0 0
    %2218 = vmatpush1.bf16.msra.mxu0 0
    %2219 = vmatprep.subr.bf16.mxu0 0
    %2220 = vmatpush1.bf16.msra.mxu0 0
    %2221 = vmatprep.subr.bf16.mxu0 0
    %2222 = vmatpush1.bf16.msra.mxu0 0
    %2223 = vmatprep.subr.bf16.mxu0 0
    %2224 = vmatpush1.bf16.msra.mxu0 0
    %2225 = vmatprep.mubr.bf16.mxu0 0
    %2226 = vmatmul.mubr.bf16.gmra.mrb[0].mxu0 %v142
    %v2227 = vpop.f32.mrb[0].mxu0
    %v2228 = vadd.f32 0.0, %v2227
    %v2229 = vpop.f32.mrb[0].mxu0
    %v2230 = vadd.f32 0.0, %v2229
    %v2231 = vpop.f32.mrb[0].mxu0
    %v2232 = vpop.f32.mrb[0].mxu0
    %2233 = vdwg.mxu0
    %2234 = vmatprep.subr.bf16.mxu0 %v2182
    %2235 = vmatpush1.bf16.msra.mxu0 %v2181
    %2236 = vmatprep.subr.bf16.mxu0 %v2191
    %2237 = vmatpush1.bf16.msra.mxu0 %v2188
    %2238 = vmatprep.subr.bf16.mxu0 0
    %2239 = vmatpush1.bf16.msra.mxu0 0
    %2240 = vmatprep.subr.bf16.mxu0 0
    %2241 = vmatpush1.bf16.msra.mxu0 0
    %2242 = vmatprep.subr.bf16.mxu0 0
    %2243 = vmatpush1.bf16.msra.mxu0 0
    %2244 = vmatprep.subr.bf16.mxu0 0
    %2245 = vmatpush1.bf16.msra.mxu0 0
    %2246 = vmatprep.subr.bf16.mxu0 0
    %2247 = vmatpush1.bf16.msra.mxu0 0
    %2248 = vmatprep.subr.bf16.mxu0 0
    %2249 = vmatpush1.bf16.msra.mxu0 0
    %2250 = vmatprep.subr.bf16.mxu0 0
    %2251 = vmatpush1.bf16.msra.mxu0 0
    %2252 = vmatprep.subr.bf16.mxu0 0
    %2253 = vmatpush1.bf16.msra.mxu0 0
    %2254 = vmatprep.subr.bf16.mxu0 0
    %2255 = vmatpush1.bf16.msra.mxu0 0
    %2256 = vmatprep.subr.bf16.mxu0 0
    %2257 = vmatpush1.bf16.msra.mxu0 0
    %2258 = vmatprep.subr.bf16.mxu0 0
    %2259 = vmatpush1.bf16.msra.mxu0 0
    %2260 = vmatprep.subr.bf16.mxu0 0
    %2261 = vmatpush1.bf16.msra.mxu0 0
    %2262 = vmatprep.subr.bf16.mxu0 0
    %2263 = vmatpush1.bf16.msra.mxu0 0
    %2264 = vmatprep.subr.bf16.mxu0 0
    %2265 = vmatpush1.bf16.msra.mxu0 0
    %2266 = vmatprep.mubr.bf16.mxu0 0
    %2267 = vmatmul.mubr.bf16.gmra.mrb[0].mxu0 %v186
    %v2268 = vpop.f32.mrb[0].mxu0
    %v2269 = vadd.f32 0.0, %v2268
    %v2270 = vpop.f32.mrb[0].mxu0
    %v2271 = vadd.f32 0.0, %v2270
    %v2272 = vpop.f32.mrb[0].mxu0
    %v2273 = vpop.f32.mrb[0].mxu0
    %2274 = vdwg.mxu0
    %2275 = vmatprep.subr.bf16.mxu0 %v2182
    %2276 = vmatpush1.bf16.msra.mxu0 %v2181
    %2277 = vmatprep.subr.bf16.mxu0 %v2191
    %2278 = vmatpush1.bf16.msra.mxu0 %v2188
    %2279 = vmatprep.subr.bf16.mxu0 0
    %2280 = vmatpush1.bf16.msra.mxu0 0
    %2281 = vmatprep.subr.bf16.mxu0 0
    %2282 = vmatpush1.bf16.msra.mxu0 0
    %2283 = vmatprep.subr.bf16.mxu0 0
    %2284 = vmatpush1.bf16.msra.mxu0 0
    %2285 = vmatprep.subr.bf16.mxu0 0
    %2286 = vmatpush1.bf16.msra.mxu0 0
    %2287 = vmatprep.subr.bf16.mxu0 0
    %2288 = vmatpush1.bf16.msra.mxu0 0
    %2289 = vmatprep.subr.bf16.mxu0 0
    %2290 = vmatpush1.bf16.msra.mxu0 0
    %2291 = vmatprep.subr.bf16.mxu0 0
    %2292 = vmatpush1.bf16.msra.mxu0 0
    %2293 = vmatprep.subr.bf16.mxu0 0
    %2294 = vmatpush1.bf16.msra.mxu0 0
    %2295 = vmatprep.subr.bf16.mxu0 0
    %2296 = vmatpush1.bf16.msra.mxu0 0
    %2297 = vmatprep.subr.bf16.mxu0 0
    %2298 = vmatpush1.bf16.msra.mxu0 0
    %2299 = vmatprep.subr.bf16.mxu0 0
    %2300 = vmatpush1.bf16.msra.mxu0 0
    %2301 = vmatprep.subr.bf16.mxu0 0
    %2302 = vmatpush1.bf16.msra.mxu0 0
    %2303 = vmatprep.subr.bf16.mxu0 0
    %2304 = vmatpush1.bf16.msra.mxu0 0
    %2305 = vmatprep.subr.bf16.mxu0 0
    %2306 = vmatpush1.bf16.msra.mxu0 0
    %2307 = vmatprep.mubr.bf16.mxu0 0
    %2308 = vmatmul.mubr.bf16.gmra.mrb[0].mxu0 %v230
    %v2309 = vpop.f32.mrb[0].mxu0
    %v2310 = vadd.f32 0.0, %v2309
    %v2311 = vpop.f32.mrb[0].mxu0
    %v2312 = vadd.f32 0.0, %v2311
    %v2313 = vpop.f32.mrb[0].mxu0
    %v2314 = vpop.f32.mrb[0].mxu0
    %2315 = vdwg.mxu0
    %2316 = vmatprep.subr.bf16.mxu0 %v2182
    %2317 = vmatpush1.bf16.msra.mxu0 %v2181
    %2318 = vmatprep.subr.bf16.mxu0 %v2191
    %2319 = vmatpush1.bf16.msra.mxu0 %v2188
    %2320 = vmatprep.subr.bf16.mxu0 0
    %2321 = vmatpush1.bf16.msra.mxu0 0
    %2322 = vmatprep.subr.bf16.mxu0 0
    %2323 = vmatpush1.bf16.msra.mxu0 0
    %2324 = vmatprep.subr.bf16.mxu0 0
    %2325 = vmatpush1.bf16.msra.mxu0 0
    %2326 = vmatprep.subr.bf16.mxu0 0
    %2327 = vmatpush1.bf16.msra.mxu0 0
    %2328 = vmatprep.subr.bf16.mxu0 0
    %2329 = vmatpush1.bf16.msra.mxu0 0
    %2330 = vmatprep.subr.bf16.mxu0 0
    %2331 = vmatpush1.bf16.msra.mxu0 0
    %2332 = vmatprep.subr.bf16.mxu0 0
    %2333 = vmatpush1.bf16.msra.mxu0 0
    %2334 = vmatprep.subr.bf16.mxu0 0
    %2335 = vmatpush1.bf16.msra.mxu0 0
    %2336 = vmatprep.subr.bf16.mxu0 0
    %2337 = vmatpush1.bf16.msra.mxu0 0
    %2338 = vmatprep.subr.bf16.mxu0 0
    %2339 = vmatpush1.bf16.msra.mxu0 0
    %2340 = vmatprep.subr.bf16.mxu0 0
    %2341 = vmatpush1.bf16.msra.mxu0 0
    %2342 = vmatprep.subr.bf16.mxu0 0
    %2343 = vmatpush1.bf16.msra.mxu0 0
    %2344 = vmatprep.subr.bf16.mxu0 0
    %2345 = vmatpush1.bf16.msra.mxu0 0
    %2346 = vmatprep.subr.bf16.mxu0 0
    %2347 = vmatpush1.bf16.msra.mxu0 0
    %2348 = vmatprep.mubr.bf16.mxu0 0
    %2349 = vmatmul.mubr.bf16.gmra.mrb[0].mxu0 %v274
    %v2350 = vpop.f32.mrb[0].mxu0
    %v2351 = vadd.f32 0.0, %v2350
    %v2352 = vpop.f32.mrb[0].mxu0
    %v2353 = vadd.f32 0.0, %v2352
    %v2354 = vpop.f32.mrb[0].mxu0
    %v2355 = vpop.f32.mrb[0].mxu0
    %2356 = vdwg.mxu0
    %2357 = vmatprep.subr.bf16.mxu0 %v2182
    %2358 = vmatpush1.bf16.msra.mxu0 %v2181
    %2359 = vmatprep.subr.bf16.mxu0 %v2191
    %2360 = vmatpush1.bf16.msra.mxu0 %v2188
    %2361 = vmatprep.subr.bf16.mxu0 0
    %2362 = vmatpush1.bf16.msra.mxu0 0
    %2363 = vmatprep.subr.bf16.mxu0 0
    %2364 = vmatpush1.bf16.msra.mxu0 0
    %2365 = vmatprep.subr.bf16.mxu0 0
    %2366 = vmatpush1.bf16.msra.mxu0 0
    %2367 = vmatprep.subr.bf16.mxu0 0
    %2368 = vmatpush1.bf16.msra.mxu0 0
    %2369 = vmatprep.subr.bf16.mxu0 0
    %2370 = vmatpush1.bf16.msra.mxu0 0
    %2371 = vmatprep.subr.bf16.mxu0 0
    %2372 = vmatpush1.bf16.msra.mxu0 0
    %2373 = vmatprep.subr.bf16.mxu0 0
    %2374 = vmatpush1.bf16.msra.mxu0 0
    %2375 = vmatprep.subr.bf16.mxu0 0
    %2376 = vmatpush1.bf16.msra.mxu0 0
    %2377 = vmatprep.subr.bf16.mxu0 0
    %2378 = vmatpush1.bf16.msra.mxu0 0
    %2379 = vmatprep.subr.bf16.mxu0 0
    %2380 = vmatpush1.bf16.msra.mxu0 0
    %2381 = vmatprep.subr.bf16.mxu0 0
    %2382 = vmatpush1.bf16.msra.mxu0 0
    %2383 = vmatprep.subr.bf16.mxu0 0
    %2384 = vmatpush1.bf16.msra.mxu0 0
    %2385 = vmatprep.subr.bf16.mxu0 0
    %2386 = vmatpush1.bf16.msra.mxu0 0
    %2387 = vmatprep.subr.bf16.mxu0 0
    %2388 = vmatpush1.bf16.msra.mxu0 0
    %2389 = vmatprep.mubr.bf16.mxu0 0
    %2390 = vmatmul.mubr.bf16.gmra.mrb[0].mxu0 %v318
    %v2391 = vpop.f32.mrb[0].mxu0
    %v2392 = vadd.f32 0.0, %v2391
    %v2393 = vpop.f32.mrb[0].mxu0
    %v2394 = vadd.f32 0.0, %v2393
    %v2395 = vpop.f32.mrb[0].mxu0
    %v2396 = vpop.f32.mrb[0].mxu0
    %2397 = vdwg.mxu0
    %2398 = vmatprep.subr.bf16.mxu0 %v2182
    %2399 = vmatpush1.bf16.msra.mxu0 %v2181
    %2400 = vmatprep.subr.bf16.mxu0 %v2191
    %2401 = vmatpush1.bf16.msra.mxu0 %v2188
    %2402 = vmatprep.subr.bf16.mxu0 0
    %2403 = vmatpush1.bf16.msra.mxu0 0
    %2404 = vmatprep.subr.bf16.mxu0 0
    %2405 = vmatpush1.bf16.msra.mxu0 0
    %2406 = vmatprep.subr.bf16.mxu0 0
    %2407 = vmatpush1.bf16.msra.mxu0 0
    %2408 = vmatprep.subr.bf16.mxu0 0
    %2409 = vmatpush1.bf16.msra.mxu0 0
    %2410 = vmatprep.subr.bf16.mxu0 0
    %2411 = vmatpush1.bf16.msra.mxu0 0
    %2412 = vmatprep.subr.bf16.mxu0 0
    %2413 = vmatpush1.bf16.msra.mxu0 0
    %2414 = vmatprep.subr.bf16.mxu0 0
    %2415 = vmatpush1.bf16.msra.mxu0 0
    %2416 = vmatprep.subr.bf16.mxu0 0
    %2417 = vmatpush1.bf16.msra.mxu0 0
    %2418 = vmatprep.subr.bf16.mxu0 0
    %2419 = vmatpush1.bf16.msra.mxu0 0
    %2420 = vmatprep.subr.bf16.mxu0 0
    %2421 = vmatpush1.bf16.msra.mxu0 0
    %2422 = vmatprep.subr.bf16.mxu0 0
    %2423 = vmatpush1.bf16.msra.mxu0 0
    %2424 = vmatprep.subr.bf16.mxu0 0
    %2425 = vmatpush1.bf16.msra.mxu0 0
    %2426 = vmatprep.subr.bf16.mxu0 0
    %2427 = vmatpush1.bf16.msra.mxu0 0
    %2428 = vmatprep.subr.bf16.mxu0 0
    %2429 = vmatpush1.bf16.msra.mxu0 0
    %2430 = vmatprep.mubr.bf16.mxu0 0
    %2431 = vmatmul.mubr.bf16.gmra.mrb[0].mxu0 %v362
    %v2432 = vpop.f32.mrb[0].mxu0
    %v2433 = vadd.f32 0.0, %v2432
    %v2434 = vpop.f32.mrb[0].mxu0
    %v2435 = vadd.f32 0.0, %v2434
    %v2436 = vpop.f32.mrb[0].mxu0
    %v2437 = vpop.f32.mrb[0].mxu0
    %2438 = vdwg.mxu0
    %2439 = vmatprep.subr.bf16.mxu0 %v2182
    %2440 = vmatpush1.bf16.msra.mxu0 %v2181
    %2441 = vmatprep.subr.bf16.mxu0 %v2191
    %2442 = vmatpush1.bf16.msra.mxu0 %v2188
    %2443 = vmatprep.subr.bf16.mxu0 0
    %2444 = vmatpush1.bf16.msra.mxu0 0
    %2445 = vmatprep.subr.bf16.mxu0 0
    %2446 = vmatpush1.bf16.msra.mxu0 0
    %2447 = vmatprep.subr.bf16.mxu0 0
    %2448 = vmatpush1.bf16.msra.mxu0 0
    %2449 = vmatprep.subr.bf16.mxu0 0
    %2450 = vmatpush1.bf16.msra.mxu0 0
    %2451 = vmatprep.subr.bf16.mxu0 0
    %2452 = vmatpush1.bf16.msra.mxu0 0
    %2453 = vmatprep.subr.bf16.mxu0 0
    %2454 = vmatpush1.bf16.msra.mxu0 0
    %2455 = vmatprep.subr.bf16.mxu0 0
    %2456 = vmatpush1.bf16.msra.mxu0 0
    %2457 = vmatprep.subr.bf16.mxu0 0
    %2458 = vmatpush1.bf16.msra.mxu0 0
    %2459 = vmatprep.subr.bf16.mxu0 0
    %2460 = vmatpush1.bf16.msra.mxu0 0
    %2461 = vmatprep.subr.bf16.mxu0 0
    %2462 = vmatpush1.bf16.msra.mxu0 0
    %2463 = vmatprep.subr.bf16.mxu0 0
    %2464 = vmatpush1.bf16.msra.mxu0 0
    %2465 = vmatprep.subr.bf16.mxu0 0
    %2466 = vmatpush1.bf16.msra.mxu0 0
    %2467 = vmatprep.subr.bf16.mxu0 0
    %2468 = vmatpush1.bf16.msra.mxu0 0
    %2469 = vmatprep.subr.bf16.mxu0 0
    %2470 = vmatpush1.bf16.msra.mxu0 0
    %2471 = vmatprep.mubr.bf16.mxu0 0
    %2472 = vmatmul.mubr.bf16.gmra.mrb[0].mxu0 %v406
    %v2473 = vpop.f32.mrb[0].mxu0
    %v2474 = vadd.f32 0.0, %v2473
    %v2475 = vpop.f32.mrb[0].mxu0
    %v2476 = vadd.f32 0.0, %v2475
    %v2477 = vpop.f32.mrb[0].mxu0
    %v2478 = vpop.f32.mrb[0].mxu0
    %2479 = vdwg.mxu0
    %2480 = vmatprep.subr.bf16.mxu0 %v2182
    %2481 = vmatpush1.bf16.msra.mxu0 %v2181
    %2482 = vmatprep.subr.bf16.mxu0 %v2191
    %2483 = vmatpush1.bf16.msra.mxu0 %v2188
    %2484 = vmatprep.subr.bf16.mxu0 0
    %2485 = vmatpush1.bf16.msra.mxu0 0
    %2486 = vmatprep.subr.bf16.mxu0 0
    %2487 = vmatpush1.bf16.msra.mxu0 0
    %2488 = vmatprep.subr.bf16.mxu0 0
    %2489 = vmatpush1.bf16.msra.mxu0 0
    %2490 = vmatprep.subr.bf16.mxu0 0
    %2491 = vmatpush1.bf16.msra.mxu0 0
    %2492 = vmatprep.subr.bf16.mxu0 0
    %2493 = vmatpush1.bf16.msra.mxu0 0
    %2494 = vmatprep.subr.bf16.mxu0 0
    %2495 = vmatpush1.bf16.msra.mxu0 0
    %2496 = vmatprep.subr.bf16.mxu0 0
    %2497 = vmatpush1.bf16.msra.mxu0 0
    %2498 = vmatprep.subr.bf16.mxu0 0
    %2499 = vmatpush1.bf16.msra.mxu0 0
    %2500 = vmatprep.subr.bf16.mxu0 0
    %2501 = vmatpush1.bf16.msra.mxu0 0
    %2502 = vmatprep.subr.bf16.mxu0 0
    %2503 = vmatpush1.bf16.msra.mxu0 0
    %2504 = vmatprep.subr.bf16.mxu0 0
    %2505 = vmatpush1.bf16.msra.mxu0 0
    %2506 = vmatprep.subr.bf16.mxu0 0
    %2507 = vmatpush1.bf16.msra.mxu0 0
    %2508 = vmatprep.subr.bf16.mxu0 0
    %2509 = vmatpush1.bf16.msra.mxu0 0
    %2510 = vmatprep.subr.bf16.mxu0 0
    %2511 = vmatpush1.bf16.msra.mxu0 0
    %2512 = vmatprep.mubr.bf16.mxu0 0
    %2513 = vmatmul.mubr.bf16.gmra.mrb[0].mxu0 %v450
    %v2514 = vpop.f32.mrb[0].mxu0
    %v2515 = vadd.f32 0.0, %v2514
    %v2516 = vpop.f32.mrb[0].mxu0
    %v2517 = vadd.f32 0.0, %v2516
    %v2518 = vpop.f32.mrb[0].mxu0
    %v2519 = vpop.f32.mrb[0].mxu0
    %2520 = vdwg.mxu0
    %2521 = vmatprep.subr.bf16.mxu0 %v2182
    %2522 = vmatpush1.bf16.msra.mxu0 %v2181
    %2523 = vmatprep.subr.bf16.mxu0 %v2191
    %2524 = vmatpush1.bf16.msra.mxu0 %v2188
    %2525 = vmatprep.subr.bf16.mxu0 0
    %2526 = vmatpush1.bf16.msra.mxu0 0
    %2527 = vmatprep.subr.bf16.mxu0 0
    %2528 = vmatpush1.bf16.msra.mxu0 0
    %2529 = vmatprep.subr.bf16.mxu0 0
    %2530 = vmatpush1.bf16.msra.mxu0 0
    %2531 = vmatprep.subr.bf16.mxu0 0
    %2532 = vmatpush1.bf16.msra.mxu0 0
    %2533 = vmatprep.subr.bf16.mxu0 0
    %2534 = vmatpush1.bf16.msra.mxu0 0
    %2535 = vmatprep.subr.bf16.mxu0 0
    %2536 = vmatpush1.bf16.msra.mxu0 0
    %2537 = vmatprep.subr.bf16.mxu0 0
    %2538 = vmatpush1.bf16.msra.mxu0 0
    %2539 = vmatprep.subr.bf16.mxu0 0
    %2540 = vmatpush1.bf16.msra.mxu0 0
    %2541 = vmatprep.subr.bf16.mxu0 0
    %2542 = vmatpush1.bf16.msra.mxu0 0
    %2543 = vmatprep.subr.bf16.mxu0 0
    %2544 = vmatpush1.bf16.msra.mxu0 0
    %2545 = vmatprep.subr.bf16.mxu0 0
    %2546 = vmatpush1.bf16.msra.mxu0 0
    %2547 = vmatprep.subr.bf16.mxu0 0
    %2548 = vmatpush1.bf16.msra.mxu0 0
    %2549 = vmatprep.subr.bf16.mxu0 0
    %2550 = vmatpush1.bf16.msra.mxu0 0
    %2551 = vmatprep.subr.bf16.mxu0 0
    %2552 = vmatpush1.bf16.msra.mxu0 0
    %2553 = vmatprep.mubr.bf16.mxu0 0
    %2554 = vmatmul.mubr.bf16.gmra.mrb[0].mxu0 %v494
    %v2555 = vpop.f32.mrb[0].mxu0
    %v2556 = vadd.f32 0.0, %v2555
    %v2557 = vpop.f32.mrb[0].mxu0
    %v2558 = vadd.f32 0.0, %v2557
    %v2559 = vpop.f32.mrb[0].mxu0
    %v2560 = vpop.f32.mrb[0].mxu0
    %2561 = vdwg.mxu0
    %2562 = vmatprep.subr.bf16.mxu0 %v2182
    %2563 = vmatpush1.bf16.msra.mxu0 %v2181
    %2564 = vmatprep.subr.bf16.mxu0 %v2191
    %2565 = vmatpush1.bf16.msra.mxu0 %v2188
    %2566 = vmatprep.subr.bf16.mxu0 0
    %2567 = vmatpush1.bf16.msra.mxu0 0
    %2568 = vmatprep.subr.bf16.mxu0 0
    %2569 = vmatpush1.bf16.msra.mxu0 0
    %2570 = vmatprep.subr.bf16.mxu0 0
    %2571 = vmatpush1.bf16.msra.mxu0 0
    %2572 = vmatprep.subr.bf16.mxu0 0
    %2573 = vmatpush1.bf16.msra.mxu0 0
    %2574 = vmatprep.subr.bf16.mxu0 0
    %2575 = vmatpush1.bf16.msra.mxu0 0
    %2576 = vmatprep.subr.bf16.mxu0 0
    %2577 = vmatpush1.bf16.msra.mxu0 0
    %2578 = vmatprep.subr.bf16.mxu0 0
    %2579 = vmatpush1.bf16.msra.mxu0 0
    %2580 = vmatprep.subr.bf16.mxu0 0
    %2581 = vmatpush1.bf16.msra.mxu0 0
    %2582 = vmatprep.subr.bf16.mxu0 0
    %2583 = vmatpush1.bf16.msra.mxu0 0
    %2584 = vmatprep.subr.bf16.mxu0 0
    %2585 = vmatpush1.bf16.msra.mxu0 0
    %2586 = vmatprep.subr.bf16.mxu0 0
    %2587 = vmatpush1.bf16.msra.mxu0 0
    %2588 = vmatprep.subr.bf16.mxu0 0
    %2589 = vmatpush1.bf16.msra.mxu0 0
    %2590 = vmatprep.subr.bf16.mxu0 0
    %2591 = vmatpush1.bf16.msra.mxu0 0
    %2592 = vmatprep.subr.bf16.mxu0 0
    %2593 = vmatpush1.bf16.msra.mxu0 0
    %2594 = vmatprep.mubr.bf16.mxu0 0
    %2595 = vmatmul.mubr.bf16.gmra.mrb[0].mxu0 %v538
    %v2596 = vpop.f32.mrb[0].mxu0
    %v2597 = vadd.f32 0.0, %v2596
    %v2598 = vpop.f32.mrb[0].mxu0
    %v2599 = vadd.f32 0.0, %v2598
    %v2600 = vpop.f32.mrb[0].mxu0
    %v2601 = vpop.f32.mrb[0].mxu0
    %2602 = vdwg.mxu0
    %2603 = vmatprep.subr.bf16.mxu0 %v2182
    %2604 = vmatpush1.bf16.msra.mxu0 %v2181
    %2605 = vmatprep.subr.bf16.mxu0 %v2191
    %2606 = vmatpush1.bf16.msra.mxu0 %v2188
    %2607 = vmatprep.subr.bf16.mxu0 0
    %2608 = vmatpush1.bf16.msra.mxu0 0
    %2609 = vmatprep.subr.bf16.mxu0 0
    %2610 = vmatpush1.bf16.msra.mxu0 0
    %2611 = vmatprep.subr.bf16.mxu0 0
    %2612 = vmatpush1.bf16.msra.mxu0 0
    %2613 = vmatprep.subr.bf16.mxu0 0
    %2614 = vmatpush1.bf16.msra.mxu0 0
    %2615 = vmatprep.subr.bf16.mxu0 0
    %2616 = vmatpush1.bf16.msra.mxu0 0
    %2617 = vmatprep.subr.bf16.mxu0 0
    %2618 = vmatpush1.bf16.msra.mxu0 0
    %2619 = vmatprep.subr.bf16.mxu0 0
    %2620 = vmatpush1.bf16.msra.mxu0 0
    %2621 = vmatprep.subr.bf16.mxu0 0
    %2622 = vmatpush1.bf16.msra.mxu0 0
    %2623 = vmatprep.subr.bf16.mxu0 0
    %2624 = vmatpush1.bf16.msra.mxu0 0
    %2625 = vmatprep.subr.bf16.mxu0 0
    %2626 = vmatpush1.bf16.msra.mxu0 0
    %2627 = vmatprep.subr.bf16.mxu0 0
    %2628 = vmatpush1.bf16.msra.mxu0 0
    %2629 = vmatprep.subr.bf16.mxu0 0
    %2630 = vmatpush1.bf16.msra.mxu0 0
    %2631 = vmatprep.subr.bf16.mxu0 0
    %2632 = vmatpush1.bf16.msra.mxu0 0
    %2633 = vmatprep.subr.bf16.mxu0 0
    %2634 = vmatpush1.bf16.msra.mxu0 0
    %2635 = vmatprep.mubr.bf16.mxu0 0
    %2636 = vmatmul.mubr.bf16.gmra.mrb[0].mxu0 %v582
    %v2637 = vpop.f32.mrb[0].mxu0
    %v2638 = vadd.f32 0.0, %v2637
    %v2639 = vpop.f32.mrb[0].mxu0
    %v2640 = vadd.f32 0.0, %v2639
    %v2641 = vpop.f32.mrb[0].mxu0
    %v2642 = vpop.f32.mrb[0].mxu0
    %2643 = vdwg.mxu0
    %2644 = vmatprep.subr.bf16.mxu0 %v2182
    %2645 = vmatpush1.bf16.msra.mxu0 %v2181
    %2646 = vmatprep.subr.bf16.mxu0 %v2191
    %2647 = vmatpush1.bf16.msra.mxu0 %v2188
    %2648 = vmatprep.subr.bf16.mxu0 0
    %2649 = vmatpush1.bf16.msra.mxu0 0
    %2650 = vmatprep.subr.bf16.mxu0 0
    %2651 = vmatpush1.bf16.msra.mxu0 0
    %2652 = vmatprep.subr.bf16.mxu0 0
    %2653 = vmatpush1.bf16.msra.mxu0 0
    %2654 = vmatprep.subr.bf16.mxu0 0
    %2655 = vmatpush1.bf16.msra.mxu0 0
    %2656 = vmatprep.subr.bf16.mxu0 0
    %2657 = vmatpush1.bf16.msra.mxu0 0
    %2658 = vmatprep.subr.bf16.mxu0 0
    %2659 = vmatpush1.bf16.msra.mxu0 0
    %2660 = vmatprep.subr.bf16.mxu0 0
    %2661 = vmatpush1.bf16.msra.mxu0 0
    %2662 = vmatprep.subr.bf16.mxu0 0
    %2663 = vmatpush1.bf16.msra.mxu0 0
    %2664 = vmatprep.subr.bf16.mxu0 0
    %2665 = vmatpush1.bf16.msra.mxu0 0
    %2666 = vmatprep.subr.bf16.mxu0 0
    %2667 = vmatpush1.bf16.msra.mxu0 0
    %2668 = vmatprep.subr.bf16.mxu0 0
    %2669 = vmatpush1.bf16.msra.mxu0 0
    %2670 = vmatprep.subr.bf16.mxu0 0
    %2671 = vmatpush1.bf16.msra.mxu0 0
    %2672 = vmatprep.subr.bf16.mxu0 0
    %2673 = vmatpush1.bf16.msra.mxu0 0
    %2674 = vmatprep.subr.bf16.mxu0 0
    %2675 = vmatpush1.bf16.msra.mxu0 0
    %2676 = vmatprep.mubr.bf16.mxu0 0
    %2677 = vmatmul.mubr.bf16.gmra.mrb[0].mxu0 %v626
    %v2678 = vpop.f32.mrb[0].mxu0
    %v2679 = vadd.f32 0.0, %v2678
    %v2680 = vpop.f32.mrb[0].mxu0
    %v2681 = vadd.f32 0.0, %v2680
    %v2682 = vpop.f32.mrb[0].mxu0
    %v2683 = vpop.f32.mrb[0].mxu0
    %2684 = vdwg.mxu0
    %2685 = vmatprep.subr.bf16.mxu0 %v2182
    %2686 = vmatpush1.bf16.msra.mxu0 %v2181
    %2687 = vmatprep.subr.bf16.mxu0 %v2191
    %2688 = vmatpush1.bf16.msra.mxu0 %v2188
    %2689 = vmatprep.subr.bf16.mxu0 0
    %2690 = vmatpush1.bf16.msra.mxu0 0
    %2691 = vmatprep.subr.bf16.mxu0 0
    %2692 = vmatpush1.bf16.msra.mxu0 0
    %2693 = vmatprep.subr.bf16.mxu0 0
    %2694 = vmatpush1.bf16.msra.mxu0 0
    %2695 = vmatprep.subr.bf16.mxu0 0
    %2696 = vmatpush1.bf16.msra.mxu0 0
    %2697 = vmatprep.subr.bf16.mxu0 0
    %2698 = vmatpush1.bf16.msra.mxu0 0
    %2699 = vmatprep.subr.bf16.mxu0 0
    %2700 = vmatpush1.bf16.msra.mxu0 0
    %2701 = vmatprep.subr.bf16.mxu0 0
    %2702 = vmatpush1.bf16.msra.mxu0 0
    %2703 = vmatprep.subr.bf16.mxu0 0
    %2704 = vmatpush1.bf16.msra.mxu0 0
    %2705 = vmatprep.subr.bf16.mxu0 0
    %2706 = vmatpush1.bf16.msra.mxu0 0
    %2707 = vmatprep.subr.bf16.mxu0 0
    %2708 = vmatpush1.bf16.msra.mxu0 0
    %2709 = vmatprep.subr.bf16.mxu0 0
    %2710 = vmatpush1.bf16.msra.mxu0 0
    %2711 = vmatprep.subr.bf16.mxu0 0
    %2712 = vmatpush1.bf16.msra.mxu0 0
    %2713 = vmatprep.subr.bf16.mxu0 0
    %2714 = vmatpush1.bf16.msra.mxu0 0
    %2715 = vmatprep.subr.bf16.mxu0 0
    %2716 = vmatpush1.bf16.msra.mxu0 0
    %2717 = vmatprep.mubr.bf16.mxu0 0
    %2718 = vmatmul.mubr.bf16.gmra.mrb[0].mxu0 %v670
    %v2719 = vpop.f32.mrb[0].mxu0
    %v2720 = vadd.f32 0.0, %v2719
    %v2721 = vpop.f32.mrb[0].mxu0
    %v2722 = vadd.f32 0.0, %v2721
    %v2723 = vpop.f32.mrb[0].mxu0
    %v2724 = vpop.f32.mrb[0].mxu0
    %2725 = vdwg.mxu0
    %2726 = vmatprep.subr.bf16.mxu0 %v2182
    %2727 = vmatpush1.bf16.msra.mxu0 %v2181
    %2728 = vmatprep.subr.bf16.mxu0 %v2191
    %2729 = vmatpush1.bf16.msra.mxu0 %v2188
    %2730 = vmatprep.subr.bf16.mxu0 0
    %2731 = vmatpush1.bf16.msra.mxu0 0
    %2732 = vmatprep.subr.bf16.mxu0 0
    %2733 = vmatpush1.bf16.msra.mxu0 0
    %2734 = vmatprep.subr.bf16.mxu0 0
    %2735 = vmatpush1.bf16.msra.mxu0 0
    %2736 = vmatprep.subr.bf16.mxu0 0
    %2737 = vmatpush1.bf16.msra.mxu0 0
    %2738 = vmatprep.subr.bf16.mxu0 0
    %2739 = vmatpush1.bf16.msra.mxu0 0
    %2740 = vmatprep.subr.bf16.mxu0 0
    %2741 = vmatpush1.bf16.msra.mxu0 0
    %2742 = vmatprep.subr.bf16.mxu0 0
    %2743 = vmatpush1.bf16.msra.mxu0 0
    %2744 = vmatprep.subr.bf16.mxu0 0
    %2745 = vmatpush1.bf16.msra.mxu0 0
    %2746 = vmatprep.subr.bf16.mxu0 0
    %2747 = vmatpush1.bf16.msra.mxu0 0
    %2748 = vmatprep.subr.bf16.mxu0 0
    %2749 = vmatpush1.bf16.msra.mxu0 0
    %2750 = vmatprep.subr.bf16.mxu0 0
    %2751 = vmatpush1.bf16.msra.mxu0 0
    %2752 = vmatprep.subr.bf16.mxu0 0
    %2753 = vmatpush1.bf16.msra.mxu0 0
    %2754 = vmatprep.subr.bf16.mxu0 0
    %2755 = vmatpush1.bf16.msra.mxu0 0
    %2756 = vmatprep.subr.bf16.mxu0 0
    %2757 = vmatpush1.bf16.msra.mxu0 0
    %2758 = vmatprep.mubr.bf16.mxu0 0
    %2759 = vmatmul.mubr.bf16.gmra.mrb[0].mxu0 %v714
    %v2760 = vpop.f32.mrb[0].mxu0
    %v2761 = vadd.f32 0.0, %v2760
    %v2762 = vpop.f32.mrb[0].mxu0
    %v2763 = vadd.f32 0.0, %v2762
    %v2764 = vpop.f32.mrb[0].mxu0
    %v2765 = vpop.f32.mrb[0].mxu0
    %2766 = vdwg.mxu0
    %2767 = vmatprep.subr.bf16.mxu0 %v2182
    %2768 = vmatpush1.bf16.msra.mxu0 %v2181
    %2769 = vmatprep.subr.bf16.mxu0 %v2191
    %2770 = vmatpush1.bf16.msra.mxu0 %v2188
    %2771 = vmatprep.subr.bf16.mxu0 0
    %2772 = vmatpush1.bf16.msra.mxu0 0
    %2773 = vmatprep.subr.bf16.mxu0 0
    %2774 = vmatpush1.bf16.msra.mxu0 0
    %2775 = vmatprep.subr.bf16.mxu0 0
    %2776 = vmatpush1.bf16.msra.mxu0 0
    %2777 = vmatprep.subr.bf16.mxu0 0
    %2778 = vmatpush1.bf16.msra.mxu0 0
    %2779 = vmatprep.subr.bf16.mxu0 0
    %2780 = vmatpush1.bf16.msra.mxu0 0
    %2781 = vmatprep.subr.bf16.mxu0 0
    %2782 = vmatpush1.bf16.msra.mxu0 0
    %2783 = vmatprep.subr.bf16.mxu0 0
    %2784 = vmatpush1.bf16.msra.mxu0 0
    %2785 = vmatprep.subr.bf16.mxu0 0
    %2786 = vmatpush1.bf16.msra.mxu0 0
    %2787 = vmatprep.subr.bf16.mxu0 0
    %2788 = vmatpush1.bf16.msra.mxu0 0
    %2789 = vmatprep.subr.bf16.mxu0 0
    %2790 = vmatpush1.bf16.msra.mxu0 0
    %2791 = vmatprep.subr.bf16.mxu0 0
    %2792 = vmatpush1.bf16.msra.mxu0 0
    %2793 = vmatprep.subr.bf16.mxu0 0
    %2794 = vmatpush1.bf16.msra.mxu0 0
    %2795 = vmatprep.subr.bf16.mxu0 0
    %2796 = vmatpush1.bf16.msra.mxu0 0
    %2797 = vmatprep.subr.bf16.mxu0 0
    %2798 = vmatpush1.bf16.msra.mxu0 0
    %2799 = vmatprep.mubr.bf16.mxu0 0
    %2800 = vmatmul.mubr.bf16.gmra.mrb[0].mxu0 %v758
    %v2801 = vpop.f32.mrb[0].mxu0
    %v2802 = vadd.f32 0.0, %v2801
    %v2803 = vpop.f32.mrb[0].mxu0
    %v2804 = vadd.f32 0.0, %v2803
    %v2805 = vpop.f32.mrb[0].mxu0
    %v2806 = vpop.f32.mrb[0].mxu0
    %2807 = vdwg.mxu0
    %2808 = vmatprep.subr.bf16.mxu0 %v2182
    %2809 = vmatpush1.bf16.msra.mxu0 %v2181
    %2810 = vmatprep.subr.bf16.mxu0 %v2191
    %2811 = vmatpush1.bf16.msra.mxu0 %v2188
    %2812 = vmatprep.subr.bf16.mxu0 0
    %2813 = vmatpush1.bf16.msra.mxu0 0
    %2814 = vmatprep.subr.bf16.mxu0 0
    %2815 = vmatpush1.bf16.msra.mxu0 0
    %2816 = vmatprep.subr.bf16.mxu0 0
    %2817 = vmatpush1.bf16.msra.mxu0 0
    %2818 = vmatprep.subr.bf16.mxu0 0
    %2819 = vmatpush1.bf16.msra.mxu0 0
    %2820 = vmatprep.subr.bf16.mxu0 0
    %2821 = vmatpush1.bf16.msra.mxu0 0
    %2822 = vmatprep.subr.bf16.mxu0 0
    %2823 = vmatpush1.bf16.msra.mxu0 0
    %2824 = vmatprep.subr.bf16.mxu0 0
    %2825 = vmatpush1.bf16.msra.mxu0 0
    %2826 = vmatprep.subr.bf16.mxu0 0
    %2827 = vmatpush1.bf16.msra.mxu0 0
    %2828 = vmatprep.subr.bf16.mxu0 0
    %2829 = vmatpush1.bf16.msra.mxu0 0
    %2830 = vmatprep.subr.bf16.mxu0 0
    %2831 = vmatpush1.bf16.msra.mxu0 0
    %2832 = vmatprep.subr.bf16.mxu0 0
    %2833 = vmatpush1.bf16.msra.mxu0 0
    %2834 = vmatprep.subr.bf16.mxu0 0
    %2835 = vmatpush1.bf16.msra.mxu0 0
    %2836 = vmatprep.subr.bf16.mxu0 0
    %2837 = vmatpush1.bf16.msra.mxu0 0
    %2838 = vmatprep.subr.bf16.mxu0 0
    %2839 = vmatpush1.bf16.msra.mxu0 0
    %2840 = vmatprep.mubr.bf16.mxu0 0
    %2841 = vmatmul.mubr.bf16.gmra.mrb[0].mxu0 %v802
    %v2842 = vpop.f32.mrb[0].mxu0
    %v2843 = vadd.f32 0.0, %v2842
    %v2844 = vpop.f32.mrb[0].mxu0
    %v2845 = vadd.f32 0.0, %v2844
    %v2846 = vpop.f32.mrb[0].mxu0
    %v2847 = vpop.f32.mrb[0].mxu0
    %2848 = vdwg.mxu0
    %2849 = vmatprep.subr.bf16.mxu0 %v2182
    %2850 = vmatpush1.bf16.msra.mxu0 %v2181
    %2851 = vmatprep.subr.bf16.mxu0 %v2191
    %2852 = vmatpush1.bf16.msra.mxu0 %v2188
    %2853 = vmatprep.subr.bf16.mxu0 0
    %2854 = vmatpush1.bf16.msra.mxu0 0
    %2855 = vmatprep.subr.bf16.mxu0 0
    %2856 = vmatpush1.bf16.msra.mxu0 0
    %2857 = vmatprep.subr.bf16.mxu0 0
    %2858 = vmatpush1.bf16.msra.mxu0 0
    %2859 = vmatprep.subr.bf16.mxu0 0
    %2860 = vmatpush1.bf16.msra.mxu0 0
    %2861 = vmatprep.subr.bf16.mxu0 0
    %2862 = vmatpush1.bf16.msra.mxu0 0
    %2863 = vmatprep.subr.bf16.mxu0 0
    %2864 = vmatpush1.bf16.msra.mxu0 0
    %2865 = vmatprep.subr.bf16.mxu0 0
    %2866 = vmatpush1.bf16.msra.mxu0 0
    %2867 = vmatprep.subr.bf16.mxu0 0
    %2868 = vmatpush1.bf16.msra.mxu0 0
    %2869 = vmatprep.subr.bf16.mxu0 0
    %2870 = vmatpush1.bf16.msra.mxu0 0
    %2871 = vmatprep.subr.bf16.mxu0 0
    %2872 = vmatpush1.bf16.msra.mxu0 0
    %2873 = vmatprep.subr.bf16.mxu0 0
    %2874 = vmatpush1.bf16.msra.mxu0 0
    %2875 = vmatprep.subr.bf16.mxu0 0
    %2876 = vmatpush1.bf16.msra.mxu0 0
    %2877 = vmatprep.subr.bf16.mxu0 0
    %2878 = vmatpush1.bf16.msra.mxu0 0
    %2879 = vmatprep.subr.bf16.mxu0 0
    %2880 = vmatpush1.bf16.msra.mxu0 0
    %2881 = vmatprep.mubr.bf16.mxu0 0
    %2882 = vmatmul.mubr.bf16.gmra.mrb[0].mxu0 %v846
    %v2883 = vpop.f32.mrb[0].mxu0
    %v2884 = vadd.f32 0.0, %v2883
    %v2885 = vpop.f32.mrb[0].mxu0
    %v2886 = vadd.f32 0.0, %v2885
    %v2887 = vpop.f32.mrb[0].mxu0
    %v2888 = vpop.f32.mrb[0].mxu0
    %2889 = vdwg.mxu0
    %2890 = vmatprep.subr.bf16.mxu0 %v2182
    %2891 = vmatpush1.bf16.msra.mxu0 %v2181
    %2892 = vmatprep.subr.bf16.mxu0 %v2191
    %2893 = vmatpush1.bf16.msra.mxu0 %v2188
    %2894 = vmatprep.subr.bf16.mxu0 0
    %2895 = vmatpush1.bf16.msra.mxu0 0
    %2896 = vmatprep.subr.bf16.mxu0 0
    %2897 = vmatpush1.bf16.msra.mxu0 0
    %2898 = vmatprep.subr.bf16.mxu0 0
    %2899 = vmatpush1.bf16.msra.mxu0 0
    %2900 = vmatprep.subr.bf16.mxu0 0
    %2901 = vmatpush1.bf16.msra.mxu0 0
    %2902 = vmatprep.subr.bf16.mxu0 0
    %2903 = vmatpush1.bf16.msra.mxu0 0
    %2904 = vmatprep.subr.bf16.mxu0 0
    %2905 = vmatpush1.bf16.msra.mxu0 0
    %2906 = vmatprep.subr.bf16.mxu0 0
    %2907 = vmatpush1.bf16.msra.mxu0 0
    %2908 = vmatprep.subr.bf16.mxu0 0
    %2909 = vmatpush1.bf16.msra.mxu0 0
    %2910 = vmatprep.subr.bf16.mxu0 0
    %2911 = vmatpush1.bf16.msra.mxu0 0
    %2912 = vmatprep.subr.bf16.mxu0 0
    %2913 = vmatpush1.bf16.msra.mxu0 0
    %2914 = vmatprep.subr.bf16.mxu0 0
    %2915 = vmatpush1.bf16.msra.mxu0 0
    %2916 = vmatprep.subr.bf16.mxu0 0
    %2917 = vmatpush1.bf16.msra.mxu0 0
    %2918 = vmatprep.subr.bf16.mxu0 0
    %2919 = vmatpush1.bf16.msra.mxu0 0
    %2920 = vmatprep.subr.bf16.mxu0 0
    %2921 = vmatpush1.bf16.msra.mxu0 0
    %2922 = vmatprep.mubr.bf16.mxu0 0
    %2923 = vmatmul.mubr.bf16.gmra.mrb[0].mxu0 %v890
    %v2924 = vpop.f32.mrb[0].mxu0
    %v2925 = vadd.f32 0.0, %v2924
    %v2926 = vpop.f32.mrb[0].mxu0
    %v2927 = vadd.f32 0.0, %v2926
    %v2928 = vpop.f32.mrb[0].mxu0
    %v2929 = vpop.f32.mrb[0].mxu0
    %2930 = vdwg.mxu0
    %2931 = vmatprep.subr.bf16.mxu0 %v2182
    %2932 = vmatpush1.bf16.msra.mxu0 %v2181
    %2933 = vmatprep.subr.bf16.mxu0 %v2191
    %2934 = vmatpush1.bf16.msra.mxu0 %v2188
    %2935 = vmatprep.subr.bf16.mxu0 0
    %2936 = vmatpush1.bf16.msra.mxu0 0
    %2937 = vmatprep.subr.bf16.mxu0 0
    %2938 = vmatpush1.bf16.msra.mxu0 0
    %2939 = vmatprep.subr.bf16.mxu0 0
    %2940 = vmatpush1.bf16.msra.mxu0 0
    %2941 = vmatprep.subr.bf16.mxu0 0
    %2942 = vmatpush1.bf16.msra.mxu0 0
    %2943 = vmatprep.subr.bf16.mxu0 0
    %2944 = vmatpush1.bf16.msra.mxu0 0
    %2945 = vmatprep.subr.bf16.mxu0 0
    %2946 = vmatpush1.bf16.msra.mxu0 0
    %2947 = vmatprep.subr.bf16.mxu0 0
    %2948 = vmatpush1.bf16.msra.mxu0 0
    %2949 = vmatprep.subr.bf16.mxu0 0
    %2950 = vmatpush1.bf16.msra.mxu0 0
    %2951 = vmatprep.subr.bf16.mxu0 0
    %2952 = vmatpush1.bf16.msra.mxu0 0
    %2953 = vmatprep.subr.bf16.mxu0 0
    %2954 = vmatpush1.bf16.msra.mxu0 0
    %2955 = vmatprep.subr.bf16.mxu0 0
    %2956 = vmatpush1.bf16.msra.mxu0 0
    %2957 = vmatprep.subr.bf16.mxu0 0
    %2958 = vmatpush1.bf16.msra.mxu0 0
    %2959 = vmatprep.subr.bf16.mxu0 0
    %2960 = vmatpush1.bf16.msra.mxu0 0
    %2961 = vmatprep.subr.bf16.mxu0 0
    %2962 = vmatpush1.bf16.msra.mxu0 0
    %2963 = vmatprep.mubr.bf16.mxu0 0
    %2964 = vmatmul.mubr.bf16.gmra.mrb[0].mxu0 %v934
    %v2965 = vpop.f32.mrb[0].mxu0
    %v2966 = vadd.f32 0.0, %v2965
    %v2967 = vpop.f32.mrb[0].mxu0
    %v2968 = vadd.f32 0.0, %v2967
    %v2969 = vpop.f32.mrb[0].mxu0
    %v2970 = vpop.f32.mrb[0].mxu0
    %2971 = vdwg.mxu0
    %2972 = vmatprep.subr.bf16.mxu0 %v2182
    %2973 = vmatpush1.bf16.msra.mxu0 %v2181
    %2974 = vmatprep.subr.bf16.mxu0 %v2191
    %2975 = vmatpush1.bf16.msra.mxu0 %v2188
    %2976 = vmatprep.subr.bf16.mxu0 0
    %2977 = vmatpush1.bf16.msra.mxu0 0
    %2978 = vmatprep.subr.bf16.mxu0 0
    %2979 = vmatpush1.bf16.msra.mxu0 0
    %2980 = vmatprep.subr.bf16.mxu0 0
    %2981 = vmatpush1.bf16.msra.mxu0 0
    %2982 = vmatprep.subr.bf16.mxu0 0
    %2983 = vmatpush1.bf16.msra.mxu0 0
    %2984 = vmatprep.subr.bf16.mxu0 0
    %2985 = vmatpush1.bf16.msra.mxu0 0
    %2986 = vmatprep.subr.bf16.mxu0 0
    %2987 = vmatpush1.bf16.msra.mxu0 0
    %2988 = vmatprep.subr.bf16.mxu0 0
    %2989 = vmatpush1.bf16.msra.mxu0 0
    %2990 = vmatprep.subr.bf16.mxu0 0
    %2991 = vmatpush1.bf16.msra.mxu0 0
    %2992 = vmatprep.subr.bf16.mxu0 0
    %2993 = vmatpush1.bf16.msra.mxu0 0
    %2994 = vmatprep.subr.bf16.mxu0 0
    %2995 = vmatpush1.bf16.msra.mxu0 0
    %2996 = vmatprep.subr.bf16.mxu0 0
    %2997 = vmatpush1.bf16.msra.mxu0 0
    %2998 = vmatprep.subr.bf16.mxu0 0
    %2999 = vmatpush1.bf16.msra.mxu0 0
    %3000 = vmatprep.subr.bf16.mxu0 0
    %3001 = vmatpush1.bf16.msra.mxu0 0
    %3002 = vmatprep.subr.bf16.mxu0 0
    %3003 = vmatpush1.bf16.msra.mxu0 0
    %3004 = vmatprep.mubr.bf16.mxu0 0
    %3005 = vmatmul.mubr.bf16.gmra.mrb[0].mxu0 %v978
    %v3006 = vpop.f32.mrb[0].mxu0
    %v3007 = vadd.f32 0.0, %v3006
    %v3008 = vpop.f32.mrb[0].mxu0
    %v3009 = vadd.f32 0.0, %v3008
    %v3010 = vpop.f32.mrb[0].mxu0
    %v3011 = vpop.f32.mrb[0].mxu0
    %3012 = vdwg.mxu0
    %3013 = vmatprep.subr.bf16.mxu0 %v2182
    %3014 = vmatpush1.bf16.msra.mxu0 %v2181
    %3015 = vmatprep.subr.bf16.mxu0 %v2191
    %3016 = vmatpush1.bf16.msra.mxu0 %v2188
    %3017 = vmatprep.subr.bf16.mxu0 0
    %3018 = vmatpush1.bf16.msra.mxu0 0
    %3019 = vmatprep.subr.bf16.mxu0 0
    %3020 = vmatpush1.bf16.msra.mxu0 0
    %3021 = vmatprep.subr.bf16.mxu0 0
    %3022 = vmatpush1.bf16.msra.mxu0 0
    %3023 = vmatprep.subr.bf16.mxu0 0
    %3024 = vmatpush1.bf16.msra.mxu0 0
    %3025 = vmatprep.subr.bf16.mxu0 0
    %3026 = vmatpush1.bf16.msra.mxu0 0
    %3027 = vmatprep.subr.bf16.mxu0 0
    %3028 = vmatpush1.bf16.msra.mxu0 0
    %3029 = vmatprep.subr.bf16.mxu0 0
    %3030 = vmatpush1.bf16.msra.mxu0 0
    %3031 = vmatprep.subr.bf16.mxu0 0
    %3032 = vmatpush1.bf16.msra.mxu0 0
    %3033 = vmatprep.subr.bf16.mxu0 0
    %3034 = vmatpush1.bf16.msra.mxu0 0
    %3035 = vmatprep.subr.bf16.mxu0 0
    %3036 = vmatpush1.bf16.msra.mxu0 0
    %3037 = vmatprep.subr.bf16.mxu0 0
    %3038 = vmatpush1.bf16.msra.mxu0 0
    %3039 = vmatprep.subr.bf16.mxu0 0
    %3040 = vmatpush1.bf16.msra.mxu0 0
    %3041 = vmatprep.subr.bf16.mxu0 0
    %3042 = vmatpush1.bf16.msra.mxu0 0
    %3043 = vmatprep.subr.bf16.mxu0 0
    %3044 = vmatpush1.bf16.msra.mxu0 0
    %3045 = vmatprep.mubr.bf16.mxu0 0
    %3046 = vmatmul.mubr.bf16.gmra.mrb[0].mxu0 %v1022
    %v3047 = vpop.f32.mrb[0].mxu0
    %v3048 = vadd.f32 0.0, %v3047
    %v3049 = vpop.f32.mrb[0].mxu0
    %v3050 = vadd.f32 0.0, %v3049
    %v3051 = vpop.f32.mrb[0].mxu0
    %v3052 = vpop.f32.mrb[0].mxu0
    %3053 = vdwg.mxu0
    %3054 = vmatprep.subr.bf16.mxu0 %v2182
    %3055 = vmatpush1.bf16.msra.mxu0 %v2181
    %3056 = vmatprep.subr.bf16.mxu0 %v2191
    %3057 = vmatpush1.bf16.msra.mxu0 %v2188
    %3058 = vmatprep.subr.bf16.mxu0 0
    %3059 = vmatpush1.bf16.msra.mxu0 0
    %3060 = vmatprep.subr.bf16.mxu0 0
    %3061 = vmatpush1.bf16.msra.mxu0 0
    %3062 = vmatprep.subr.bf16.mxu0 0
    %3063 = vmatpush1.bf16.msra.mxu0 0
    %3064 = vmatprep.subr.bf16.mxu0 0
    %3065 = vmatpush1.bf16.msra.mxu0 0
    %3066 = vmatprep.subr.bf16.mxu0 0
    %3067 = vmatpush1.bf16.msra.mxu0 0
    %3068 = vmatprep.subr.bf16.mxu0 0
    %3069 = vmatpush1.bf16.msra.mxu0 0
    %3070 = vmatprep.subr.bf16.mxu0 0
    %3071 = vmatpush1.bf16.msra.mxu0 0
    %3072 = vmatprep.subr.bf16.mxu0 0
    %3073 = vmatpush1.bf16.msra.mxu0 0
    %3074 = vmatprep.subr.bf16.mxu0 0
    %3075 = vmatpush1.bf16.msra.mxu0 0
    %3076 = vmatprep.subr.bf16.mxu0 0
    %3077 = vmatpush1.bf16.msra.mxu0 0
    %3078 = vmatprep.subr.bf16.mxu0 0
    %3079 = vmatpush1.bf16.msra.mxu0 0
    %3080 = vmatprep.subr.bf16.mxu0 0
    %3081 = vmatpush1.bf16.msra.mxu0 0
    %3082 = vmatprep.subr.bf16.mxu0 0
    %3083 = vmatpush1.bf16.msra.mxu0 0
    %3084 = vmatprep.subr.bf16.mxu0 0
    %3085 = vmatpush1.bf16.msra.mxu0 0
    %3086 = vmatprep.mubr.bf16.mxu0 0
    %3087 = vmatmul.mubr.bf16.gmra.mrb[0].mxu0 %v1066
    %v3088 = vpop.f32.mrb[0].mxu0
    %v3089 = vadd.f32 0.0, %v3088
    %v3090 = vpop.f32.mrb[0].mxu0
    %v3091 = vadd.f32 0.0, %v3090
    %v3092 = vpop.f32.mrb[0].mxu0
    %v3093 = vpop.f32.mrb[0].mxu0
    %3094 = vdwg.mxu0
    %3095 = vmatprep.subr.bf16.mxu0 %v2182
    %3096 = vmatpush1.bf16.msra.mxu0 %v2181
    %3097 = vmatprep.subr.bf16.mxu0 %v2191
    %3098 = vmatpush1.bf16.msra.mxu0 %v2188
    %3099 = vmatprep.subr.bf16.mxu0 0
    %3100 = vmatpush1.bf16.msra.mxu0 0
    %3101 = vmatprep.subr.bf16.mxu0 0
    %3102 = vmatpush1.bf16.msra.mxu0 0
    %3103 = vmatprep.subr.bf16.mxu0 0
    %3104 = vmatpush1.bf16.msra.mxu0 0
    %3105 = vmatprep.subr.bf16.mxu0 0
    %3106 = vmatpush1.bf16.msra.mxu0 0
    %3107 = vmatprep.subr.bf16.mxu0 0
    %3108 = vmatpush1.bf16.msra.mxu0 0
    %3109 = vmatprep.subr.bf16.mxu0 0
    %3110 = vmatpush1.bf16.msra.mxu0 0
    %3111 = vmatprep.subr.bf16.mxu0 0
    %3112 = vmatpush1.bf16.msra.mxu0 0
    %3113 = vmatprep.subr.bf16.mxu0 0
    %3114 = vmatpush1.bf16.msra.mxu0 0
    %3115 = vmatprep.subr.bf16.mxu0 0
    %3116 = vmatpush1.bf16.msra.mxu0 0
    %3117 = vmatprep.subr.bf16.mxu0 0
    %3118 = vmatpush1.bf16.msra.mxu0 0
    %3119 = vmatprep.subr.bf16.mxu0 0
    %3120 = vmatpush1.bf16.msra.mxu0 0
    %3121 = vmatprep.subr.bf16.mxu0 0
    %3122 = vmatpush1.bf16.msra.mxu0 0
    %3123 = vmatprep.subr.bf16.mxu0 0
    %3124 = vmatpush1.bf16.msra.mxu0 0
    %3125 = vmatprep.subr.bf16.mxu0 0
    %3126 = vmatpush1.bf16.msra.mxu0 0
    %3127 = vmatprep.mubr.bf16.mxu0 0
    %3128 = vmatmul.mubr.bf16.gmra.mrb[0].mxu0 %v1110
    %v3129 = vpop.f32.mrb[0].mxu0
    %v3130 = vadd.f32 0.0, %v3129
    %v3131 = vpop.f32.mrb[0].mxu0
    %v3132 = vadd.f32 0.0, %v3131
    %v3133 = vpop.f32.mrb[0].mxu0
    %v3134 = vpop.f32.mrb[0].mxu0
    %3135 = vdwg.mxu0
    %v3137 = vsel %vm89, %v59, 0
    %3139 = vmatprep.subr.bf16.mxu0 %v2182
    %3140 = vmatpush1.bf16.msra.mxu0 %v2181
    %3141 = vmatprep.subr.bf16.mxu0 %v2191
    %3142 = vmatpush1.bf16.msra.mxu0 %v2188
    %3143 = vmatprep.subr.bf16.mxu0 0
    %3144 = vmatpush1.bf16.msra.mxu0 0
    %3145 = vmatprep.subr.bf16.mxu0 0
    %3146 = vmatpush1.bf16.msra.mxu0 0
    %3147 = vmatprep.subr.bf16.mxu0 0
    %3148 = vmatpush1.bf16.msra.mxu0 0
    %3149 = vmatprep.subr.bf16.mxu0 0
    %3150 = vmatpush1.bf16.msra.mxu0 0
    %3151 = vmatprep.subr.bf16.mxu0 0
    %3152 = vmatpush1.bf16.msra.mxu0 0
    %3153 = vmatprep.subr.bf16.mxu0 0
    %3154 = vmatpush1.bf16.msra.mxu0 0
    %3155 = vmatprep.subr.bf16.mxu0 0
    %3156 = vmatpush1.bf16.msra.mxu0 0
    %3157 = vmatprep.subr.bf16.mxu0 0
    %3158 = vmatpush1.bf16.msra.mxu0 0
    %3159 = vmatprep.subr.bf16.mxu0 0
    %3160 = vmatpush1.bf16.msra.mxu0 0
    %3161 = vmatprep.subr.bf16.mxu0 0
    %3162 = vmatpush1.bf16.msra.mxu0 0
    %3163 = vmatprep.subr.bf16.mxu0 0
    %3164 = vmatpush1.bf16.msra.mxu0 0
    %3165 = vmatprep.subr.bf16.mxu0 0
    %3166 = vmatpush1.bf16.msra.mxu0 0
    %3167 = vmatprep.subr.bf16.mxu0 0
    %3168 = vmatpush1.bf16.msra.mxu0 0
    %3169 = vmatprep.subr.bf16.mxu0 0
    %3170 = vmatpush1.bf16.msra.mxu0 0
    %3171 = vmatprep.mubr.bf16.mxu0 0
    %3172 = vmatmul.mubr.bf16.gmra.mrb[0].mxu0 %v3137
    %v3173 = vpop.f32.mrb[0].mxu0
    %v3174 = vadd.f32 0.0, %v3173
    %v3175 = vpop.f32.mrb[0].mxu0
    %v3176 = vadd.f32 0.0, %v3175
    %v3177 = vpop.f32.mrb[0].mxu0
    %v3178 = vpop.f32.mrb[0].mxu0
    %3179 = vdwg.mxu0
    %v3180 = vadd.f32 %v1215, %v2228
    %v3181 = vadd.f32 %v1217, %v2230
    %v3182 = vadd.f32 %v1256, %v2269
    %v3183 = vadd.f32 %v1258, %v2271
    %v3184 = vadd.f32 %v1297, %v2310
    %v3185 = vadd.f32 %v1299, %v2312
    %v3186 = vadd.f32 %v1338, %v2351
    %v3187 = vadd.f32 %v1340, %v2353
    %v3188 = vadd.f32 %v1379, %v2392
    %v3189 = vadd.f32 %v1381, %v2394
    %v3190 = vadd.f32 %v1420, %v2433
    %v3191 = vadd.f32 %v1422, %v2435
    %v3192 = vadd.f32 %v1461, %v2474
    %v3193 = vadd.f32 %v1463, %v2476
    %v3194 = vadd.f32 %v1502, %v2515
    %v3195 = vadd.f32 %v1504, %v2517
    %v3196 = vadd.f32 %v1543, %v2556
    %v3197 = vadd.f32 %v1545, %v2558
    %v3198 = vadd.f32 %v1584, %v2597
    %v3199 = vadd.f32 %v1586, %v2599
    %v3200 = vadd.f32 %v1625, %v2638
    %v3201 = vadd.f32 %v1627, %v2640
    %v3202 = vadd.f32 %v1666, %v2679
    %v3203 = vadd.f32 %v1668, %v2681
    %v3204 = vadd.f32 %v1707, %v2720
    %v3205 = vadd.f32 %v1709, %v2722
    %v3206 = vadd.f32 %v1748, %v2761
    %v3207 = vadd.f32 %v1750, %v2763
    %v3208 = vadd.f32 %v1789, %v2802
    %v3209 = vadd.f32 %v1791, %v2804
    %v3210 = vadd.f32 %v1830, %v2843
    %v3211 = vadd.f32 %v1832, %v2845
    %v3212 = vadd.f32 %v1871, %v2884
    %v3213 = vadd.f32 %v1873, %v2886
    %v3214 = vadd.f32 %v1912, %v2925
    %v3215 = vadd.f32 %v1914, %v2927
    %v3216 = vadd.f32 %v1953, %v2966
    %v3217 = vadd.f32 %v1955, %v2968
    %v3218 = vadd.f32 %v1994, %v3007
    %v3219 = vadd.f32 %v1996, %v3009
    %v3220 = vadd.f32 %v2035, %v3048
    %v3221 = vadd.f32 %v2037, %v3050
    %v3222 = vadd.f32 %v2076, %v3089
    %v3223 = vadd.f32 %v2078, %v3091
    %v3224 = vadd.f32 %v2117, %v3130
    %v3225 = vadd.f32 %v2119, %v3132
    %v3226 = vadd.f32 %v2158, %v3174
    %v3227 = vadd.f32 %v2160, %v3176
    %s3228 = scalar_lea.vmem %s1, 96
    %v3229 = vld [vmem:[%s3228] sm:$0xff]
    %v3230 = vld [vmem:[%s3228 + $0x8] sm:$0xff]
    %v3231 = vld [vmem:[%s3228 + $0x10] sm:$0xff]
    %v3232 = vld [vmem:[%s3228 + $0x18] sm:$0x33]
    %v3237 = vunpack.c.l.b16 %v3229
    %v3238 = vunpack.c.h.b16 %v3229
    %v3239 = vunpack.c.l.b16 %v3230
    %v3240 = vunpack.c.h.b16 %v3230
    %v3241 = vunpack.c.l.b16 %v3231
    %v3242 = vunpack.c.h.b16 %v3231
    %v3243 = vunpack.c.l.b16 %v3232
    %v3244 = vunpack.c.h.b16 %v3232
    %v3245 = vpack.c.b16 %v3239, %v3237
    %v3246 = vpack.c.b16 %v3240, %v3238
    %v3247 = vpack.c.b16 %v3243, %v3241
    %v3248 = vpack.c.b16 %v3244, %v3242
    %v3252 = vsel %vm93, %v3247, 0
    %v3255 = vsel %vm93, %v3248, 0
    %3257 = vmatprep.subr.bf16.mxu0 %v3246
    %3258 = vmatpush1.bf16.msra.mxu0 %v3245
    %3259 = vmatprep.subr.bf16.mxu0 %v3255
    %3260 = vmatpush1.bf16.msra.mxu0 %v3252
    %3261 = vmatprep.subr.bf16.mxu0 0
    %3262 = vmatpush1.bf16.msra.mxu0 0
    %3263 = vmatprep.subr.bf16.mxu0 0
    %3264 = vmatpush1.bf16.msra.mxu0 0
    %3265 = vmatprep.subr.bf16.mxu0 0
    %3266 = vmatpush1.bf16.msra.mxu0 0
    %3267 = vmatprep.subr.bf16.mxu0 0
    %3268 = vmatpush1.bf16.msra.mxu0 0
    %3269 = vmatprep.subr.bf16.mxu0 0
    %3270 = vmatpush1.bf16.msra.mxu0 0
    %3271 = vmatprep.subr.bf16.mxu0 0
    %3272 = vmatpush1.bf16.msra.mxu0 0
    %3273 = vmatprep.subr.bf16.mxu0 0
    %3274 = vmatpush1.bf16.msra.mxu0 0
    %3275 = vmatprep.subr.bf16.mxu0 0
    %3276 = vmatpush1.bf16.msra.mxu0 0
    %3277 = vmatprep.subr.bf16.mxu0 0
    %3278 = vmatpush1.bf16.msra.mxu0 0
    %3279 = vmatprep.subr.bf16.mxu0 0
    %3280 = vmatpush1.bf16.msra.mxu0 0
    %3281 = vmatprep.subr.bf16.mxu0 0
    %3282 = vmatpush1.bf16.msra.mxu0 0
    %3283 = vmatprep.subr.bf16.mxu0 0
    %3284 = vmatpush1.bf16.msra.mxu0 0
    %3285 = vmatprep.subr.bf16.mxu0 0
    %3286 = vmatpush1.bf16.msra.mxu0 0
    %3287 = vmatprep.subr.bf16.mxu0 0
    %3288 = vmatpush1.bf16.msra.mxu0 0
    %3289 = vmatprep.mubr.bf16.mxu0 0
    %3290 = vmatmul.mubr.bf16.gmra.mrb[0].mxu0 %v186
    %v3291 = vpop.f32.mrb[0].mxu0
    %v3292 = vadd.f32 0.0, %v3291
    %v3293 = vpop.f32.mrb[0].mxu0
    %v3294 = vadd.f32 0.0, %v3293
    %v3295 = vpop.f32.mrb[0].mxu0
    %v3296 = vpop.f32.mrb[0].mxu0
    %3297 = vdwg.mxu0
    %3298 = vmatprep.subr.bf16.mxu0 %v3246
    %3299 = vmatpush1.bf16.msra.mxu0 %v3245
    %3300 = vmatprep.subr.bf16.mxu0 %v3255
    %3301 = vmatpush1.bf16.msra.mxu0 %v3252
    %3302 = vmatprep.subr.bf16.mxu0 0
    %3303 = vmatpush1.bf16.msra.mxu0 0
    %3304 = vmatprep.subr.bf16.mxu0 0
    %3305 = vmatpush1.bf16.msra.mxu0 0
    %3306 = vmatprep.subr.bf16.mxu0 0
    %3307 = vmatpush1.bf16.msra.mxu0 0
    %3308 = vmatprep.subr.bf16.mxu0 0
    %3309 = vmatpush1.bf16.msra.mxu0 0
    %3310 = vmatprep.subr.bf16.mxu0 0
    %3311 = vmatpush1.bf16.msra.mxu0 0
    %3312 = vmatprep.subr.bf16.mxu0 0
    %3313 = vmatpush1.bf16.msra.mxu0 0
    %3314 = vmatprep.subr.bf16.mxu0 0
    %3315 = vmatpush1.bf16.msra.mxu0 0
    %3316 = vmatprep.subr.bf16.mxu0 0
    %3317 = vmatpush1.bf16.msra.mxu0 0
    %3318 = vmatprep.subr.bf16.mxu0 0
    %3319 = vmatpush1.bf16.msra.mxu0 0
    %3320 = vmatprep.subr.bf16.mxu0 0
    %3321 = vmatpush1.bf16.msra.mxu0 0
    %3322 = vmatprep.subr.bf16.mxu0 0
    %3323 = vmatpush1.bf16.msra.mxu0 0
    %3324 = vmatprep.subr.bf16.mxu0 0
    %3325 = vmatpush1.bf16.msra.mxu0 0
    %3326 = vmatprep.subr.bf16.mxu0 0
    %3327 = vmatpush1.bf16.msra.mxu0 0
    %3328 = vmatprep.subr.bf16.mxu0 0
    %3329 = vmatpush1.bf16.msra.mxu0 0
    %3330 = vmatprep.mubr.bf16.mxu0 0
    %3331 = vmatmul.mubr.bf16.gmra.mrb[0].mxu0 %v230
    %v3332 = vpop.f32.mrb[0].mxu0
    %v3333 = vadd.f32 0.0, %v3332
    %v3334 = vpop.f32.mrb[0].mxu0
    %v3335 = vadd.f32 0.0, %v3334
    %v3336 = vpop.f32.mrb[0].mxu0
    %v3337 = vpop.f32.mrb[0].mxu0
    %3338 = vdwg.mxu0
    %3339 = vmatprep.subr.bf16.mxu0 %v3246
    %3340 = vmatpush1.bf16.msra.mxu0 %v3245
    %3341 = vmatprep.subr.bf16.mxu0 %v3255
    %3342 = vmatpush1.bf16.msra.mxu0 %v3252
    %3343 = vmatprep.subr.bf16.mxu0 0
    %3344 = vmatpush1.bf16.msra.mxu0 0
    %3345 = vmatprep.subr.bf16.mxu0 0
    %3346 = vmatpush1.bf16.msra.mxu0 0
    %3347 = vmatprep.subr.bf16.mxu0 0
    %3348 = vmatpush1.bf16.msra.mxu0 0
    %3349 = vmatprep.subr.bf16.mxu0 0
    %3350 = vmatpush1.bf16.msra.mxu0 0
    %3351 = vmatprep.subr.bf16.mxu0 0
    %3352 = vmatpush1.bf16.msra.mxu0 0
    %3353 = vmatprep.subr.bf16.mxu0 0
    %3354 = vmatpush1.bf16.msra.mxu0 0
    %3355 = vmatprep.subr.bf16.mxu0 0
    %3356 = vmatpush1.bf16.msra.mxu0 0
    %3357 = vmatprep.subr.bf16.mxu0 0
    %3358 = vmatpush1.bf16.msra.mxu0 0
    %3359 = vmatprep.subr.bf16.mxu0 0
    %3360 = vmatpush1.bf16.msra.mxu0 0
    %3361 = vmatprep.subr.bf16.mxu0 0
    %3362 = vmatpush1.bf16.msra.mxu0 0
    %3363 = vmatprep.subr.bf16.mxu0 0
    %3364 = vmatpush1.bf16.msra.mxu0 0
    %3365 = vmatprep.subr.bf16.mxu0 0
    %3366 = vmatpush1.bf16.msra.mxu0 0
    %3367 = vmatprep.subr.bf16.mxu0 0
    %3368 = vmatpush1.bf16.msra.mxu0 0
    %3369 = vmatprep.subr.bf16.mxu0 0
    %3370 = vmatpush1.bf16.msra.mxu0 0
    %3371 = vmatprep.mubr.bf16.mxu0 0
    %3372 = vmatmul.mubr.bf16.gmra.mrb[0].mxu0 %v274
    %v3373 = vpop.f32.mrb[0].mxu0
    %v3374 = vadd.f32 0.0, %v3373
    %v3375 = vpop.f32.mrb[0].mxu0
    %v3376 = vadd.f32 0.0, %v3375
    %v3377 = vpop.f32.mrb[0].mxu0
    %v3378 = vpop.f32.mrb[0].mxu0
    %3379 = vdwg.mxu0
    %3380 = vmatprep.subr.bf16.mxu0 %v3246
    %3381 = vmatpush1.bf16.msra.mxu0 %v3245
    %3382 = vmatprep.subr.bf16.mxu0 %v3255
    %3383 = vmatpush1.bf16.msra.mxu0 %v3252
    %3384 = vmatprep.subr.bf16.mxu0 0
    %3385 = vmatpush1.bf16.msra.mxu0 0
    %3386 = vmatprep.subr.bf16.mxu0 0
    %3387 = vmatpush1.bf16.msra.mxu0 0
    %3388 = vmatprep.subr.bf16.mxu0 0
    %3389 = vmatpush1.bf16.msra.mxu0 0
    %3390 = vmatprep.subr.bf16.mxu0 0
    %3391 = vmatpush1.bf16.msra.mxu0 0
    %3392 = vmatprep.subr.bf16.mxu0 0
    %3393 = vmatpush1.bf16.msra.mxu0 0
    %3394 = vmatprep.subr.bf16.mxu0 0
    %3395 = vmatpush1.bf16.msra.mxu0 0
    %3396 = vmatprep.subr.bf16.mxu0 0
    %3397 = vmatpush1.bf16.msra.mxu0 0
    %3398 = vmatprep.subr.bf16.mxu0 0
    %3399 = vmatpush1.bf16.msra.mxu0 0
    %3400 = vmatprep.subr.bf16.mxu0 0
    %3401 = vmatpush1.bf16.msra.mxu0 0
    %3402 = vmatprep.subr.bf16.mxu0 0
    %3403 = vmatpush1.bf16.msra.mxu0 0
    %3404 = vmatprep.subr.bf16.mxu0 0
    %3405 = vmatpush1.bf16.msra.mxu0 0
    %3406 = vmatprep.subr.bf16.mxu0 0
    %3407 = vmatpush1.bf16.msra.mxu0 0
    %3408 = vmatprep.subr.bf16.mxu0 0
    %3409 = vmatpush1.bf16.msra.mxu0 0
    %3410 = vmatprep.subr.bf16.mxu0 0
    %3411 = vmatpush1.bf16.msra.mxu0 0
    %3412 = vmatprep.mubr.bf16.mxu0 0
    %3413 = vmatmul.mubr.bf16.gmra.mrb[0].mxu0 %v318
    %v3414 = vpop.f32.mrb[0].mxu0
    %v3415 = vadd.f32 0.0, %v3414
    %v3416 = vpop.f32.mrb[0].mxu0
    %v3417 = vadd.f32 0.0, %v3416
    %v3418 = vpop.f32.mrb[0].mxu0
    %v3419 = vpop.f32.mrb[0].mxu0
    %3420 = vdwg.mxu0
    %3421 = vmatprep.subr.bf16.mxu0 %v3246
    %3422 = vmatpush1.bf16.msra.mxu0 %v3245
    %3423 = vmatprep.subr.bf16.mxu0 %v3255
    %3424 = vmatpush1.bf16.msra.mxu0 %v3252
    %3425 = vmatprep.subr.bf16.mxu0 0
    %3426 = vmatpush1.bf16.msra.mxu0 0
    %3427 = vmatprep.subr.bf16.mxu0 0
    %3428 = vmatpush1.bf16.msra.mxu0 0
    %3429 = vmatprep.subr.bf16.mxu0 0
    %3430 = vmatpush1.bf16.msra.mxu0 0
    %3431 = vmatprep.subr.bf16.mxu0 0
    %3432 = vmatpush1.bf16.msra.mxu0 0
    %3433 = vmatprep.subr.bf16.mxu0 0
    %3434 = vmatpush1.bf16.msra.mxu0 0
    %3435 = vmatprep.subr.bf16.mxu0 0
    %3436 = vmatpush1.bf16.msra.mxu0 0
    %3437 = vmatprep.subr.bf16.mxu0 0
    %3438 = vmatpush1.bf16.msra.mxu0 0
    %3439 = vmatprep.subr.bf16.mxu0 0
    %3440 = vmatpush1.bf16.msra.mxu0 0
    %3441 = vmatprep.subr.bf16.mxu0 0
    %3442 = vmatpush1.bf16.msra.mxu0 0
    %3443 = vmatprep.subr.bf16.mxu0 0
    %3444 = vmatpush1.bf16.msra.mxu0 0
    %3445 = vmatprep.subr.bf16.mxu0 0
    %3446 = vmatpush1.bf16.msra.mxu0 0
    %3447 = vmatprep.subr.bf16.mxu0 0
    %3448 = vmatpush1.bf16.msra.mxu0 0
    %3449 = vmatprep.subr.bf16.mxu0 0
    %3450 = vmatpush1.bf16.msra.mxu0 0
    %3451 = vmatprep.subr.bf16.mxu0 0
    %3452 = vmatpush1.bf16.msra.mxu0 0
    %3453 = vmatprep.mubr.bf16.mxu0 0
    %3454 = vmatmul.mubr.bf16.gmra.mrb[0].mxu0 %v362
    %v3455 = vpop.f32.mrb[0].mxu0
    %v3456 = vadd.f32 0.0, %v3455
    %v3457 = vpop.f32.mrb[0].mxu0
    %v3458 = vadd.f32 0.0, %v3457
    %v3459 = vpop.f32.mrb[0].mxu0
    %v3460 = vpop.f32.mrb[0].mxu0
    %3461 = vdwg.mxu0
    %3462 = vmatprep.subr.bf16.mxu0 %v3246
    %3463 = vmatpush1.bf16.msra.mxu0 %v3245
    %3464 = vmatprep.subr.bf16.mxu0 %v3255
    %3465 = vmatpush1.bf16.msra.mxu0 %v3252
    %3466 = vmatprep.subr.bf16.mxu0 0
    %3467 = vmatpush1.bf16.msra.mxu0 0
    %3468 = vmatprep.subr.bf16.mxu0 0
    %3469 = vmatpush1.bf16.msra.mxu0 0
    %3470 = vmatprep.subr.bf16.mxu0 0
    %3471 = vmatpush1.bf16.msra.mxu0 0
    %3472 = vmatprep.subr.bf16.mxu0 0
    %3473 = vmatpush1.bf16.msra.mxu0 0
    %3474 = vmatprep.subr.bf16.mxu0 0
    %3475 = vmatpush1.bf16.msra.mxu0 0
    %3476 = vmatprep.subr.bf16.mxu0 0
    %3477 = vmatpush1.bf16.msra.mxu0 0
    %3478 = vmatprep.subr.bf16.mxu0 0
    %3479 = vmatpush1.bf16.msra.mxu0 0
    %3480 = vmatprep.subr.bf16.mxu0 0
    %3481 = vmatpush1.bf16.msra.mxu0 0
    %3482 = vmatprep.subr.bf16.mxu0 0
    %3483 = vmatpush1.bf16.msra.mxu0 0
    %3484 = vmatprep.subr.bf16.mxu0 0
    %3485 = vmatpush1.bf16.msra.mxu0 0
    %3486 = vmatprep.subr.bf16.mxu0 0
    %3487 = vmatpush1.bf16.msra.mxu0 0
    %3488 = vmatprep.subr.bf16.mxu0 0
    %3489 = vmatpush1.bf16.msra.mxu0 0
    %3490 = vmatprep.subr.bf16.mxu0 0
    %3491 = vmatpush1.bf16.msra.mxu0 0
    %3492 = vmatprep.subr.bf16.mxu0 0
    %3493 = vmatpush1.bf16.msra.mxu0 0
    %3494 = vmatprep.mubr.bf16.mxu0 0
    %3495 = vmatmul.mubr.bf16.gmra.mrb[0].mxu0 %v406
    %v3496 = vpop.f32.mrb[0].mxu0
    %v3497 = vadd.f32 0.0, %v3496
    %v3498 = vpop.f32.mrb[0].mxu0
    %v3499 = vadd.f32 0.0, %v3498
    %v3500 = vpop.f32.mrb[0].mxu0
    %v3501 = vpop.f32.mrb[0].mxu0
    %3502 = vdwg.mxu0
    %3503 = vmatprep.subr.bf16.mxu0 %v3246
    %3504 = vmatpush1.bf16.msra.mxu0 %v3245
    %3505 = vmatprep.subr.bf16.mxu0 %v3255
    %3506 = vmatpush1.bf16.msra.mxu0 %v3252
    %3507 = vmatprep.subr.bf16.mxu0 0
    %3508 = vmatpush1.bf16.msra.mxu0 0
    %3509 = vmatprep.subr.bf16.mxu0 0
    %3510 = vmatpush1.bf16.msra.mxu0 0
    %3511 = vmatprep.subr.bf16.mxu0 0
    %3512 = vmatpush1.bf16.msra.mxu0 0
    %3513 = vmatprep.subr.bf16.mxu0 0
    %3514 = vmatpush1.bf16.msra.mxu0 0
    %3515 = vmatprep.subr.bf16.mxu0 0
    %3516 = vmatpush1.bf16.msra.mxu0 0
    %3517 = vmatprep.subr.bf16.mxu0 0
    %3518 = vmatpush1.bf16.msra.mxu0 0
    %3519 = vmatprep.subr.bf16.mxu0 0
    %3520 = vmatpush1.bf16.msra.mxu0 0
    %3521 = vmatprep.subr.bf16.mxu0 0
    %3522 = vmatpush1.bf16.msra.mxu0 0
    %3523 = vmatprep.subr.bf16.mxu0 0
    %3524 = vmatpush1.bf16.msra.mxu0 0
    %3525 = vmatprep.subr.bf16.mxu0 0
    %3526 = vmatpush1.bf16.msra.mxu0 0
    %3527 = vmatprep.subr.bf16.mxu0 0
    %3528 = vmatpush1.bf16.msra.mxu0 0
    %3529 = vmatprep.subr.bf16.mxu0 0
    %3530 = vmatpush1.bf16.msra.mxu0 0
    %3531 = vmatprep.subr.bf16.mxu0 0
    %3532 = vmatpush1.bf16.msra.mxu0 0
    %3533 = vmatprep.subr.bf16.mxu0 0
    %3534 = vmatpush1.bf16.msra.mxu0 0
    %3535 = vmatprep.mubr.bf16.mxu0 0
    %3536 = vmatmul.mubr.bf16.gmra.mrb[0].mxu0 %v450
    %v3537 = vpop.f32.mrb[0].mxu0
    %v3538 = vadd.f32 0.0, %v3537
    %v3539 = vpop.f32.mrb[0].mxu0
    %v3540 = vadd.f32 0.0, %v3539
    %v3541 = vpop.f32.mrb[0].mxu0
    %v3542 = vpop.f32.mrb[0].mxu0
    %3543 = vdwg.mxu0
    %3544 = vmatprep.subr.bf16.mxu0 %v3246
    %3545 = vmatpush1.bf16.msra.mxu0 %v3245
    %3546 = vmatprep.subr.bf16.mxu0 %v3255
    %3547 = vmatpush1.bf16.msra.mxu0 %v3252
    %3548 = vmatprep.subr.bf16.mxu0 0
    %3549 = vmatpush1.bf16.msra.mxu0 0
    %3550 = vmatprep.subr.bf16.mxu0 0
    %3551 = vmatpush1.bf16.msra.mxu0 0
    %3552 = vmatprep.subr.bf16.mxu0 0
    %3553 = vmatpush1.bf16.msra.mxu0 0
    %3554 = vmatprep.subr.bf16.mxu0 0
    %3555 = vmatpush1.bf16.msra.mxu0 0
    %3556 = vmatprep.subr.bf16.mxu0 0
    %3557 = vmatpush1.bf16.msra.mxu0 0
    %3558 = vmatprep.subr.bf16.mxu0 0
    %3559 = vmatpush1.bf16.msra.mxu0 0
    %3560 = vmatprep.subr.bf16.mxu0 0
    %3561 = vmatpush1.bf16.msra.mxu0 0
    %3562 = vmatprep.subr.bf16.mxu0 0
    %3563 = vmatpush1.bf16.msra.mxu0 0
    %3564 = vmatprep.subr.bf16.mxu0 0
    %3565 = vmatpush1.bf16.msra.mxu0 0
    %3566 = vmatprep.subr.bf16.mxu0 0
    %3567 = vmatpush1.bf16.msra.mxu0 0
    %3568 = vmatprep.subr.bf16.mxu0 0
    %3569 = vmatpush1.bf16.msra.mxu0 0
    %3570 = vmatprep.subr.bf16.mxu0 0
    %3571 = vmatpush1.bf16.msra.mxu0 0
    %3572 = vmatprep.subr.bf16.mxu0 0
    %3573 = vmatpush1.bf16.msra.mxu0 0
    %3574 = vmatprep.subr.bf16.mxu0 0
    %3575 = vmatpush1.bf16.msra.mxu0 0
    %3576 = vmatprep.mubr.bf16.mxu0 0
    %3577 = vmatmul.mubr.bf16.gmra.mrb[0].mxu0 %v494
    %v3578 = vpop.f32.mrb[0].mxu0
    %v3579 = vadd.f32 0.0, %v3578
    %v3580 = vpop.f32.mrb[0].mxu0
    %v3581 = vadd.f32 0.0, %v3580
    %v3582 = vpop.f32.mrb[0].mxu0
    %v3583 = vpop.f32.mrb[0].mxu0
    %3584 = vdwg.mxu0
    %3585 = vmatprep.subr.bf16.mxu0 %v3246
    %3586 = vmatpush1.bf16.msra.mxu0 %v3245
    %3587 = vmatprep.subr.bf16.mxu0 %v3255
    %3588 = vmatpush1.bf16.msra.mxu0 %v3252
    %3589 = vmatprep.subr.bf16.mxu0 0
    %3590 = vmatpush1.bf16.msra.mxu0 0
    %3591 = vmatprep.subr.bf16.mxu0 0
    %3592 = vmatpush1.bf16.msra.mxu0 0
    %3593 = vmatprep.subr.bf16.mxu0 0
    %3594 = vmatpush1.bf16.msra.mxu0 0
    %3595 = vmatprep.subr.bf16.mxu0 0
    %3596 = vmatpush1.bf16.msra.mxu0 0
    %3597 = vmatprep.subr.bf16.mxu0 0
    %3598 = vmatpush1.bf16.msra.mxu0 0
    %3599 = vmatprep.subr.bf16.mxu0 0
    %3600 = vmatpush1.bf16.msra.mxu0 0
    %3601 = vmatprep.subr.bf16.mxu0 0
    %3602 = vmatpush1.bf16.msra.mxu0 0
    %3603 = vmatprep.subr.bf16.mxu0 0
    %3604 = vmatpush1.bf16.msra.mxu0 0
    %3605 = vmatprep.subr.bf16.mxu0 0
    %3606 = vmatpush1.bf16.msra.mxu0 0
    %3607 = vmatprep.subr.bf16.mxu0 0
    %3608 = vmatpush1.bf16.msra.mxu0 0
    %3609 = vmatprep.subr.bf16.mxu0 0
    %3610 = vmatpush1.bf16.msra.mxu0 0
    %3611 = vmatprep.subr.bf16.mxu0 0
    %3612 = vmatpush1.bf16.msra.mxu0 0
    %3613 = vmatprep.subr.bf16.mxu0 0
    %3614 = vmatpush1.bf16.msra.mxu0 0
    %3615 = vmatprep.subr.bf16.mxu0 0
    %3616 = vmatpush1.bf16.msra.mxu0 0
    %3617 = vmatprep.mubr.bf16.mxu0 0
    %3618 = vmatmul.mubr.bf16.gmra.mrb[0].mxu0 %v538
    %v3619 = vpop.f32.mrb[0].mxu0
    %v3620 = vadd.f32 0.0, %v3619
    %v3621 = vpop.f32.mrb[0].mxu0
    %v3622 = vadd.f32 0.0, %v3621
    %v3623 = vpop.f32.mrb[0].mxu0
    %v3624 = vpop.f32.mrb[0].mxu0
    %3625 = vdwg.mxu0
    %3626 = vmatprep.subr.bf16.mxu0 %v3246
    %3627 = vmatpush1.bf16.msra.mxu0 %v3245
    %3628 = vmatprep.subr.bf16.mxu0 %v3255
    %3629 = vmatpush1.bf16.msra.mxu0 %v3252
    %3630 = vmatprep.subr.bf16.mxu0 0
    %3631 = vmatpush1.bf16.msra.mxu0 0
    %3632 = vmatprep.subr.bf16.mxu0 0
    %3633 = vmatpush1.bf16.msra.mxu0 0
    %3634 = vmatprep.subr.bf16.mxu0 0
    %3635 = vmatpush1.bf16.msra.mxu0 0
    %3636 = vmatprep.subr.bf16.mxu0 0
    %3637 = vmatpush1.bf16.msra.mxu0 0
    %3638 = vmatprep.subr.bf16.mxu0 0
    %3639 = vmatpush1.bf16.msra.mxu0 0
    %3640 = vmatprep.subr.bf16.mxu0 0
    %3641 = vmatpush1.bf16.msra.mxu0 0
    %3642 = vmatprep.subr.bf16.mxu0 0
    %3643 = vmatpush1.bf16.msra.mxu0 0
    %3644 = vmatprep.subr.bf16.mxu0 0
    %3645 = vmatpush1.bf16.msra.mxu0 0
    %3646 = vmatprep.subr.bf16.mxu0 0
    %3647 = vmatpush1.bf16.msra.mxu0 0
    %3648 = vmatprep.subr.bf16.mxu0 0
    %3649 = vmatpush1.bf16.msra.mxu0 0
    %3650 = vmatprep.subr.bf16.mxu0 0
    %3651 = vmatpush1.bf16.msra.mxu0 0
    %3652 = vmatprep.subr.bf16.mxu0 0
    %3653 = vmatpush1.bf16.msra.mxu0 0
    %3654 = vmatprep.subr.bf16.mxu0 0
    %3655 = vmatpush1.bf16.msra.mxu0 0
    %3656 = vmatprep.subr.bf16.mxu0 0
    %3657 = vmatpush1.bf16.msra.mxu0 0
    %3658 = vmatprep.mubr.bf16.mxu0 0
    %3659 = vmatmul.mubr.bf16.gmra.mrb[0].mxu0 %v582
    %v3660 = vpop.f32.mrb[0].mxu0
    %v3661 = vadd.f32 0.0, %v3660
    %v3662 = vpop.f32.mrb[0].mxu0
    %v3663 = vadd.f32 0.0, %v3662
    %v3664 = vpop.f32.mrb[0].mxu0
    %v3665 = vpop.f32.mrb[0].mxu0
    %3666 = vdwg.mxu0
    %3667 = vmatprep.subr.bf16.mxu0 %v3246
    %3668 = vmatpush1.bf16.msra.mxu0 %v3245
    %3669 = vmatprep.subr.bf16.mxu0 %v3255
    %3670 = vmatpush1.bf16.msra.mxu0 %v3252
    %3671 = vmatprep.subr.bf16.mxu0 0
    %3672 = vmatpush1.bf16.msra.mxu0 0
    %3673 = vmatprep.subr.bf16.mxu0 0
    %3674 = vmatpush1.bf16.msra.mxu0 0
    %3675 = vmatprep.subr.bf16.mxu0 0
    %3676 = vmatpush1.bf16.msra.mxu0 0
    %3677 = vmatprep.subr.bf16.mxu0 0
    %3678 = vmatpush1.bf16.msra.mxu0 0
    %3679 = vmatprep.subr.bf16.mxu0 0
    %3680 = vmatpush1.bf16.msra.mxu0 0
    %3681 = vmatprep.subr.bf16.mxu0 0
    %3682 = vmatpush1.bf16.msra.mxu0 0
    %3683 = vmatprep.subr.bf16.mxu0 0
    %3684 = vmatpush1.bf16.msra.mxu0 0
    %3685 = vmatprep.subr.bf16.mxu0 0
    %3686 = vmatpush1.bf16.msra.mxu0 0
    %3687 = vmatprep.subr.bf16.mxu0 0
    %3688 = vmatpush1.bf16.msra.mxu0 0
    %3689 = vmatprep.subr.bf16.mxu0 0
    %3690 = vmatpush1.bf16.msra.mxu0 0
    %3691 = vmatprep.subr.bf16.mxu0 0
    %3692 = vmatpush1.bf16.msra.mxu0 0
    %3693 = vmatprep.subr.bf16.mxu0 0
    %3694 = vmatpush1.bf16.msra.mxu0 0
    %3695 = vmatprep.subr.bf16.mxu0 0
    %3696 = vmatpush1.bf16.msra.mxu0 0
    %3697 = vmatprep.subr.bf16.mxu0 0
    %3698 = vmatpush1.bf16.msra.mxu0 0
    %3699 = vmatprep.mubr.bf16.mxu0 0
    %3700 = vmatmul.mubr.bf16.gmra.mrb[0].mxu0 %v626
    %v3701 = vpop.f32.mrb[0].mxu0
    %v3702 = vadd.f32 0.0, %v3701
    %v3703 = vpop.f32.mrb[0].mxu0
    %v3704 = vadd.f32 0.0, %v3703
    %v3705 = vpop.f32.mrb[0].mxu0
    %v3706 = vpop.f32.mrb[0].mxu0
    %3707 = vdwg.mxu0
    %3708 = vmatprep.subr.bf16.mxu0 %v3246
    %3709 = vmatpush1.bf16.msra.mxu0 %v3245
    %3710 = vmatprep.subr.bf16.mxu0 %v3255
    %3711 = vmatpush1.bf16.msra.mxu0 %v3252
    %3712 = vmatprep.subr.bf16.mxu0 0
    %3713 = vmatpush1.bf16.msra.mxu0 0
    %3714 = vmatprep.subr.bf16.mxu0 0
    %3715 = vmatpush1.bf16.msra.mxu0 0
    %3716 = vmatprep.subr.bf16.mxu0 0
    %3717 = vmatpush1.bf16.msra.mxu0 0
    %3718 = vmatprep.subr.bf16.mxu0 0
    %3719 = vmatpush1.bf16.msra.mxu0 0
    %3720 = vmatprep.subr.bf16.mxu0 0
    %3721 = vmatpush1.bf16.msra.mxu0 0
    %3722 = vmatprep.subr.bf16.mxu0 0
    %3723 = vmatpush1.bf16.msra.mxu0 0
    %3724 = vmatprep.subr.bf16.mxu0 0
    %3725 = vmatpush1.bf16.msra.mxu0 0
    %3726 = vmatprep.subr.bf16.mxu0 0
    %3727 = vmatpush1.bf16.msra.mxu0 0
    %3728 = vmatprep.subr.bf16.mxu0 0
    %3729 = vmatpush1.bf16.msra.mxu0 0
    %3730 = vmatprep.subr.bf16.mxu0 0
    %3731 = vmatpush1.bf16.msra.mxu0 0
    %3732 = vmatprep.subr.bf16.mxu0 0
    %3733 = vmatpush1.bf16.msra.mxu0 0
    %3734 = vmatprep.subr.bf16.mxu0 0
    %3735 = vmatpush1.bf16.msra.mxu0 0
    %3736 = vmatprep.subr.bf16.mxu0 0
    %3737 = vmatpush1.bf16.msra.mxu0 0
    %3738 = vmatprep.subr.bf16.mxu0 0
    %3739 = vmatpush1.bf16.msra.mxu0 0
    %3740 = vmatprep.mubr.bf16.mxu0 0
    %3741 = vmatmul.mubr.bf16.gmra.mrb[0].mxu0 %v670
    %v3742 = vpop.f32.mrb[0].mxu0
    %v3743 = vadd.f32 0.0, %v3742
    %v3744 = vpop.f32.mrb[0].mxu0
    %v3745 = vadd.f32 0.0, %v3744
    %v3746 = vpop.f32.mrb[0].mxu0
    %v3747 = vpop.f32.mrb[0].mxu0
    %3748 = vdwg.mxu0
    %3749 = vmatprep.subr.bf16.mxu0 %v3246
    %3750 = vmatpush1.bf16.msra.mxu0 %v3245
    %3751 = vmatprep.subr.bf16.mxu0 %v3255
    %3752 = vmatpush1.bf16.msra.mxu0 %v3252
    %3753 = vmatprep.subr.bf16.mxu0 0
    %3754 = vmatpush1.bf16.msra.mxu0 0
    %3755 = vmatprep.subr.bf16.mxu0 0
    %3756 = vmatpush1.bf16.msra.mxu0 0
    %3757 = vmatprep.subr.bf16.mxu0 0
    %3758 = vmatpush1.bf16.msra.mxu0 0
    %3759 = vmatprep.subr.bf16.mxu0 0
    %3760 = vmatpush1.bf16.msra.mxu0 0
    %3761 = vmatprep.subr.bf16.mxu0 0
    %3762 = vmatpush1.bf16.msra.mxu0 0
    %3763 = vmatprep.subr.bf16.mxu0 0
    %3764 = vmatpush1.bf16.msra.mxu0 0
    %3765 = vmatprep.subr.bf16.mxu0 0
    %3766 = vmatpush1.bf16.msra.mxu0 0
    %3767 = vmatprep.subr.bf16.mxu0 0
    %3768 = vmatpush1.bf16.msra.mxu0 0
    %3769 = vmatprep.subr.bf16.mxu0 0
    %3770 = vmatpush1.bf16.msra.mxu0 0
    %3771 = vmatprep.subr.bf16.mxu0 0
    %3772 = vmatpush1.bf16.msra.mxu0 0
    %3773 = vmatprep.subr.bf16.mxu0 0
    %3774 = vmatpush1.bf16.msra.mxu0 0
    %3775 = vmatprep.subr.bf16.mxu0 0
    %3776 = vmatpush1.bf16.msra.mxu0 0
    %3777 = vmatprep.subr.bf16.mxu0 0
    %3778 = vmatpush1.bf16.msra.mxu0 0
    %3779 = vmatprep.subr.bf16.mxu0 0
    %3780 = vmatpush1.bf16.msra.mxu0 0
    %3781 = vmatprep.mubr.bf16.mxu0 0
    %3782 = vmatmul.mubr.bf16.gmra.mrb[0].mxu0 %v714
    %v3783 = vpop.f32.mrb[0].mxu0
    %v3784 = vadd.f32 0.0, %v3783
    %v3785 = vpop.f32.mrb[0].mxu0
    %v3786 = vadd.f32 0.0, %v3785
    %v3787 = vpop.f32.mrb[0].mxu0
    %v3788 = vpop.f32.mrb[0].mxu0
    %3789 = vdwg.mxu0
    %3790 = vmatprep.subr.bf16.mxu0 %v3246
    %3791 = vmatpush1.bf16.msra.mxu0 %v3245
    %3792 = vmatprep.subr.bf16.mxu0 %v3255
    %3793 = vmatpush1.bf16.msra.mxu0 %v3252
    %3794 = vmatprep.subr.bf16.mxu0 0
    %3795 = vmatpush1.bf16.msra.mxu0 0
    %3796 = vmatprep.subr.bf16.mxu0 0
    %3797 = vmatpush1.bf16.msra.mxu0 0
    %3798 = vmatprep.subr.bf16.mxu0 0
    %3799 = vmatpush1.bf16.msra.mxu0 0
    %3800 = vmatprep.subr.bf16.mxu0 0
    %3801 = vmatpush1.bf16.msra.mxu0 0
    %3802 = vmatprep.subr.bf16.mxu0 0
    %3803 = vmatpush1.bf16.msra.mxu0 0
    %3804 = vmatprep.subr.bf16.mxu0 0
    %3805 = vmatpush1.bf16.msra.mxu0 0
    %3806 = vmatprep.subr.bf16.mxu0 0
    %3807 = vmatpush1.bf16.msra.mxu0 0
    %3808 = vmatprep.subr.bf16.mxu0 0
    %3809 = vmatpush1.bf16.msra.mxu0 0
    %3810 = vmatprep.subr.bf16.mxu0 0
    %3811 = vmatpush1.bf16.msra.mxu0 0
    %3812 = vmatprep.subr.bf16.mxu0 0
    %3813 = vmatpush1.bf16.msra.mxu0 0
    %3814 = vmatprep.subr.bf16.mxu0 0
    %3815 = vmatpush1.bf16.msra.mxu0 0
    %3816 = vmatprep.subr.bf16.mxu0 0
    %3817 = vmatpush1.bf16.msra.mxu0 0
    %3818 = vmatprep.subr.bf16.mxu0 0
    %3819 = vmatpush1.bf16.msra.mxu0 0
    %3820 = vmatprep.subr.bf16.mxu0 0
    %3821 = vmatpush1.bf16.msra.mxu0 0
    %3822 = vmatprep.mubr.bf16.mxu0 0
    %3823 = vmatmul.mubr.bf16.gmra.mrb[0].mxu0 %v758
    %v3824 = vpop.f32.mrb[0].mxu0
    %v3825 = vadd.f32 0.0, %v3824
    %v3826 = vpop.f32.mrb[0].mxu0
    %v3827 = vadd.f32 0.0, %v3826
    %v3828 = vpop.f32.mrb[0].mxu0
    %v3829 = vpop.f32.mrb[0].mxu0
    %3830 = vdwg.mxu0
    %3831 = vmatprep.subr.bf16.mxu0 %v3246
    %3832 = vmatpush1.bf16.msra.mxu0 %v3245
    %3833 = vmatprep.subr.bf16.mxu0 %v3255
    %3834 = vmatpush1.bf16.msra.mxu0 %v3252
    %3835 = vmatprep.subr.bf16.mxu0 0
    %3836 = vmatpush1.bf16.msra.mxu0 0
    %3837 = vmatprep.subr.bf16.mxu0 0
    %3838 = vmatpush1.bf16.msra.mxu0 0
    %3839 = vmatprep.subr.bf16.mxu0 0
    %3840 = vmatpush1.bf16.msra.mxu0 0
    %3841 = vmatprep.subr.bf16.mxu0 0
    %3842 = vmatpush1.bf16.msra.mxu0 0
    %3843 = vmatprep.subr.bf16.mxu0 0
    %3844 = vmatpush1.bf16.msra.mxu0 0
    %3845 = vmatprep.subr.bf16.mxu0 0
    %3846 = vmatpush1.bf16.msra.mxu0 0
    %3847 = vmatprep.subr.bf16.mxu0 0
    %3848 = vmatpush1.bf16.msra.mxu0 0
    %3849 = vmatprep.subr.bf16.mxu0 0
    %3850 = vmatpush1.bf16.msra.mxu0 0
    %3851 = vmatprep.subr.bf16.mxu0 0
    %3852 = vmatpush1.bf16.msra.mxu0 0
    %3853 = vmatprep.subr.bf16.mxu0 0
    %3854 = vmatpush1.bf16.msra.mxu0 0
    %3855 = vmatprep.subr.bf16.mxu0 0
    %3856 = vmatpush1.bf16.msra.mxu0 0
    %3857 = vmatprep.subr.bf16.mxu0 0
    %3858 = vmatpush1.bf16.msra.mxu0 0
    %3859 = vmatprep.subr.bf16.mxu0 0
    %3860 = vmatpush1.bf16.msra.mxu0 0
    %3861 = vmatprep.subr.bf16.mxu0 0
    %3862 = vmatpush1.bf16.msra.mxu0 0
    %3863 = vmatprep.mubr.bf16.mxu0 0
    %3864 = vmatmul.mubr.bf16.gmra.mrb[0].mxu0 %v802
    %v3865 = vpop.f32.mrb[0].mxu0
    %v3866 = vadd.f32 0.0, %v3865
    %v3867 = vpop.f32.mrb[0].mxu0
    %v3868 = vadd.f32 0.0, %v3867
    %v3869 = vpop.f32.mrb[0].mxu0
    %v3870 = vpop.f32.mrb[0].mxu0
    %3871 = vdwg.mxu0
    %3872 = vmatprep.subr.bf16.mxu0 %v3246
    %3873 = vmatpush1.bf16.msra.mxu0 %v3245
    %3874 = vmatprep.subr.bf16.mxu0 %v3255
    %3875 = vmatpush1.bf16.msra.mxu0 %v3252
    %3876 = vmatprep.subr.bf16.mxu0 0
    %3877 = vmatpush1.bf16.msra.mxu0 0
    %3878 = vmatprep.subr.bf16.mxu0 0
    %3879 = vmatpush1.bf16.msra.mxu0 0
    %3880 = vmatprep.subr.bf16.mxu0 0
    %3881 = vmatpush1.bf16.msra.mxu0 0
    %3882 = vmatprep.subr.bf16.mxu0 0
    %3883 = vmatpush1.bf16.msra.mxu0 0
    %3884 = vmatprep.subr.bf16.mxu0 0
    %3885 = vmatpush1.bf16.msra.mxu0 0
    %3886 = vmatprep.subr.bf16.mxu0 0
    %3887 = vmatpush1.bf16.msra.mxu0 0
    %3888 = vmatprep.subr.bf16.mxu0 0
    %3889 = vmatpush1.bf16.msra.mxu0 0
    %3890 = vmatprep.subr.bf16.mxu0 0
    %3891 = vmatpush1.bf16.msra.mxu0 0
    %3892 = vmatprep.subr.bf16.mxu0 0
    %3893 = vmatpush1.bf16.msra.mxu0 0
    %3894 = vmatprep.subr.bf16.mxu0 0
    %3895 = vmatpush1.bf16.msra.mxu0 0
    %3896 = vmatprep.subr.bf16.mxu0 0
    %3897 = vmatpush1.bf16.msra.mxu0 0
    %3898 = vmatprep.subr.bf16.mxu0 0
    %3899 = vmatpush1.bf16.msra.mxu0 0
    %3900 = vmatprep.subr.bf16.mxu0 0
    %3901 = vmatpush1.bf16.msra.mxu0 0
    %3902 = vmatprep.subr.bf16.mxu0 0
    %3903 = vmatpush1.bf16.msra.mxu0 0
    %3904 = vmatprep.mubr.bf16.mxu0 0
    %3905 = vmatmul.mubr.bf16.gmra.mrb[0].mxu0 %v846
    %v3906 = vpop.f32.mrb[0].mxu0
    %v3907 = vadd.f32 0.0, %v3906
    %v3908 = vpop.f32.mrb[0].mxu0
    %v3909 = vadd.f32 0.0, %v3908
    %v3910 = vpop.f32.mrb[0].mxu0
    %v3911 = vpop.f32.mrb[0].mxu0
    %3912 = vdwg.mxu0
    %3913 = vmatprep.subr.bf16.mxu0 %v3246
    %3914 = vmatpush1.bf16.msra.mxu0 %v3245
    %3915 = vmatprep.subr.bf16.mxu0 %v3255
    %3916 = vmatpush1.bf16.msra.mxu0 %v3252
    %3917 = vmatprep.subr.bf16.mxu0 0
    %3918 = vmatpush1.bf16.msra.mxu0 0
    %3919 = vmatprep.subr.bf16.mxu0 0
    %3920 = vmatpush1.bf16.msra.mxu0 0
    %3921 = vmatprep.subr.bf16.mxu0 0
    %3922 = vmatpush1.bf16.msra.mxu0 0
    %3923 = vmatprep.subr.bf16.mxu0 0
    %3924 = vmatpush1.bf16.msra.mxu0 0
    %3925 = vmatprep.subr.bf16.mxu0 0
    %3926 = vmatpush1.bf16.msra.mxu0 0
    %3927 = vmatprep.subr.bf16.mxu0 0
    %3928 = vmatpush1.bf16.msra.mxu0 0
    %3929 = vmatprep.subr.bf16.mxu0 0
    %3930 = vmatpush1.bf16.msra.mxu0 0
    %3931 = vmatprep.subr.bf16.mxu0 0
    %3932 = vmatpush1.bf16.msra.mxu0 0
    %3933 = vmatprep.subr.bf16.mxu0 0
    %3934 = vmatpush1.bf16.msra.mxu0 0
    %3935 = vmatprep.subr.bf16.mxu0 0
    %3936 = vmatpush1.bf16.msra.mxu0 0
    %3937 = vmatprep.subr.bf16.mxu0 0
    %3938 = vmatpush1.bf16.msra.mxu0 0
    %3939 = vmatprep.subr.bf16.mxu0 0
    %3940 = vmatpush1.bf16.msra.mxu0 0
    %3941 = vmatprep.subr.bf16.mxu0 0
    %3942 = vmatpush1.bf16.msra.mxu0 0
    %3943 = vmatprep.subr.bf16.mxu0 0
    %3944 = vmatpush1.bf16.msra.mxu0 0
    %3945 = vmatprep.mubr.bf16.mxu0 0
    %3946 = vmatmul.mubr.bf16.gmra.mrb[0].mxu0 %v890
    %v3947 = vpop.f32.mrb[0].mxu0
    %v3948 = vadd.f32 0.0, %v3947
    %v3949 = vpop.f32.mrb[0].mxu0
    %v3950 = vadd.f32 0.0, %v3949
    %v3951 = vpop.f32.mrb[0].mxu0
    %v3952 = vpop.f32.mrb[0].mxu0
    %3953 = vdwg.mxu0
    %3954 = vmatprep.subr.bf16.mxu0 %v3246
    %3955 = vmatpush1.bf16.msra.mxu0 %v3245
    %3956 = vmatprep.subr.bf16.mxu0 %v3255
    %3957 = vmatpush1.bf16.msra.mxu0 %v3252
    %3958 = vmatprep.subr.bf16.mxu0 0
    %3959 = vmatpush1.bf16.msra.mxu0 0
    %3960 = vmatprep.subr.bf16.mxu0 0
    %3961 = vmatpush1.bf16.msra.mxu0 0
    %3962 = vmatprep.subr.bf16.mxu0 0
    %3963 = vmatpush1.bf16.msra.mxu0 0
    %3964 = vmatprep.subr.bf16.mxu0 0
    %3965 = vmatpush1.bf16.msra.mxu0 0
    %3966 = vmatprep.subr.bf16.mxu0 0
    %3967 = vmatpush1.bf16.msra.mxu0 0
    %3968 = vmatprep.subr.bf16.mxu0 0
    %3969 = vmatpush1.bf16.msra.mxu0 0
    %3970 = vmatprep.subr.bf16.mxu0 0
    %3971 = vmatpush1.bf16.msra.mxu0 0
    %3972 = vmatprep.subr.bf16.mxu0 0
    %3973 = vmatpush1.bf16.msra.mxu0 0
    %3974 = vmatprep.subr.bf16.mxu0 0
    %3975 = vmatpush1.bf16.msra.mxu0 0
    %3976 = vmatprep.subr.bf16.mxu0 0
    %3977 = vmatpush1.bf16.msra.mxu0 0
    %3978 = vmatprep.subr.bf16.mxu0 0
    %3979 = vmatpush1.bf16.msra.mxu0 0
    %3980 = vmatprep.subr.bf16.mxu0 0
    %3981 = vmatpush1.bf16.msra.mxu0 0
    %3982 = vmatprep.subr.bf16.mxu0 0
    %3983 = vmatpush1.bf16.msra.mxu0 0
    %3984 = vmatprep.subr.bf16.mxu0 0
    %3985 = vmatpush1.bf16.msra.mxu0 0
    %3986 = vmatprep.mubr.bf16.mxu0 0
    %3987 = vmatmul.mubr.bf16.gmra.mrb[0].mxu0 %v934
    %v3988 = vpop.f32.mrb[0].mxu0
    %v3989 = vadd.f32 0.0, %v3988
    %v3990 = vpop.f32.mrb[0].mxu0
    %v3991 = vadd.f32 0.0, %v3990
    %v3992 = vpop.f32.mrb[0].mxu0
    %v3993 = vpop.f32.mrb[0].mxu0
    %3994 = vdwg.mxu0
    %3995 = vmatprep.subr.bf16.mxu0 %v3246
    %3996 = vmatpush1.bf16.msra.mxu0 %v3245
    %3997 = vmatprep.subr.bf16.mxu0 %v3255
    %3998 = vmatpush1.bf16.msra.mxu0 %v3252
    %3999 = vmatprep.subr.bf16.mxu0 0
    %4000 = vmatpush1.bf16.msra.mxu0 0
    %4001 = vmatprep.subr.bf16.mxu0 0
    %4002 = vmatpush1.bf16.msra.mxu0 0
    %4003 = vmatprep.subr.bf16.mxu0 0
    %4004 = vmatpush1.bf16.msra.mxu0 0
    %4005 = vmatprep.subr.bf16.mxu0 0
    %4006 = vmatpush1.bf16.msra.mxu0 0
    %4007 = vmatprep.subr.bf16.mxu0 0
    %4008 = vmatpush1.bf16.msra.mxu0 0
    %4009 = vmatprep.subr.bf16.mxu0 0
    %4010 = vmatpush1.bf16.msra.mxu0 0
    %4011 = vmatprep.subr.bf16.mxu0 0
    %4012 = vmatpush1.bf16.msra.mxu0 0
    %4013 = vmatprep.subr.bf16.mxu0 0
    %4014 = vmatpush1.bf16.msra.mxu0 0
    %4015 = vmatprep.subr.bf16.mxu0 0
    %4016 = vmatpush1.bf16.msra.mxu0 0
    %4017 = vmatprep.subr.bf16.mxu0 0
    %4018 = vmatpush1.bf16.msra.mxu0 0
    %4019 = vmatprep.subr.bf16.mxu0 0
    %4020 = vmatpush1.bf16.msra.mxu0 0
    %4021 = vmatprep.subr.bf16.mxu0 0
    %4022 = vmatpush1.bf16.msra.mxu0 0
    %4023 = vmatprep.subr.bf16.mxu0 0
    %4024 = vmatpush1.bf16.msra.mxu0 0
    %4025 = vmatprep.subr.bf16.mxu0 0
    %4026 = vmatpush1.bf16.msra.mxu0 0
    %4027 = vmatprep.mubr.bf16.mxu0 0
    %4028 = vmatmul.mubr.bf16.gmra.mrb[0].mxu0 %v978
    %v4029 = vpop.f32.mrb[0].mxu0
    %v4030 = vadd.f32 0.0, %v4029
    %v4031 = vpop.f32.mrb[0].mxu0
    %v4032 = vadd.f32 0.0, %v4031
    %v4033 = vpop.f32.mrb[0].mxu0
    %v4034 = vpop.f32.mrb[0].mxu0
    %4035 = vdwg.mxu0
    %4036 = vmatprep.subr.bf16.mxu0 %v3246
    %4037 = vmatpush1.bf16.msra.mxu0 %v3245
    %4038 = vmatprep.subr.bf16.mxu0 %v3255
    %4039 = vmatpush1.bf16.msra.mxu0 %v3252
    %4040 = vmatprep.subr.bf16.mxu0 0
    %4041 = vmatpush1.bf16.msra.mxu0 0
    %4042 = vmatprep.subr.bf16.mxu0 0
    %4043 = vmatpush1.bf16.msra.mxu0 0
    %4044 = vmatprep.subr.bf16.mxu0 0
    %4045 = vmatpush1.bf16.msra.mxu0 0
    %4046 = vmatprep.subr.bf16.mxu0 0
    %4047 = vmatpush1.bf16.msra.mxu0 0
    %4048 = vmatprep.subr.bf16.mxu0 0
    %4049 = vmatpush1.bf16.msra.mxu0 0
    %4050 = vmatprep.subr.bf16.mxu0 0
    %4051 = vmatpush1.bf16.msra.mxu0 0
    %4052 = vmatprep.subr.bf16.mxu0 0
    %4053 = vmatpush1.bf16.msra.mxu0 0
    %4054 = vmatprep.subr.bf16.mxu0 0
    %4055 = vmatpush1.bf16.msra.mxu0 0
    %4056 = vmatprep.subr.bf16.mxu0 0
    %4057 = vmatpush1.bf16.msra.mxu0 0
    %4058 = vmatprep.subr.bf16.mxu0 0
    %4059 = vmatpush1.bf16.msra.mxu0 0
    %4060 = vmatprep.subr.bf16.mxu0 0
    %4061 = vmatpush1.bf16.msra.mxu0 0
    %4062 = vmatprep.subr.bf16.mxu0 0
    %4063 = vmatpush1.bf16.msra.mxu0 0
    %4064 = vmatprep.subr.bf16.mxu0 0
    %4065 = vmatpush1.bf16.msra.mxu0 0
    %4066 = vmatprep.subr.bf16.mxu0 0
    %4067 = vmatpush1.bf16.msra.mxu0 0
    %4068 = vmatprep.mubr.bf16.mxu0 0
    %4069 = vmatmul.mubr.bf16.gmra.mrb[0].mxu0 %v1022
    %v4070 = vpop.f32.mrb[0].mxu0
    %v4071 = vadd.f32 0.0, %v4070
    %v4072 = vpop.f32.mrb[0].mxu0
    %v4073 = vadd.f32 0.0, %v4072
    %v4074 = vpop.f32.mrb[0].mxu0
    %v4075 = vpop.f32.mrb[0].mxu0
    %4076 = vdwg.mxu0
    %4077 = vmatprep.subr.bf16.mxu0 %v3246
    %4078 = vmatpush1.bf16.msra.mxu0 %v3245
    %4079 = vmatprep.subr.bf16.mxu0 %v3255
    %4080 = vmatpush1.bf16.msra.mxu0 %v3252
    %4081 = vmatprep.subr.bf16.mxu0 0
    %4082 = vmatpush1.bf16.msra.mxu0 0
    %4083 = vmatprep.subr.bf16.mxu0 0
    %4084 = vmatpush1.bf16.msra.mxu0 0
    %4085 = vmatprep.subr.bf16.mxu0 0
    %4086 = vmatpush1.bf16.msra.mxu0 0
    %4087 = vmatprep.subr.bf16.mxu0 0
    %4088 = vmatpush1.bf16.msra.mxu0 0
    %4089 = vmatprep.subr.bf16.mxu0 0
    %4090 = vmatpush1.bf16.msra.mxu0 0
    %4091 = vmatprep.subr.bf16.mxu0 0
    %4092 = vmatpush1.bf16.msra.mxu0 0
    %4093 = vmatprep.subr.bf16.mxu0 0
    %4094 = vmatpush1.bf16.msra.mxu0 0
    %4095 = vmatprep.subr.bf16.mxu0 0
    %4096 = vmatpush1.bf16.msra.mxu0 0
    %4097 = vmatprep.subr.bf16.mxu0 0
    %4098 = vmatpush1.bf16.msra.mxu0 0
    %4099 = vmatprep.subr.bf16.mxu0 0
    %4100 = vmatpush1.bf16.msra.mxu0 0
    %4101 = vmatprep.subr.bf16.mxu0 0
    %4102 = vmatpush1.bf16.msra.mxu0 0
    %4103 = vmatprep.subr.bf16.mxu0 0
    %4104 = vmatpush1.bf16.msra.mxu0 0
    %4105 = vmatprep.subr.bf16.mxu0 0
    %4106 = vmatpush1.bf16.msra.mxu0 0
    %4107 = vmatprep.subr.bf16.mxu0 0
    %4108 = vmatpush1.bf16.msra.mxu0 0
    %4109 = vmatprep.mubr.bf16.mxu0 0
    %4110 = vmatmul.mubr.bf16.gmra.mrb[0].mxu0 %v1066
    %v4111 = vpop.f32.mrb[0].mxu0
    %v4112 = vadd.f32 0.0, %v4111
    %v4113 = vpop.f32.mrb[0].mxu0
    %v4114 = vadd.f32 0.0, %v4113
    %v4115 = vpop.f32.mrb[0].mxu0
    %v4116 = vpop.f32.mrb[0].mxu0
    %4117 = vdwg.mxu0
    %4118 = vmatprep.subr.bf16.mxu0 %v3246
    %4119 = vmatpush1.bf16.msra.mxu0 %v3245
    %4120 = vmatprep.subr.bf16.mxu0 %v3255
    %4121 = vmatpush1.bf16.msra.mxu0 %v3252
    %4122 = vmatprep.subr.bf16.mxu0 0
    %4123 = vmatpush1.bf16.msra.mxu0 0
    %4124 = vmatprep.subr.bf16.mxu0 0
    %4125 = vmatpush1.bf16.msra.mxu0 0
    %4126 = vmatprep.subr.bf16.mxu0 0
    %4127 = vmatpush1.bf16.msra.mxu0 0
    %4128 = vmatprep.subr.bf16.mxu0 0
    %4129 = vmatpush1.bf16.msra.mxu0 0
    %4130 = vmatprep.subr.bf16.mxu0 0
    %4131 = vmatpush1.bf16.msra.mxu0 0
    %4132 = vmatprep.subr.bf16.mxu0 0
    %4133 = vmatpush1.bf16.msra.mxu0 0
    %4134 = vmatprep.subr.bf16.mxu0 0
    %4135 = vmatpush1.bf16.msra.mxu0 0
    %4136 = vmatprep.subr.bf16.mxu0 0
    %4137 = vmatpush1.bf16.msra.mxu0 0
    %4138 = vmatprep.subr.bf16.mxu0 0
    %4139 = vmatpush1.bf16.msra.mxu0 0
    %4140 = vmatprep.subr.bf16.mxu0 0
    %4141 = vmatpush1.bf16.msra.mxu0 0
    %4142 = vmatprep.subr.bf16.mxu0 0
    %4143 = vmatpush1.bf16.msra.mxu0 0
    %4144 = vmatprep.subr.bf16.mxu0 0
    %4145 = vmatpush1.bf16.msra.mxu0 0
    %4146 = vmatprep.subr.bf16.mxu0 0
    %4147 = vmatpush1.bf16.msra.mxu0 0
    %4148 = vmatprep.subr.bf16.mxu0 0
    %4149 = vmatpush1.bf16.msra.mxu0 0
    %4150 = vmatprep.mubr.bf16.mxu0 0
    %4151 = vmatmul.mubr.bf16.gmra.mrb[0].mxu0 %v1110
    %v4152 = vpop.f32.mrb[0].mxu0
    %v4153 = vadd.f32 0.0, %v4152
    %v4154 = vpop.f32.mrb[0].mxu0
    %v4155 = vadd.f32 0.0, %v4154
    %v4156 = vpop.f32.mrb[0].mxu0
    %v4157 = vpop.f32.mrb[0].mxu0
    %4158 = vdwg.mxu0
    %4159 = vmatprep.subr.bf16.mxu0 %v3246
    %4160 = vmatpush1.bf16.msra.mxu0 %v3245
    %4161 = vmatprep.subr.bf16.mxu0 %v3255
    %4162 = vmatpush1.bf16.msra.mxu0 %v3252
    %4163 = vmatprep.subr.bf16.mxu0 0
    %4164 = vmatpush1.bf16.msra.mxu0 0
    %4165 = vmatprep.subr.bf16.mxu0 0
    %4166 = vmatpush1.bf16.msra.mxu0 0
    %4167 = vmatprep.subr.bf16.mxu0 0
    %4168 = vmatpush1.bf16.msra.mxu0 0
    %4169 = vmatprep.subr.bf16.mxu0 0
    %4170 = vmatpush1.bf16.msra.mxu0 0
    %4171 = vmatprep.subr.bf16.mxu0 0
    %4172 = vmatpush1.bf16.msra.mxu0 0
    %4173 = vmatprep.subr.bf16.mxu0 0
    %4174 = vmatpush1.bf16.msra.mxu0 0
    %4175 = vmatprep.subr.bf16.mxu0 0
    %4176 = vmatpush1.bf16.msra.mxu0 0
    %4177 = vmatprep.subr.bf16.mxu0 0
    %4178 = vmatpush1.bf16.msra.mxu0 0
    %4179 = vmatprep.subr.bf16.mxu0 0
    %4180 = vmatpush1.bf16.msra.mxu0 0
    %4181 = vmatprep.subr.bf16.mxu0 0
    %4182 = vmatpush1.bf16.msra.mxu0 0
    %4183 = vmatprep.subr.bf16.mxu0 0
    %4184 = vmatpush1.bf16.msra.mxu0 0
    %4185 = vmatprep.subr.bf16.mxu0 0
    %4186 = vmatpush1.bf16.msra.mxu0 0
    %4187 = vmatprep.subr.bf16.mxu0 0
    %4188 = vmatpush1.bf16.msra.mxu0 0
    %4189 = vmatprep.subr.bf16.mxu0 0
    %4190 = vmatpush1.bf16.msra.mxu0 0
    %4191 = vmatprep.mubr.bf16.mxu0 0
    %4192 = vmatmul.mubr.bf16.gmra.mrb[0].mxu0 %v3137
    %v4193 = vpop.f32.mrb[0].mxu0
    %v4194 = vadd.f32 0.0, %v4193
    %v4195 = vpop.f32.mrb[0].mxu0
    %v4196 = vadd.f32 0.0, %v4195
    %v4197 = vpop.f32.mrb[0].mxu0
    %v4198 = vpop.f32.mrb[0].mxu0
    %4199 = vdwg.mxu0
    %v4201 = vsel %vm89, %v60, 0
    %4203 = vmatprep.subr.bf16.mxu0 %v3246
    %4204 = vmatpush1.bf16.msra.mxu0 %v3245
    %4205 = vmatprep.subr.bf16.mxu0 %v3255
    %4206 = vmatpush1.bf16.msra.mxu0 %v3252
    %4207 = vmatprep.subr.bf16.mxu0 0
    %4208 = vmatpush1.bf16.msra.mxu0 0
    %4209 = vmatprep.subr.bf16.mxu0 0
    %4210 = vmatpush1.bf16.msra.mxu0 0
    %4211 = vmatprep.subr.bf16.mxu0 0
    %4212 = vmatpush1.bf16.msra.mxu0 0
    %4213 = vmatprep.subr.bf16.mxu0 0
    %4214 = vmatpush1.bf16.msra.mxu0 0
    %4215 = vmatprep.subr.bf16.mxu0 0
    %4216 = vmatpush1.bf16.msra.mxu0 0
    %4217 = vmatprep.subr.bf16.mxu0 0
    %4218 = vmatpush1.bf16.msra.mxu0 0
    %4219 = vmatprep.subr.bf16.mxu0 0
    %4220 = vmatpush1.bf16.msra.mxu0 0
    %4221 = vmatprep.subr.bf16.mxu0 0
    %4222 = vmatpush1.bf16.msra.mxu0 0
    %4223 = vmatprep.subr.bf16.mxu0 0
    %4224 = vmatpush1.bf16.msra.mxu0 0
    %4225 = vmatprep.subr.bf16.mxu0 0
    %4226 = vmatpush1.bf16.msra.mxu0 0
    %4227 = vmatprep.subr.bf16.mxu0 0
    %4228 = vmatpush1.bf16.msra.mxu0 0
    %4229 = vmatprep.subr.bf16.mxu0 0
    %4230 = vmatpush1.bf16.msra.mxu0 0
    %4231 = vmatprep.subr.bf16.mxu0 0
    %4232 = vmatpush1.bf16.msra.mxu0 0
    %4233 = vmatprep.subr.bf16.mxu0 0
    %4234 = vmatpush1.bf16.msra.mxu0 0
    %4235 = vmatprep.mubr.bf16.mxu0 0
    %4236 = vmatmul.mubr.bf16.gmra.mrb[0].mxu0 %v4201
    %v4237 = vpop.f32.mrb[0].mxu0
    %v4238 = vadd.f32 0.0, %v4237
    %v4239 = vpop.f32.mrb[0].mxu0
    %v4240 = vadd.f32 0.0, %v4239
    %v4241 = vpop.f32.mrb[0].mxu0
    %v4242 = vpop.f32.mrb[0].mxu0
    %4243 = vdwg.mxu0
    %v4244 = vadd.f32 %v3180, %v3292
    %v4245 = vadd.f32 %v3181, %v3294
    %v4246 = vadd.f32 %v3182, %v3333
    %v4247 = vadd.f32 %v3183, %v3335
    %v4248 = vadd.f32 %v3184, %v3374
    %v4249 = vadd.f32 %v3185, %v3376
    %v4250 = vadd.f32 %v3186, %v3415
    %v4251 = vadd.f32 %v3187, %v3417
    %v4252 = vadd.f32 %v3188, %v3456
    %v4253 = vadd.f32 %v3189, %v3458
    %v4254 = vadd.f32 %v3190, %v3497
    %v4255 = vadd.f32 %v3191, %v3499
    %v4256 = vadd.f32 %v3192, %v3538
    %v4257 = vadd.f32 %v3193, %v3540
    %v4258 = vadd.f32 %v3194, %v3579
    %v4259 = vadd.f32 %v3195, %v3581
    %v4260 = vadd.f32 %v3196, %v3620
    %v4261 = vadd.f32 %v3197, %v3622
    %v4262 = vadd.f32 %v3198, %v3661
    %v4263 = vadd.f32 %v3199, %v3663
    %v4264 = vadd.f32 %v3200, %v3702
    %v4265 = vadd.f32 %v3201, %v3704
    %v4266 = vadd.f32 %v3202, %v3743
    %v4267 = vadd.f32 %v3203, %v3745
    %v4268 = vadd.f32 %v3204, %v3784
    %v4269 = vadd.f32 %v3205, %v3786
    %v4270 = vadd.f32 %v3206, %v3825
    %v4271 = vadd.f32 %v3207, %v3827
    %v4272 = vadd.f32 %v3208, %v3866
    %v4273 = vadd.f32 %v3209, %v3868
    %v4274 = vadd.f32 %v3210, %v3907
    %v4275 = vadd.f32 %v3211, %v3909
    %v4276 = vadd.f32 %v3212, %v3948
    %v4277 = vadd.f32 %v3213, %v3950
    %v4278 = vadd.f32 %v3214, %v3989
    %v4279 = vadd.f32 %v3215, %v3991
    %v4280 = vadd.f32 %v3216, %v4030
    %v4281 = vadd.f32 %v3217, %v4032
    %v4282 = vadd.f32 %v3218, %v4071
    %v4283 = vadd.f32 %v3219, %v4073
    %v4284 = vadd.f32 %v3220, %v4112
    %v4285 = vadd.f32 %v3221, %v4114
    %v4286 = vadd.f32 %v3222, %v4153
    %v4287 = vadd.f32 %v3223, %v4155
    %v4288 = vadd.f32 %v3224, %v4194
    %v4289 = vadd.f32 %v3225, %v4196
    %v4290 = vadd.f32 %v3226, %v4238
    %v4291 = vadd.f32 %v3227, %v4240
    %s4292 = scalar_lea.vmem %s1, 128
    %v4293 = vld [vmem:[%s4292] sm:$0xff]
    %v4294 = vld [vmem:[%s4292 + $0x8] sm:$0xff]
    %v4295 = vld [vmem:[%s4292 + $0x10] sm:$0xff]
    %v4296 = vld [vmem:[%s4292 + $0x18] sm:$0x33]
    %v4301 = vunpack.c.l.b16 %v4293
    %v4302 = vunpack.c.h.b16 %v4293
    %v4303 = vunpack.c.l.b16 %v4294
    %v4304 = vunpack.c.h.b16 %v4294
    %v4305 = vunpack.c.l.b16 %v4295
    %v4306 = vunpack.c.h.b16 %v4295
    %v4307 = vunpack.c.l.b16 %v4296
    %v4308 = vunpack.c.h.b16 %v4296
    %v4309 = vpack.c.b16 %v4303, %v4301
    %v4310 = vpack.c.b16 %v4304, %v4302
    %v4311 = vpack.c.b16 %v4307, %v4305
    %v4312 = vpack.c.b16 %v4308, %v4306
    %v4316 = vsel %vm93, %v4311, 0
    %v4319 = vsel %vm93, %v4312, 0
    %4321 = vmatprep.subr.bf16.mxu0 %v4310
    %4322 = vmatpush1.bf16.msra.mxu0 %v4309
    %4323 = vmatprep.subr.bf16.mxu0 %v4319
    %4324 = vmatpush1.bf16.msra.mxu0 %v4316
    %4325 = vmatprep.subr.bf16.mxu0 0
    %4326 = vmatpush1.bf16.msra.mxu0 0
    %4327 = vmatprep.subr.bf16.mxu0 0
    %4328 = vmatpush1.bf16.msra.mxu0 0
    %4329 = vmatprep.subr.bf16.mxu0 0
    %4330 = vmatpush1.bf16.msra.mxu0 0
    %4331 = vmatprep.subr.bf16.mxu0 0
    %4332 = vmatpush1.bf16.msra.mxu0 0
    %4333 = vmatprep.subr.bf16.mxu0 0
    %4334 = vmatpush1.bf16.msra.mxu0 0
    %4335 = vmatprep.subr.bf16.mxu0 0
    %4336 = vmatpush1.bf16.msra.mxu0 0
    %4337 = vmatprep.subr.bf16.mxu0 0
    %4338 = vmatpush1.bf16.msra.mxu0 0
    %4339 = vmatprep.subr.bf16.mxu0 0
    %4340 = vmatpush1.bf16.msra.mxu0 0
    %4341 = vmatprep.subr.bf16.mxu0 0
    %4342 = vmatpush1.bf16.msra.mxu0 0
    %4343 = vmatprep.subr.bf16.mxu0 0
    %4344 = vmatpush1.bf16.msra.mxu0 0
    %4345 = vmatprep.subr.bf16.mxu0 0
    %4346 = vmatpush1.bf16.msra.mxu0 0
    %4347 = vmatprep.subr.bf16.mxu0 0
    %4348 = vmatpush1.bf16.msra.mxu0 0
    %4349 = vmatprep.subr.bf16.mxu0 0
    %4350 = vmatpush1.bf16.msra.mxu0 0
    %4351 = vmatprep.subr.bf16.mxu0 0
    %4352 = vmatpush1.bf16.msra.mxu0 0
    %4353 = vmatprep.mubr.bf16.mxu0 0
    %4354 = vmatmul.mubr.bf16.gmra.mrb[0].mxu0 %v230
    %v4355 = vpop.f32.mrb[0].mxu0
    %v4356 = vadd.f32 0.0, %v4355
    %v4357 = vpop.f32.mrb[0].mxu0
    %v4358 = vadd.f32 0.0, %v4357
    %v4359 = vpop.f32.mrb[0].mxu0
    %v4360 = vpop.f32.mrb[0].mxu0
    %4361 = vdwg.mxu0
    %4362 = vmatprep.subr.bf16.mxu0 %v4310
    %4363 = vmatpush1.bf16.msra.mxu0 %v4309
    %4364 = vmatprep.subr.bf16.mxu0 %v4319
    %4365 = vmatpush1.bf16.msra.mxu0 %v4316
    %4366 = vmatprep.subr.bf16.mxu0 0
    %4367 = vmatpush1.bf16.msra.mxu0 0
    %4368 = vmatprep.subr.bf16.mxu0 0
    %4369 = vmatpush1.bf16.msra.mxu0 0
    %4370 = vmatprep.subr.bf16.mxu0 0
    %4371 = vmatpush1.bf16.msra.mxu0 0
    %4372 = vmatprep.subr.bf16.mxu0 0
    %4373 = vmatpush1.bf16.msra.mxu0 0
    %4374 = vmatprep.subr.bf16.mxu0 0
    %4375 = vmatpush1.bf16.msra.mxu0 0
    %4376 = vmatprep.subr.bf16.mxu0 0
    %4377 = vmatpush1.bf16.msra.mxu0 0
    %4378 = vmatprep.subr.bf16.mxu0 0
    %4379 = vmatpush1.bf16.msra.mxu0 0
    %4380 = vmatprep.subr.bf16.mxu0 0
    %4381 = vmatpush1.bf16.msra.mxu0 0
    %4382 = vmatprep.subr.bf16.mxu0 0
    %4383 = vmatpush1.bf16.msra.mxu0 0
    %4384 = vmatprep.subr.bf16.mxu0 0
    %4385 = vmatpush1.bf16.msra.mxu0 0
    %4386 = vmatprep.subr.bf16.mxu0 0
    %4387 = vmatpush1.bf16.msra.mxu0 0
    %4388 = vmatprep.subr.bf16.mxu0 0
    %4389 = vmatpush1.bf16.msra.mxu0 0
    %4390 = vmatprep.subr.bf16.mxu0 0
    %4391 = vmatpush1.bf16.msra.mxu0 0
    %4392 = vmatprep.subr.bf16.mxu0 0
    %4393 = vmatpush1.bf16.msra.mxu0 0
    %4394 = vmatprep.mubr.bf16.mxu0 0
    %4395 = vmatmul.mubr.bf16.gmra.mrb[0].mxu0 %v274
    %v4396 = vpop.f32.mrb[0].mxu0
    %v4397 = vadd.f32 0.0, %v4396
    %v4398 = vpop.f32.mrb[0].mxu0
    %v4399 = vadd.f32 0.0, %v4398
    %v4400 = vpop.f32.mrb[0].mxu0
    %v4401 = vpop.f32.mrb[0].mxu0
    %4402 = vdwg.mxu0
    %4403 = vmatprep.subr.bf16.mxu0 %v4310
    %4404 = vmatpush1.bf16.msra.mxu0 %v4309
    %4405 = vmatprep.subr.bf16.mxu0 %v4319
    %4406 = vmatpush1.bf16.msra.mxu0 %v4316
    %4407 = vmatprep.subr.bf16.mxu0 0
    %4408 = vmatpush1.bf16.msra.mxu0 0
    %4409 = vmatprep.subr.bf16.mxu0 0
    %4410 = vmatpush1.bf16.msra.mxu0 0
    %4411 = vmatprep.subr.bf16.mxu0 0
    %4412 = vmatpush1.bf16.msra.mxu0 0
    %4413 = vmatprep.subr.bf16.mxu0 0
    %4414 = vmatpush1.bf16.msra.mxu0 0
    %4415 = vmatprep.subr.bf16.mxu0 0
    %4416 = vmatpush1.bf16.msra.mxu0 0
    %4417 = vmatprep.subr.bf16.mxu0 0
    %4418 = vmatpush1.bf16.msra.mxu0 0
    %4419 = vmatprep.subr.bf16.mxu0 0
    %4420 = vmatpush1.bf16.msra.mxu0 0
    %4421 = vmatprep.subr.bf16.mxu0 0
    %4422 = vmatpush1.bf16.msra.mxu0 0
    %4423 = vmatprep.subr.bf16.mxu0 0
    %4424 = vmatpush1.bf16.msra.mxu0 0
    %4425 = vmatprep.subr.bf16.mxu0 0
    %4426 = vmatpush1.bf16.msra.mxu0 0
    %4427 = vmatprep.subr.bf16.mxu0 0
    %4428 = vmatpush1.bf16.msra.mxu0 0
    %4429 = vmatprep.subr.bf16.mxu0 0
    %4430 = vmatpush1.bf16.msra.mxu0 0
    %4431 = vmatprep.subr.bf16.mxu0 0
    %4432 = vmatpush1.bf16.msra.mxu0 0
    %4433 = vmatprep.subr.bf16.mxu0 0
    %4434 = vmatpush1.bf16.msra.mxu0 0
    %4435 = vmatprep.mubr.bf16.mxu0 0
    %4436 = vmatmul.mubr.bf16.gmra.mrb[0].mxu0 %v318
    %v4437 = vpop.f32.mrb[0].mxu0
    %v4438 = vadd.f32 0.0, %v4437
    %v4439 = vpop.f32.mrb[0].mxu0
    %v4440 = vadd.f32 0.0, %v4439
    %v4441 = vpop.f32.mrb[0].mxu0
    %v4442 = vpop.f32.mrb[0].mxu0
    %4443 = vdwg.mxu0
    %4444 = vmatprep.subr.bf16.mxu0 %v4310
    %4445 = vmatpush1.bf16.msra.mxu0 %v4309
    %4446 = vmatprep.subr.bf16.mxu0 %v4319
    %4447 = vmatpush1.bf16.msra.mxu0 %v4316
    %4448 = vmatprep.subr.bf16.mxu0 0
    %4449 = vmatpush1.bf16.msra.mxu0 0
    %4450 = vmatprep.subr.bf16.mxu0 0
    %4451 = vmatpush1.bf16.msra.mxu0 0
    %4452 = vmatprep.subr.bf16.mxu0 0
    %4453 = vmatpush1.bf16.msra.mxu0 0
    %4454 = vmatprep.subr.bf16.mxu0 0
    %4455 = vmatpush1.bf16.msra.mxu0 0
    %4456 = vmatprep.subr.bf16.mxu0 0
    %4457 = vmatpush1.bf16.msra.mxu0 0
    %4458 = vmatprep.subr.bf16.mxu0 0
    %4459 = vmatpush1.bf16.msra.mxu0 0
    %4460 = vmatprep.subr.bf16.mxu0 0
    %4461 = vmatpush1.bf16.msra.mxu0 0
    %4462 = vmatprep.subr.bf16.mxu0 0
    %4463 = vmatpush1.bf16.msra.mxu0 0
    %4464 = vmatprep.subr.bf16.mxu0 0
    %4465 = vmatpush1.bf16.msra.mxu0 0
    %4466 = vmatprep.subr.bf16.mxu0 0
    %4467 = vmatpush1.bf16.msra.mxu0 0
    %4468 = vmatprep.subr.bf16.mxu0 0
    %4469 = vmatpush1.bf16.msra.mxu0 0
    %4470 = vmatprep.subr.bf16.mxu0 0
    %4471 = vmatpush1.bf16.msra.mxu0 0
    %4472 = vmatprep.subr.bf16.mxu0 0
    %4473 = vmatpush1.bf16.msra.mxu0 0
    %4474 = vmatprep.subr.bf16.mxu0 0
    %4475 = vmatpush1.bf16.msra.mxu0 0
    %4476 = vmatprep.mubr.bf16.mxu0 0
    %4477 = vmatmul.mubr.bf16.gmra.mrb[0].mxu0 %v362
    %v4478 = vpop.f32.mrb[0].mxu0
    %v4479 = vadd.f32 0.0, %v4478
    %v4480 = vpop.f32.mrb[0].mxu0
    %v4481 = vadd.f32 0.0, %v4480
    %v4482 = vpop.f32.mrb[0].mxu0
    %v4483 = vpop.f32.mrb[0].mxu0
    %4484 = vdwg.mxu0
    %4485 = vmatprep.subr.bf16.mxu0 %v4310
    %4486 = vmatpush1.bf16.msra.mxu0 %v4309
    %4487 = vmatprep.subr.bf16.mxu0 %v4319
    %4488 = vmatpush1.bf16.msra.mxu0 %v4316
    %4489 = vmatprep.subr.bf16.mxu0 0
    %4490 = vmatpush1.bf16.msra.mxu0 0
    %4491 = vmatprep.subr.bf16.mxu0 0
    %4492 = vmatpush1.bf16.msra.mxu0 0
    %4493 = vmatprep.subr.bf16.mxu0 0
    %4494 = vmatpush1.bf16.msra.mxu0 0
    %4495 = vmatprep.subr.bf16.mxu0 0
    %4496 = vmatpush1.bf16.msra.mxu0 0
    %4497 = vmatprep.subr.bf16.mxu0 0
    %4498 = vmatpush1.bf16.msra.mxu0 0
    %4499 = vmatprep.subr.bf16.mxu0 0
    %4500 = vmatpush1.bf16.msra.mxu0 0
    %4501 = vmatprep.subr.bf16.mxu0 0
    %4502 = vmatpush1.bf16.msra.mxu0 0
    %4503 = vmatprep.subr.bf16.mxu0 0
    %4504 = vmatpush1.bf16.msra.mxu0 0
    %4505 = vmatprep.subr.bf16.mxu0 0
    %4506 = vmatpush1.bf16.msra.mxu0 0
    %4507 = vmatprep.subr.bf16.mxu0 0
    %4508 = vmatpush1.bf16.msra.mxu0 0
    %4509 = vmatprep.subr.bf16.mxu0 0
    %4510 = vmatpush1.bf16.msra.mxu0 0
    %4511 = vmatprep.subr.bf16.mxu0 0
    %4512 = vmatpush1.bf16.msra.mxu0 0
    %4513 = vmatprep.subr.bf16.mxu0 0
    %4514 = vmatpush1.bf16.msra.mxu0 0
    %4515 = vmatprep.subr.bf16.mxu0 0
    %4516 = vmatpush1.bf16.msra.mxu0 0
    %4517 = vmatprep.mubr.bf16.mxu0 0
    %4518 = vmatmul.mubr.bf16.gmra.mrb[0].mxu0 %v406
    %v4519 = vpop.f32.mrb[0].mxu0
    %v4520 = vadd.f32 0.0, %v4519
    %v4521 = vpop.f32.mrb[0].mxu0
    %v4522 = vadd.f32 0.0, %v4521
    %v4523 = vpop.f32.mrb[0].mxu0
    %v4524 = vpop.f32.mrb[0].mxu0
    %4525 = vdwg.mxu0
    %4526 = vmatprep.subr.bf16.mxu0 %v4310
    %4527 = vmatpush1.bf16.msra.mxu0 %v4309
    %4528 = vmatprep.subr.bf16.mxu0 %v4319
    %4529 = vmatpush1.bf16.msra.mxu0 %v4316
    %4530 = vmatprep.subr.bf16.mxu0 0
    %4531 = vmatpush1.bf16.msra.mxu0 0
    %4532 = vmatprep.subr.bf16.mxu0 0
    %4533 = vmatpush1.bf16.msra.mxu0 0
    %4534 = vmatprep.subr.bf16.mxu0 0
    %4535 = vmatpush1.bf16.msra.mxu0 0
    %4536 = vmatprep.subr.bf16.mxu0 0
    %4537 = vmatpush1.bf16.msra.mxu0 0
    %4538 = vmatprep.subr.bf16.mxu0 0
    %4539 = vmatpush1.bf16.msra.mxu0 0
    %4540 = vmatprep.subr.bf16.mxu0 0
    %4541 = vmatpush1.bf16.msra.mxu0 0
    %4542 = vmatprep.subr.bf16.mxu0 0
    %4543 = vmatpush1.bf16.msra.mxu0 0
    %4544 = vmatprep.subr.bf16.mxu0 0
    %4545 = vmatpush1.bf16.msra.mxu0 0
    %4546 = vmatprep.subr.bf16.mxu0 0
    %4547 = vmatpush1.bf16.msra.mxu0 0
    %4548 = vmatprep.subr.bf16.mxu0 0
    %4549 = vmatpush1.bf16.msra.mxu0 0
    %4550 = vmatprep.subr.bf16.mxu0 0
    %4551 = vmatpush1.bf16.msra.mxu0 0
    %4552 = vmatprep.subr.bf16.mxu0 0
    %4553 = vmatpush1.bf16.msra.mxu0 0
    %4554 = vmatprep.subr.bf16.mxu0 0
    %4555 = vmatpush1.bf16.msra.mxu0 0
    %4556 = vmatprep.subr.bf16.mxu0 0
    %4557 = vmatpush1.bf16.msra.mxu0 0
    %4558 = vmatprep.mubr.bf16.mxu0 0
    %4559 = vmatmul.mubr.bf16.gmra.mrb[0].mxu0 %v450
    %v4560 = vpop.f32.mrb[0].mxu0
    %v4561 = vadd.f32 0.0, %v4560
    %v4562 = vpop.f32.mrb[0].mxu0
    %v4563 = vadd.f32 0.0, %v4562
    %v4564 = vpop.f32.mrb[0].mxu0
    %v4565 = vpop.f32.mrb[0].mxu0
    %4566 = vdwg.mxu0
    %4567 = vmatprep.subr.bf16.mxu0 %v4310
    %4568 = vmatpush1.bf16.msra.mxu0 %v4309
    %4569 = vmatprep.subr.bf16.mxu0 %v4319
    %4570 = vmatpush1.bf16.msra.mxu0 %v4316
    %4571 = vmatprep.subr.bf16.mxu0 0
    %4572 = vmatpush1.bf16.msra.mxu0 0
    %4573 = vmatprep.subr.bf16.mxu0 0
    %4574 = vmatpush1.bf16.msra.mxu0 0
    %4575 = vmatprep.subr.bf16.mxu0 0
    %4576 = vmatpush1.bf16.msra.mxu0 0
    %4577 = vmatprep.subr.bf16.mxu0 0
    %4578 = vmatpush1.bf16.msra.mxu0 0
    %4579 = vmatprep.subr.bf16.mxu0 0
    %4580 = vmatpush1.bf16.msra.mxu0 0
    %4581 = vmatprep.subr.bf16.mxu0 0
    %4582 = vmatpush1.bf16.msra.mxu0 0
    %4583 = vmatprep.subr.bf16.mxu0 0
    %4584 = vmatpush1.bf16.msra.mxu0 0
    %4585 = vmatprep.subr.bf16.mxu0 0
    %4586 = vmatpush1.bf16.msra.mxu0 0
    %4587 = vmatprep.subr.bf16.mxu0 0
    %4588 = vmatpush1.bf16.msra.mxu0 0
    %4589 = vmatprep.subr.bf16.mxu0 0
    %4590 = vmatpush1.bf16.msra.mxu0 0
    %4591 = vmatprep.subr.bf16.mxu0 0
    %4592 = vmatpush1.bf16.msra.mxu0 0
    %4593 = vmatprep.subr.bf16.mxu0 0
    %4594 = vmatpush1.bf16.msra.mxu0 0
    %4595 = vmatprep.subr.bf16.mxu0 0
    %4596 = vmatpush1.bf16.msra.mxu0 0
    %4597 = vmatprep.subr.bf16.mxu0 0
    %4598 = vmatpush1.bf16.msra.mxu0 0
    %4599 = vmatprep.mubr.bf16.mxu0 0
    %4600 = vmatmul.mubr.bf16.gmra.mrb[0].mxu0 %v494
    %v4601 = vpop.f32.mrb[0].mxu0
    %v4602 = vadd.f32 0.0, %v4601
    %v4603 = vpop.f32.mrb[0].mxu0
    %v4604 = vadd.f32 0.0, %v4603
    %v4605 = vpop.f32.mrb[0].mxu0
    %v4606 = vpop.f32.mrb[0].mxu0
    %4607 = vdwg.mxu0
    %4608 = vmatprep.subr.bf16.mxu0 %v4310
    %4609 = vmatpush1.bf16.msra.mxu0 %v4309
    %4610 = vmatprep.subr.bf16.mxu0 %v4319
    %4611 = vmatpush1.bf16.msra.mxu0 %v4316
    %4612 = vmatprep.subr.bf16.mxu0 0
    %4613 = vmatpush1.bf16.msra.mxu0 0
    %4614 = vmatprep.subr.bf16.mxu0 0
    %4615 = vmatpush1.bf16.msra.mxu0 0
    %4616 = vmatprep.subr.bf16.mxu0 0
    %4617 = vmatpush1.bf16.msra.mxu0 0
    %4618 = vmatprep.subr.bf16.mxu0 0
    %4619 = vmatpush1.bf16.msra.mxu0 0
    %4620 = vmatprep.subr.bf16.mxu0 0
    %4621 = vmatpush1.bf16.msra.mxu0 0
    %4622 = vmatprep.subr.bf16.mxu0 0
    %4623 = vmatpush1.bf16.msra.mxu0 0
    %4624 = vmatprep.subr.bf16.mxu0 0
    %4625 = vmatpush1.bf16.msra.mxu0 0
    %4626 = vmatprep.subr.bf16.mxu0 0
    %4627 = vmatpush1.bf16.msra.mxu0 0
    %4628 = vmatprep.subr.bf16.mxu0 0
    %4629 = vmatpush1.bf16.msra.mxu0 0
    %4630 = vmatprep.subr.bf16.mxu0 0
    %4631 = vmatpush1.bf16.msra.mxu0 0
    %4632 = vmatprep.subr.bf16.mxu0 0
    %4633 = vmatpush1.bf16.msra.mxu0 0
    %4634 = vmatprep.subr.bf16.mxu0 0
    %4635 = vmatpush1.bf16.msra.mxu0 0
    %4636 = vmatprep.subr.bf16.mxu0 0
    %4637 = vmatpush1.bf16.msra.mxu0 0
    %4638 = vmatprep.subr.bf16.mxu0 0
    %4639 = vmatpush1.bf16.msra.mxu0 0
    %4640 = vmatprep.mubr.bf16.mxu0 0
    %4641 = vmatmul.mubr.bf16.gmra.mrb[0].mxu0 %v538
    %v4642 = vpop.f32.mrb[0].mxu0
    %v4643 = vadd.f32 0.0, %v4642
    %v4644 = vpop.f32.mrb[0].mxu0
    %v4645 = vadd.f32 0.0, %v4644
    %v4646 = vpop.f32.mrb[0].mxu0
    %v4647 = vpop.f32.mrb[0].mxu0
    %4648 = vdwg.mxu0
    %4649 = vmatprep.subr.bf16.mxu0 %v4310
    %4650 = vmatpush1.bf16.msra.mxu0 %v4309
    %4651 = vmatprep.subr.bf16.mxu0 %v4319
    %4652 = vmatpush1.bf16.msra.mxu0 %v4316
    %4653 = vmatprep.subr.bf16.mxu0 0
    %4654 = vmatpush1.bf16.msra.mxu0 0
    %4655 = vmatprep.subr.bf16.mxu0 0
    %4656 = vmatpush1.bf16.msra.mxu0 0
    %4657 = vmatprep.subr.bf16.mxu0 0
    %4658 = vmatpush1.bf16.msra.mxu0 0
    %4659 = vmatprep.subr.bf16.mxu0 0
    %4660 = vmatpush1.bf16.msra.mxu0 0
    %4661 = vmatprep.subr.bf16.mxu0 0
    %4662 = vmatpush1.bf16.msra.mxu0 0
    %4663 = vmatprep.subr.bf16.mxu0 0
    %4664 = vmatpush1.bf16.msra.mxu0 0
    %4665 = vmatprep.subr.bf16.mxu0 0
    %4666 = vmatpush1.bf16.msra.mxu0 0
    %4667 = vmatprep.subr.bf16.mxu0 0
    %4668 = vmatpush1.bf16.msra.mxu0 0
    %4669 = vmatprep.subr.bf16.mxu0 0
    %4670 = vmatpush1.bf16.msra.mxu0 0
    %4671 = vmatprep.subr.bf16.mxu0 0
    %4672 = vmatpush1.bf16.msra.mxu0 0
    %4673 = vmatprep.subr.bf16.mxu0 0
    %4674 = vmatpush1.bf16.msra.mxu0 0
    %4675 = vmatprep.subr.bf16.mxu0 0
    %4676 = vmatpush1.bf16.msra.mxu0 0
    %4677 = vmatprep.subr.bf16.mxu0 0
    %4678 = vmatpush1.bf16.msra.mxu0 0
    %4679 = vmatprep.subr.bf16.mxu0 0
    %4680 = vmatpush1.bf16.msra.mxu0 0
    %4681 = vmatprep.mubr.bf16.mxu0 0
    %4682 = vmatmul.mubr.bf16.gmra.mrb[0].mxu0 %v582
    %v4683 = vpop.f32.mrb[0].mxu0
    %v4684 = vadd.f32 0.0, %v4683
    %v4685 = vpop.f32.mrb[0].mxu0
    %v4686 = vadd.f32 0.0, %v4685
    %v4687 = vpop.f32.mrb[0].mxu0
    %v4688 = vpop.f32.mrb[0].mxu0
    %4689 = vdwg.mxu0
    %4690 = vmatprep.subr.bf16.mxu0 %v4310
    %4691 = vmatpush1.bf16.msra.mxu0 %v4309
    %4692 = vmatprep.subr.bf16.mxu0 %v4319
    %4693 = vmatpush1.bf16.msra.mxu0 %v4316
    %4694 = vmatprep.subr.bf16.mxu0 0
    %4695 = vmatpush1.bf16.msra.mxu0 0
    %4696 = vmatprep.subr.bf16.mxu0 0
    %4697 = vmatpush1.bf16.msra.mxu0 0
    %4698 = vmatprep.subr.bf16.mxu0 0
    %4699 = vmatpush1.bf16.msra.mxu0 0
    %4700 = vmatprep.subr.bf16.mxu0 0
    %4701 = vmatpush1.bf16.msra.mxu0 0
    %4702 = vmatprep.subr.bf16.mxu0 0
    %4703 = vmatpush1.bf16.msra.mxu0 0
    %4704 = vmatprep.subr.bf16.mxu0 0
    %4705 = vmatpush1.bf16.msra.mxu0 0
    %4706 = vmatprep.subr.bf16.mxu0 0
    %4707 = vmatpush1.bf16.msra.mxu0 0
    %4708 = vmatprep.subr.bf16.mxu0 0
    %4709 = vmatpush1.bf16.msra.mxu0 0
    %4710 = vmatprep.subr.bf16.mxu0 0
    %4711 = vmatpush1.bf16.msra.mxu0 0
    %4712 = vmatprep.subr.bf16.mxu0 0
    %4713 = vmatpush1.bf16.msra.mxu0 0
    %4714 = vmatprep.subr.bf16.mxu0 0
    %4715 = vmatpush1.bf16.msra.mxu0 0
    %4716 = vmatprep.subr.bf16.mxu0 0
    %4717 = vmatpush1.bf16.msra.mxu0 0
    %4718 = vmatprep.subr.bf16.mxu0 0
    %4719 = vmatpush1.bf16.msra.mxu0 0
    %4720 = vmatprep.subr.bf16.mxu0 0
    %4721 = vmatpush1.bf16.msra.mxu0 0
    %4722 = vmatprep.mubr.bf16.mxu0 0
    %4723 = vmatmul.mubr.bf16.gmra.mrb[0].mxu0 %v626
    %v4724 = vpop.f32.mrb[0].mxu0
    %v4725 = vadd.f32 0.0, %v4724
    %v4726 = vpop.f32.mrb[0].mxu0
    %v4727 = vadd.f32 0.0, %v4726
    %v4728 = vpop.f32.mrb[0].mxu0
    %v4729 = vpop.f32.mrb[0].mxu0
    %4730 = vdwg.mxu0
    %4731 = vmatprep.subr.bf16.mxu0 %v4310
    %4732 = vmatpush1.bf16.msra.mxu0 %v4309
    %4733 = vmatprep.subr.bf16.mxu0 %v4319
    %4734 = vmatpush1.bf16.msra.mxu0 %v4316
    %4735 = vmatprep.subr.bf16.mxu0 0
    %4736 = vmatpush1.bf16.msra.mxu0 0
    %4737 = vmatprep.subr.bf16.mxu0 0
    %4738 = vmatpush1.bf16.msra.mxu0 0
    %4739 = vmatprep.subr.bf16.mxu0 0
    %4740 = vmatpush1.bf16.msra.mxu0 0
    %4741 = vmatprep.subr.bf16.mxu0 0
    %4742 = vmatpush1.bf16.msra.mxu0 0
    %4743 = vmatprep.subr.bf16.mxu0 0
    %4744 = vmatpush1.bf16.msra.mxu0 0
    %4745 = vmatprep.subr.bf16.mxu0 0
    %4746 = vmatpush1.bf16.msra.mxu0 0
    %4747 = vmatprep.subr.bf16.mxu0 0
    %4748 = vmatpush1.bf16.msra.mxu0 0
    %4749 = vmatprep.subr.bf16.mxu0 0
    %4750 = vmatpush1.bf16.msra.mxu0 0
    %4751 = vmatprep.subr.bf16.mxu0 0
    %4752 = vmatpush1.bf16.msra.mxu0 0
    %4753 = vmatprep.subr.bf16.mxu0 0
    %4754 = vmatpush1.bf16.msra.mxu0 0
    %4755 = vmatprep.subr.bf16.mxu0 0
    %4756 = vmatpush1.bf16.msra.mxu0 0
    %4757 = vmatprep.subr.bf16.mxu0 0
    %4758 = vmatpush1.bf16.msra.mxu0 0
    %4759 = vmatprep.subr.bf16.mxu0 0
    %4760 = vmatpush1.bf16.msra.mxu0 0
    %4761 = vmatprep.subr.bf16.mxu0 0
    %4762 = vmatpush1.bf16.msra.mxu0 0
    %4763 = vmatprep.mubr.bf16.mxu0 0
    %4764 = vmatmul.mubr.bf16.gmra.mrb[0].mxu0 %v670
    %v4765 = vpop.f32.mrb[0].mxu0
    %v4766 = vadd.f32 0.0, %v4765
    %v4767 = vpop.f32.mrb[0].mxu0
    %v4768 = vadd.f32 0.0, %v4767
    %v4769 = vpop.f32.mrb[0].mxu0
    %v4770 = vpop.f32.mrb[0].mxu0
    %4771 = vdwg.mxu0
    %4772 = vmatprep.subr.bf16.mxu0 %v4310
    %4773 = vmatpush1.bf16.msra.mxu0 %v4309
    %4774 = vmatprep.subr.bf16.mxu0 %v4319
    %4775 = vmatpush1.bf16.msra.mxu0 %v4316
    %4776 = vmatprep.subr.bf16.mxu0 0
    %4777 = vmatpush1.bf16.msra.mxu0 0
    %4778 = vmatprep.subr.bf16.mxu0 0
    %4779 = vmatpush1.bf16.msra.mxu0 0
    %4780 = vmatprep.subr.bf16.mxu0 0
    %4781 = vmatpush1.bf16.msra.mxu0 0
    %4782 = vmatprep.subr.bf16.mxu0 0
    %4783 = vmatpush1.bf16.msra.mxu0 0
    %4784 = vmatprep.subr.bf16.mxu0 0
    %4785 = vmatpush1.bf16.msra.mxu0 0
    %4786 = vmatprep.subr.bf16.mxu0 0
    %4787 = vmatpush1.bf16.msra.mxu0 0
    %4788 = vmatprep.subr.bf16.mxu0 0
    %4789 = vmatpush1.bf16.msra.mxu0 0
    %4790 = vmatprep.subr.bf16.mxu0 0
    %4791 = vmatpush1.bf16.msra.mxu0 0
    %4792 = vmatprep.subr.bf16.mxu0 0
    %4793 = vmatpush1.bf16.msra.mxu0 0
    %4794 = vmatprep.subr.bf16.mxu0 0
    %4795 = vmatpush1.bf16.msra.mxu0 0
    %4796 = vmatprep.subr.bf16.mxu0 0
    %4797 = vmatpush1.bf16.msra.mxu0 0
    %4798 = vmatprep.subr.bf16.mxu0 0
    %4799 = vmatpush1.bf16.msra.mxu0 0
    %4800 = vmatprep.subr.bf16.mxu0 0
    %4801 = vmatpush1.bf16.msra.mxu0 0
    %4802 = vmatprep.subr.bf16.mxu0 0
    %4803 = vmatpush1.bf16.msra.mxu0 0
    %4804 = vmatprep.mubr.bf16.mxu0 0
    %4805 = vmatmul.mubr.bf16.gmra.mrb[0].mxu0 %v714
    %v4806 = vpop.f32.mrb[0].mxu0
    %v4807 = vadd.f32 0.0, %v4806
    %v4808 = vpop.f32.mrb[0].mxu0
    %v4809 = vadd.f32 0.0, %v4808
    %v4810 = vpop.f32.mrb[0].mxu0
    %v4811 = vpop.f32.mrb[0].mxu0
    %4812 = vdwg.mxu0
    %4813 = vmatprep.subr.bf16.mxu0 %v4310
    %4814 = vmatpush1.bf16.msra.mxu0 %v4309
    %4815 = vmatprep.subr.bf16.mxu0 %v4319
    %4816 = vmatpush1.bf16.msra.mxu0 %v4316
    %4817 = vmatprep.subr.bf16.mxu0 0
    %4818 = vmatpush1.bf16.msra.mxu0 0
    %4819 = vmatprep.subr.bf16.mxu0 0
    %4820 = vmatpush1.bf16.msra.mxu0 0
    %4821 = vmatprep.subr.bf16.mxu0 0
    %4822 = vmatpush1.bf16.msra.mxu0 0
    %4823 = vmatprep.subr.bf16.mxu0 0
    %4824 = vmatpush1.bf16.msra.mxu0 0
    %4825 = vmatprep.subr.bf16.mxu0 0
    %4826 = vmatpush1.bf16.msra.mxu0 0
    %4827 = vmatprep.subr.bf16.mxu0 0
    %4828 = vmatpush1.bf16.msra.mxu0 0
    %4829 = vmatprep.subr.bf16.mxu0 0
    %4830 = vmatpush1.bf16.msra.mxu0 0
    %4831 = vmatprep.subr.bf16.mxu0 0
    %4832 = vmatpush1.bf16.msra.mxu0 0
    %4833 = vmatprep.subr.bf16.mxu0 0
    %4834 = vmatpush1.bf16.msra.mxu0 0
    %4835 = vmatprep.subr.bf16.mxu0 0
    %4836 = vmatpush1.bf16.msra.mxu0 0
    %4837 = vmatprep.subr.bf16.mxu0 0
    %4838 = vmatpush1.bf16.msra.mxu0 0
    %4839 = vmatprep.subr.bf16.mxu0 0
    %4840 = vmatpush1.bf16.msra.mxu0 0
    %4841 = vmatprep.subr.bf16.mxu0 0
    %4842 = vmatpush1.bf16.msra.mxu0 0
    %4843 = vmatprep.subr.bf16.mxu0 0
    %4844 = vmatpush1.bf16.msra.mxu0 0
    %4845 = vmatprep.mubr.bf16.mxu0 0
    %4846 = vmatmul.mubr.bf16.gmra.mrb[0].mxu0 %v758
    %v4847 = vpop.f32.mrb[0].mxu0
    %v4848 = vadd.f32 0.0, %v4847
    %v4849 = vpop.f32.mrb[0].mxu0
    %v4850 = vadd.f32 0.0, %v4849
    %v4851 = vpop.f32.mrb[0].mxu0
    %v4852 = vpop.f32.mrb[0].mxu0
    %4853 = vdwg.mxu0
    %4854 = vmatprep.subr.bf16.mxu0 %v4310
    %4855 = vmatpush1.bf16.msra.mxu0 %v4309
    %4856 = vmatprep.subr.bf16.mxu0 %v4319
    %4857 = vmatpush1.bf16.msra.mxu0 %v4316
    %4858 = vmatprep.subr.bf16.mxu0 0
    %4859 = vmatpush1.bf16.msra.mxu0 0
    %4860 = vmatprep.subr.bf16.mxu0 0
    %4861 = vmatpush1.bf16.msra.mxu0 0
    %4862 = vmatprep.subr.bf16.mxu0 0
    %4863 = vmatpush1.bf16.msra.mxu0 0
    %4864 = vmatprep.subr.bf16.mxu0 0
    %4865 = vmatpush1.bf16.msra.mxu0 0
    %4866 = vmatprep.subr.bf16.mxu0 0
    %4867 = vmatpush1.bf16.msra.mxu0 0
    %4868 = vmatprep.subr.bf16.mxu0 0
    %4869 = vmatpush1.bf16.msra.mxu0 0
    %4870 = vmatprep.subr.bf16.mxu0 0
    %4871 = vmatpush1.bf16.msra.mxu0 0
    %4872 = vmatprep.subr.bf16.mxu0 0
    %4873 = vmatpush1.bf16.msra.mxu0 0
    %4874 = vmatprep.subr.bf16.mxu0 0
    %4875 = vmatpush1.bf16.msra.mxu0 0
    %4876 = vmatprep.subr.bf16.mxu0 0
    %4877 = vmatpush1.bf16.msra.mxu0 0
    %4878 = vmatprep.subr.bf16.mxu0 0
    %4879 = vmatpush1.bf16.msra.mxu0 0
    %4880 = vmatprep.subr.bf16.mxu0 0
    %4881 = vmatpush1.bf16.msra.mxu0 0
    %4882 = vmatprep.subr.bf16.mxu0 0
    %4883 = vmatpush1.bf16.msra.mxu0 0
    %4884 = vmatprep.subr.bf16.mxu0 0
    %4885 = vmatpush1.bf16.msra.mxu0 0
    %4886 = vmatprep.mubr.bf16.mxu0 0
    %4887 = vmatmul.mubr.bf16.gmra.mrb[0].mxu0 %v802
    %v4888 = vpop.f32.mrb[0].mxu0
    %v4889 = vadd.f32 0.0, %v4888
    %v4890 = vpop.f32.mrb[0].mxu0
    %v4891 = vadd.f32 0.0, %v4890
    %v4892 = vpop.f32.mrb[0].mxu0
    %v4893 = vpop.f32.mrb[0].mxu0
    %4894 = vdwg.mxu0
    %4895 = vmatprep.subr.bf16.mxu0 %v4310
    %4896 = vmatpush1.bf16.msra.mxu0 %v4309
    %4897 = vmatprep.subr.bf16.mxu0 %v4319
    %4898 = vmatpush1.bf16.msra.mxu0 %v4316
    %4899 = vmatprep.subr.bf16.mxu0 0
    %4900 = vmatpush1.bf16.msra.mxu0 0
    %4901 = vmatprep.subr.bf16.mxu0 0
    %4902 = vmatpush1.bf16.msra.mxu0 0
    %4903 = vmatprep.subr.bf16.mxu0 0
    %4904 = vmatpush1.bf16.msra.mxu0 0
    %4905 = vmatprep.subr.bf16.mxu0 0
    %4906 = vmatpush1.bf16.msra.mxu0 0
    %4907 = vmatprep.subr.bf16.mxu0 0
    %4908 = vmatpush1.bf16.msra.mxu0 0
    %4909 = vmatprep.subr.bf16.mxu0 0
    %4910 = vmatpush1.bf16.msra.mxu0 0
    %4911 = vmatprep.subr.bf16.mxu0 0
    %4912 = vmatpush1.bf16.msra.mxu0 0
    %4913 = vmatprep.subr.bf16.mxu0 0
    %4914 = vmatpush1.bf16.msra.mxu0 0
    %4915 = vmatprep.subr.bf16.mxu0 0
    %4916 = vmatpush1.bf16.msra.mxu0 0
    %4917 = vmatprep.subr.bf16.mxu0 0
    %4918 = vmatpush1.bf16.msra.mxu0 0
    %4919 = vmatprep.subr.bf16.mxu0 0
    %4920 = vmatpush1.bf16.msra.mxu0 0
    %4921 = vmatprep.subr.bf16.mxu0 0
    %4922 = vmatpush1.bf16.msra.mxu0 0
    %4923 = vmatprep.subr.bf16.mxu0 0
    %4924 = vmatpush1.bf16.msra.mxu0 0
    %4925 = vmatprep.subr.bf16.mxu0 0
    %4926 = vmatpush1.bf16.msra.mxu0 0
    %4927 = vmatprep.mubr.bf16.mxu0 0
    %4928 = vmatmul.mubr.bf16.gmra.mrb[0].mxu0 %v846
    %v4929 = vpop.f32.mrb[0].mxu0
    %v4930 = vadd.f32 0.0, %v4929
    %v4931 = vpop.f32.mrb[0].mxu0
    %v4932 = vadd.f32 0.0, %v4931
    %v4933 = vpop.f32.mrb[0].mxu0
    %v4934 = vpop.f32.mrb[0].mxu0
    %4935 = vdwg.mxu0
    %4936 = vmatprep.subr.bf16.mxu0 %v4310
    %4937 = vmatpush1.bf16.msra.mxu0 %v4309
    %4938 = vmatprep.subr.bf16.mxu0 %v4319
    %4939 = vmatpush1.bf16.msra.mxu0 %v4316
    %4940 = vmatprep.subr.bf16.mxu0 0
    %4941 = vmatpush1.bf16.msra.mxu0 0
    %4942 = vmatprep.subr.bf16.mxu0 0
    %4943 = vmatpush1.bf16.msra.mxu0 0
    %4944 = vmatprep.subr.bf16.mxu0 0
    %4945 = vmatpush1.bf16.msra.mxu0 0
    %4946 = vmatprep.subr.bf16.mxu0 0
    %4947 = vmatpush1.bf16.msra.mxu0 0
    %4948 = vmatprep.subr.bf16.mxu0 0
    %4949 = vmatpush1.bf16.msra.mxu0 0
    %4950 = vmatprep.subr.bf16.mxu0 0
    %4951 = vmatpush1.bf16.msra.mxu0 0
    %4952 = vmatprep.subr.bf16.mxu0 0
    %4953 = vmatpush1.bf16.msra.mxu0 0
    %4954 = vmatprep.subr.bf16.mxu0 0
    %4955 = vmatpush1.bf16.msra.mxu0 0
    %4956 = vmatprep.subr.bf16.mxu0 0
    %4957 = vmatpush1.bf16.msra.mxu0 0
    %4958 = vmatprep.subr.bf16.mxu0 0
    %4959 = vmatpush1.bf16.msra.mxu0 0
    %4960 = vmatprep.subr.bf16.mxu0 0
    %4961 = vmatpush1.bf16.msra.mxu0 0
    %4962 = vmatprep.subr.bf16.mxu0 0
    %4963 = vmatpush1.bf16.msra.mxu0 0
    %4964 = vmatprep.subr.bf16.mxu0 0
    %4965 = vmatpush1.bf16.msra.mxu0 0
    %4966 = vmatprep.subr.bf16.mxu0 0
    %4967 = vmatpush1.bf16.msra.mxu0 0
    %4968 = vmatprep.mubr.bf16.mxu0 0
    %4969 = vmatmul.mubr.bf16.gmra.mrb[0].mxu0 %v890
    %v4970 = vpop.f32.mrb[0].mxu0
    %v4971 = vadd.f32 0.0, %v4970
    %v4972 = vpop.f32.mrb[0].mxu0
    %v4973 = vadd.f32 0.0, %v4972
    %v4974 = vpop.f32.mrb[0].mxu0
    %v4975 = vpop.f32.mrb[0].mxu0
    %4976 = vdwg.mxu0
    %4977 = vmatprep.subr.bf16.mxu0 %v4310
    %4978 = vmatpush1.bf16.msra.mxu0 %v4309
    %4979 = vmatprep.subr.bf16.mxu0 %v4319
    %4980 = vmatpush1.bf16.msra.mxu0 %v4316
    %4981 = vmatprep.subr.bf16.mxu0 0
    %4982 = vmatpush1.bf16.msra.mxu0 0
    %4983 = vmatprep.subr.bf16.mxu0 0
    %4984 = vmatpush1.bf16.msra.mxu0 0
    %4985 = vmatprep.subr.bf16.mxu0 0
    %4986 = vmatpush1.bf16.msra.mxu0 0
    %4987 = vmatprep.subr.bf16.mxu0 0
    %4988 = vmatpush1.bf16.msra.mxu0 0
    %4989 = vmatprep.subr.bf16.mxu0 0
    %4990 = vmatpush1.bf16.msra.mxu0 0
    %4991 = vmatprep.subr.bf16.mxu0 0
    %4992 = vmatpush1.bf16.msra.mxu0 0
    %4993 = vmatprep.subr.bf16.mxu0 0
    %4994 = vmatpush1.bf16.msra.mxu0 0
    %4995 = vmatprep.subr.bf16.mxu0 0
    %4996 = vmatpush1.bf16.msra.mxu0 0
    %4997 = vmatprep.subr.bf16.mxu0 0
    %4998 = vmatpush1.bf16.msra.mxu0 0
    %4999 = vmatprep.subr.bf16.mxu0 0
    %5000 = vmatpush1.bf16.msra.mxu0 0
    %5001 = vmatprep.subr.bf16.mxu0 0
    %5002 = vmatpush1.bf16.msra.mxu0 0
    %5003 = vmatprep.subr.bf16.mxu0 0
    %5004 = vmatpush1.bf16.msra.mxu0 0
    %5005 = vmatprep.subr.bf16.mxu0 0
    %5006 = vmatpush1.bf16.msra.mxu0 0
    %5007 = vmatprep.subr.bf16.mxu0 0
    %5008 = vmatpush1.bf16.msra.mxu0 0
    %5009 = vmatprep.mubr.bf16.mxu0 0
    %5010 = vmatmul.mubr.bf16.gmra.mrb[0].mxu0 %v934
    %v5011 = vpop.f32.mrb[0].mxu0
    %v5012 = vadd.f32 0.0, %v5011
    %v5013 = vpop.f32.mrb[0].mxu0
    %v5014 = vadd.f32 0.0, %v5013
    %v5015 = vpop.f32.mrb[0].mxu0
    %v5016 = vpop.f32.mrb[0].mxu0
    %5017 = vdwg.mxu0
    %5018 = vmatprep.subr.bf16.mxu0 %v4310
    %5019 = vmatpush1.bf16.msra.mxu0 %v4309
    %5020 = vmatprep.subr.bf16.mxu0 %v4319
    %5021 = vmatpush1.bf16.msra.mxu0 %v4316
    %5022 = vmatprep.subr.bf16.mxu0 0
    %5023 = vmatpush1.bf16.msra.mxu0 0
    %5024 = vmatprep.subr.bf16.mxu0 0
    %5025 = vmatpush1.bf16.msra.mxu0 0
    %5026 = vmatprep.subr.bf16.mxu0 0
    %5027 = vmatpush1.bf16.msra.mxu0 0
    %5028 = vmatprep.subr.bf16.mxu0 0
    %5029 = vmatpush1.bf16.msra.mxu0 0
    %5030 = vmatprep.subr.bf16.mxu0 0
    %5031 = vmatpush1.bf16.msra.mxu0 0
    %5032 = vmatprep.subr.bf16.mxu0 0
    %5033 = vmatpush1.bf16.msra.mxu0 0
    %5034 = vmatprep.subr.bf16.mxu0 0
    %5035 = vmatpush1.bf16.msra.mxu0 0
    %5036 = vmatprep.subr.bf16.mxu0 0
    %5037 = vmatpush1.bf16.msra.mxu0 0
    %5038 = vmatprep.subr.bf16.mxu0 0
    %5039 = vmatpush1.bf16.msra.mxu0 0
    %5040 = vmatprep.subr.bf16.mxu0 0
    %5041 = vmatpush1.bf16.msra.mxu0 0
    %5042 = vmatprep.subr.bf16.mxu0 0
    %5043 = vmatpush1.bf16.msra.mxu0 0
    %5044 = vmatprep.subr.bf16.mxu0 0
    %5045 = vmatpush1.bf16.msra.mxu0 0
    %5046 = vmatprep.subr.bf16.mxu0 0
    %5047 = vmatpush1.bf16.msra.mxu0 0
    %5048 = vmatprep.subr.bf16.mxu0 0
    %5049 = vmatpush1.bf16.msra.mxu0 0
    %5050 = vmatprep.mubr.bf16.mxu0 0
    %5051 = vmatmul.mubr.bf16.gmra.mrb[0].mxu0 %v978
    %v5052 = vpop.f32.mrb[0].mxu0
    %v5053 = vadd.f32 0.0, %v5052
    %v5054 = vpop.f32.mrb[0].mxu0
    %v5055 = vadd.f32 0.0, %v5054
    %v5056 = vpop.f32.mrb[0].mxu0
    %v5057 = vpop.f32.mrb[0].mxu0
    %5058 = vdwg.mxu0
    %5059 = vmatprep.subr.bf16.mxu0 %v4310
    %5060 = vmatpush1.bf16.msra.mxu0 %v4309
    %5061 = vmatprep.subr.bf16.mxu0 %v4319
    %5062 = vmatpush1.bf16.msra.mxu0 %v4316
    %5063 = vmatprep.subr.bf16.mxu0 0
    %5064 = vmatpush1.bf16.msra.mxu0 0
    %5065 = vmatprep.subr.bf16.mxu0 0
    %5066 = vmatpush1.bf16.msra.mxu0 0
    %5067 = vmatprep.subr.bf16.mxu0 0
    %5068 = vmatpush1.bf16.msra.mxu0 0
    %5069 = vmatprep.subr.bf16.mxu0 0
    %5070 = vmatpush1.bf16.msra.mxu0 0
    %5071 = vmatprep.subr.bf16.mxu0 0
    %5072 = vmatpush1.bf16.msra.mxu0 0
    %5073 = vmatprep.subr.bf16.mxu0 0
    %5074 = vmatpush1.bf16.msra.mxu0 0
    %5075 = vmatprep.subr.bf16.mxu0 0
    %5076 = vmatpush1.bf16.msra.mxu0 0
    %5077 = vmatprep.subr.bf16.mxu0 0
    %5078 = vmatpush1.bf16.msra.mxu0 0
    %5079 = vmatprep.subr.bf16.mxu0 0
    %5080 = vmatpush1.bf16.msra.mxu0 0
    %5081 = vmatprep.subr.bf16.mxu0 0
    %5082 = vmatpush1.bf16.msra.mxu0 0
    %5083 = vmatprep.subr.bf16.mxu0 0
    %5084 = vmatpush1.bf16.msra.mxu0 0
    %5085 = vmatprep.subr.bf16.mxu0 0
    %5086 = vmatpush1.bf16.msra.mxu0 0
    %5087 = vmatprep.subr.bf16.mxu0 0
    %5088 = vmatpush1.bf16.msra.mxu0 0
    %5089 = vmatprep.subr.bf16.mxu0 0
    %5090 = vmatpush1.bf16.msra.mxu0 0
    %5091 = vmatprep.mubr.bf16.mxu0 0
    %5092 = vmatmul.mubr.bf16.gmra.mrb[0].mxu0 %v1022
    %v5093 = vpop.f32.mrb[0].mxu0
    %v5094 = vadd.f32 0.0, %v5093
    %v5095 = vpop.f32.mrb[0].mxu0
    %v5096 = vadd.f32 0.0, %v5095
    %v5097 = vpop.f32.mrb[0].mxu0
    %v5098 = vpop.f32.mrb[0].mxu0
    %5099 = vdwg.mxu0
    %5100 = vmatprep.subr.bf16.mxu0 %v4310
    %5101 = vmatpush1.bf16.msra.mxu0 %v4309
    %5102 = vmatprep.subr.bf16.mxu0 %v4319
    %5103 = vmatpush1.bf16.msra.mxu0 %v4316
    %5104 = vmatprep.subr.bf16.mxu0 0
    %5105 = vmatpush1.bf16.msra.mxu0 0
    %5106 = vmatprep.subr.bf16.mxu0 0
    %5107 = vmatpush1.bf16.msra.mxu0 0
    %5108 = vmatprep.subr.bf16.mxu0 0
    %5109 = vmatpush1.bf16.msra.mxu0 0
    %5110 = vmatprep.subr.bf16.mxu0 0
    %5111 = vmatpush1.bf16.msra.mxu0 0
    %5112 = vmatprep.subr.bf16.mxu0 0
    %5113 = vmatpush1.bf16.msra.mxu0 0
    %5114 = vmatprep.subr.bf16.mxu0 0
    %5115 = vmatpush1.bf16.msra.mxu0 0
    %5116 = vmatprep.subr.bf16.mxu0 0
    %5117 = vmatpush1.bf16.msra.mxu0 0
    %5118 = vmatprep.subr.bf16.mxu0 0
    %5119 = vmatpush1.bf16.msra.mxu0 0
    %5120 = vmatprep.subr.bf16.mxu0 0
    %5121 = vmatpush1.bf16.msra.mxu0 0
    %5122 = vmatprep.subr.bf16.mxu0 0
    %5123 = vmatpush1.bf16.msra.mxu0 0
    %5124 = vmatprep.subr.bf16.mxu0 0
    %5125 = vmatpush1.bf16.msra.mxu0 0
    %5126 = vmatprep.subr.bf16.mxu0 0
    %5127 = vmatpush1.bf16.msra.mxu0 0
    %5128 = vmatprep.subr.bf16.mxu0 0
    %5129 = vmatpush1.bf16.msra.mxu0 0
    %5130 = vmatprep.subr.bf16.mxu0 0
    %5131 = vmatpush1.bf16.msra.mxu0 0
    %5132 = vmatprep.mubr.bf16.mxu0 0
    %5133 = vmatmul.mubr.bf16.gmra.mrb[0].mxu0 %v1066
    %v5134 = vpop.f32.mrb[0].mxu0
    %v5135 = vadd.f32 0.0, %v5134
    %v5136 = vpop.f32.mrb[0].mxu0
    %v5137 = vadd.f32 0.0, %v5136
    %v5138 = vpop.f32.mrb[0].mxu0
    %v5139 = vpop.f32.mrb[0].mxu0
    %5140 = vdwg.mxu0
    %5141 = vmatprep.subr.bf16.mxu0 %v4310
    %5142 = vmatpush1.bf16.msra.mxu0 %v4309
    %5143 = vmatprep.subr.bf16.mxu0 %v4319
    %5144 = vmatpush1.bf16.msra.mxu0 %v4316
    %5145 = vmatprep.subr.bf16.mxu0 0
    %5146 = vmatpush1.bf16.msra.mxu0 0
    %5147 = vmatprep.subr.bf16.mxu0 0
    %5148 = vmatpush1.bf16.msra.mxu0 0
    %5149 = vmatprep.subr.bf16.mxu0 0
    %5150 = vmatpush1.bf16.msra.mxu0 0
    %5151 = vmatprep.subr.bf16.mxu0 0
    %5152 = vmatpush1.bf16.msra.mxu0 0
    %5153 = vmatprep.subr.bf16.mxu0 0
    %5154 = vmatpush1.bf16.msra.mxu0 0
    %5155 = vmatprep.subr.bf16.mxu0 0
    %5156 = vmatpush1.bf16.msra.mxu0 0
    %5157 = vmatprep.subr.bf16.mxu0 0
    %5158 = vmatpush1.bf16.msra.mxu0 0
    %5159 = vmatprep.subr.bf16.mxu0 0
    %5160 = vmatpush1.bf16.msra.mxu0 0
    %5161 = vmatprep.subr.bf16.mxu0 0
    %5162 = vmatpush1.bf16.msra.mxu0 0
    %5163 = vmatprep.subr.bf16.mxu0 0
    %5164 = vmatpush1.bf16.msra.mxu0 0
    %5165 = vmatprep.subr.bf16.mxu0 0
    %5166 = vmatpush1.bf16.msra.mxu0 0
    %5167 = vmatprep.subr.bf16.mxu0 0
    %5168 = vmatpush1.bf16.msra.mxu0 0
    %5169 = vmatprep.subr.bf16.mxu0 0
    %5170 = vmatpush1.bf16.msra.mxu0 0
    %5171 = vmatprep.subr.bf16.mxu0 0
    %5172 = vmatpush1.bf16.msra.mxu0 0
    %5173 = vmatprep.mubr.bf16.mxu0 0
    %5174 = vmatmul.mubr.bf16.gmra.mrb[0].mxu0 %v1110
    %v5175 = vpop.f32.mrb[0].mxu0
    %v5176 = vadd.f32 0.0, %v5175
    %v5177 = vpop.f32.mrb[0].mxu0
    %v5178 = vadd.f32 0.0, %v5177
    %v5179 = vpop.f32.mrb[0].mxu0
    %v5180 = vpop.f32.mrb[0].mxu0
    %5181 = vdwg.mxu0
    %5182 = vmatprep.subr.bf16.mxu0 %v4310
    %5183 = vmatpush1.bf16.msra.mxu0 %v4309
    %5184 = vmatprep.subr.bf16.mxu0 %v4319
    %5185 = vmatpush1.bf16.msra.mxu0 %v4316
    %5186 = vmatprep.subr.bf16.mxu0 0
    %5187 = vmatpush1.bf16.msra.mxu0 0
    %5188 = vmatprep.subr.bf16.mxu0 0
    %5189 = vmatpush1.bf16.msra.mxu0 0
    %5190 = vmatprep.subr.bf16.mxu0 0
    %5191 = vmatpush1.bf16.msra.mxu0 0
    %5192 = vmatprep.subr.bf16.mxu0 0
    %5193 = vmatpush1.bf16.msra.mxu0 0
    %5194 = vmatprep.subr.bf16.mxu0 0
    %5195 = vmatpush1.bf16.msra.mxu0 0
    %5196 = vmatprep.subr.bf16.mxu0 0
    %5197 = vmatpush1.bf16.msra.mxu0 0
    %5198 = vmatprep.subr.bf16.mxu0 0
    %5199 = vmatpush1.bf16.msra.mxu0 0
    %5200 = vmatprep.subr.bf16.mxu0 0
    %5201 = vmatpush1.bf16.msra.mxu0 0
    %5202 = vmatprep.subr.bf16.mxu0 0
    %5203 = vmatpush1.bf16.msra.mxu0 0
    %5204 = vmatprep.subr.bf16.mxu0 0
    %5205 = vmatpush1.bf16.msra.mxu0 0
    %5206 = vmatprep.subr.bf16.mxu0 0
    %5207 = vmatpush1.bf16.msra.mxu0 0
    %5208 = vmatprep.subr.bf16.mxu0 0
    %5209 = vmatpush1.bf16.msra.mxu0 0
    %5210 = vmatprep.subr.bf16.mxu0 0
    %5211 = vmatpush1.bf16.msra.mxu0 0
    %5212 = vmatprep.subr.bf16.mxu0 0
    %5213 = vmatpush1.bf16.msra.mxu0 0
    %5214 = vmatprep.mubr.bf16.mxu0 0
    %5215 = vmatmul.mubr.bf16.gmra.mrb[0].mxu0 %v3137
    %v5216 = vpop.f32.mrb[0].mxu0
    %v5217 = vadd.f32 0.0, %v5216
    %v5218 = vpop.f32.mrb[0].mxu0
    %v5219 = vadd.f32 0.0, %v5218
    %v5220 = vpop.f32.mrb[0].mxu0
    %v5221 = vpop.f32.mrb[0].mxu0
    %5222 = vdwg.mxu0
    %5223 = vmatprep.subr.bf16.mxu0 %v4310
    %5224 = vmatpush1.bf16.msra.mxu0 %v4309
    %5225 = vmatprep.subr.bf16.mxu0 %v4319
    %5226 = vmatpush1.bf16.msra.mxu0 %v4316
    %5227 = vmatprep.subr.bf16.mxu0 0
    %5228 = vmatpush1.bf16.msra.mxu0 0
    %5229 = vmatprep.subr.bf16.mxu0 0
    %5230 = vmatpush1.bf16.msra.mxu0 0
    %5231 = vmatprep.subr.bf16.mxu0 0
    %5232 = vmatpush1.bf16.msra.mxu0 0
    %5233 = vmatprep.subr.bf16.mxu0 0
    %5234 = vmatpush1.bf16.msra.mxu0 0
    %5235 = vmatprep.subr.bf16.mxu0 0
    %5236 = vmatpush1.bf16.msra.mxu0 0
    %5237 = vmatprep.subr.bf16.mxu0 0
    %5238 = vmatpush1.bf16.msra.mxu0 0
    %5239 = vmatprep.subr.bf16.mxu0 0
    %5240 = vmatpush1.bf16.msra.mxu0 0
    %5241 = vmatprep.subr.bf16.mxu0 0
    %5242 = vmatpush1.bf16.msra.mxu0 0
    %5243 = vmatprep.subr.bf16.mxu0 0
    %5244 = vmatpush1.bf16.msra.mxu0 0
    %5245 = vmatprep.subr.bf16.mxu0 0
    %5246 = vmatpush1.bf16.msra.mxu0 0
    %5247 = vmatprep.subr.bf16.mxu0 0
    %5248 = vmatpush1.bf16.msra.mxu0 0
    %5249 = vmatprep.subr.bf16.mxu0 0
    %5250 = vmatpush1.bf16.msra.mxu0 0
    %5251 = vmatprep.subr.bf16.mxu0 0
    %5252 = vmatpush1.bf16.msra.mxu0 0
    %5253 = vmatprep.subr.bf16.mxu0 0
    %5254 = vmatpush1.bf16.msra.mxu0 0
    %5255 = vmatprep.mubr.bf16.mxu0 0
    %5256 = vmatmul.mubr.bf16.gmra.mrb[0].mxu0 %v4201
    %v5257 = vpop.f32.mrb[0].mxu0
    %v5258 = vadd.f32 0.0, %v5257
    %v5259 = vpop.f32.mrb[0].mxu0
    %v5260 = vadd.f32 0.0, %v5259
    %v5261 = vpop.f32.mrb[0].mxu0
    %v5262 = vpop.f32.mrb[0].mxu0
    %5263 = vdwg.mxu0
    %v5265 = vsel %vm89, %v61, 0
    %5267 = vmatprep.subr.bf16.mxu0 %v4310
    %5268 = vmatpush1.bf16.msra.mxu0 %v4309
    %5269 = vmatprep.subr.bf16.mxu0 %v4319
    %5270 = vmatpush1.bf16.msra.mxu0 %v4316
    %5271 = vmatprep.subr.bf16.mxu0 0
    %5272 = vmatpush1.bf16.msra.mxu0 0
    %5273 = vmatprep.subr.bf16.mxu0 0
    %5274 = vmatpush1.bf16.msra.mxu0 0
    %5275 = vmatprep.subr.bf16.mxu0 0
    %5276 = vmatpush1.bf16.msra.mxu0 0
    %5277 = vmatprep.subr.bf16.mxu0 0
    %5278 = vmatpush1.bf16.msra.mxu0 0
    %5279 = vmatprep.subr.bf16.mxu0 0
    %5280 = vmatpush1.bf16.msra.mxu0 0
    %5281 = vmatprep.subr.bf16.mxu0 0
    %5282 = vmatpush1.bf16.msra.mxu0 0
    %5283 = vmatprep.subr.bf16.mxu0 0
    %5284 = vmatpush1.bf16.msra.mxu0 0
    %5285 = vmatprep.subr.bf16.mxu0 0
    %5286 = vmatpush1.bf16.msra.mxu0 0
    %5287 = vmatprep.subr.bf16.mxu0 0
    %5288 = vmatpush1.bf16.msra.mxu0 0
    %5289 = vmatprep.subr.bf16.mxu0 0
    %5290 = vmatpush1.bf16.msra.mxu0 0
    %5291 = vmatprep.subr.bf16.mxu0 0
    %5292 = vmatpush1.bf16.msra.mxu0 0
    %5293 = vmatprep.subr.bf16.mxu0 0
    %5294 = vmatpush1.bf16.msra.mxu0 0
    %5295 = vmatprep.subr.bf16.mxu0 0
    %5296 = vmatpush1.bf16.msra.mxu0 0
    %5297 = vmatprep.subr.bf16.mxu0 0
    %5298 = vmatpush1.bf16.msra.mxu0 0
    %5299 = vmatprep.mubr.bf16.mxu0 0
    %5300 = vmatmul.mubr.bf16.gmra.mrb[0].mxu0 %v5265
    %v5301 = vpop.f32.mrb[0].mxu0
    %v5302 = vadd.f32 0.0, %v5301
    %v5303 = vpop.f32.mrb[0].mxu0
    %v5304 = vadd.f32 0.0, %v5303
    %v5305 = vpop.f32.mrb[0].mxu0
    %v5306 = vpop.f32.mrb[0].mxu0
    %5307 = vdwg.mxu0
    %v5308 = vadd.f32 %v4244, %v4356
    %v5309 = vadd.f32 %v4245, %v4358
    %v5310 = vadd.f32 %v4246, %v4397
    %v5311 = vadd.f32 %v4247, %v4399
    %v5312 = vadd.f32 %v4248, %v4438
    %v5313 = vadd.f32 %v4249, %v4440
    %v5314 = vadd.f32 %v4250, %v4479
    %v5315 = vadd.f32 %v4251, %v4481
    %v5316 = vadd.f32 %v4252, %v4520
    %v5317 = vadd.f32 %v4253, %v4522
    %v5318 = vadd.f32 %v4254, %v4561
    %v5319 = vadd.f32 %v4255, %v4563
    %v5320 = vadd.f32 %v4256, %v4602
    %v5321 = vadd.f32 %v4257, %v4604
    %v5322 = vadd.f32 %v4258, %v4643
    %v5323 = vadd.f32 %v4259, %v4645
    %v5324 = vadd.f32 %v4260, %v4684
    %v5325 = vadd.f32 %v4261, %v4686
    %v5326 = vadd.f32 %v4262, %v4725
    %v5327 = vadd.f32 %v4263, %v4727
    %v5328 = vadd.f32 %v4264, %v4766
    %v5329 = vadd.f32 %v4265, %v4768
    %v5330 = vadd.f32 %v4266, %v4807
    %v5331 = vadd.f32 %v4267, %v4809
    %v5332 = vadd.f32 %v4268, %v4848
    %v5333 = vadd.f32 %v4269, %v4850
    %v5334 = vadd.f32 %v4270, %v4889
    %v5335 = vadd.f32 %v4271, %v4891
    %v5336 = vadd.f32 %v4272, %v4930
    %v5337 = vadd.f32 %v4273, %v4932
    %v5338 = vadd.f32 %v4274, %v4971
    %v5339 = vadd.f32 %v4275, %v4973
    %v5340 = vadd.f32 %v4276, %v5012
    %v5341 = vadd.f32 %v4277, %v5014
    %v5342 = vadd.f32 %v4278, %v5053
    %v5343 = vadd.f32 %v4279, %v5055
    %v5344 = vadd.f32 %v4280, %v5094
    %v5345 = vadd.f32 %v4281, %v5096
    %v5346 = vadd.f32 %v4282, %v5135
    %v5347 = vadd.f32 %v4283, %v5137
    %v5348 = vadd.f32 %v4284, %v5176
    %v5349 = vadd.f32 %v4285, %v5178
    %v5350 = vadd.f32 %v4286, %v5217
    %v5351 = vadd.f32 %v4287, %v5219
    %v5352 = vadd.f32 %v4288, %v5258
    %v5353 = vadd.f32 %v4289, %v5260
    %v5354 = vadd.f32 %v4290, %v5302
    %v5355 = vadd.f32 %v4291, %v5304
    %5380 = vrot.lane.b32.xlu0 %v5308, 8
    %v5381 = vpop.permute.xlu0 %5380
    %5382 = vrot.lane.b32.xlu0 %v5309, 8
    %v5383 = vpop.permute.xlu0 %5382
    %5384 = vrot.lane.b32.xlu0 %v5312, 8
    %v5385 = vpop.permute.xlu0 %5384
    %5386 = vrot.lane.b32.xlu0 %v5313, 8
    %v5387 = vpop.permute.xlu0 %5386
    %5388 = vrot.lane.b32.xlu0 %v5316, 8
    %v5389 = vpop.permute.xlu0 %5388
    %5390 = vrot.lane.b32.xlu0 %v5317, 8
    %v5391 = vpop.permute.xlu0 %5390
    %5392 = vrot.lane.b32.xlu0 %v5320, 8
    %v5393 = vpop.permute.xlu0 %5392
    %5394 = vrot.lane.b32.xlu0 %v5321, 8
    %v5395 = vpop.permute.xlu0 %5394
    %5396 = vrot.lane.b32.xlu0 %v5324, 8
    %v5397 = vpop.permute.xlu0 %5396
    %5398 = vrot.lane.b32.xlu0 %v5325, 8
    %v5399 = vpop.permute.xlu0 %5398
    %5400 = vrot.lane.b32.xlu0 %v5328, 8
    %v5401 = vpop.permute.xlu0 %5400
    %5402 = vrot.lane.b32.xlu0 %v5329, 8
    %v5403 = vpop.permute.xlu0 %5402
    %5404 = vrot.lane.b32.xlu0 %v5332, 8
    %v5405 = vpop.permute.xlu0 %5404
    %5406 = vrot.lane.b32.xlu0 %v5333, 8
    %v5407 = vpop.permute.xlu0 %5406
    %5408 = vrot.lane.b32.xlu0 %v5336, 8
    %v5409 = vpop.permute.xlu0 %5408
    %5410 = vrot.lane.b32.xlu0 %v5337, 8
    %v5411 = vpop.permute.xlu0 %5410
    %5412 = vrot.lane.b32.xlu0 %v5340, 8
    %v5413 = vpop.permute.xlu0 %5412
    %5414 = vrot.lane.b32.xlu0 %v5341, 8
    %v5415 = vpop.permute.xlu0 %5414
    %5416 = vrot.lane.b32.xlu0 %v5344, 8
    %v5417 = vpop.permute.xlu0 %5416
    %5418 = vrot.lane.b32.xlu0 %v5345, 8
    %v5419 = vpop.permute.xlu0 %5418
    %5420 = vrot.lane.b32.xlu0 %v5348, 8
    %v5421 = vpop.permute.xlu0 %5420
    %5422 = vrot.lane.b32.xlu0 %v5349, 8
    %v5423 = vpop.permute.xlu0 %5422
    %5424 = vrot.lane.b32.xlu0 %v5352, 8
    %v5425 = vpop.permute.xlu0 %5424
    %5426 = vrot.lane.b32.xlu0 %v5353, 8
    %v5427 = vpop.permute.xlu0 %5426
    %vm5428 = vcmask 64512
    %v5429 = vsel %vm5428, %v5381, %v5383
    %v5430 = vsel %vm5428, %v5385, %v5387
    %v5431 = vsel %vm5428, %v5389, %v5391
    %v5432 = vsel %vm5428, %v5393, %v5395
    %v5433 = vsel %vm5428, %v5397, %v5399
    %v5434 = vsel %vm5428, %v5401, %v5403
    %v5435 = vsel %vm5428, %v5405, %v5407
    %v5436 = vsel %vm5428, %v5409, %v5411
    %v5437 = vsel %vm5428, %v5413, %v5415
    %v5438 = vsel %vm5428, %v5417, %v5419
    %v5439 = vsel %vm5428, %v5421, %v5423
    %v5440 = vsel %vm5428, %v5425, %v5427
    %v5453 = vmax.f32 %v5308, %v5429
    %v5454 = vmax.f32 %v5312, %v5430
    %v5455 = vmax.f32 %v5316, %v5431
    %v5456 = vmax.f32 %v5320, %v5432
    %v5457 = vmax.f32 %v5324, %v5433
    %v5458 = vmax.f32 %v5328, %v5434
    %v5459 = vmax.f32 %v5332, %v5435
    %v5460 = vmax.f32 %v5336, %v5436
    %v5461 = vmax.f32 %v5340, %v5437
    %v5462 = vmax.f32 %v5344, %v5438
    %v5463 = vmax.f32 %v5348, %v5439
    %v5464 = vmax.f32 %v5352, %v5440
    %5489 = vrot.lane.b32.xlu0 %v5310, 8
    %v5490 = vpop.permute.xlu0 %5489
    %5491 = vrot.lane.b32.xlu0 %v5311, 8
    %v5492 = vpop.permute.xlu0 %5491
    %5493 = vrot.lane.b32.xlu0 %v5314, 8
    %v5494 = vpop.permute.xlu0 %5493
    %5495 = vrot.lane.b32.xlu0 %v5315, 8
    %v5496 = vpop.permute.xlu0 %5495
    %5497 = vrot.lane.b32.xlu0 %v5318, 8
    %v5498 = vpop.permute.xlu0 %5497
    %5499 = vrot.lane.b32.xlu0 %v5319, 8
    %v5500 = vpop.permute.xlu0 %5499
    %5501 = vrot.lane.b32.xlu0 %v5322, 8
    %v5502 = vpop.permute.xlu0 %5501
    %5503 = vrot.lane.b32.xlu0 %v5323, 8
    %v5504 = vpop.permute.xlu0 %5503
    %5505 = vrot.lane.b32.xlu0 %v5326, 8
    %v5506 = vpop.permute.xlu0 %5505
    %5507 = vrot.lane.b32.xlu0 %v5327, 8
    %v5508 = vpop.permute.xlu0 %5507
    %5509 = vrot.lane.b32.xlu0 %v5330, 8
    %v5510 = vpop.permute.xlu0 %5509
    %5511 = vrot.lane.b32.xlu0 %v5331, 8
    %v5512 = vpop.permute.xlu0 %5511
    %5513 = vrot.lane.b32.xlu0 %v5334, 8
    %v5514 = vpop.permute.xlu0 %5513
    %5515 = vrot.lane.b32.xlu0 %v5335, 8
    %v5516 = vpop.permute.xlu0 %5515
    %5517 = vrot.lane.b32.xlu0 %v5338, 8
    %v5518 = vpop.permute.xlu0 %5517
    %5519 = vrot.lane.b32.xlu0 %v5339, 8
    %v5520 = vpop.permute.xlu0 %5519
    %5521 = vrot.lane.b32.xlu0 %v5342, 8
    %v5522 = vpop.permute.xlu0 %5521
    %5523 = vrot.lane.b32.xlu0 %v5343, 8
    %v5524 = vpop.permute.xlu0 %5523
    %5525 = vrot.lane.b32.xlu0 %v5346, 8
    %v5526 = vpop.permute.xlu0 %5525
    %5527 = vrot.lane.b32.xlu0 %v5347, 8
    %v5528 = vpop.permute.xlu0 %5527
    %5529 = vrot.lane.b32.xlu0 %v5350, 8
    %v5530 = vpop.permute.xlu0 %5529
    %5531 = vrot.lane.b32.xlu0 %v5351, 8
    %v5532 = vpop.permute.xlu0 %5531
    %5533 = vrot.lane.b32.xlu0 %v5354, 8
    %v5534 = vpop.permute.xlu0 %5533
    %5535 = vrot.lane.b32.xlu0 %v5355, 8
    %v5536 = vpop.permute.xlu0 %5535
    %v5537 = vsel %vm5428, %v5490, %v5492
    %v5538 = vsel %vm5428, %v5494, %v5496
    %v5539 = vsel %vm5428, %v5498, %v5500
    %v5540 = vsel %vm5428, %v5502, %v5504
    %v5541 = vsel %vm5428, %v5506, %v5508
    %v5542 = vsel %vm5428, %v5510, %v5512
    %v5543 = vsel %vm5428, %v5514, %v5516
    %v5544 = vsel %vm5428, %v5518, %v5520
    %v5545 = vsel %vm5428, %v5522, %v5524
    %v5546 = vsel %vm5428, %v5526, %v5528
    %v5547 = vsel %vm5428, %v5530, %v5532
    %v5548 = vsel %vm5428, %v5534, %v5536
    %v5561 = vmax.f32 %v5310, %v5537
    %v5562 = vmax.f32 %v5314, %v5538
    %v5563 = vmax.f32 %v5318, %v5539
    %v5564 = vmax.f32 %v5322, %v5540
    %v5565 = vmax.f32 %v5326, %v5541
    %v5566 = vmax.f32 %v5330, %v5542
    %v5567 = vmax.f32 %v5334, %v5543
    %v5568 = vmax.f32 %v5338, %v5544
    %v5569 = vmax.f32 %v5342, %v5545
    %v5570 = vmax.f32 %v5346, %v5546
    %v5571 = vmax.f32 %v5350, %v5547
    %v5572 = vmax.f32 %v5354, %v5548
    %v5573 = vmax.f32 %v5453, %v5561
    %v5574 = vmax.f32 %v5454, %v5562
    %v5575 = vmax.f32 %v5455, %v5563
    %v5576 = vmax.f32 %v5456, %v5564
    %v5577 = vmax.f32 %v5457, %v5565
    %v5578 = vmax.f32 %v5458, %v5566
    %v5579 = vmax.f32 %v5459, %v5567
    %v5580 = vmax.f32 %v5460, %v5568
    %v5581 = vmax.f32 %v5461, %v5569
    %v5582 = vmax.f32 %v5462, %v5570
    %v5583 = vmax.f32 %v5463, %v5571
    %v5584 = vmax.f32 %v5464, %v5572
    %v5585 = vld [vmem:[%s2] sm:$0x1]
    %v5587 = vlaneseq
    %v5588 = vshrl.u32 %v5587, 7
    %v5589 = vsub.s32 0, %v5588
    %v5590 = vrot.slane %v5585, %v5589
    %v5592 = vadd.f32 %v5573, %v5590
    %v5593 = vadd.f32 %v5574, %v5590
    %v5594 = vadd.f32 %v5575, %v5590
    %v5595 = vadd.f32 %v5576, %v5590
    %v5596 = vadd.f32 %v5577, %v5590
    %v5597 = vadd.f32 %v5578, %v5590
    %v5598 = vadd.f32 %v5579, %v5590
    %v5599 = vadd.f32 %v5580, %v5590
    %v5600 = vadd.f32 %v5581, %v5590
    %v5601 = vadd.f32 %v5582, %v5590
    %v5602 = vadd.f32 %v5583, %v5590
    %v5603 = vadd.f32 %v5584, %v5590
    %v5604 = vmax.f32 %v5592, 0.0
    %v5605 = vmax.f32 %v5593, 0.0
    %v5606 = vmax.f32 %v5594, 0.0
    %v5607 = vmax.f32 %v5595, 0.0
    %v5608 = vmax.f32 %v5596, 0.0
    %v5609 = vmax.f32 %v5597, 0.0
    %v5610 = vmax.f32 %v5598, 0.0
    %v5611 = vmax.f32 %v5599, 0.0
    %v5612 = vmax.f32 %v5600, 0.0
    %v5613 = vmax.f32 %v5601, 0.0
    %v5614 = vmax.f32 %v5602, 0.0
    %v5615 = vmax.f32 %v5603, 0.0
    %v5616 = vpack.c.bf16 %v5604, %v5604
    %v5617 = vpack.c.bf16 %v5605, %v5605
    %v5618 = vpack.c.bf16 %v5606, %v5606
    %v5619 = vpack.c.bf16 %v5607, %v5607
    %v5620 = vpack.c.bf16 %v5608, %v5608
    %v5621 = vpack.c.bf16 %v5609, %v5609
    %v5622 = vpack.c.bf16 %v5610, %v5610
    %v5623 = vpack.c.bf16 %v5611, %v5611
    %v5624 = vpack.c.bf16 %v5612, %v5612
    %v5625 = vpack.c.bf16 %v5613, %v5613
    %v5626 = vpack.c.bf16 %v5614, %v5614
    %v5627 = vpack.c.bf16 %v5615, %v5615
    %v5628 = vld [vmem:[%s3] sm:$0xff]
    %v5629 = vld [vmem:[%s3 + $0x8] sm:$0xff]
    %v5630 = vld [vmem:[%s3 + $0x10] sm:$0xff]
    %v5631 = vld [vmem:[%s3 + $0x18] sm:$0xff]
    %v5632 = vld [vmem:[%s3 + $0x20] sm:$0xff]
    %v5633 = vld [vmem:[%s3 + $0x28] sm:$0xff]
    %v5634 = vld [vmem:[%s3 + $0x30] sm:$0xff]
    %v5635 = vld [vmem:[%s3 + $0x38] sm:$0xff]
    %v5636 = vld [vmem:[%s3 + $0x40] sm:$0xff]
    %v5637 = vld [vmem:[%s3 + $0x48] sm:$0xff]
    %v5638 = vld [vmem:[%s3 + $0x50] sm:$0xff]
    %v5639 = vld [vmem:[%s3 + $0x58] sm:$0xff]
    %v5640 = vld [vmem:[%s3 + $0x60] sm:$0xff]
    %v5641 = vld [vmem:[%s3 + $0x68] sm:$0xff]
    %v5642 = vld [vmem:[%s3 + $0x70] sm:$0xff]
    %s5643 = scalar_lea.vmem %s3, 120
    %v5644 = vld [vmem:[%s5643] sm:$0xff]
    %v5645 = vld [vmem:[%s5643 + $0x8] sm:$0xff]
    %v5646 = vld [vmem:[%s5643 + $0x10] sm:$0xff]
    %v5647 = vld [vmem:[%s5643 + $0x18] sm:$0xff]
    %v5648 = vld [vmem:[%s5643 + $0x20] sm:$0xff]
    %v5649 = vld [vmem:[%s5643 + $0x28] sm:$0xff]
    %v5650 = vld [vmem:[%s5643 + $0x30] sm:$0xff]
    %v5651 = vld [vmem:[%s5643 + $0x38] sm:$0xff]
    %v5652 = vld [vmem:[%s5643 + $0x40] sm:$0xff]
    %v5653 = vld [vmem:[%s5643 + $0x48] sm:$0xff]
    %v5654 = vld [vmem:[%s5643 + $0x50] sm:$0xff]
    %v5655 = vld [vmem:[%s5643 + $0x58] sm:$0xff]
    %v5656 = vld [vmem:[%s5643 + $0x60] sm:$0xff]
    %v5657 = vld [vmem:[%s5643 + $0x68] sm:$0xff]
    %v5658 = vld [vmem:[%s5643 + $0x70] sm:$0xff]
    %v5674 = vunpack.c.l.b16 %v5644
    %v5675 = vunpack.c.h.b16 %v5644
    %v5676 = vunpack.c.l.b16 %v5645
    %v5677 = vunpack.c.h.b16 %v5645
    %v5678 = vunpack.c.l.b16 %v5646
    %v5679 = vunpack.c.h.b16 %v5646
    %v5680 = vunpack.c.l.b16 %v5647
    %v5681 = vunpack.c.h.b16 %v5647
    %v5682 = vunpack.c.l.b16 %v5648
    %v5683 = vunpack.c.h.b16 %v5648
    %v5684 = vunpack.c.l.b16 %v5649
    %v5685 = vunpack.c.h.b16 %v5649
    %v5686 = vunpack.c.l.b16 %v5650
    %v5687 = vunpack.c.h.b16 %v5650
    %v5688 = vunpack.c.l.b16 %v5651
    %v5689 = vunpack.c.h.b16 %v5651
    %v5690 = vunpack.c.l.b16 %v5652
    %v5691 = vunpack.c.h.b16 %v5652
    %v5692 = vunpack.c.l.b16 %v5653
    %v5693 = vunpack.c.h.b16 %v5653
    %v5694 = vunpack.c.l.b16 %v5654
    %v5695 = vunpack.c.h.b16 %v5654
    %v5696 = vunpack.c.l.b16 %v5655
    %v5697 = vunpack.c.h.b16 %v5655
    %v5698 = vunpack.c.l.b16 %v5656
    %v5699 = vunpack.c.h.b16 %v5656
    %v5700 = vunpack.c.l.b16 %v5657
    %v5701 = vunpack.c.h.b16 %v5657
    %v5702 = vunpack.c.l.b16 %v5658
    %v5703 = vunpack.c.h.b16 %v5658
    %v5704 = vpack.c.b16 %v5676, %v5674
    %v5705 = vpack.c.b16 %v5677, %v5675
    %v5706 = vpack.c.b16 %v5680, %v5678
    %v5707 = vpack.c.b16 %v5681, %v5679
    %v5708 = vpack.c.b16 %v5684, %v5682
    %v5709 = vpack.c.b16 %v5685, %v5683
    %v5710 = vpack.c.b16 %v5688, %v5686
    %v5711 = vpack.c.b16 %v5689, %v5687
    %v5712 = vpack.c.b16 %v5692, %v5690
    %v5713 = vpack.c.b16 %v5693, %v5691
    %v5714 = vpack.c.b16 %v5696, %v5694
    %v5715 = vpack.c.b16 %v5697, %v5695
    %v5716 = vpack.c.b16 %v5700, %v5698
    %v5717 = vpack.c.b16 %v5701, %v5699
    %v5718 = vpack.c.b16 %v5702, %v5702
    %v5719 = vpack.c.b16 %v5703, %v5703
    %vm5734 = vcmask 982016
    %v5736 = vsel %vm5734, %v5617, 0
    %vm5738 = vcmask 1043456
    %v5740 = vsel %vm5738, %v5718, 0
    %v5743 = vsel %vm5738, %v5719, 0
    %5745 = vmatprep.subr.bf16.mxu0 %v5705
    %5746 = vmatpush1.bf16.msra.mxu0 %v5704
    %5747 = vmatprep.subr.bf16.mxu0 %v5707
    %5748 = vmatpush1.bf16.msra.mxu0 %v5706
    %5749 = vmatprep.subr.bf16.mxu0 %v5709
    %5750 = vmatpush1.bf16.msra.mxu0 %v5708
    %5751 = vmatprep.subr.bf16.mxu0 %v5711
    %5752 = vmatpush1.bf16.msra.mxu0 %v5710
    %5753 = vmatprep.subr.bf16.mxu0 %v5713
    %5754 = vmatpush1.bf16.msra.mxu0 %v5712
    %5755 = vmatprep.subr.bf16.mxu0 %v5715
    %5756 = vmatpush1.bf16.msra.mxu0 %v5714
    %5757 = vmatprep.subr.bf16.mxu0 %v5717
    %5758 = vmatpush1.bf16.msra.mxu0 %v5716
    %5759 = vmatprep.subr.bf16.mxu0 %v5743
    %5760 = vmatpush1.bf16.msra.mxu0 %v5740
    %5761 = vmatprep.subr.bf16.mxu0 0
    %5762 = vmatpush1.bf16.msra.mxu0 0
    %5763 = vmatprep.subr.bf16.mxu0 0
    %5764 = vmatpush1.bf16.msra.mxu0 0
    %5765 = vmatprep.subr.bf16.mxu0 0
    %5766 = vmatpush1.bf16.msra.mxu0 0
    %5767 = vmatprep.subr.bf16.mxu0 0
    %5768 = vmatpush1.bf16.msra.mxu0 0
    %5769 = vmatprep.subr.bf16.mxu0 0
    %5770 = vmatpush1.bf16.msra.mxu0 0
    %5771 = vmatprep.subr.bf16.mxu0 0
    %5772 = vmatpush1.bf16.msra.mxu0 0
    %5773 = vmatprep.subr.bf16.mxu0 0
    %5774 = vmatpush1.bf16.msra.mxu0 0
    %5775 = vmatprep.subr.bf16.mxu0 0
    %5776 = vmatpush1.bf16.msra.mxu0 0
    %5777 = vmatprep.mubr.bf16.mxu0 0
    %5778 = vmatmul.mubr.bf16.gmra.mrb[0].mxu0 %v5736
    %v5779 = vpop.f32.mrb[0].mxu0
    %v5780 = vadd.f32 0.0, %v5779
    %v5781 = vpop.f32.mrb[0].mxu0
    %v5782 = vadd.f32 0.0, %v5781
    %v5783 = vpop.f32.mrb[0].mxu0
    %v5784 = vpop.f32.mrb[0].mxu0
    %5785 = vdwg.mxu0
    %v5787 = vsel %vm5734, %v5618, 0
    %5789 = vmatprep.subr.bf16.mxu0 %v5705
    %5790 = vmatpush1.bf16.msra.mxu0 %v5704
    %5791 = vmatprep.subr.bf16.mxu0 %v5707
    %5792 = vmatpush1.bf16.msra.mxu0 %v5706
    %5793 = vmatprep.subr.bf16.mxu0 %v5709
    %5794 = vmatpush1.bf16.msra.mxu0 %v5708
    %5795 = vmatprep.subr.bf16.mxu0 %v5711
    %5796 = vmatpush1.bf16.msra.mxu0 %v5710
    %5797 = vmatprep.subr.bf16.mxu0 %v5713
    %5798 = vmatpush1.bf16.msra.mxu0 %v5712
    %5799 = vmatprep.subr.bf16.mxu0 %v5715
    %5800 = vmatpush1.bf16.msra.mxu0 %v5714
    %5801 = vmatprep.subr.bf16.mxu0 %v5717
    %5802 = vmatpush1.bf16.msra.mxu0 %v5716
    %5803 = vmatprep.subr.bf16.mxu0 %v5743
    %5804 = vmatpush1.bf16.msra.mxu0 %v5740
    %5805 = vmatprep.subr.bf16.mxu0 0
    %5806 = vmatpush1.bf16.msra.mxu0 0
    %5807 = vmatprep.subr.bf16.mxu0 0
    %5808 = vmatpush1.bf16.msra.mxu0 0
    %5809 = vmatprep.subr.bf16.mxu0 0
    %5810 = vmatpush1.bf16.msra.mxu0 0
    %5811 = vmatprep.subr.bf16.mxu0 0
    %5812 = vmatpush1.bf16.msra.mxu0 0
    %5813 = vmatprep.subr.bf16.mxu0 0
    %5814 = vmatpush1.bf16.msra.mxu0 0
    %5815 = vmatprep.subr.bf16.mxu0 0
    %5816 = vmatpush1.bf16.msra.mxu0 0
    %5817 = vmatprep.subr.bf16.mxu0 0
    %5818 = vmatpush1.bf16.msra.mxu0 0
    %5819 = vmatprep.subr.bf16.mxu0 0
    %5820 = vmatpush1.bf16.msra.mxu0 0
    %5821 = vmatprep.mubr.bf16.mxu0 0
    %5822 = vmatmul.mubr.bf16.gmra.mrb[0].mxu0 %v5787
    %v5823 = vpop.f32.mrb[0].mxu0
    %v5824 = vadd.f32 0.0, %v5823
    %v5825 = vpop.f32.mrb[0].mxu0
    %v5826 = vadd.f32 0.0, %v5825
    %v5827 = vpop.f32.mrb[0].mxu0
    %v5828 = vpop.f32.mrb[0].mxu0
    %5829 = vdwg.mxu0
    %v5831 = vsel %vm5734, %v5619, 0
    %5833 = vmatprep.subr.bf16.mxu0 %v5705
    %5834 = vmatpush1.bf16.msra.mxu0 %v5704
    %5835 = vmatprep.subr.bf16.mxu0 %v5707
    %5836 = vmatpush1.bf16.msra.mxu0 %v5706
    %5837 = vmatprep.subr.bf16.mxu0 %v5709
    %5838 = vmatpush1.bf16.msra.mxu0 %v5708
    %5839 = vmatprep.subr.bf16.mxu0 %v5711
    %5840 = vmatpush1.bf16.msra.mxu0 %v5710
    %5841 = vmatprep.subr.bf16.mxu0 %v5713
    %5842 = vmatpush1.bf16.msra.mxu0 %v5712
    %5843 = vmatprep.subr.bf16.mxu0 %v5715
    %5844 = vmatpush1.bf16.msra.mxu0 %v5714
    %5845 = vmatprep.subr.bf16.mxu0 %v5717
    %5846 = vmatpush1.bf16.msra.mxu0 %v5716
    %5847 = vmatprep.subr.bf16.mxu0 %v5743
    %5848 = vmatpush1.bf16.msra.mxu0 %v5740
    %5849 = vmatprep.subr.bf16.mxu0 0
    %5850 = vmatpush1.bf16.msra.mxu0 0
    %5851 = vmatprep.subr.bf16.mxu0 0
    %5852 = vmatpush1.bf16.msra.mxu0 0
    %5853 = vmatprep.subr.bf16.mxu0 0
    %5854 = vmatpush1.bf16.msra.mxu0 0
    %5855 = vmatprep.subr.bf16.mxu0 0
    %5856 = vmatpush1.bf16.msra.mxu0 0
    %5857 = vmatprep.subr.bf16.mxu0 0
    %5858 = vmatpush1.bf16.msra.mxu0 0
    %5859 = vmatprep.subr.bf16.mxu0 0
    %5860 = vmatpush1.bf16.msra.mxu0 0
    %5861 = vmatprep.subr.bf16.mxu0 0
    %5862 = vmatpush1.bf16.msra.mxu0 0
    %5863 = vmatprep.subr.bf16.mxu0 0
    %5864 = vmatpush1.bf16.msra.mxu0 0
    %5865 = vmatprep.mubr.bf16.mxu0 0
    %5866 = vmatmul.mubr.bf16.gmra.mrb[0].mxu0 %v5831
    %v5867 = vpop.f32.mrb[0].mxu0
    %v5868 = vadd.f32 0.0, %v5867
    %v5869 = vpop.f32.mrb[0].mxu0
    %v5870 = vadd.f32 0.0, %v5869
    %v5871 = vpop.f32.mrb[0].mxu0
    %v5872 = vpop.f32.mrb[0].mxu0
    %5873 = vdwg.mxu0
    %v5875 = vsel %vm5734, %v5620, 0
    %5877 = vmatprep.subr.bf16.mxu0 %v5705
    %5878 = vmatpush1.bf16.msra.mxu0 %v5704
    %5879 = vmatprep.subr.bf16.mxu0 %v5707
    %5880 = vmatpush1.bf16.msra.mxu0 %v5706
    %5881 = vmatprep.subr.bf16.mxu0 %v5709
    %5882 = vmatpush1.bf16.msra.mxu0 %v5708
    %5883 = vmatprep.subr.bf16.mxu0 %v5711
    %5884 = vmatpush1.bf16.msra.mxu0 %v5710
    %5885 = vmatprep.subr.bf16.mxu0 %v5713
    %5886 = vmatpush1.bf16.msra.mxu0 %v5712
    %5887 = vmatprep.subr.bf16.mxu0 %v5715
    %5888 = vmatpush1.bf16.msra.mxu0 %v5714
    %5889 = vmatprep.subr.bf16.mxu0 %v5717
    %5890 = vmatpush1.bf16.msra.mxu0 %v5716
    %5891 = vmatprep.subr.bf16.mxu0 %v5743
    %5892 = vmatpush1.bf16.msra.mxu0 %v5740
    %5893 = vmatprep.subr.bf16.mxu0 0
    %5894 = vmatpush1.bf16.msra.mxu0 0
    %5895 = vmatprep.subr.bf16.mxu0 0
    %5896 = vmatpush1.bf16.msra.mxu0 0
    %5897 = vmatprep.subr.bf16.mxu0 0
    %5898 = vmatpush1.bf16.msra.mxu0 0
    %5899 = vmatprep.subr.bf16.mxu0 0
    %5900 = vmatpush1.bf16.msra.mxu0 0
    %5901 = vmatprep.subr.bf16.mxu0 0
    %5902 = vmatpush1.bf16.msra.mxu0 0
    %5903 = vmatprep.subr.bf16.mxu0 0
    %5904 = vmatpush1.bf16.msra.mxu0 0
    %5905 = vmatprep.subr.bf16.mxu0 0
    %5906 = vmatpush1.bf16.msra.mxu0 0
    %5907 = vmatprep.subr.bf16.mxu0 0
    %5908 = vmatpush1.bf16.msra.mxu0 0
    %5909 = vmatprep.mubr.bf16.mxu0 0
    %5910 = vmatmul.mubr.bf16.gmra.mrb[0].mxu0 %v5875
    %v5911 = vpop.f32.mrb[0].mxu0
    %v5912 = vadd.f32 0.0, %v5911
    %v5913 = vpop.f32.mrb[0].mxu0
    %v5914 = vadd.f32 0.0, %v5913
    %v5915 = vpop.f32.mrb[0].mxu0
    %v5916 = vpop.f32.mrb[0].mxu0
    %5917 = vdwg.mxu0
    %v5919 = vsel %vm5734, %v5621, 0
    %5921 = vmatprep.subr.bf16.mxu0 %v5705
    %5922 = vmatpush1.bf16.msra.mxu0 %v5704
    %5923 = vmatprep.subr.bf16.mxu0 %v5707
    %5924 = vmatpush1.bf16.msra.mxu0 %v5706
    %5925 = vmatprep.subr.bf16.mxu0 %v5709
    %5926 = vmatpush1.bf16.msra.mxu0 %v5708
    %5927 = vmatprep.subr.bf16.mxu0 %v5711
    %5928 = vmatpush1.bf16.msra.mxu0 %v5710
    %5929 = vmatprep.subr.bf16.mxu0 %v5713
    %5930 = vmatpush1.bf16.msra.mxu0 %v5712
    %5931 = vmatprep.subr.bf16.mxu0 %v5715
    %5932 = vmatpush1.bf16.msra.mxu0 %v5714
    %5933 = vmatprep.subr.bf16.mxu0 %v5717
    %5934 = vmatpush1.bf16.msra.mxu0 %v5716
    %5935 = vmatprep.subr.bf16.mxu0 %v5743
    %5936 = vmatpush1.bf16.msra.mxu0 %v5740
    %5937 = vmatprep.subr.bf16.mxu0 0
    %5938 = vmatpush1.bf16.msra.mxu0 0
    %5939 = vmatprep.subr.bf16.mxu0 0
    %5940 = vmatpush1.bf16.msra.mxu0 0
    %5941 = vmatprep.subr.bf16.mxu0 0
    %5942 = vmatpush1.bf16.msra.mxu0 0
    %5943 = vmatprep.subr.bf16.mxu0 0
    %5944 = vmatpush1.bf16.msra.mxu0 0
    %5945 = vmatprep.subr.bf16.mxu0 0
    %5946 = vmatpush1.bf16.msra.mxu0 0
    %5947 = vmatprep.subr.bf16.mxu0 0
    %5948 = vmatpush1.bf16.msra.mxu0 0
    %5949 = vmatprep.subr.bf16.mxu0 0
    %5950 = vmatpush1.bf16.msra.mxu0 0
    %5951 = vmatprep.subr.bf16.mxu0 0
    %5952 = vmatpush1.bf16.msra.mxu0 0
    %5953 = vmatprep.mubr.bf16.mxu0 0
    %5954 = vmatmul.mubr.bf16.gmra.mrb[0].mxu0 %v5919
    %v5955 = vpop.f32.mrb[0].mxu0
    %v5956 = vadd.f32 0.0, %v5955
    %v5957 = vpop.f32.mrb[0].mxu0
    %v5958 = vadd.f32 0.0, %v5957
    %v5959 = vpop.f32.mrb[0].mxu0
    %v5960 = vpop.f32.mrb[0].mxu0
    %5961 = vdwg.mxu0
    %v5963 = vsel %vm5734, %v5622, 0
    %5965 = vmatprep.subr.bf16.mxu0 %v5705
    %5966 = vmatpush1.bf16.msra.mxu0 %v5704
    %5967 = vmatprep.subr.bf16.mxu0 %v5707
    %5968 = vmatpush1.bf16.msra.mxu0 %v5706
    %5969 = vmatprep.subr.bf16.mxu0 %v5709
    %5970 = vmatpush1.bf16.msra.mxu0 %v5708
    %5971 = vmatprep.subr.bf16.mxu0 %v5711
    %5972 = vmatpush1.bf16.msra.mxu0 %v5710
    %5973 = vmatprep.subr.bf16.mxu0 %v5713
    %5974 = vmatpush1.bf16.msra.mxu0 %v5712
    %5975 = vmatprep.subr.bf16.mxu0 %v5715
    %5976 = vmatpush1.bf16.msra.mxu0 %v5714
    %5977 = vmatprep.subr.bf16.mxu0 %v5717
    %5978 = vmatpush1.bf16.msra.mxu0 %v5716
    %5979 = vmatprep.subr.bf16.mxu0 %v5743
    %5980 = vmatpush1.bf16.msra.mxu0 %v5740
    %5981 = vmatprep.subr.bf16.mxu0 0
    %5982 = vmatpush1.bf16.msra.mxu0 0
    %5983 = vmatprep.subr.bf16.mxu0 0
    %5984 = vmatpush1.bf16.msra.mxu0 0
    %5985 = vmatprep.subr.bf16.mxu0 0
    %5986 = vmatpush1.bf16.msra.mxu0 0
    %5987 = vmatprep.subr.bf16.mxu0 0
    %5988 = vmatpush1.bf16.msra.mxu0 0
    %5989 = vmatprep.subr.bf16.mxu0 0
    %5990 = vmatpush1.bf16.msra.mxu0 0
    %5991 = vmatprep.subr.bf16.mxu0 0
    %5992 = vmatpush1.bf16.msra.mxu0 0
    %5993 = vmatprep.subr.bf16.mxu0 0
    %5994 = vmatpush1.bf16.msra.mxu0 0
    %5995 = vmatprep.subr.bf16.mxu0 0
    %5996 = vmatpush1.bf16.msra.mxu0 0
    %5997 = vmatprep.mubr.bf16.mxu0 0
    %5998 = vmatmul.mubr.bf16.gmra.mrb[0].mxu0 %v5963
    %v5999 = vpop.f32.mrb[0].mxu0
    %v6000 = vadd.f32 0.0, %v5999
    %v6001 = vpop.f32.mrb[0].mxu0
    %v6002 = vadd.f32 0.0, %v6001
    %v6003 = vpop.f32.mrb[0].mxu0
    %v6004 = vpop.f32.mrb[0].mxu0
    %6005 = vdwg.mxu0
    %v6007 = vsel %vm5734, %v5623, 0
    %6009 = vmatprep.subr.bf16.mxu0 %v5705
    %6010 = vmatpush1.bf16.msra.mxu0 %v5704
    %6011 = vmatprep.subr.bf16.mxu0 %v5707
    %6012 = vmatpush1.bf16.msra.mxu0 %v5706
    %6013 = vmatprep.subr.bf16.mxu0 %v5709
    %6014 = vmatpush1.bf16.msra.mxu0 %v5708
    %6015 = vmatprep.subr.bf16.mxu0 %v5711
    %6016 = vmatpush1.bf16.msra.mxu0 %v5710
    %6017 = vmatprep.subr.bf16.mxu0 %v5713
    %6018 = vmatpush1.bf16.msra.mxu0 %v5712
    %6019 = vmatprep.subr.bf16.mxu0 %v5715
    %6020 = vmatpush1.bf16.msra.mxu0 %v5714
    %6021 = vmatprep.subr.bf16.mxu0 %v5717
    %6022 = vmatpush1.bf16.msra.mxu0 %v5716
    %6023 = vmatprep.subr.bf16.mxu0 %v5743
    %6024 = vmatpush1.bf16.msra.mxu0 %v5740
    %6025 = vmatprep.subr.bf16.mxu0 0
    %6026 = vmatpush1.bf16.msra.mxu0 0
    %6027 = vmatprep.subr.bf16.mxu0 0
    %6028 = vmatpush1.bf16.msra.mxu0 0
    %6029 = vmatprep.subr.bf16.mxu0 0
    %6030 = vmatpush1.bf16.msra.mxu0 0
    %6031 = vmatprep.subr.bf16.mxu0 0
    %6032 = vmatpush1.bf16.msra.mxu0 0
    %6033 = vmatprep.subr.bf16.mxu0 0
    %6034 = vmatpush1.bf16.msra.mxu0 0
    %6035 = vmatprep.subr.bf16.mxu0 0
    %6036 = vmatpush1.bf16.msra.mxu0 0
    %6037 = vmatprep.subr.bf16.mxu0 0
    %6038 = vmatpush1.bf16.msra.mxu0 0
    %6039 = vmatprep.subr.bf16.mxu0 0
    %6040 = vmatpush1.bf16.msra.mxu0 0
    %6041 = vmatprep.mubr.bf16.mxu0 0
    %6042 = vmatmul.mubr.bf16.gmra.mrb[0].mxu0 %v6007
    %v6043 = vpop.f32.mrb[0].mxu0
    %v6044 = vadd.f32 0.0, %v6043
    %v6045 = vpop.f32.mrb[0].mxu0
    %v6046 = vadd.f32 0.0, %v6045
    %v6047 = vpop.f32.mrb[0].mxu0
    %v6048 = vpop.f32.mrb[0].mxu0
    %6049 = vdwg.mxu0
    %v6051 = vsel %vm5734, %v5624, 0
    %6053 = vmatprep.subr.bf16.mxu0 %v5705
    %6054 = vmatpush1.bf16.msra.mxu0 %v5704
    %6055 = vmatprep.subr.bf16.mxu0 %v5707
    %6056 = vmatpush1.bf16.msra.mxu0 %v5706
    %6057 = vmatprep.subr.bf16.mxu0 %v5709
    %6058 = vmatpush1.bf16.msra.mxu0 %v5708
    %6059 = vmatprep.subr.bf16.mxu0 %v5711
    %6060 = vmatpush1.bf16.msra.mxu0 %v5710
    %6061 = vmatprep.subr.bf16.mxu0 %v5713
    %6062 = vmatpush1.bf16.msra.mxu0 %v5712
    %6063 = vmatprep.subr.bf16.mxu0 %v5715
    %6064 = vmatpush1.bf16.msra.mxu0 %v5714
    %6065 = vmatprep.subr.bf16.mxu0 %v5717
    %6066 = vmatpush1.bf16.msra.mxu0 %v5716
    %6067 = vmatprep.subr.bf16.mxu0 %v5743
    %6068 = vmatpush1.bf16.msra.mxu0 %v5740
    %6069 = vmatprep.subr.bf16.mxu0 0
    %6070 = vmatpush1.bf16.msra.mxu0 0
    %6071 = vmatprep.subr.bf16.mxu0 0
    %6072 = vmatpush1.bf16.msra.mxu0 0
    %6073 = vmatprep.subr.bf16.mxu0 0
    %6074 = vmatpush1.bf16.msra.mxu0 0
    %6075 = vmatprep.subr.bf16.mxu0 0
    %6076 = vmatpush1.bf16.msra.mxu0 0
    %6077 = vmatprep.subr.bf16.mxu0 0
    %6078 = vmatpush1.bf16.msra.mxu0 0
    %6079 = vmatprep.subr.bf16.mxu0 0
    %6080 = vmatpush1.bf16.msra.mxu0 0
    %6081 = vmatprep.subr.bf16.mxu0 0
    %6082 = vmatpush1.bf16.msra.mxu0 0
    %6083 = vmatprep.subr.bf16.mxu0 0
    %6084 = vmatpush1.bf16.msra.mxu0 0
    %6085 = vmatprep.mubr.bf16.mxu0 0
    %6086 = vmatmul.mubr.bf16.gmra.mrb[0].mxu0 %v6051
    %v6087 = vpop.f32.mrb[0].mxu0
    %v6088 = vadd.f32 0.0, %v6087
    %v6089 = vpop.f32.mrb[0].mxu0
    %v6090 = vadd.f32 0.0, %v6089
    %v6091 = vpop.f32.mrb[0].mxu0
    %v6092 = vpop.f32.mrb[0].mxu0
    %6093 = vdwg.mxu0
    %v6109 = vunpack.c.l.b16 %v5628
    %v6110 = vunpack.c.h.b16 %v5628
    %v6111 = vunpack.c.l.b16 %v5629
    %v6112 = vunpack.c.h.b16 %v5629
    %v6113 = vunpack.c.l.b16 %v5630
    %v6114 = vunpack.c.h.b16 %v5630
    %v6115 = vunpack.c.l.b16 %v5631
    %v6116 = vunpack.c.h.b16 %v5631
    %v6117 = vunpack.c.l.b16 %v5632
    %v6118 = vunpack.c.h.b16 %v5632
    %v6119 = vunpack.c.l.b16 %v5633
    %v6120 = vunpack.c.h.b16 %v5633
    %v6121 = vunpack.c.l.b16 %v5634
    %v6122 = vunpack.c.h.b16 %v5634
    %v6123 = vunpack.c.l.b16 %v5635
    %v6124 = vunpack.c.h.b16 %v5635
    %v6125 = vunpack.c.l.b16 %v5636
    %v6126 = vunpack.c.h.b16 %v5636
    %v6127 = vunpack.c.l.b16 %v5637
    %v6128 = vunpack.c.h.b16 %v5637
    %v6129 = vunpack.c.l.b16 %v5638
    %v6130 = vunpack.c.h.b16 %v5638
    %v6131 = vunpack.c.l.b16 %v5639
    %v6132 = vunpack.c.h.b16 %v5639
    %v6133 = vunpack.c.l.b16 %v5640
    %v6134 = vunpack.c.h.b16 %v5640
    %v6135 = vunpack.c.l.b16 %v5641
    %v6136 = vunpack.c.h.b16 %v5641
    %v6137 = vunpack.c.l.b16 %v5642
    %v6138 = vunpack.c.h.b16 %v5642
    %v6139 = vpack.c.b16 %v6111, %v6109
    %v6140 = vpack.c.b16 %v6112, %v6110
    %v6141 = vpack.c.b16 %v6115, %v6113
    %v6142 = vpack.c.b16 %v6116, %v6114
    %v6143 = vpack.c.b16 %v6119, %v6117
    %v6144 = vpack.c.b16 %v6120, %v6118
    %v6145 = vpack.c.b16 %v6123, %v6121
    %v6146 = vpack.c.b16 %v6124, %v6122
    %v6147 = vpack.c.b16 %v6127, %v6125
    %v6148 = vpack.c.b16 %v6128, %v6126
    %v6149 = vpack.c.b16 %v6131, %v6129
    %v6150 = vpack.c.b16 %v6132, %v6130
    %v6151 = vpack.c.b16 %v6135, %v6133
    %v6152 = vpack.c.b16 %v6136, %v6134
    %v6153 = vpack.c.b16 %v6137, %v6137
    %v6154 = vpack.c.b16 %v6138, %v6138
    %v6170 = vsel %vm5734, %v5616, 0
    %v6173 = vsel %vm5738, %v6153, 0
    %v6176 = vsel %vm5738, %v6154, 0
    %6178 = vmatprep.subr.bf16.mxu0 %v6140
    %6179 = vmatpush1.bf16.msra.mxu0 %v6139
    %6180 = vmatprep.subr.bf16.mxu0 %v6142
    %6181 = vmatpush1.bf16.msra.mxu0 %v6141
    %6182 = vmatprep.subr.bf16.mxu0 %v6144
    %6183 = vmatpush1.bf16.msra.mxu0 %v6143
    %6184 = vmatprep.subr.bf16.mxu0 %v6146
    %6185 = vmatpush1.bf16.msra.mxu0 %v6145
    %6186 = vmatprep.subr.bf16.mxu0 %v6148
    %6187 = vmatpush1.bf16.msra.mxu0 %v6147
    %6188 = vmatprep.subr.bf16.mxu0 %v6150
    %6189 = vmatpush1.bf16.msra.mxu0 %v6149
    %6190 = vmatprep.subr.bf16.mxu0 %v6152
    %6191 = vmatpush1.bf16.msra.mxu0 %v6151
    %6192 = vmatprep.subr.bf16.mxu0 %v6176
    %6193 = vmatpush1.bf16.msra.mxu0 %v6173
    %6194 = vmatprep.subr.bf16.mxu0 0
    %6195 = vmatpush1.bf16.msra.mxu0 0
    %6196 = vmatprep.subr.bf16.mxu0 0
    %6197 = vmatpush1.bf16.msra.mxu0 0
    %6198 = vmatprep.subr.bf16.mxu0 0
    %6199 = vmatpush1.bf16.msra.mxu0 0
    %6200 = vmatprep.subr.bf16.mxu0 0
    %6201 = vmatpush1.bf16.msra.mxu0 0
    %6202 = vmatprep.subr.bf16.mxu0 0
    %6203 = vmatpush1.bf16.msra.mxu0 0
    %6204 = vmatprep.subr.bf16.mxu0 0
    %6205 = vmatpush1.bf16.msra.mxu0 0
    %6206 = vmatprep.subr.bf16.mxu0 0
    %6207 = vmatpush1.bf16.msra.mxu0 0
    %6208 = vmatprep.subr.bf16.mxu0 0
    %6209 = vmatpush1.bf16.msra.mxu0 0
    %6210 = vmatprep.mubr.bf16.mxu0 0
    %6211 = vmatmul.mubr.bf16.gmra.mrb[0].mxu0 %v6170
    %v6212 = vpop.f32.mrb[0].mxu0
    %v6213 = vadd.f32 %v5780, %v6212
    %v6214 = vpop.f32.mrb[0].mxu0
    %v6215 = vadd.f32 %v5782, %v6214
    %v6216 = vpop.f32.mrb[0].mxu0
    %v6217 = vpop.f32.mrb[0].mxu0
    %6218 = vdwg.mxu0
    %6219 = vmatprep.subr.bf16.mxu0 %v6140
    %6220 = vmatpush1.bf16.msra.mxu0 %v6139
    %6221 = vmatprep.subr.bf16.mxu0 %v6142
    %6222 = vmatpush1.bf16.msra.mxu0 %v6141
    %6223 = vmatprep.subr.bf16.mxu0 %v6144
    %6224 = vmatpush1.bf16.msra.mxu0 %v6143
    %6225 = vmatprep.subr.bf16.mxu0 %v6146
    %6226 = vmatpush1.bf16.msra.mxu0 %v6145
    %6227 = vmatprep.subr.bf16.mxu0 %v6148
    %6228 = vmatpush1.bf16.msra.mxu0 %v6147
    %6229 = vmatprep.subr.bf16.mxu0 %v6150
    %6230 = vmatpush1.bf16.msra.mxu0 %v6149
    %6231 = vmatprep.subr.bf16.mxu0 %v6152
    %6232 = vmatpush1.bf16.msra.mxu0 %v6151
    %6233 = vmatprep.subr.bf16.mxu0 %v6176
    %6234 = vmatpush1.bf16.msra.mxu0 %v6173
    %6235 = vmatprep.subr.bf16.mxu0 0
    %6236 = vmatpush1.bf16.msra.mxu0 0
    %6237 = vmatprep.subr.bf16.mxu0 0
    %6238 = vmatpush1.bf16.msra.mxu0 0
    %6239 = vmatprep.subr.bf16.mxu0 0
    %6240 = vmatpush1.bf16.msra.mxu0 0
    %6241 = vmatprep.subr.bf16.mxu0 0
    %6242 = vmatpush1.bf16.msra.mxu0 0
    %6243 = vmatprep.subr.bf16.mxu0 0
    %6244 = vmatpush1.bf16.msra.mxu0 0
    %6245 = vmatprep.subr.bf16.mxu0 0
    %6246 = vmatpush1.bf16.msra.mxu0 0
    %6247 = vmatprep.subr.bf16.mxu0 0
    %6248 = vmatpush1.bf16.msra.mxu0 0
    %6249 = vmatprep.subr.bf16.mxu0 0
    %6250 = vmatpush1.bf16.msra.mxu0 0
    %6251 = vmatprep.mubr.bf16.mxu0 0
    %6252 = vmatmul.mubr.bf16.gmra.mrb[0].mxu0 %v5736
    %v6253 = vpop.f32.mrb[0].mxu0
    %v6254 = vadd.f32 %v5824, %v6253
    %v6255 = vpop.f32.mrb[0].mxu0
    %v6256 = vadd.f32 %v5826, %v6255
    %v6257 = vpop.f32.mrb[0].mxu0
    %v6258 = vpop.f32.mrb[0].mxu0
    %6259 = vdwg.mxu0
    %6260 = vmatprep.subr.bf16.mxu0 %v6140
    %6261 = vmatpush1.bf16.msra.mxu0 %v6139
    %6262 = vmatprep.subr.bf16.mxu0 %v6142
    %6263 = vmatpush1.bf16.msra.mxu0 %v6141
    %6264 = vmatprep.subr.bf16.mxu0 %v6144
    %6265 = vmatpush1.bf16.msra.mxu0 %v6143
    %6266 = vmatprep.subr.bf16.mxu0 %v6146
    %6267 = vmatpush1.bf16.msra.mxu0 %v6145
    %6268 = vmatprep.subr.bf16.mxu0 %v6148
    %6269 = vmatpush1.bf16.msra.mxu0 %v6147
    %6270 = vmatprep.subr.bf16.mxu0 %v6150
    %6271 = vmatpush1.bf16.msra.mxu0 %v6149
    %6272 = vmatprep.subr.bf16.mxu0 %v6152
    %6273 = vmatpush1.bf16.msra.mxu0 %v6151
    %6274 = vmatprep.subr.bf16.mxu0 %v6176
    %6275 = vmatpush1.bf16.msra.mxu0 %v6173
    %6276 = vmatprep.subr.bf16.mxu0 0
    %6277 = vmatpush1.bf16.msra.mxu0 0
    %6278 = vmatprep.subr.bf16.mxu0 0
    %6279 = vmatpush1.bf16.msra.mxu0 0
    %6280 = vmatprep.subr.bf16.mxu0 0
    %6281 = vmatpush1.bf16.msra.mxu0 0
    %6282 = vmatprep.subr.bf16.mxu0 0
    %6283 = vmatpush1.bf16.msra.mxu0 0
    %6284 = vmatprep.subr.bf16.mxu0 0
    %6285 = vmatpush1.bf16.msra.mxu0 0
    %6286 = vmatprep.subr.bf16.mxu0 0
    %6287 = vmatpush1.bf16.msra.mxu0 0
    %6288 = vmatprep.subr.bf16.mxu0 0
    %6289 = vmatpush1.bf16.msra.mxu0 0
    %6290 = vmatprep.subr.bf16.mxu0 0
    %6291 = vmatpush1.bf16.msra.mxu0 0
    %6292 = vmatprep.mubr.bf16.mxu0 0
    %6293 = vmatmul.mubr.bf16.gmra.mrb[0].mxu0 %v5787
    %v6294 = vpop.f32.mrb[0].mxu0
    %v6295 = vadd.f32 %v5868, %v6294
    %v6296 = vpop.f32.mrb[0].mxu0
    %v6297 = vadd.f32 %v5870, %v6296
    %v6298 = vpop.f32.mrb[0].mxu0
    %v6299 = vpop.f32.mrb[0].mxu0
    %6300 = vdwg.mxu0
    %6301 = vmatprep.subr.bf16.mxu0 %v6140
    %6302 = vmatpush1.bf16.msra.mxu0 %v6139
    %6303 = vmatprep.subr.bf16.mxu0 %v6142
    %6304 = vmatpush1.bf16.msra.mxu0 %v6141
    %6305 = vmatprep.subr.bf16.mxu0 %v6144
    %6306 = vmatpush1.bf16.msra.mxu0 %v6143
    %6307 = vmatprep.subr.bf16.mxu0 %v6146
    %6308 = vmatpush1.bf16.msra.mxu0 %v6145
    %6309 = vmatprep.subr.bf16.mxu0 %v6148
    %6310 = vmatpush1.bf16.msra.mxu0 %v6147
    %6311 = vmatprep.subr.bf16.mxu0 %v6150
    %6312 = vmatpush1.bf16.msra.mxu0 %v6149
    %6313 = vmatprep.subr.bf16.mxu0 %v6152
    %6314 = vmatpush1.bf16.msra.mxu0 %v6151
    %6315 = vmatprep.subr.bf16.mxu0 %v6176
    %6316 = vmatpush1.bf16.msra.mxu0 %v6173
    %6317 = vmatprep.subr.bf16.mxu0 0
    %6318 = vmatpush1.bf16.msra.mxu0 0
    %6319 = vmatprep.subr.bf16.mxu0 0
    %6320 = vmatpush1.bf16.msra.mxu0 0
    %6321 = vmatprep.subr.bf16.mxu0 0
    %6322 = vmatpush1.bf16.msra.mxu0 0
    %6323 = vmatprep.subr.bf16.mxu0 0
    %6324 = vmatpush1.bf16.msra.mxu0 0
    %6325 = vmatprep.subr.bf16.mxu0 0
    %6326 = vmatpush1.bf16.msra.mxu0 0
    %6327 = vmatprep.subr.bf16.mxu0 0
    %6328 = vmatpush1.bf16.msra.mxu0 0
    %6329 = vmatprep.subr.bf16.mxu0 0
    %6330 = vmatpush1.bf16.msra.mxu0 0
    %6331 = vmatprep.subr.bf16.mxu0 0
    %6332 = vmatpush1.bf16.msra.mxu0 0
    %6333 = vmatprep.mubr.bf16.mxu0 0
    %6334 = vmatmul.mubr.bf16.gmra.mrb[0].mxu0 %v5831
    %v6335 = vpop.f32.mrb[0].mxu0
    %v6336 = vadd.f32 %v5912, %v6335
    %v6337 = vpop.f32.mrb[0].mxu0
    %v6338 = vadd.f32 %v5914, %v6337
    %v6339 = vpop.f32.mrb[0].mxu0
    %v6340 = vpop.f32.mrb[0].mxu0
    %6341 = vdwg.mxu0
    %6342 = vmatprep.subr.bf16.mxu0 %v6140
    %6343 = vmatpush1.bf16.msra.mxu0 %v6139
    %6344 = vmatprep.subr.bf16.mxu0 %v6142
    %6345 = vmatpush1.bf16.msra.mxu0 %v6141
    %6346 = vmatprep.subr.bf16.mxu0 %v6144
    %6347 = vmatpush1.bf16.msra.mxu0 %v6143
    %6348 = vmatprep.subr.bf16.mxu0 %v6146
    %6349 = vmatpush1.bf16.msra.mxu0 %v6145
    %6350 = vmatprep.subr.bf16.mxu0 %v6148
    %6351 = vmatpush1.bf16.msra.mxu0 %v6147
    %6352 = vmatprep.subr.bf16.mxu0 %v6150
    %6353 = vmatpush1.bf16.msra.mxu0 %v6149
    %6354 = vmatprep.subr.bf16.mxu0 %v6152
    %6355 = vmatpush1.bf16.msra.mxu0 %v6151
    %6356 = vmatprep.subr.bf16.mxu0 %v6176
    %6357 = vmatpush1.bf16.msra.mxu0 %v6173
    %6358 = vmatprep.subr.bf16.mxu0 0
    %6359 = vmatpush1.bf16.msra.mxu0 0
    %6360 = vmatprep.subr.bf16.mxu0 0
    %6361 = vmatpush1.bf16.msra.mxu0 0
    %6362 = vmatprep.subr.bf16.mxu0 0
    %6363 = vmatpush1.bf16.msra.mxu0 0
    %6364 = vmatprep.subr.bf16.mxu0 0
    %6365 = vmatpush1.bf16.msra.mxu0 0
    %6366 = vmatprep.subr.bf16.mxu0 0
    %6367 = vmatpush1.bf16.msra.mxu0 0
    %6368 = vmatprep.subr.bf16.mxu0 0
    %6369 = vmatpush1.bf16.msra.mxu0 0
    %6370 = vmatprep.subr.bf16.mxu0 0
    %6371 = vmatpush1.bf16.msra.mxu0 0
    %6372 = vmatprep.subr.bf16.mxu0 0
    %6373 = vmatpush1.bf16.msra.mxu0 0
    %6374 = vmatprep.mubr.bf16.mxu0 0
    %6375 = vmatmul.mubr.bf16.gmra.mrb[0].mxu0 %v5875
    %v6376 = vpop.f32.mrb[0].mxu0
    %v6377 = vadd.f32 %v5956, %v6376
    %v6378 = vpop.f32.mrb[0].mxu0
    %v6379 = vadd.f32 %v5958, %v6378
    %v6380 = vpop.f32.mrb[0].mxu0
    %v6381 = vpop.f32.mrb[0].mxu0
    %6382 = vdwg.mxu0
    %6383 = vmatprep.subr.bf16.mxu0 %v6140
    %6384 = vmatpush1.bf16.msra.mxu0 %v6139
    %6385 = vmatprep.subr.bf16.mxu0 %v6142
    %6386 = vmatpush1.bf16.msra.mxu0 %v6141
    %6387 = vmatprep.subr.bf16.mxu0 %v6144
    %6388 = vmatpush1.bf16.msra.mxu0 %v6143
    %6389 = vmatprep.subr.bf16.mxu0 %v6146
    %6390 = vmatpush1.bf16.msra.mxu0 %v6145
    %6391 = vmatprep.subr.bf16.mxu0 %v6148
    %6392 = vmatpush1.bf16.msra.mxu0 %v6147
    %6393 = vmatprep.subr.bf16.mxu0 %v6150
    %6394 = vmatpush1.bf16.msra.mxu0 %v6149
    %6395 = vmatprep.subr.bf16.mxu0 %v6152
    %6396 = vmatpush1.bf16.msra.mxu0 %v6151
    %6397 = vmatprep.subr.bf16.mxu0 %v6176
    %6398 = vmatpush1.bf16.msra.mxu0 %v6173
    %6399 = vmatprep.subr.bf16.mxu0 0
    %6400 = vmatpush1.bf16.msra.mxu0 0
    %6401 = vmatprep.subr.bf16.mxu0 0
    %6402 = vmatpush1.bf16.msra.mxu0 0
    %6403 = vmatprep.subr.bf16.mxu0 0
    %6404 = vmatpush1.bf16.msra.mxu0 0
    %6405 = vmatprep.subr.bf16.mxu0 0
    %6406 = vmatpush1.bf16.msra.mxu0 0
    %6407 = vmatprep.subr.bf16.mxu0 0
    %6408 = vmatpush1.bf16.msra.mxu0 0
    %6409 = vmatprep.subr.bf16.mxu0 0
    %6410 = vmatpush1.bf16.msra.mxu0 0
    %6411 = vmatprep.subr.bf16.mxu0 0
    %6412 = vmatpush1.bf16.msra.mxu0 0
    %6413 = vmatprep.subr.bf16.mxu0 0
    %6414 = vmatpush1.bf16.msra.mxu0 0
    %6415 = vmatprep.mubr.bf16.mxu0 0
    %6416 = vmatmul.mubr.bf16.gmra.mrb[0].mxu0 %v5919
    %v6417 = vpop.f32.mrb[0].mxu0
    %v6418 = vadd.f32 %v6000, %v6417
    %v6419 = vpop.f32.mrb[0].mxu0
    %v6420 = vadd.f32 %v6002, %v6419
    %v6421 = vpop.f32.mrb[0].mxu0
    %v6422 = vpop.f32.mrb[0].mxu0
    %6423 = vdwg.mxu0
    %6424 = vmatprep.subr.bf16.mxu0 %v6140
    %6425 = vmatpush1.bf16.msra.mxu0 %v6139
    %6426 = vmatprep.subr.bf16.mxu0 %v6142
    %6427 = vmatpush1.bf16.msra.mxu0 %v6141
    %6428 = vmatprep.subr.bf16.mxu0 %v6144
    %6429 = vmatpush1.bf16.msra.mxu0 %v6143
    %6430 = vmatprep.subr.bf16.mxu0 %v6146
    %6431 = vmatpush1.bf16.msra.mxu0 %v6145
    %6432 = vmatprep.subr.bf16.mxu0 %v6148
    %6433 = vmatpush1.bf16.msra.mxu0 %v6147
    %6434 = vmatprep.subr.bf16.mxu0 %v6150
    %6435 = vmatpush1.bf16.msra.mxu0 %v6149
    %6436 = vmatprep.subr.bf16.mxu0 %v6152
    %6437 = vmatpush1.bf16.msra.mxu0 %v6151
    %6438 = vmatprep.subr.bf16.mxu0 %v6176
    %6439 = vmatpush1.bf16.msra.mxu0 %v6173
    %6440 = vmatprep.subr.bf16.mxu0 0
    %6441 = vmatpush1.bf16.msra.mxu0 0
    %6442 = vmatprep.subr.bf16.mxu0 0
    %6443 = vmatpush1.bf16.msra.mxu0 0
    %6444 = vmatprep.subr.bf16.mxu0 0
    %6445 = vmatpush1.bf16.msra.mxu0 0
    %6446 = vmatprep.subr.bf16.mxu0 0
    %6447 = vmatpush1.bf16.msra.mxu0 0
    %6448 = vmatprep.subr.bf16.mxu0 0
    %6449 = vmatpush1.bf16.msra.mxu0 0
    %6450 = vmatprep.subr.bf16.mxu0 0
    %6451 = vmatpush1.bf16.msra.mxu0 0
    %6452 = vmatprep.subr.bf16.mxu0 0
    %6453 = vmatpush1.bf16.msra.mxu0 0
    %6454 = vmatprep.subr.bf16.mxu0 0
    %6455 = vmatpush1.bf16.msra.mxu0 0
    %6456 = vmatprep.mubr.bf16.mxu0 0
    %6457 = vmatmul.mubr.bf16.gmra.mrb[0].mxu0 %v5963
    %v6458 = vpop.f32.mrb[0].mxu0
    %v6459 = vadd.f32 %v6044, %v6458
    %v6460 = vpop.f32.mrb[0].mxu0
    %v6461 = vadd.f32 %v6046, %v6460
    %v6462 = vpop.f32.mrb[0].mxu0
    %v6463 = vpop.f32.mrb[0].mxu0
    %6464 = vdwg.mxu0
    %6465 = vmatprep.subr.bf16.mxu0 %v6140
    %6466 = vmatpush1.bf16.msra.mxu0 %v6139
    %6467 = vmatprep.subr.bf16.mxu0 %v6142
    %6468 = vmatpush1.bf16.msra.mxu0 %v6141
    %6469 = vmatprep.subr.bf16.mxu0 %v6144
    %6470 = vmatpush1.bf16.msra.mxu0 %v6143
    %6471 = vmatprep.subr.bf16.mxu0 %v6146
    %6472 = vmatpush1.bf16.msra.mxu0 %v6145
    %6473 = vmatprep.subr.bf16.mxu0 %v6148
    %6474 = vmatpush1.bf16.msra.mxu0 %v6147
    %6475 = vmatprep.subr.bf16.mxu0 %v6150
    %6476 = vmatpush1.bf16.msra.mxu0 %v6149
    %6477 = vmatprep.subr.bf16.mxu0 %v6152
    %6478 = vmatpush1.bf16.msra.mxu0 %v6151
    %6479 = vmatprep.subr.bf16.mxu0 %v6176
    %6480 = vmatpush1.bf16.msra.mxu0 %v6173
    %6481 = vmatprep.subr.bf16.mxu0 0
    %6482 = vmatpush1.bf16.msra.mxu0 0
    %6483 = vmatprep.subr.bf16.mxu0 0
    %6484 = vmatpush1.bf16.msra.mxu0 0
    %6485 = vmatprep.subr.bf16.mxu0 0
    %6486 = vmatpush1.bf16.msra.mxu0 0
    %6487 = vmatprep.subr.bf16.mxu0 0
    %6488 = vmatpush1.bf16.msra.mxu0 0
    %6489 = vmatprep.subr.bf16.mxu0 0
    %6490 = vmatpush1.bf16.msra.mxu0 0
    %6491 = vmatprep.subr.bf16.mxu0 0
    %6492 = vmatpush1.bf16.msra.mxu0 0
    %6493 = vmatprep.subr.bf16.mxu0 0
    %6494 = vmatpush1.bf16.msra.mxu0 0
    %6495 = vmatprep.subr.bf16.mxu0 0
    %6496 = vmatpush1.bf16.msra.mxu0 0
    %6497 = vmatprep.mubr.bf16.mxu0 0
    %6498 = vmatmul.mubr.bf16.gmra.mrb[0].mxu0 %v6007
    %v6499 = vpop.f32.mrb[0].mxu0
    %v6500 = vadd.f32 %v6088, %v6499
    %v6501 = vpop.f32.mrb[0].mxu0
    %v6502 = vadd.f32 %v6090, %v6501
    %v6503 = vpop.f32.mrb[0].mxu0
    %v6504 = vpop.f32.mrb[0].mxu0
    %6505 = vdwg.mxu0
    %s6506 = scalar_lea.vmem %s3, 240
    %v6507 = vld [vmem:[%s6506] sm:$0xff]
    %v6508 = vld [vmem:[%s6506 + $0x8] sm:$0xff]
    %v6509 = vld [vmem:[%s6506 + $0x10] sm:$0xff]
    %v6510 = vld [vmem:[%s6506 + $0x18] sm:$0xff]
    %v6511 = vld [vmem:[%s6506 + $0x20] sm:$0xff]
    %v6512 = vld [vmem:[%s6506 + $0x28] sm:$0xff]
    %v6513 = vld [vmem:[%s6506 + $0x30] sm:$0xff]
    %v6514 = vld [vmem:[%s6506 + $0x38] sm:$0xff]
    %v6515 = vld [vmem:[%s6506 + $0x40] sm:$0xff]
    %v6516 = vld [vmem:[%s6506 + $0x48] sm:$0xff]
    %v6517 = vld [vmem:[%s6506 + $0x50] sm:$0xff]
    %v6518 = vld [vmem:[%s6506 + $0x58] sm:$0xff]
    %v6519 = vld [vmem:[%s6506 + $0x60] sm:$0xff]
    %v6520 = vld [vmem:[%s6506 + $0x68] sm:$0xff]
    %v6521 = vld [vmem:[%s6506 + $0x70] sm:$0xff]
    %v6537 = vunpack.c.l.b16 %v6507
    %v6538 = vunpack.c.h.b16 %v6507
    %v6539 = vunpack.c.l.b16 %v6508
    %v6540 = vunpack.c.h.b16 %v6508
    %v6541 = vunpack.c.l.b16 %v6509
    %v6542 = vunpack.c.h.b16 %v6509
    %v6543 = vunpack.c.l.b16 %v6510
    %v6544 = vunpack.c.h.b16 %v6510
    %v6545 = vunpack.c.l.b16 %v6511
    %v6546 = vunpack.c.h.b16 %v6511
    %v6547 = vunpack.c.l.b16 %v6512
    %v6548 = vunpack.c.h.b16 %v6512
    %v6549 = vunpack.c.l.b16 %v6513
    %v6550 = vunpack.c.h.b16 %v6513
    %v6551 = vunpack.c.l.b16 %v6514
    %v6552 = vunpack.c.h.b16 %v6514
    %v6553 = vunpack.c.l.b16 %v6515
    %v6554 = vunpack.c.h.b16 %v6515
    %v6555 = vunpack.c.l.b16 %v6516
    %v6556 = vunpack.c.h.b16 %v6516
    %v6557 = vunpack.c.l.b16 %v6517
    %v6558 = vunpack.c.h.b16 %v6517
    %v6559 = vunpack.c.l.b16 %v6518
    %v6560 = vunpack.c.h.b16 %v6518
    %v6561 = vunpack.c.l.b16 %v6519
    %v6562 = vunpack.c.h.b16 %v6519
    %v6563 = vunpack.c.l.b16 %v6520
    %v6564 = vunpack.c.h.b16 %v6520
    %v6565 = vunpack.c.l.b16 %v6521
    %v6566 = vunpack.c.h.b16 %v6521
    %v6567 = vpack.c.b16 %v6539, %v6537
    %v6568 = vpack.c.b16 %v6540, %v6538
    %v6569 = vpack.c.b16 %v6543, %v6541
    %v6570 = vpack.c.b16 %v6544, %v6542
    %v6571 = vpack.c.b16 %v6547, %v6545
    %v6572 = vpack.c.b16 %v6548, %v6546
    %v6573 = vpack.c.b16 %v6551, %v6549
    %v6574 = vpack.c.b16 %v6552, %v6550
    %v6575 = vpack.c.b16 %v6555, %v6553
    %v6576 = vpack.c.b16 %v6556, %v6554
    %v6577 = vpack.c.b16 %v6559, %v6557
    %v6578 = vpack.c.b16 %v6560, %v6558
    %v6579 = vpack.c.b16 %v6563, %v6561
    %v6580 = vpack.c.b16 %v6564, %v6562
    %v6581 = vpack.c.b16 %v6565, %v6565
    %v6582 = vpack.c.b16 %v6566, %v6566
    %v6598 = vsel %vm5738, %v6581, 0
    %v6601 = vsel %vm5738, %v6582, 0
    %6603 = vmatprep.subr.bf16.mxu0 %v6568
    %6604 = vmatpush1.bf16.msra.mxu0 %v6567
    %6605 = vmatprep.subr.bf16.mxu0 %v6570
    %6606 = vmatpush1.bf16.msra.mxu0 %v6569
    %6607 = vmatprep.subr.bf16.mxu0 %v6572
    %6608 = vmatpush1.bf16.msra.mxu0 %v6571
    %6609 = vmatprep.subr.bf16.mxu0 %v6574
    %6610 = vmatpush1.bf16.msra.mxu0 %v6573
    %6611 = vmatprep.subr.bf16.mxu0 %v6576
    %6612 = vmatpush1.bf16.msra.mxu0 %v6575
    %6613 = vmatprep.subr.bf16.mxu0 %v6578
    %6614 = vmatpush1.bf16.msra.mxu0 %v6577
    %6615 = vmatprep.subr.bf16.mxu0 %v6580
    %6616 = vmatpush1.bf16.msra.mxu0 %v6579
    %6617 = vmatprep.subr.bf16.mxu0 %v6601
    %6618 = vmatpush1.bf16.msra.mxu0 %v6598
    %6619 = vmatprep.subr.bf16.mxu0 0
    %6620 = vmatpush1.bf16.msra.mxu0 0
    %6621 = vmatprep.subr.bf16.mxu0 0
    %6622 = vmatpush1.bf16.msra.mxu0 0
    %6623 = vmatprep.subr.bf16.mxu0 0
    %6624 = vmatpush1.bf16.msra.mxu0 0
    %6625 = vmatprep.subr.bf16.mxu0 0
    %6626 = vmatpush1.bf16.msra.mxu0 0
    %6627 = vmatprep.subr.bf16.mxu0 0
    %6628 = vmatpush1.bf16.msra.mxu0 0
    %6629 = vmatprep.subr.bf16.mxu0 0
    %6630 = vmatpush1.bf16.msra.mxu0 0
    %6631 = vmatprep.subr.bf16.mxu0 0
    %6632 = vmatpush1.bf16.msra.mxu0 0
    %6633 = vmatprep.subr.bf16.mxu0 0
    %6634 = vmatpush1.bf16.msra.mxu0 0
    %6635 = vmatprep.mubr.bf16.mxu0 0
    %6636 = vmatmul.mubr.bf16.gmra.mrb[0].mxu0 %v5787
    %v6637 = vpop.f32.mrb[0].mxu0
    %v6638 = vadd.f32 0.0, %v6637
    %v6639 = vpop.f32.mrb[0].mxu0
    %v6640 = vadd.f32 0.0, %v6639
    %v6641 = vpop.f32.mrb[0].mxu0
    %v6642 = vpop.f32.mrb[0].mxu0
    %6643 = vdwg.mxu0
    %6644 = vmatprep.subr.bf16.mxu0 %v6568
    %6645 = vmatpush1.bf16.msra.mxu0 %v6567
    %6646 = vmatprep.subr.bf16.mxu0 %v6570
    %6647 = vmatpush1.bf16.msra.mxu0 %v6569
    %6648 = vmatprep.subr.bf16.mxu0 %v6572
    %6649 = vmatpush1.bf16.msra.mxu0 %v6571
    %6650 = vmatprep.subr.bf16.mxu0 %v6574
    %6651 = vmatpush1.bf16.msra.mxu0 %v6573
    %6652 = vmatprep.subr.bf16.mxu0 %v6576
    %6653 = vmatpush1.bf16.msra.mxu0 %v6575
    %6654 = vmatprep.subr.bf16.mxu0 %v6578
    %6655 = vmatpush1.bf16.msra.mxu0 %v6577
    %6656 = vmatprep.subr.bf16.mxu0 %v6580
    %6657 = vmatpush1.bf16.msra.mxu0 %v6579
    %6658 = vmatprep.subr.bf16.mxu0 %v6601
    %6659 = vmatpush1.bf16.msra.mxu0 %v6598
    %6660 = vmatprep.subr.bf16.mxu0 0
    %6661 = vmatpush1.bf16.msra.mxu0 0
    %6662 = vmatprep.subr.bf16.mxu0 0
    %6663 = vmatpush1.bf16.msra.mxu0 0
    %6664 = vmatprep.subr.bf16.mxu0 0
    %6665 = vmatpush1.bf16.msra.mxu0 0
    %6666 = vmatprep.subr.bf16.mxu0 0
    %6667 = vmatpush1.bf16.msra.mxu0 0
    %6668 = vmatprep.subr.bf16.mxu0 0
    %6669 = vmatpush1.bf16.msra.mxu0 0
    %6670 = vmatprep.subr.bf16.mxu0 0
    %6671 = vmatpush1.bf16.msra.mxu0 0
    %6672 = vmatprep.subr.bf16.mxu0 0
    %6673 = vmatpush1.bf16.msra.mxu0 0
    %6674 = vmatprep.subr.bf16.mxu0 0
    %6675 = vmatpush1.bf16.msra.mxu0 0
    %6676 = vmatprep.mubr.bf16.mxu0 0
    %6677 = vmatmul.mubr.bf16.gmra.mrb[0].mxu0 %v5831
    %v6678 = vpop.f32.mrb[0].mxu0
    %v6679 = vadd.f32 0.0, %v6678
    %v6680 = vpop.f32.mrb[0].mxu0
    %v6681 = vadd.f32 0.0, %v6680
    %v6682 = vpop.f32.mrb[0].mxu0
    %v6683 = vpop.f32.mrb[0].mxu0
    %6684 = vdwg.mxu0
    %6685 = vmatprep.subr.bf16.mxu0 %v6568
    %6686 = vmatpush1.bf16.msra.mxu0 %v6567
    %6687 = vmatprep.subr.bf16.mxu0 %v6570
    %6688 = vmatpush1.bf16.msra.mxu0 %v6569
    %6689 = vmatprep.subr.bf16.mxu0 %v6572
    %6690 = vmatpush1.bf16.msra.mxu0 %v6571
    %6691 = vmatprep.subr.bf16.mxu0 %v6574
    %6692 = vmatpush1.bf16.msra.mxu0 %v6573
    %6693 = vmatprep.subr.bf16.mxu0 %v6576
    %6694 = vmatpush1.bf16.msra.mxu0 %v6575
    %6695 = vmatprep.subr.bf16.mxu0 %v6578
    %6696 = vmatpush1.bf16.msra.mxu0 %v6577
    %6697 = vmatprep.subr.bf16.mxu0 %v6580
    %6698 = vmatpush1.bf16.msra.mxu0 %v6579
    %6699 = vmatprep.subr.bf16.mxu0 %v6601
    %6700 = vmatpush1.bf16.msra.mxu0 %v6598
    %6701 = vmatprep.subr.bf16.mxu0 0
    %6702 = vmatpush1.bf16.msra.mxu0 0
    %6703 = vmatprep.subr.bf16.mxu0 0
    %6704 = vmatpush1.bf16.msra.mxu0 0
    %6705 = vmatprep.subr.bf16.mxu0 0
    %6706 = vmatpush1.bf16.msra.mxu0 0
    %6707 = vmatprep.subr.bf16.mxu0 0
    %6708 = vmatpush1.bf16.msra.mxu0 0
    %6709 = vmatprep.subr.bf16.mxu0 0
    %6710 = vmatpush1.bf16.msra.mxu0 0
    %6711 = vmatprep.subr.bf16.mxu0 0
    %6712 = vmatpush1.bf16.msra.mxu0 0
    %6713 = vmatprep.subr.bf16.mxu0 0
    %6714 = vmatpush1.bf16.msra.mxu0 0
    %6715 = vmatprep.subr.bf16.mxu0 0
    %6716 = vmatpush1.bf16.msra.mxu0 0
    %6717 = vmatprep.mubr.bf16.mxu0 0
    %6718 = vmatmul.mubr.bf16.gmra.mrb[0].mxu0 %v5875
    %v6719 = vpop.f32.mrb[0].mxu0
    %v6720 = vadd.f32 0.0, %v6719
    %v6721 = vpop.f32.mrb[0].mxu0
    %v6722 = vadd.f32 0.0, %v6721
    %v6723 = vpop.f32.mrb[0].mxu0
    %v6724 = vpop.f32.mrb[0].mxu0
    %6725 = vdwg.mxu0
    %6726 = vmatprep.subr.bf16.mxu0 %v6568
    %6727 = vmatpush1.bf16.msra.mxu0 %v6567
    %6728 = vmatprep.subr.bf16.mxu0 %v6570
    %6729 = vmatpush1.bf16.msra.mxu0 %v6569
    %6730 = vmatprep.subr.bf16.mxu0 %v6572
    %6731 = vmatpush1.bf16.msra.mxu0 %v6571
    %6732 = vmatprep.subr.bf16.mxu0 %v6574
    %6733 = vmatpush1.bf16.msra.mxu0 %v6573
    %6734 = vmatprep.subr.bf16.mxu0 %v6576
    %6735 = vmatpush1.bf16.msra.mxu0 %v6575
    %6736 = vmatprep.subr.bf16.mxu0 %v6578
    %6737 = vmatpush1.bf16.msra.mxu0 %v6577
    %6738 = vmatprep.subr.bf16.mxu0 %v6580
    %6739 = vmatpush1.bf16.msra.mxu0 %v6579
    %6740 = vmatprep.subr.bf16.mxu0 %v6601
    %6741 = vmatpush1.bf16.msra.mxu0 %v6598
    %6742 = vmatprep.subr.bf16.mxu0 0
    %6743 = vmatpush1.bf16.msra.mxu0 0
    %6744 = vmatprep.subr.bf16.mxu0 0
    %6745 = vmatpush1.bf16.msra.mxu0 0
    %6746 = vmatprep.subr.bf16.mxu0 0
    %6747 = vmatpush1.bf16.msra.mxu0 0
    %6748 = vmatprep.subr.bf16.mxu0 0
    %6749 = vmatpush1.bf16.msra.mxu0 0
    %6750 = vmatprep.subr.bf16.mxu0 0
    %6751 = vmatpush1.bf16.msra.mxu0 0
    %6752 = vmatprep.subr.bf16.mxu0 0
    %6753 = vmatpush1.bf16.msra.mxu0 0
    %6754 = vmatprep.subr.bf16.mxu0 0
    %6755 = vmatpush1.bf16.msra.mxu0 0
    %6756 = vmatprep.subr.bf16.mxu0 0
    %6757 = vmatpush1.bf16.msra.mxu0 0
    %6758 = vmatprep.mubr.bf16.mxu0 0
    %6759 = vmatmul.mubr.bf16.gmra.mrb[0].mxu0 %v5919
    %v6760 = vpop.f32.mrb[0].mxu0
    %v6761 = vadd.f32 0.0, %v6760
    %v6762 = vpop.f32.mrb[0].mxu0
    %v6763 = vadd.f32 0.0, %v6762
    %v6764 = vpop.f32.mrb[0].mxu0
    %v6765 = vpop.f32.mrb[0].mxu0
    %6766 = vdwg.mxu0
    %6767 = vmatprep.subr.bf16.mxu0 %v6568
    %6768 = vmatpush1.bf16.msra.mxu0 %v6567
    %6769 = vmatprep.subr.bf16.mxu0 %v6570
    %6770 = vmatpush1.bf16.msra.mxu0 %v6569
    %6771 = vmatprep.subr.bf16.mxu0 %v6572
    %6772 = vmatpush1.bf16.msra.mxu0 %v6571
    %6773 = vmatprep.subr.bf16.mxu0 %v6574
    %6774 = vmatpush1.bf16.msra.mxu0 %v6573
    %6775 = vmatprep.subr.bf16.mxu0 %v6576
    %6776 = vmatpush1.bf16.msra.mxu0 %v6575
    %6777 = vmatprep.subr.bf16.mxu0 %v6578
    %6778 = vmatpush1.bf16.msra.mxu0 %v6577
    %6779 = vmatprep.subr.bf16.mxu0 %v6580
    %6780 = vmatpush1.bf16.msra.mxu0 %v6579
    %6781 = vmatprep.subr.bf16.mxu0 %v6601
    %6782 = vmatpush1.bf16.msra.mxu0 %v6598
    %6783 = vmatprep.subr.bf16.mxu0 0
    %6784 = vmatpush1.bf16.msra.mxu0 0
    %6785 = vmatprep.subr.bf16.mxu0 0
    %6786 = vmatpush1.bf16.msra.mxu0 0
    %6787 = vmatprep.subr.bf16.mxu0 0
    %6788 = vmatpush1.bf16.msra.mxu0 0
    %6789 = vmatprep.subr.bf16.mxu0 0
    %6790 = vmatpush1.bf16.msra.mxu0 0
    %6791 = vmatprep.subr.bf16.mxu0 0
    %6792 = vmatpush1.bf16.msra.mxu0 0
    %6793 = vmatprep.subr.bf16.mxu0 0
    %6794 = vmatpush1.bf16.msra.mxu0 0
    %6795 = vmatprep.subr.bf16.mxu0 0
    %6796 = vmatpush1.bf16.msra.mxu0 0
    %6797 = vmatprep.subr.bf16.mxu0 0
    %6798 = vmatpush1.bf16.msra.mxu0 0
    %6799 = vmatprep.mubr.bf16.mxu0 0
    %6800 = vmatmul.mubr.bf16.gmra.mrb[0].mxu0 %v5963
    %v6801 = vpop.f32.mrb[0].mxu0
    %v6802 = vadd.f32 0.0, %v6801
    %v6803 = vpop.f32.mrb[0].mxu0
    %v6804 = vadd.f32 0.0, %v6803
    %v6805 = vpop.f32.mrb[0].mxu0
    %v6806 = vpop.f32.mrb[0].mxu0
    %6807 = vdwg.mxu0
    %6808 = vmatprep.subr.bf16.mxu0 %v6568
    %6809 = vmatpush1.bf16.msra.mxu0 %v6567
    %6810 = vmatprep.subr.bf16.mxu0 %v6570
    %6811 = vmatpush1.bf16.msra.mxu0 %v6569
    %6812 = vmatprep.subr.bf16.mxu0 %v6572
    %6813 = vmatpush1.bf16.msra.mxu0 %v6571
    %6814 = vmatprep.subr.bf16.mxu0 %v6574
    %6815 = vmatpush1.bf16.msra.mxu0 %v6573
    %6816 = vmatprep.subr.bf16.mxu0 %v6576
    %6817 = vmatpush1.bf16.msra.mxu0 %v6575
    %6818 = vmatprep.subr.bf16.mxu0 %v6578
    %6819 = vmatpush1.bf16.msra.mxu0 %v6577
    %6820 = vmatprep.subr.bf16.mxu0 %v6580
    %6821 = vmatpush1.bf16.msra.mxu0 %v6579
    %6822 = vmatprep.subr.bf16.mxu0 %v6601
    %6823 = vmatpush1.bf16.msra.mxu0 %v6598
    %6824 = vmatprep.subr.bf16.mxu0 0
    %6825 = vmatpush1.bf16.msra.mxu0 0
    %6826 = vmatprep.subr.bf16.mxu0 0
    %6827 = vmatpush1.bf16.msra.mxu0 0
    %6828 = vmatprep.subr.bf16.mxu0 0
    %6829 = vmatpush1.bf16.msra.mxu0 0
    %6830 = vmatprep.subr.bf16.mxu0 0
    %6831 = vmatpush1.bf16.msra.mxu0 0
    %6832 = vmatprep.subr.bf16.mxu0 0
    %6833 = vmatpush1.bf16.msra.mxu0 0
    %6834 = vmatprep.subr.bf16.mxu0 0
    %6835 = vmatpush1.bf16.msra.mxu0 0
    %6836 = vmatprep.subr.bf16.mxu0 0
    %6837 = vmatpush1.bf16.msra.mxu0 0
    %6838 = vmatprep.subr.bf16.mxu0 0
    %6839 = vmatpush1.bf16.msra.mxu0 0
    %6840 = vmatprep.mubr.bf16.mxu0 0
    %6841 = vmatmul.mubr.bf16.gmra.mrb[0].mxu0 %v6007
    %v6842 = vpop.f32.mrb[0].mxu0
    %v6843 = vadd.f32 0.0, %v6842
    %v6844 = vpop.f32.mrb[0].mxu0
    %v6845 = vadd.f32 0.0, %v6844
    %v6846 = vpop.f32.mrb[0].mxu0
    %v6847 = vpop.f32.mrb[0].mxu0
    %6848 = vdwg.mxu0
    %6849 = vmatprep.subr.bf16.mxu0 %v6568
    %6850 = vmatpush1.bf16.msra.mxu0 %v6567
    %6851 = vmatprep.subr.bf16.mxu0 %v6570
    %6852 = vmatpush1.bf16.msra.mxu0 %v6569
    %6853 = vmatprep.subr.bf16.mxu0 %v6572
    %6854 = vmatpush1.bf16.msra.mxu0 %v6571
    %6855 = vmatprep.subr.bf16.mxu0 %v6574
    %6856 = vmatpush1.bf16.msra.mxu0 %v6573
    %6857 = vmatprep.subr.bf16.mxu0 %v6576
    %6858 = vmatpush1.bf16.msra.mxu0 %v6575
    %6859 = vmatprep.subr.bf16.mxu0 %v6578
    %6860 = vmatpush1.bf16.msra.mxu0 %v6577
    %6861 = vmatprep.subr.bf16.mxu0 %v6580
    %6862 = vmatpush1.bf16.msra.mxu0 %v6579
    %6863 = vmatprep.subr.bf16.mxu0 %v6601
    %6864 = vmatpush1.bf16.msra.mxu0 %v6598
    %6865 = vmatprep.subr.bf16.mxu0 0
    %6866 = vmatpush1.bf16.msra.mxu0 0
    %6867 = vmatprep.subr.bf16.mxu0 0
    %6868 = vmatpush1.bf16.msra.mxu0 0
    %6869 = vmatprep.subr.bf16.mxu0 0
    %6870 = vmatpush1.bf16.msra.mxu0 0
    %6871 = vmatprep.subr.bf16.mxu0 0
    %6872 = vmatpush1.bf16.msra.mxu0 0
    %6873 = vmatprep.subr.bf16.mxu0 0
    %6874 = vmatpush1.bf16.msra.mxu0 0
    %6875 = vmatprep.subr.bf16.mxu0 0
    %6876 = vmatpush1.bf16.msra.mxu0 0
    %6877 = vmatprep.subr.bf16.mxu0 0
    %6878 = vmatpush1.bf16.msra.mxu0 0
    %6879 = vmatprep.subr.bf16.mxu0 0
    %6880 = vmatpush1.bf16.msra.mxu0 0
    %6881 = vmatprep.mubr.bf16.mxu0 0
    %6882 = vmatmul.mubr.bf16.gmra.mrb[0].mxu0 %v6051
    %v6883 = vpop.f32.mrb[0].mxu0
    %v6884 = vadd.f32 0.0, %v6883
    %v6885 = vpop.f32.mrb[0].mxu0
    %v6886 = vadd.f32 0.0, %v6885
    %v6887 = vpop.f32.mrb[0].mxu0
    %v6888 = vpop.f32.mrb[0].mxu0
    %6889 = vdwg.mxu0
    %v6891 = vsel %vm5734, %v5625, 0
    %6893 = vmatprep.subr.bf16.mxu0 %v6568
    %6894 = vmatpush1.bf16.msra.mxu0 %v6567
    %6895 = vmatprep.subr.bf16.mxu0 %v6570
    %6896 = vmatpush1.bf16.msra.mxu0 %v6569
    %6897 = vmatprep.subr.bf16.mxu0 %v6572
    %6898 = vmatpush1.bf16.msra.mxu0 %v6571
    %6899 = vmatprep.subr.bf16.mxu0 %v6574
    %6900 = vmatpush1.bf16.msra.mxu0 %v6573
    %6901 = vmatprep.subr.bf16.mxu0 %v6576
    %6902 = vmatpush1.bf16.msra.mxu0 %v6575
    %6903 = vmatprep.subr.bf16.mxu0 %v6578
    %6904 = vmatpush1.bf16.msra.mxu0 %v6577
    %6905 = vmatprep.subr.bf16.mxu0 %v6580
    %6906 = vmatpush1.bf16.msra.mxu0 %v6579
    %6907 = vmatprep.subr.bf16.mxu0 %v6601
    %6908 = vmatpush1.bf16.msra.mxu0 %v6598
    %6909 = vmatprep.subr.bf16.mxu0 0
    %6910 = vmatpush1.bf16.msra.mxu0 0
    %6911 = vmatprep.subr.bf16.mxu0 0
    %6912 = vmatpush1.bf16.msra.mxu0 0
    %6913 = vmatprep.subr.bf16.mxu0 0
    %6914 = vmatpush1.bf16.msra.mxu0 0
    %6915 = vmatprep.subr.bf16.mxu0 0
    %6916 = vmatpush1.bf16.msra.mxu0 0
    %6917 = vmatprep.subr.bf16.mxu0 0
    %6918 = vmatpush1.bf16.msra.mxu0 0
    %6919 = vmatprep.subr.bf16.mxu0 0
    %6920 = vmatpush1.bf16.msra.mxu0 0
    %6921 = vmatprep.subr.bf16.mxu0 0
    %6922 = vmatpush1.bf16.msra.mxu0 0
    %6923 = vmatprep.subr.bf16.mxu0 0
    %6924 = vmatpush1.bf16.msra.mxu0 0
    %6925 = vmatprep.mubr.bf16.mxu0 0
    %6926 = vmatmul.mubr.bf16.gmra.mrb[0].mxu0 %v6891
    %v6927 = vpop.f32.mrb[0].mxu0
    %v6928 = vadd.f32 0.0, %v6927
    %v6929 = vpop.f32.mrb[0].mxu0
    %v6930 = vadd.f32 0.0, %v6929
    %v6931 = vpop.f32.mrb[0].mxu0
    %v6932 = vpop.f32.mrb[0].mxu0
    %6933 = vdwg.mxu0
    %v6934 = vadd.f32 %v6213, %v6638
    %v6935 = vadd.f32 %v6215, %v6640
    %v6936 = vadd.f32 %v6254, %v6679
    %v6937 = vadd.f32 %v6256, %v6681
    %v6938 = vadd.f32 %v6295, %v6720
    %v6939 = vadd.f32 %v6297, %v6722
    %v6940 = vadd.f32 %v6336, %v6761
    %v6941 = vadd.f32 %v6338, %v6763
    %v6942 = vadd.f32 %v6377, %v6802
    %v6943 = vadd.f32 %v6379, %v6804
    %v6944 = vadd.f32 %v6418, %v6843
    %v6945 = vadd.f32 %v6420, %v6845
    %v6946 = vadd.f32 %v6459, %v6884
    %v6947 = vadd.f32 %v6461, %v6886
    %v6948 = vadd.f32 %v6500, %v6928
    %v6949 = vadd.f32 %v6502, %v6930
    %s6950 = scalar_lea.vmem %s3, 360
    %v6951 = vld [vmem:[%s6950] sm:$0xff]
    %v6952 = vld [vmem:[%s6950 + $0x8] sm:$0xff]
    %v6953 = vld [vmem:[%s6950 + $0x10] sm:$0xff]
    %v6954 = vld [vmem:[%s6950 + $0x18] sm:$0xff]
    %v6955 = vld [vmem:[%s6950 + $0x20] sm:$0xff]
    %v6956 = vld [vmem:[%s6950 + $0x28] sm:$0xff]
    %v6957 = vld [vmem:[%s6950 + $0x30] sm:$0xff]
    %v6958 = vld [vmem:[%s6950 + $0x38] sm:$0xff]
    %v6959 = vld [vmem:[%s6950 + $0x40] sm:$0xff]
    %v6960 = vld [vmem:[%s6950 + $0x48] sm:$0xff]
    %v6961 = vld [vmem:[%s6950 + $0x50] sm:$0xff]
    %v6962 = vld [vmem:[%s6950 + $0x58] sm:$0xff]
    %v6963 = vld [vmem:[%s6950 + $0x60] sm:$0xff]
    %v6964 = vld [vmem:[%s6950 + $0x68] sm:$0xff]
    %v6965 = vld [vmem:[%s6950 + $0x70] sm:$0xff]
    %v6981 = vunpack.c.l.b16 %v6951
    %v6982 = vunpack.c.h.b16 %v6951
    %v6983 = vunpack.c.l.b16 %v6952
    %v6984 = vunpack.c.h.b16 %v6952
    %v6985 = vunpack.c.l.b16 %v6953
    %v6986 = vunpack.c.h.b16 %v6953
    %v6987 = vunpack.c.l.b16 %v6954
    %v6988 = vunpack.c.h.b16 %v6954
    %v6989 = vunpack.c.l.b16 %v6955
    %v6990 = vunpack.c.h.b16 %v6955
    %v6991 = vunpack.c.l.b16 %v6956
    %v6992 = vunpack.c.h.b16 %v6956
    %v6993 = vunpack.c.l.b16 %v6957
    %v6994 = vunpack.c.h.b16 %v6957
    %v6995 = vunpack.c.l.b16 %v6958
    %v6996 = vunpack.c.h.b16 %v6958
    %v6997 = vunpack.c.l.b16 %v6959
    %v6998 = vunpack.c.h.b16 %v6959
    %v6999 = vunpack.c.l.b16 %v6960
    %v7000 = vunpack.c.h.b16 %v6960
    %v7001 = vunpack.c.l.b16 %v6961
    %v7002 = vunpack.c.h.b16 %v6961
    %v7003 = vunpack.c.l.b16 %v6962
    %v7004 = vunpack.c.h.b16 %v6962
    %v7005 = vunpack.c.l.b16 %v6963
    %v7006 = vunpack.c.h.b16 %v6963
    %v7007 = vunpack.c.l.b16 %v6964
    %v7008 = vunpack.c.h.b16 %v6964
    %v7009 = vunpack.c.l.b16 %v6965
    %v7010 = vunpack.c.h.b16 %v6965
    %v7011 = vpack.c.b16 %v6983, %v6981
    %v7012 = vpack.c.b16 %v6984, %v6982
    %v7013 = vpack.c.b16 %v6987, %v6985
    %v7014 = vpack.c.b16 %v6988, %v6986
    %v7015 = vpack.c.b16 %v6991, %v6989
    %v7016 = vpack.c.b16 %v6992, %v6990
    %v7017 = vpack.c.b16 %v6995, %v6993
    %v7018 = vpack.c.b16 %v6996, %v6994
    %v7019 = vpack.c.b16 %v6999, %v6997
    %v7020 = vpack.c.b16 %v7000, %v6998
    %v7021 = vpack.c.b16 %v7003, %v7001
    %v7022 = vpack.c.b16 %v7004, %v7002
    %v7023 = vpack.c.b16 %v7007, %v7005
    %v7024 = vpack.c.b16 %v7008, %v7006
    %v7025 = vpack.c.b16 %v7009, %v7009
    %v7026 = vpack.c.b16 %v7010, %v7010
    %v7042 = vsel %vm5738, %v7025, 0
    %v7045 = vsel %vm5738, %v7026, 0
    %7047 = vmatprep.subr.bf16.mxu0 %v7012
    %7048 = vmatpush1.bf16.msra.mxu0 %v7011
    %7049 = vmatprep.subr.bf16.mxu0 %v7014
    %7050 = vmatpush1.bf16.msra.mxu0 %v7013
    %7051 = vmatprep.subr.bf16.mxu0 %v7016
    %7052 = vmatpush1.bf16.msra.mxu0 %v7015
    %7053 = vmatprep.subr.bf16.mxu0 %v7018
    %7054 = vmatpush1.bf16.msra.mxu0 %v7017
    %7055 = vmatprep.subr.bf16.mxu0 %v7020
    %7056 = vmatpush1.bf16.msra.mxu0 %v7019
    %7057 = vmatprep.subr.bf16.mxu0 %v7022
    %7058 = vmatpush1.bf16.msra.mxu0 %v7021
    %7059 = vmatprep.subr.bf16.mxu0 %v7024
    %7060 = vmatpush1.bf16.msra.mxu0 %v7023
    %7061 = vmatprep.subr.bf16.mxu0 %v7045
    %7062 = vmatpush1.bf16.msra.mxu0 %v7042
    %7063 = vmatprep.subr.bf16.mxu0 0
    %7064 = vmatpush1.bf16.msra.mxu0 0
    %7065 = vmatprep.subr.bf16.mxu0 0
    %7066 = vmatpush1.bf16.msra.mxu0 0
    %7067 = vmatprep.subr.bf16.mxu0 0
    %7068 = vmatpush1.bf16.msra.mxu0 0
    %7069 = vmatprep.subr.bf16.mxu0 0
    %7070 = vmatpush1.bf16.msra.mxu0 0
    %7071 = vmatprep.subr.bf16.mxu0 0
    %7072 = vmatpush1.bf16.msra.mxu0 0
    %7073 = vmatprep.subr.bf16.mxu0 0
    %7074 = vmatpush1.bf16.msra.mxu0 0
    %7075 = vmatprep.subr.bf16.mxu0 0
    %7076 = vmatpush1.bf16.msra.mxu0 0
    %7077 = vmatprep.subr.bf16.mxu0 0
    %7078 = vmatpush1.bf16.msra.mxu0 0
    %7079 = vmatprep.mubr.bf16.mxu0 0
    %7080 = vmatmul.mubr.bf16.gmra.mrb[0].mxu0 %v5831
    %v7081 = vpop.f32.mrb[0].mxu0
    %v7082 = vadd.f32 0.0, %v7081
    %v7083 = vpop.f32.mrb[0].mxu0
    %v7084 = vadd.f32 0.0, %v7083
    %v7085 = vpop.f32.mrb[0].mxu0
    %v7086 = vpop.f32.mrb[0].mxu0
    %7087 = vdwg.mxu0
    %7088 = vmatprep.subr.bf16.mxu0 %v7012
    %7089 = vmatpush1.bf16.msra.mxu0 %v7011
    %7090 = vmatprep.subr.bf16.mxu0 %v7014
    %7091 = vmatpush1.bf16.msra.mxu0 %v7013
    %7092 = vmatprep.subr.bf16.mxu0 %v7016
    %7093 = vmatpush1.bf16.msra.mxu0 %v7015
    %7094 = vmatprep.subr.bf16.mxu0 %v7018
    %7095 = vmatpush1.bf16.msra.mxu0 %v7017
    %7096 = vmatprep.subr.bf16.mxu0 %v7020
    %7097 = vmatpush1.bf16.msra.mxu0 %v7019
    %7098 = vmatprep.subr.bf16.mxu0 %v7022
    %7099 = vmatpush1.bf16.msra.mxu0 %v7021
    %7100 = vmatprep.subr.bf16.mxu0 %v7024
    %7101 = vmatpush1.bf16.msra.mxu0 %v7023
    %7102 = vmatprep.subr.bf16.mxu0 %v7045
    %7103 = vmatpush1.bf16.msra.mxu0 %v7042
    %7104 = vmatprep.subr.bf16.mxu0 0
    %7105 = vmatpush1.bf16.msra.mxu0 0
    %7106 = vmatprep.subr.bf16.mxu0 0
    %7107 = vmatpush1.bf16.msra.mxu0 0
    %7108 = vmatprep.subr.bf16.mxu0 0
    %7109 = vmatpush1.bf16.msra.mxu0 0
    %7110 = vmatprep.subr.bf16.mxu0 0
    %7111 = vmatpush1.bf16.msra.mxu0 0
    %7112 = vmatprep.subr.bf16.mxu0 0
    %7113 = vmatpush1.bf16.msra.mxu0 0
    %7114 = vmatprep.subr.bf16.mxu0 0
    %7115 = vmatpush1.bf16.msra.mxu0 0
    %7116 = vmatprep.subr.bf16.mxu0 0
    %7117 = vmatpush1.bf16.msra.mxu0 0
    %7118 = vmatprep.subr.bf16.mxu0 0
    %7119 = vmatpush1.bf16.msra.mxu0 0
    %7120 = vmatprep.mubr.bf16.mxu0 0
    %7121 = vmatmul.mubr.bf16.gmra.mrb[0].mxu0 %v5875
    %v7122 = vpop.f32.mrb[0].mxu0
    %v7123 = vadd.f32 0.0, %v7122
    %v7124 = vpop.f32.mrb[0].mxu0
    %v7125 = vadd.f32 0.0, %v7124
    %v7126 = vpop.f32.mrb[0].mxu0
    %v7127 = vpop.f32.mrb[0].mxu0
    %7128 = vdwg.mxu0
    %7129 = vmatprep.subr.bf16.mxu0 %v7012
    %7130 = vmatpush1.bf16.msra.mxu0 %v7011
    %7131 = vmatprep.subr.bf16.mxu0 %v7014
    %7132 = vmatpush1.bf16.msra.mxu0 %v7013
    %7133 = vmatprep.subr.bf16.mxu0 %v7016
    %7134 = vmatpush1.bf16.msra.mxu0 %v7015
    %7135 = vmatprep.subr.bf16.mxu0 %v7018
    %7136 = vmatpush1.bf16.msra.mxu0 %v7017
    %7137 = vmatprep.subr.bf16.mxu0 %v7020
    %7138 = vmatpush1.bf16.msra.mxu0 %v7019
    %7139 = vmatprep.subr.bf16.mxu0 %v7022
    %7140 = vmatpush1.bf16.msra.mxu0 %v7021
    %7141 = vmatprep.subr.bf16.mxu0 %v7024
    %7142 = vmatpush1.bf16.msra.mxu0 %v7023
    %7143 = vmatprep.subr.bf16.mxu0 %v7045
    %7144 = vmatpush1.bf16.msra.mxu0 %v7042
    %7145 = vmatprep.subr.bf16.mxu0 0
    %7146 = vmatpush1.bf16.msra.mxu0 0
    %7147 = vmatprep.subr.bf16.mxu0 0
    %7148 = vmatpush1.bf16.msra.mxu0 0
    %7149 = vmatprep.subr.bf16.mxu0 0
    %7150 = vmatpush1.bf16.msra.mxu0 0
    %7151 = vmatprep.subr.bf16.mxu0 0
    %7152 = vmatpush1.bf16.msra.mxu0 0
    %7153 = vmatprep.subr.bf16.mxu0 0
    %7154 = vmatpush1.bf16.msra.mxu0 0
    %7155 = vmatprep.subr.bf16.mxu0 0
    %7156 = vmatpush1.bf16.msra.mxu0 0
    %7157 = vmatprep.subr.bf16.mxu0 0
    %7158 = vmatpush1.bf16.msra.mxu0 0
    %7159 = vmatprep.subr.bf16.mxu0 0
    %7160 = vmatpush1.bf16.msra.mxu0 0
    %7161 = vmatprep.mubr.bf16.mxu0 0
    %7162 = vmatmul.mubr.bf16.gmra.mrb[0].mxu0 %v5919
    %v7163 = vpop.f32.mrb[0].mxu0
    %v7164 = vadd.f32 0.0, %v7163
    %v7165 = vpop.f32.mrb[0].mxu0
    %v7166 = vadd.f32 0.0, %v7165
    %v7167 = vpop.f32.mrb[0].mxu0
    %v7168 = vpop.f32.mrb[0].mxu0
    %7169 = vdwg.mxu0
    %7170 = vmatprep.subr.bf16.mxu0 %v7012
    %7171 = vmatpush1.bf16.msra.mxu0 %v7011
    %7172 = vmatprep.subr.bf16.mxu0 %v7014
    %7173 = vmatpush1.bf16.msra.mxu0 %v7013
    %7174 = vmatprep.subr.bf16.mxu0 %v7016
    %7175 = vmatpush1.bf16.msra.mxu0 %v7015
    %7176 = vmatprep.subr.bf16.mxu0 %v7018
    %7177 = vmatpush1.bf16.msra.mxu0 %v7017
    %7178 = vmatprep.subr.bf16.mxu0 %v7020
    %7179 = vmatpush1.bf16.msra.mxu0 %v7019
    %7180 = vmatprep.subr.bf16.mxu0 %v7022
    %7181 = vmatpush1.bf16.msra.mxu0 %v7021
    %7182 = vmatprep.subr.bf16.mxu0 %v7024
    %7183 = vmatpush1.bf16.msra.mxu0 %v7023
    %7184 = vmatprep.subr.bf16.mxu0 %v7045
    %7185 = vmatpush1.bf16.msra.mxu0 %v7042
    %7186 = vmatprep.subr.bf16.mxu0 0
    %7187 = vmatpush1.bf16.msra.mxu0 0
    %7188 = vmatprep.subr.bf16.mxu0 0
    %7189 = vmatpush1.bf16.msra.mxu0 0
    %7190 = vmatprep.subr.bf16.mxu0 0
    %7191 = vmatpush1.bf16.msra.mxu0 0
    %7192 = vmatprep.subr.bf16.mxu0 0
    %7193 = vmatpush1.bf16.msra.mxu0 0
    %7194 = vmatprep.subr.bf16.mxu0 0
    %7195 = vmatpush1.bf16.msra.mxu0 0
    %7196 = vmatprep.subr.bf16.mxu0 0
    %7197 = vmatpush1.bf16.msra.mxu0 0
    %7198 = vmatprep.subr.bf16.mxu0 0
    %7199 = vmatpush1.bf16.msra.mxu0 0
    %7200 = vmatprep.subr.bf16.mxu0 0
    %7201 = vmatpush1.bf16.msra.mxu0 0
    %7202 = vmatprep.mubr.bf16.mxu0 0
    %7203 = vmatmul.mubr.bf16.gmra.mrb[0].mxu0 %v5963
    %v7204 = vpop.f32.mrb[0].mxu0
    %v7205 = vadd.f32 0.0, %v7204
    %v7206 = vpop.f32.mrb[0].mxu0
    %v7207 = vadd.f32 0.0, %v7206
    %v7208 = vpop.f32.mrb[0].mxu0
    %v7209 = vpop.f32.mrb[0].mxu0
    %7210 = vdwg.mxu0
    %7211 = vmatprep.subr.bf16.mxu0 %v7012
    %7212 = vmatpush1.bf16.msra.mxu0 %v7011
    %7213 = vmatprep.subr.bf16.mxu0 %v7014
    %7214 = vmatpush1.bf16.msra.mxu0 %v7013
    %7215 = vmatprep.subr.bf16.mxu0 %v7016
    %7216 = vmatpush1.bf16.msra.mxu0 %v7015
    %7217 = vmatprep.subr.bf16.mxu0 %v7018
    %7218 = vmatpush1.bf16.msra.mxu0 %v7017
    %7219 = vmatprep.subr.bf16.mxu0 %v7020
    %7220 = vmatpush1.bf16.msra.mxu0 %v7019
    %7221 = vmatprep.subr.bf16.mxu0 %v7022
    %7222 = vmatpush1.bf16.msra.mxu0 %v7021
    %7223 = vmatprep.subr.bf16.mxu0 %v7024
    %7224 = vmatpush1.bf16.msra.mxu0 %v7023
    %7225 = vmatprep.subr.bf16.mxu0 %v7045
    %7226 = vmatpush1.bf16.msra.mxu0 %v7042
    %7227 = vmatprep.subr.bf16.mxu0 0
    %7228 = vmatpush1.bf16.msra.mxu0 0
    %7229 = vmatprep.subr.bf16.mxu0 0
    %7230 = vmatpush1.bf16.msra.mxu0 0
    %7231 = vmatprep.subr.bf16.mxu0 0
    %7232 = vmatpush1.bf16.msra.mxu0 0
    %7233 = vmatprep.subr.bf16.mxu0 0
    %7234 = vmatpush1.bf16.msra.mxu0 0
    %7235 = vmatprep.subr.bf16.mxu0 0
    %7236 = vmatpush1.bf16.msra.mxu0 0
    %7237 = vmatprep.subr.bf16.mxu0 0
    %7238 = vmatpush1.bf16.msra.mxu0 0
    %7239 = vmatprep.subr.bf16.mxu0 0
    %7240 = vmatpush1.bf16.msra.mxu0 0
    %7241 = vmatprep.subr.bf16.mxu0 0
    %7242 = vmatpush1.bf16.msra.mxu0 0
    %7243 = vmatprep.mubr.bf16.mxu0 0
    %7244 = vmatmul.mubr.bf16.gmra.mrb[0].mxu0 %v6007
    %v7245 = vpop.f32.mrb[0].mxu0
    %v7246 = vadd.f32 0.0, %v7245
    %v7247 = vpop.f32.mrb[0].mxu0
    %v7248 = vadd.f32 0.0, %v7247
    %v7249 = vpop.f32.mrb[0].mxu0
    %v7250 = vpop.f32.mrb[0].mxu0
    %7251 = vdwg.mxu0
    %7252 = vmatprep.subr.bf16.mxu0 %v7012
    %7253 = vmatpush1.bf16.msra.mxu0 %v7011
    %7254 = vmatprep.subr.bf16.mxu0 %v7014
    %7255 = vmatpush1.bf16.msra.mxu0 %v7013
    %7256 = vmatprep.subr.bf16.mxu0 %v7016
    %7257 = vmatpush1.bf16.msra.mxu0 %v7015
    %7258 = vmatprep.subr.bf16.mxu0 %v7018
    %7259 = vmatpush1.bf16.msra.mxu0 %v7017
    %7260 = vmatprep.subr.bf16.mxu0 %v7020
    %7261 = vmatpush1.bf16.msra.mxu0 %v7019
    %7262 = vmatprep.subr.bf16.mxu0 %v7022
    %7263 = vmatpush1.bf16.msra.mxu0 %v7021
    %7264 = vmatprep.subr.bf16.mxu0 %v7024
    %7265 = vmatpush1.bf16.msra.mxu0 %v7023
    %7266 = vmatprep.subr.bf16.mxu0 %v7045
    %7267 = vmatpush1.bf16.msra.mxu0 %v7042
    %7268 = vmatprep.subr.bf16.mxu0 0
    %7269 = vmatpush1.bf16.msra.mxu0 0
    %7270 = vmatprep.subr.bf16.mxu0 0
    %7271 = vmatpush1.bf16.msra.mxu0 0
    %7272 = vmatprep.subr.bf16.mxu0 0
    %7273 = vmatpush1.bf16.msra.mxu0 0
    %7274 = vmatprep.subr.bf16.mxu0 0
    %7275 = vmatpush1.bf16.msra.mxu0 0
    %7276 = vmatprep.subr.bf16.mxu0 0
    %7277 = vmatpush1.bf16.msra.mxu0 0
    %7278 = vmatprep.subr.bf16.mxu0 0
    %7279 = vmatpush1.bf16.msra.mxu0 0
    %7280 = vmatprep.subr.bf16.mxu0 0
    %7281 = vmatpush1.bf16.msra.mxu0 0
    %7282 = vmatprep.subr.bf16.mxu0 0
    %7283 = vmatpush1.bf16.msra.mxu0 0
    %7284 = vmatprep.mubr.bf16.mxu0 0
    %7285 = vmatmul.mubr.bf16.gmra.mrb[0].mxu0 %v6051
    %v7286 = vpop.f32.mrb[0].mxu0
    %v7287 = vadd.f32 0.0, %v7286
    %v7288 = vpop.f32.mrb[0].mxu0
    %v7289 = vadd.f32 0.0, %v7288
    %v7290 = vpop.f32.mrb[0].mxu0
    %v7291 = vpop.f32.mrb[0].mxu0
    %7292 = vdwg.mxu0
    %7293 = vmatprep.subr.bf16.mxu0 %v7012
    %7294 = vmatpush1.bf16.msra.mxu0 %v7011
    %7295 = vmatprep.subr.bf16.mxu0 %v7014
    %7296 = vmatpush1.bf16.msra.mxu0 %v7013
    %7297 = vmatprep.subr.bf16.mxu0 %v7016
    %7298 = vmatpush1.bf16.msra.mxu0 %v7015
    %7299 = vmatprep.subr.bf16.mxu0 %v7018
    %7300 = vmatpush1.bf16.msra.mxu0 %v7017
    %7301 = vmatprep.subr.bf16.mxu0 %v7020
    %7302 = vmatpush1.bf16.msra.mxu0 %v7019
    %7303 = vmatprep.subr.bf16.mxu0 %v7022
    %7304 = vmatpush1.bf16.msra.mxu0 %v7021
    %7305 = vmatprep.subr.bf16.mxu0 %v7024
    %7306 = vmatpush1.bf16.msra.mxu0 %v7023
    %7307 = vmatprep.subr.bf16.mxu0 %v7045
    %7308 = vmatpush1.bf16.msra.mxu0 %v7042
    %7309 = vmatprep.subr.bf16.mxu0 0
    %7310 = vmatpush1.bf16.msra.mxu0 0
    %7311 = vmatprep.subr.bf16.mxu0 0
    %7312 = vmatpush1.bf16.msra.mxu0 0
    %7313 = vmatprep.subr.bf16.mxu0 0
    %7314 = vmatpush1.bf16.msra.mxu0 0
    %7315 = vmatprep.subr.bf16.mxu0 0
    %7316 = vmatpush1.bf16.msra.mxu0 0
    %7317 = vmatprep.subr.bf16.mxu0 0
    %7318 = vmatpush1.bf16.msra.mxu0 0
    %7319 = vmatprep.subr.bf16.mxu0 0
    %7320 = vmatpush1.bf16.msra.mxu0 0
    %7321 = vmatprep.subr.bf16.mxu0 0
    %7322 = vmatpush1.bf16.msra.mxu0 0
    %7323 = vmatprep.subr.bf16.mxu0 0
    %7324 = vmatpush1.bf16.msra.mxu0 0
    %7325 = vmatprep.mubr.bf16.mxu0 0
    %7326 = vmatmul.mubr.bf16.gmra.mrb[0].mxu0 %v6891
    %v7327 = vpop.f32.mrb[0].mxu0
    %v7328 = vadd.f32 0.0, %v7327
    %v7329 = vpop.f32.mrb[0].mxu0
    %v7330 = vadd.f32 0.0, %v7329
    %v7331 = vpop.f32.mrb[0].mxu0
    %v7332 = vpop.f32.mrb[0].mxu0
    %7333 = vdwg.mxu0
    %v7335 = vsel %vm5734, %v5626, 0
    %7337 = vmatprep.subr.bf16.mxu0 %v7012
    %7338 = vmatpush1.bf16.msra.mxu0 %v7011
    %7339 = vmatprep.subr.bf16.mxu0 %v7014
    %7340 = vmatpush1.bf16.msra.mxu0 %v7013
    %7341 = vmatprep.subr.bf16.mxu0 %v7016
    %7342 = vmatpush1.bf16.msra.mxu0 %v7015
    %7343 = vmatprep.subr.bf16.mxu0 %v7018
    %7344 = vmatpush1.bf16.msra.mxu0 %v7017
    %7345 = vmatprep.subr.bf16.mxu0 %v7020
    %7346 = vmatpush1.bf16.msra.mxu0 %v7019
    %7347 = vmatprep.subr.bf16.mxu0 %v7022
    %7348 = vmatpush1.bf16.msra.mxu0 %v7021
    %7349 = vmatprep.subr.bf16.mxu0 %v7024
    %7350 = vmatpush1.bf16.msra.mxu0 %v7023
    %7351 = vmatprep.subr.bf16.mxu0 %v7045
    %7352 = vmatpush1.bf16.msra.mxu0 %v7042
    %7353 = vmatprep.subr.bf16.mxu0 0
    %7354 = vmatpush1.bf16.msra.mxu0 0
    %7355 = vmatprep.subr.bf16.mxu0 0
    %7356 = vmatpush1.bf16.msra.mxu0 0
    %7357 = vmatprep.subr.bf16.mxu0 0
    %7358 = vmatpush1.bf16.msra.mxu0 0
    %7359 = vmatprep.subr.bf16.mxu0 0
    %7360 = vmatpush1.bf16.msra.mxu0 0
    %7361 = vmatprep.subr.bf16.mxu0 0
    %7362 = vmatpush1.bf16.msra.mxu0 0
    %7363 = vmatprep.subr.bf16.mxu0 0
    %7364 = vmatpush1.bf16.msra.mxu0 0
    %7365 = vmatprep.subr.bf16.mxu0 0
    %7366 = vmatpush1.bf16.msra.mxu0 0
    %7367 = vmatprep.subr.bf16.mxu0 0
    %7368 = vmatpush1.bf16.msra.mxu0 0
    %7369 = vmatprep.mubr.bf16.mxu0 0
    %7370 = vmatmul.mubr.bf16.gmra.mrb[0].mxu0 %v7335
    %v7371 = vpop.f32.mrb[0].mxu0
    %v7372 = vadd.f32 0.0, %v7371
    %v7373 = vpop.f32.mrb[0].mxu0
    %v7374 = vadd.f32 0.0, %v7373
    %v7375 = vpop.f32.mrb[0].mxu0
    %v7376 = vpop.f32.mrb[0].mxu0
    %7377 = vdwg.mxu0
    %v7378 = vadd.f32 %v6934, %v7082
    %v7379 = vadd.f32 %v6935, %v7084
    %v7380 = vadd.f32 %v6936, %v7123
    %v7381 = vadd.f32 %v6937, %v7125
    %v7382 = vadd.f32 %v6938, %v7164
    %v7383 = vadd.f32 %v6939, %v7166
    %v7384 = vadd.f32 %v6940, %v7205
    %v7385 = vadd.f32 %v6941, %v7207
    %v7386 = vadd.f32 %v6942, %v7246
    %v7387 = vadd.f32 %v6943, %v7248
    %v7388 = vadd.f32 %v6944, %v7287
    %v7389 = vadd.f32 %v6945, %v7289
    %v7390 = vadd.f32 %v6946, %v7328
    %v7391 = vadd.f32 %v6947, %v7330
    %v7392 = vadd.f32 %v6948, %v7372
    %v7393 = vadd.f32 %v6949, %v7374
    %s7394 = scalar_lea.vmem %s3, 480
    %v7395 = vld [vmem:[%s7394] sm:$0xff]
    %v7396 = vld [vmem:[%s7394 + $0x8] sm:$0xff]
    %v7397 = vld [vmem:[%s7394 + $0x10] sm:$0xff]
    %v7398 = vld [vmem:[%s7394 + $0x18] sm:$0xff]
    %v7399 = vld [vmem:[%s7394 + $0x20] sm:$0xff]
    %v7400 = vld [vmem:[%s7394 + $0x28] sm:$0xff]
    %v7401 = vld [vmem:[%s7394 + $0x30] sm:$0xff]
    %v7402 = vld [vmem:[%s7394 + $0x38] sm:$0xff]
    %v7403 = vld [vmem:[%s7394 + $0x40] sm:$0xff]
    %v7404 = vld [vmem:[%s7394 + $0x48] sm:$0xff]
    %v7405 = vld [vmem:[%s7394 + $0x50] sm:$0xff]
    %v7406 = vld [vmem:[%s7394 + $0x58] sm:$0xff]
    %v7407 = vld [vmem:[%s7394 + $0x60] sm:$0xff]
    %v7408 = vld [vmem:[%s7394 + $0x68] sm:$0xff]
    %v7409 = vld [vmem:[%s7394 + $0x70] sm:$0xff]
    %v7425 = vunpack.c.l.b16 %v7395
    %v7426 = vunpack.c.h.b16 %v7395
    %v7427 = vunpack.c.l.b16 %v7396
    %v7428 = vunpack.c.h.b16 %v7396
    %v7429 = vunpack.c.l.b16 %v7397
    %v7430 = vunpack.c.h.b16 %v7397
    %v7431 = vunpack.c.l.b16 %v7398
    %v7432 = vunpack.c.h.b16 %v7398
    %v7433 = vunpack.c.l.b16 %v7399
    %v7434 = vunpack.c.h.b16 %v7399
    %v7435 = vunpack.c.l.b16 %v7400
    %v7436 = vunpack.c.h.b16 %v7400
    %v7437 = vunpack.c.l.b16 %v7401
    %v7438 = vunpack.c.h.b16 %v7401
    %v7439 = vunpack.c.l.b16 %v7402
    %v7440 = vunpack.c.h.b16 %v7402
    %v7441 = vunpack.c.l.b16 %v7403
    %v7442 = vunpack.c.h.b16 %v7403
    %v7443 = vunpack.c.l.b16 %v7404
    %v7444 = vunpack.c.h.b16 %v7404
    %v7445 = vunpack.c.l.b16 %v7405
    %v7446 = vunpack.c.h.b16 %v7405
    %v7447 = vunpack.c.l.b16 %v7406
    %v7448 = vunpack.c.h.b16 %v7406
    %v7449 = vunpack.c.l.b16 %v7407
    %v7450 = vunpack.c.h.b16 %v7407
    %v7451 = vunpack.c.l.b16 %v7408
    %v7452 = vunpack.c.h.b16 %v7408
    %v7453 = vunpack.c.l.b16 %v7409
    %v7454 = vunpack.c.h.b16 %v7409
    %v7455 = vpack.c.b16 %v7427, %v7425
    %v7456 = vpack.c.b16 %v7428, %v7426
    %v7457 = vpack.c.b16 %v7431, %v7429
    %v7458 = vpack.c.b16 %v7432, %v7430
    %v7459 = vpack.c.b16 %v7435, %v7433
    %v7460 = vpack.c.b16 %v7436, %v7434
    %v7461 = vpack.c.b16 %v7439, %v7437
    %v7462 = vpack.c.b16 %v7440, %v7438
    %v7463 = vpack.c.b16 %v7443, %v7441
    %v7464 = vpack.c.b16 %v7444, %v7442
    %v7465 = vpack.c.b16 %v7447, %v7445
    %v7466 = vpack.c.b16 %v7448, %v7446
    %v7467 = vpack.c.b16 %v7451, %v7449
    %v7468 = vpack.c.b16 %v7452, %v7450
    %v7469 = vpack.c.b16 %v7453, %v7453
    %v7470 = vpack.c.b16 %v7454, %v7454
    %v7486 = vsel %vm5738, %v7469, 0
    %v7489 = vsel %vm5738, %v7470, 0
    %7491 = vmatprep.subr.bf16.mxu0 %v7456
    %7492 = vmatpush1.bf16.msra.mxu0 %v7455
    %7493 = vmatprep.subr.bf16.mxu0 %v7458
    %7494 = vmatpush1.bf16.msra.mxu0 %v7457
    %7495 = vmatprep.subr.bf16.mxu0 %v7460
    %7496 = vmatpush1.bf16.msra.mxu0 %v7459
    %7497 = vmatprep.subr.bf16.mxu0 %v7462
    %7498 = vmatpush1.bf16.msra.mxu0 %v7461
    %7499 = vmatprep.subr.bf16.mxu0 %v7464
    %7500 = vmatpush1.bf16.msra.mxu0 %v7463
    %7501 = vmatprep.subr.bf16.mxu0 %v7466
    %7502 = vmatpush1.bf16.msra.mxu0 %v7465
    %7503 = vmatprep.subr.bf16.mxu0 %v7468
    %7504 = vmatpush1.bf16.msra.mxu0 %v7467
    %7505 = vmatprep.subr.bf16.mxu0 %v7489
    %7506 = vmatpush1.bf16.msra.mxu0 %v7486
    %7507 = vmatprep.subr.bf16.mxu0 0
    %7508 = vmatpush1.bf16.msra.mxu0 0
    %7509 = vmatprep.subr.bf16.mxu0 0
    %7510 = vmatpush1.bf16.msra.mxu0 0
    %7511 = vmatprep.subr.bf16.mxu0 0
    %7512 = vmatpush1.bf16.msra.mxu0 0
    %7513 = vmatprep.subr.bf16.mxu0 0
    %7514 = vmatpush1.bf16.msra.mxu0 0
    %7515 = vmatprep.subr.bf16.mxu0 0
    %7516 = vmatpush1.bf16.msra.mxu0 0
    %7517 = vmatprep.subr.bf16.mxu0 0
    %7518 = vmatpush1.bf16.msra.mxu0 0
    %7519 = vmatprep.subr.bf16.mxu0 0
    %7520 = vmatpush1.bf16.msra.mxu0 0
    %7521 = vmatprep.subr.bf16.mxu0 0
    %7522 = vmatpush1.bf16.msra.mxu0 0
    %7523 = vmatprep.mubr.bf16.mxu0 0
    %7524 = vmatmul.mubr.bf16.gmra.mrb[0].mxu0 %v5875
    %v7525 = vpop.f32.mrb[0].mxu0
    %v7526 = vadd.f32 0.0, %v7525
    %v7527 = vpop.f32.mrb[0].mxu0
    %v7528 = vadd.f32 0.0, %v7527
    %v7529 = vpop.f32.mrb[0].mxu0
    %v7530 = vpop.f32.mrb[0].mxu0
    %7531 = vdwg.mxu0
    %7532 = vmatprep.subr.bf16.mxu0 %v7456
    %7533 = vmatpush1.bf16.msra.mxu0 %v7455
    %7534 = vmatprep.subr.bf16.mxu0 %v7458
    %7535 = vmatpush1.bf16.msra.mxu0 %v7457
    %7536 = vmatprep.subr.bf16.mxu0 %v7460
    %7537 = vmatpush1.bf16.msra.mxu0 %v7459
    %7538 = vmatprep.subr.bf16.mxu0 %v7462
    %7539 = vmatpush1.bf16.msra.mxu0 %v7461
    %7540 = vmatprep.subr.bf16.mxu0 %v7464
    %7541 = vmatpush1.bf16.msra.mxu0 %v7463
    %7542 = vmatprep.subr.bf16.mxu0 %v7466
    %7543 = vmatpush1.bf16.msra.mxu0 %v7465
    %7544 = vmatprep.subr.bf16.mxu0 %v7468
    %7545 = vmatpush1.bf16.msra.mxu0 %v7467
    %7546 = vmatprep.subr.bf16.mxu0 %v7489
    %7547 = vmatpush1.bf16.msra.mxu0 %v7486
    %7548 = vmatprep.subr.bf16.mxu0 0
    %7549 = vmatpush1.bf16.msra.mxu0 0
    %7550 = vmatprep.subr.bf16.mxu0 0
    %7551 = vmatpush1.bf16.msra.mxu0 0
    %7552 = vmatprep.subr.bf16.mxu0 0
    %7553 = vmatpush1.bf16.msra.mxu0 0
    %7554 = vmatprep.subr.bf16.mxu0 0
    %7555 = vmatpush1.bf16.msra.mxu0 0
    %7556 = vmatprep.subr.bf16.mxu0 0
    %7557 = vmatpush1.bf16.msra.mxu0 0
    %7558 = vmatprep.subr.bf16.mxu0 0
    %7559 = vmatpush1.bf16.msra.mxu0 0
    %7560 = vmatprep.subr.bf16.mxu0 0
    %7561 = vmatpush1.bf16.msra.mxu0 0
    %7562 = vmatprep.subr.bf16.mxu0 0
    %7563 = vmatpush1.bf16.msra.mxu0 0
    %7564 = vmatprep.mubr.bf16.mxu0 0
    %7565 = vmatmul.mubr.bf16.gmra.mrb[0].mxu0 %v5919
    %v7566 = vpop.f32.mrb[0].mxu0
    %v7567 = vadd.f32 0.0, %v7566
    %v7568 = vpop.f32.mrb[0].mxu0
    %v7569 = vadd.f32 0.0, %v7568
    %v7570 = vpop.f32.mrb[0].mxu0
    %v7571 = vpop.f32.mrb[0].mxu0
    %7572 = vdwg.mxu0
    %7573 = vmatprep.subr.bf16.mxu0 %v7456
    %7574 = vmatpush1.bf16.msra.mxu0 %v7455
    %7575 = vmatprep.subr.bf16.mxu0 %v7458
    %7576 = vmatpush1.bf16.msra.mxu0 %v7457
    %7577 = vmatprep.subr.bf16.mxu0 %v7460
    %7578 = vmatpush1.bf16.msra.mxu0 %v7459
    %7579 = vmatprep.subr.bf16.mxu0 %v7462
    %7580 = vmatpush1.bf16.msra.mxu0 %v7461
    %7581 = vmatprep.subr.bf16.mxu0 %v7464
    %7582 = vmatpush1.bf16.msra.mxu0 %v7463
    %7583 = vmatprep.subr.bf16.mxu0 %v7466
    %7584 = vmatpush1.bf16.msra.mxu0 %v7465
    %7585 = vmatprep.subr.bf16.mxu0 %v7468
    %7586 = vmatpush1.bf16.msra.mxu0 %v7467
    %7587 = vmatprep.subr.bf16.mxu0 %v7489
    %7588 = vmatpush1.bf16.msra.mxu0 %v7486
    %7589 = vmatprep.subr.bf16.mxu0 0
    %7590 = vmatpush1.bf16.msra.mxu0 0
    %7591 = vmatprep.subr.bf16.mxu0 0
    %7592 = vmatpush1.bf16.msra.mxu0 0
    %7593 = vmatprep.subr.bf16.mxu0 0
    %7594 = vmatpush1.bf16.msra.mxu0 0
    %7595 = vmatprep.subr.bf16.mxu0 0
    %7596 = vmatpush1.bf16.msra.mxu0 0
    %7597 = vmatprep.subr.bf16.mxu0 0
    %7598 = vmatpush1.bf16.msra.mxu0 0
    %7599 = vmatprep.subr.bf16.mxu0 0
    %7600 = vmatpush1.bf16.msra.mxu0 0
    %7601 = vmatprep.subr.bf16.mxu0 0
    %7602 = vmatpush1.bf16.msra.mxu0 0
    %7603 = vmatprep.subr.bf16.mxu0 0
    %7604 = vmatpush1.bf16.msra.mxu0 0
    %7605 = vmatprep.mubr.bf16.mxu0 0
    %7606 = vmatmul.mubr.bf16.gmra.mrb[0].mxu0 %v5963
    %v7607 = vpop.f32.mrb[0].mxu0
    %v7608 = vadd.f32 0.0, %v7607
    %v7609 = vpop.f32.mrb[0].mxu0
    %v7610 = vadd.f32 0.0, %v7609
    %v7611 = vpop.f32.mrb[0].mxu0
    %v7612 = vpop.f32.mrb[0].mxu0
    %7613 = vdwg.mxu0
    %7614 = vmatprep.subr.bf16.mxu0 %v7456
    %7615 = vmatpush1.bf16.msra.mxu0 %v7455
    %7616 = vmatprep.subr.bf16.mxu0 %v7458
    %7617 = vmatpush1.bf16.msra.mxu0 %v7457
    %7618 = vmatprep.subr.bf16.mxu0 %v7460
    %7619 = vmatpush1.bf16.msra.mxu0 %v7459
    %7620 = vmatprep.subr.bf16.mxu0 %v7462
    %7621 = vmatpush1.bf16.msra.mxu0 %v7461
    %7622 = vmatprep.subr.bf16.mxu0 %v7464
    %7623 = vmatpush1.bf16.msra.mxu0 %v7463
    %7624 = vmatprep.subr.bf16.mxu0 %v7466
    %7625 = vmatpush1.bf16.msra.mxu0 %v7465
    %7626 = vmatprep.subr.bf16.mxu0 %v7468
    %7627 = vmatpush1.bf16.msra.mxu0 %v7467
    %7628 = vmatprep.subr.bf16.mxu0 %v7489
    %7629 = vmatpush1.bf16.msra.mxu0 %v7486
    %7630 = vmatprep.subr.bf16.mxu0 0
    %7631 = vmatpush1.bf16.msra.mxu0 0
    %7632 = vmatprep.subr.bf16.mxu0 0
    %7633 = vmatpush1.bf16.msra.mxu0 0
    %7634 = vmatprep.subr.bf16.mxu0 0
    %7635 = vmatpush1.bf16.msra.mxu0 0
    %7636 = vmatprep.subr.bf16.mxu0 0
    %7637 = vmatpush1.bf16.msra.mxu0 0
    %7638 = vmatprep.subr.bf16.mxu0 0
    %7639 = vmatpush1.bf16.msra.mxu0 0
    %7640 = vmatprep.subr.bf16.mxu0 0
    %7641 = vmatpush1.bf16.msra.mxu0 0
    %7642 = vmatprep.subr.bf16.mxu0 0
    %7643 = vmatpush1.bf16.msra.mxu0 0
    %7644 = vmatprep.subr.bf16.mxu0 0
    %7645 = vmatpush1.bf16.msra.mxu0 0
    %7646 = vmatprep.mubr.bf16.mxu0 0
    %7647 = vmatmul.mubr.bf16.gmra.mrb[0].mxu0 %v6007
    %v7648 = vpop.f32.mrb[0].mxu0
    %v7649 = vadd.f32 0.0, %v7648
    %v7650 = vpop.f32.mrb[0].mxu0
    %v7651 = vadd.f32 0.0, %v7650
    %v7652 = vpop.f32.mrb[0].mxu0
    %v7653 = vpop.f32.mrb[0].mxu0
    %7654 = vdwg.mxu0
    %7655 = vmatprep.subr.bf16.mxu0 %v7456
    %7656 = vmatpush1.bf16.msra.mxu0 %v7455
    %7657 = vmatprep.subr.bf16.mxu0 %v7458
    %7658 = vmatpush1.bf16.msra.mxu0 %v7457
    %7659 = vmatprep.subr.bf16.mxu0 %v7460
    %7660 = vmatpush1.bf16.msra.mxu0 %v7459
    %7661 = vmatprep.subr.bf16.mxu0 %v7462
    %7662 = vmatpush1.bf16.msra.mxu0 %v7461
    %7663 = vmatprep.subr.bf16.mxu0 %v7464
    %7664 = vmatpush1.bf16.msra.mxu0 %v7463
    %7665 = vmatprep.subr.bf16.mxu0 %v7466
    %7666 = vmatpush1.bf16.msra.mxu0 %v7465
    %7667 = vmatprep.subr.bf16.mxu0 %v7468
    %7668 = vmatpush1.bf16.msra.mxu0 %v7467
    %7669 = vmatprep.subr.bf16.mxu0 %v7489
    %7670 = vmatpush1.bf16.msra.mxu0 %v7486
    %7671 = vmatprep.subr.bf16.mxu0 0
    %7672 = vmatpush1.bf16.msra.mxu0 0
    %7673 = vmatprep.subr.bf16.mxu0 0
    %7674 = vmatpush1.bf16.msra.mxu0 0
    %7675 = vmatprep.subr.bf16.mxu0 0
    %7676 = vmatpush1.bf16.msra.mxu0 0
    %7677 = vmatprep.subr.bf16.mxu0 0
    %7678 = vmatpush1.bf16.msra.mxu0 0
    %7679 = vmatprep.subr.bf16.mxu0 0
    %7680 = vmatpush1.bf16.msra.mxu0 0
    %7681 = vmatprep.subr.bf16.mxu0 0
    %7682 = vmatpush1.bf16.msra.mxu0 0
    %7683 = vmatprep.subr.bf16.mxu0 0
    %7684 = vmatpush1.bf16.msra.mxu0 0
    %7685 = vmatprep.subr.bf16.mxu0 0
    %7686 = vmatpush1.bf16.msra.mxu0 0
    %7687 = vmatprep.mubr.bf16.mxu0 0
    %7688 = vmatmul.mubr.bf16.gmra.mrb[0].mxu0 %v6051
    %v7689 = vpop.f32.mrb[0].mxu0
    %v7690 = vadd.f32 0.0, %v7689
    %v7691 = vpop.f32.mrb[0].mxu0
    %v7692 = vadd.f32 0.0, %v7691
    %v7693 = vpop.f32.mrb[0].mxu0
    %v7694 = vpop.f32.mrb[0].mxu0
    %7695 = vdwg.mxu0
    %7696 = vmatprep.subr.bf16.mxu0 %v7456
    %7697 = vmatpush1.bf16.msra.mxu0 %v7455
    %7698 = vmatprep.subr.bf16.mxu0 %v7458
    %7699 = vmatpush1.bf16.msra.mxu0 %v7457
    %7700 = vmatprep.subr.bf16.mxu0 %v7460
    %7701 = vmatpush1.bf16.msra.mxu0 %v7459
    %7702 = vmatprep.subr.bf16.mxu0 %v7462
    %7703 = vmatpush1.bf16.msra.mxu0 %v7461
    %7704 = vmatprep.subr.bf16.mxu0 %v7464
    %7705 = vmatpush1.bf16.msra.mxu0 %v7463
    %7706 = vmatprep.subr.bf16.mxu0 %v7466
    %7707 = vmatpush1.bf16.msra.mxu0 %v7465
    %7708 = vmatprep.subr.bf16.mxu0 %v7468
    %7709 = vmatpush1.bf16.msra.mxu0 %v7467
    %7710 = vmatprep.subr.bf16.mxu0 %v7489
    %7711 = vmatpush1.bf16.msra.mxu0 %v7486
    %7712 = vmatprep.subr.bf16.mxu0 0
    %7713 = vmatpush1.bf16.msra.mxu0 0
    %7714 = vmatprep.subr.bf16.mxu0 0
    %7715 = vmatpush1.bf16.msra.mxu0 0
    %7716 = vmatprep.subr.bf16.mxu0 0
    %7717 = vmatpush1.bf16.msra.mxu0 0
    %7718 = vmatprep.subr.bf16.mxu0 0
    %7719 = vmatpush1.bf16.msra.mxu0 0
    %7720 = vmatprep.subr.bf16.mxu0 0
    %7721 = vmatpush1.bf16.msra.mxu0 0
    %7722 = vmatprep.subr.bf16.mxu0 0
    %7723 = vmatpush1.bf16.msra.mxu0 0
    %7724 = vmatprep.subr.bf16.mxu0 0
    %7725 = vmatpush1.bf16.msra.mxu0 0
    %7726 = vmatprep.subr.bf16.mxu0 0
    %7727 = vmatpush1.bf16.msra.mxu0 0
    %7728 = vmatprep.mubr.bf16.mxu0 0
    %7729 = vmatmul.mubr.bf16.gmra.mrb[0].mxu0 %v6891
    %v7730 = vpop.f32.mrb[0].mxu0
    %v7731 = vadd.f32 0.0, %v7730
    %v7732 = vpop.f32.mrb[0].mxu0
    %v7733 = vadd.f32 0.0, %v7732
    %v7734 = vpop.f32.mrb[0].mxu0
    %v7735 = vpop.f32.mrb[0].mxu0
    %7736 = vdwg.mxu0
    %7737 = vmatprep.subr.bf16.mxu0 %v7456
    %7738 = vmatpush1.bf16.msra.mxu0 %v7455
    %7739 = vmatprep.subr.bf16.mxu0 %v7458
    %7740 = vmatpush1.bf16.msra.mxu0 %v7457
    %7741 = vmatprep.subr.bf16.mxu0 %v7460
    %7742 = vmatpush1.bf16.msra.mxu0 %v7459
    %7743 = vmatprep.subr.bf16.mxu0 %v7462
    %7744 = vmatpush1.bf16.msra.mxu0 %v7461
    %7745 = vmatprep.subr.bf16.mxu0 %v7464
    %7746 = vmatpush1.bf16.msra.mxu0 %v7463
    %7747 = vmatprep.subr.bf16.mxu0 %v7466
    %7748 = vmatpush1.bf16.msra.mxu0 %v7465
    %7749 = vmatprep.subr.bf16.mxu0 %v7468
    %7750 = vmatpush1.bf16.msra.mxu0 %v7467
    %7751 = vmatprep.subr.bf16.mxu0 %v7489
    %7752 = vmatpush1.bf16.msra.mxu0 %v7486
    %7753 = vmatprep.subr.bf16.mxu0 0
    %7754 = vmatpush1.bf16.msra.mxu0 0
    %7755 = vmatprep.subr.bf16.mxu0 0
    %7756 = vmatpush1.bf16.msra.mxu0 0
    %7757 = vmatprep.subr.bf16.mxu0 0
    %7758 = vmatpush1.bf16.msra.mxu0 0
    %7759 = vmatprep.subr.bf16.mxu0 0
    %7760 = vmatpush1.bf16.msra.mxu0 0
    %7761 = vmatprep.subr.bf16.mxu0 0
    %7762 = vmatpush1.bf16.msra.mxu0 0
    %7763 = vmatprep.subr.bf16.mxu0 0
    %7764 = vmatpush1.bf16.msra.mxu0 0
    %7765 = vmatprep.subr.bf16.mxu0 0
    %7766 = vmatpush1.bf16.msra.mxu0 0
    %7767 = vmatprep.subr.bf16.mxu0 0
    %7768 = vmatpush1.bf16.msra.mxu0 0
    %7769 = vmatprep.mubr.bf16.mxu0 0
    %7770 = vmatmul.mubr.bf16.gmra.mrb[0].mxu0 %v7335
    %v7771 = vpop.f32.mrb[0].mxu0
    %v7772 = vadd.f32 0.0, %v7771
    %v7773 = vpop.f32.mrb[0].mxu0
    %v7774 = vadd.f32 0.0, %v7773
    %v7775 = vpop.f32.mrb[0].mxu0
    %v7776 = vpop.f32.mrb[0].mxu0
    %7777 = vdwg.mxu0
    %v7779 = vsel %vm5734, %v5627, 0
    %7781 = vmatprep.subr.bf16.mxu0 %v7456
    %7782 = vmatpush1.bf16.msra.mxu0 %v7455
    %7783 = vmatprep.subr.bf16.mxu0 %v7458
    %7784 = vmatpush1.bf16.msra.mxu0 %v7457
    %7785 = vmatprep.subr.bf16.mxu0 %v7460
    %7786 = vmatpush1.bf16.msra.mxu0 %v7459
    %7787 = vmatprep.subr.bf16.mxu0 %v7462
    %7788 = vmatpush1.bf16.msra.mxu0 %v7461
    %7789 = vmatprep.subr.bf16.mxu0 %v7464
    %7790 = vmatpush1.bf16.msra.mxu0 %v7463
    %7791 = vmatprep.subr.bf16.mxu0 %v7466
    %7792 = vmatpush1.bf16.msra.mxu0 %v7465
    %7793 = vmatprep.subr.bf16.mxu0 %v7468
    %7794 = vmatpush1.bf16.msra.mxu0 %v7467
    %7795 = vmatprep.subr.bf16.mxu0 %v7489
    %7796 = vmatpush1.bf16.msra.mxu0 %v7486
    %7797 = vmatprep.subr.bf16.mxu0 0
    %7798 = vmatpush1.bf16.msra.mxu0 0
    %7799 = vmatprep.subr.bf16.mxu0 0
    %7800 = vmatpush1.bf16.msra.mxu0 0
    %7801 = vmatprep.subr.bf16.mxu0 0
    %7802 = vmatpush1.bf16.msra.mxu0 0
    %7803 = vmatprep.subr.bf16.mxu0 0
    %7804 = vmatpush1.bf16.msra.mxu0 0
    %7805 = vmatprep.subr.bf16.mxu0 0
    %7806 = vmatpush1.bf16.msra.mxu0 0
    %7807 = vmatprep.subr.bf16.mxu0 0
    %7808 = vmatpush1.bf16.msra.mxu0 0
    %7809 = vmatprep.subr.bf16.mxu0 0
    %7810 = vmatpush1.bf16.msra.mxu0 0
    %7811 = vmatprep.subr.bf16.mxu0 0
    %7812 = vmatpush1.bf16.msra.mxu0 0
    %7813 = vmatprep.mubr.bf16.mxu0 0
    %7814 = vmatmul.mubr.bf16.gmra.mrb[0].mxu0 %v7779
    %v7815 = vpop.f32.mrb[0].mxu0
    %v7816 = vadd.f32 0.0, %v7815
    %v7817 = vpop.f32.mrb[0].mxu0
    %v7818 = vadd.f32 0.0, %v7817
    %v7819 = vpop.f32.mrb[0].mxu0
    %v7820 = vpop.f32.mrb[0].mxu0
    %7821 = vdwg.mxu0
    %v7822 = vadd.f32 %v7378, %v7526
    %v7823 = vadd.f32 %v7379, %v7528
    %v7824 = vadd.f32 %v7380, %v7567
    %v7825 = vadd.f32 %v7381, %v7569
    %v7826 = vadd.f32 %v7382, %v7608
    %v7827 = vadd.f32 %v7383, %v7610
    %v7828 = vadd.f32 %v7384, %v7649
    %v7829 = vadd.f32 %v7385, %v7651
    %v7830 = vadd.f32 %v7386, %v7690
    %v7831 = vadd.f32 %v7387, %v7692
    %v7832 = vadd.f32 %v7388, %v7731
    %v7833 = vadd.f32 %v7389, %v7733
    %v7834 = vadd.f32 %v7390, %v7772
    %v7835 = vadd.f32 %v7391, %v7774
    %v7836 = vadd.f32 %v7392, %v7816
    %v7837 = vadd.f32 %v7393, %v7818
    %7846 = vrot.lane.b32.xlu0 %v7822, 48
    %v7847 = vpop.permute.xlu0 %7846
    %7848 = vrot.lane.b32.xlu0 %v7823, 48
    %v7849 = vpop.permute.xlu0 %7848
    %7850 = vrot.lane.b32.xlu0 %v7826, 48
    %v7851 = vpop.permute.xlu0 %7850
    %7852 = vrot.lane.b32.xlu0 %v7827, 48
    %v7853 = vpop.permute.xlu0 %7852
    %7854 = vrot.lane.b32.xlu0 %v7830, 48
    %v7855 = vpop.permute.xlu0 %7854
    %7856 = vrot.lane.b32.xlu0 %v7831, 48
    %v7857 = vpop.permute.xlu0 %7856
    %7858 = vrot.lane.b32.xlu0 %v7834, 48
    %v7859 = vpop.permute.xlu0 %7858
    %7860 = vrot.lane.b32.xlu0 %v7835, 48
    %v7861 = vpop.permute.xlu0 %7860
    %vm7862 = vcmask 392192
    %v7863 = vsel %vm7862, %v7847, %v7849
    %v7864 = vsel %vm7862, %v7851, %v7853
    %v7865 = vsel %vm7862, %v7855, %v7857
    %v7866 = vsel %vm7862, %v7859, %v7861
    %v7871 = vmax.f32 %v7822, %v7863
    %v7872 = vmax.f32 %v7826, %v7864
    %v7873 = vmax.f32 %v7830, %v7865
    %v7874 = vmax.f32 %v7834, %v7866
    %7883 = vrot.lane.b32.xlu0 %v7824, 48
    %v7884 = vpop.permute.xlu0 %7883
    %7885 = vrot.lane.b32.xlu0 %v7825, 48
    %v7886 = vpop.permute.xlu0 %7885
    %7887 = vrot.lane.b32.xlu0 %v7828, 48
    %v7888 = vpop.permute.xlu0 %7887
    %7889 = vrot.lane.b32.xlu0 %v7829, 48
    %v7890 = vpop.permute.xlu0 %7889
    %7891 = vrot.lane.b32.xlu0 %v7832, 48
    %v7892 = vpop.permute.xlu0 %7891
    %7893 = vrot.lane.b32.xlu0 %v7833, 48
    %v7894 = vpop.permute.xlu0 %7893
    %7895 = vrot.lane.b32.xlu0 %v7836, 48
    %v7896 = vpop.permute.xlu0 %7895
    %7897 = vrot.lane.b32.xlu0 %v7837, 48
    %v7898 = vpop.permute.xlu0 %7897
    %v7899 = vsel %vm7862, %v7884, %v7886
    %v7900 = vsel %vm7862, %v7888, %v7890
    %v7901 = vsel %vm7862, %v7892, %v7894
    %v7902 = vsel %vm7862, %v7896, %v7898
    %v7907 = vmax.f32 %v7824, %v7899
    %v7908 = vmax.f32 %v7828, %v7900
    %v7909 = vmax.f32 %v7832, %v7901
    %v7910 = vmax.f32 %v7836, %v7902
    %v7911 = vmax.f32 %v7871, %v7907
    %v7912 = vmax.f32 %v7872, %v7908
    %v7913 = vmax.f32 %v7873, %v7909
    %v7914 = vmax.f32 %v7874, %v7910
    %v7915 = vld [vmem:[%s4] sm:$0x1]
    %v7917 = vlaneseq
    %v7918 = vshrl.u32 %v7917, 7
    %v7919 = vsub.s32 0, %v7918
    %v7920 = vrot.slane %v7915, %v7919
    %v7922 = vadd.f32 %v7911, %v7920
    %v7923 = vadd.f32 %v7912, %v7920
    %v7924 = vadd.f32 %v7913, %v7920
    %v7925 = vadd.f32 %v7914, %v7920
    %v7926 = vmax.f32 %v7922, 0.0
    %v7927 = vmax.f32 %v7923, 0.0
    %v7928 = vmax.f32 %v7924, 0.0
    %v7929 = vmax.f32 %v7925, 0.0
    %v7930 = vpack.c.bf16 %v7926, %v7926
    %v7931 = vpack.c.bf16 %v7927, %v7927
    %v7932 = vpack.c.bf16 %v7928, %v7928
    %v7933 = vpack.c.bf16 %v7929, %v7929
    %v7934 = vld [vmem:[%s5] sm:$0xf]
    %v7935 = vld [vmem:[%s5 + $0x4] sm:$0xf]
    %v7936 = vld [vmem:[%s5 + $0x8] sm:$0xf]
    %v7937 = vld [vmem:[%s5 + $0xc] sm:$0xf]
    %v7938 = vld [vmem:[%s5 + $0x10] sm:$0xf]
    %v7939 = vld [vmem:[%s5 + $0x14] sm:$0xf]
    %v7940 = vld [vmem:[%s5 + $0x18] sm:$0xf]
    %v7941 = vld [vmem:[%s5 + $0x1c] sm:$0xf]
    %v7942 = vld [vmem:[%s5 + $0x20] sm:$0xf]
    %v7943 = vld [vmem:[%s5 + $0x24] sm:$0xf]
    %s7944 = scalar_lea.vmem %s5, 40
    %v7945 = vld [vmem:[%s7944] sm:$0xf]
    %v7946 = vld [vmem:[%s7944 + $0x4] sm:$0xf]
    %v7947 = vld [vmem:[%s7944 + $0x8] sm:$0xf]
    %v7948 = vld [vmem:[%s7944 + $0xc] sm:$0xf]
    %v7949 = vld [vmem:[%s7944 + $0x10] sm:$0xf]
    %v7950 = vld [vmem:[%s7944 + $0x14] sm:$0xf]
    %v7951 = vld [vmem:[%s7944 + $0x18] sm:$0xf]
    %v7952 = vld [vmem:[%s7944 + $0x1c] sm:$0xf]
    %v7953 = vld [vmem:[%s7944 + $0x20] sm:$0xf]
    %v7954 = vld [vmem:[%s7944 + $0x24] sm:$0xf]
    %v7965 = vunpack.c.l.b16 %v7945
    %v7966 = vunpack.c.l.b16 %v7946
    %v7967 = vunpack.c.l.b16 %v7947
    %v7968 = vunpack.c.l.b16 %v7948
    %v7969 = vunpack.c.l.b16 %v7949
    %v7970 = vunpack.c.l.b16 %v7950
    %v7971 = vunpack.c.l.b16 %v7951
    %v7972 = vunpack.c.l.b16 %v7952
    %v7973 = vunpack.c.l.b16 %v7953
    %v7974 = vunpack.c.l.b16 %v7954
    %v7975 = vpack.c.b16 %v7966, %v7965
    %v7976 = vpack.c.b16 %v7968, %v7967
    %v7977 = vpack.c.b16 %v7970, %v7969
    %v7978 = vpack.c.b16 %v7972, %v7971
    %v7979 = vpack.c.b16 %v7974, %v7973
    %vm7985 = vcmask 654336
    %v7987 = vsel %vm7985, %v7931, 0
    %7989 = vmatprep.subr.bf16.mxu0 0
    %7990 = vmatpush1.bf16.msra.mxu0 %v7975
    %7991 = vmatprep.subr.bf16.mxu0 0
    %7992 = vmatpush1.bf16.msra.mxu0 %v7976
    %7993 = vmatprep.subr.bf16.mxu0 0
    %7994 = vmatpush1.bf16.msra.mxu0 %v7977
    %7995 = vmatprep.subr.bf16.mxu0 0
    %7996 = vmatpush1.bf16.msra.mxu0 %v7978
    %7997 = vmatprep.subr.bf16.mxu0 0
    %7998 = vmatpush1.bf16.msra.mxu0 %v7979
    %7999 = vmatprep.subr.bf16.mxu0 0
    %8000 = vmatpush1.bf16.msra.mxu0 0
    %8001 = vmatprep.subr.bf16.mxu0 0
    %8002 = vmatpush1.bf16.msra.mxu0 0
    %8003 = vmatprep.subr.bf16.mxu0 0
    %8004 = vmatpush1.bf16.msra.mxu0 0
    %8005 = vmatprep.subr.bf16.mxu0 0
    %8006 = vmatpush1.bf16.msra.mxu0 0
    %8007 = vmatprep.subr.bf16.mxu0 0
    %8008 = vmatpush1.bf16.msra.mxu0 0
    %8009 = vmatprep.subr.bf16.mxu0 0
    %8010 = vmatpush1.bf16.msra.mxu0 0
    %8011 = vmatprep.subr.bf16.mxu0 0
    %8012 = vmatpush1.bf16.msra.mxu0 0
    %8013 = vmatprep.subr.bf16.mxu0 0
    %8014 = vmatpush1.bf16.msra.mxu0 0
    %8015 = vmatprep.subr.bf16.mxu0 0
    %8016 = vmatpush1.bf16.msra.mxu0 0
    %8017 = vmatprep.subr.bf16.mxu0 0
    %8018 = vmatpush1.bf16.msra.mxu0 0
    %8019 = vmatprep.subr.bf16.mxu0 0
    %8020 = vmatpush1.bf16.msra.mxu0 0
    %8021 = vmatprep.mubr.bf16.mxu0 0
    %8022 = vmatmul.mubr.bf16.gmra.mrb[0].mxu0 %v7987
    %v8023 = vpop.f32.mrb[0].mxu0
    %v8024 = vadd.f32 0.0, %v8023
    %v8025 = vpop.f32.mrb[0].mxu0
    %v8026 = vpop.f32.mrb[0].mxu0
    %v8027 = vpop.f32.mrb[0].mxu0
    %8028 = vdwg.mxu0
    %v8039 = vunpack.c.l.b16 %v7934
    %v8040 = vunpack.c.l.b16 %v7935
    %v8041 = vunpack.c.l.b16 %v7936
    %v8042 = vunpack.c.l.b16 %v7937
    %v8043 = vunpack.c.l.b16 %v7938
    %v8044 = vunpack.c.l.b16 %v7939
    %v8045 = vunpack.c.l.b16 %v7940
    %v8046 = vunpack.c.l.b16 %v7941
    %v8047 = vunpack.c.l.b16 %v7942
    %v8048 = vunpack.c.l.b16 %v7943
    %v8049 = vpack.c.b16 %v8040, %v8039
    %v8050 = vpack.c.b16 %v8042, %v8041
    %v8051 = vpack.c.b16 %v8044, %v8043
    %v8052 = vpack.c.b16 %v8046, %v8045
    %v8053 = vpack.c.b16 %v8048, %v8047
    %v8060 = vsel %vm7985, %v7930, 0
    %8062 = vmatprep.subr.bf16.mxu0 0
    %8063 = vmatpush1.bf16.msra.mxu0 %v8049
    %8064 = vmatprep.subr.bf16.mxu0 0
    %8065 = vmatpush1.bf16.msra.mxu0 %v8050
    %8066 = vmatprep.subr.bf16.mxu0 0
    %8067 = vmatpush1.bf16.msra.mxu0 %v8051
    %8068 = vmatprep.subr.bf16.mxu0 0
    %8069 = vmatpush1.bf16.msra.mxu0 %v8052
    %8070 = vmatprep.subr.bf16.mxu0 0
    %8071 = vmatpush1.bf16.msra.mxu0 %v8053
    %8072 = vmatprep.subr.bf16.mxu0 0
    %8073 = vmatpush1.bf16.msra.mxu0 0
    %8074 = vmatprep.subr.bf16.mxu0 0
    %8075 = vmatpush1.bf16.msra.mxu0 0
    %8076 = vmatprep.subr.bf16.mxu0 0
    %8077 = vmatpush1.bf16.msra.mxu0 0
    %8078 = vmatprep.subr.bf16.mxu0 0
    %8079 = vmatpush1.bf16.msra.mxu0 0
    %8080 = vmatprep.subr.bf16.mxu0 0
    %8081 = vmatpush1.bf16.msra.mxu0 0
    %8082 = vmatprep.subr.bf16.mxu0 0
    %8083 = vmatpush1.bf16.msra.mxu0 0
    %8084 = vmatprep.subr.bf16.mxu0 0
    %8085 = vmatpush1.bf16.msra.mxu0 0
    %8086 = vmatprep.subr.bf16.mxu0 0
    %8087 = vmatpush1.bf16.msra.mxu0 0
    %8088 = vmatprep.subr.bf16.mxu0 0
    %8089 = vmatpush1.bf16.msra.mxu0 0
    %8090 = vmatprep.subr.bf16.mxu0 0
    %8091 = vmatpush1.bf16.msra.mxu0 0
    %8092 = vmatprep.subr.bf16.mxu0 0
    %8093 = vmatpush1.bf16.msra.mxu0 0
    %8094 = vmatprep.mubr.bf16.mxu0 0
    %8095 = vmatmul.mubr.bf16.gmra.mrb[0].mxu0 %v8060
    %v8096 = vpop.f32.mrb[0].mxu0
    %v8097 = vadd.f32 %v8024, %v8096
    %v8098 = vpop.f32.mrb[0].mxu0
    %v8099 = vpop.f32.mrb[0].mxu0
    %v8100 = vpop.f32.mrb[0].mxu0
    %8101 = vdwg.mxu0
    %s8102 = scalar_lea.vmem %s5, 80
    %v8103 = vld [vmem:[%s8102] sm:$0xf]
    %v8104 = vld [vmem:[%s8102 + $0x4] sm:$0xf]
    %v8105 = vld [vmem:[%s8102 + $0x8] sm:$0xf]
    %v8106 = vld [vmem:[%s8102 + $0xc] sm:$0xf]
    %v8107 = vld [vmem:[%s8102 + $0x10] sm:$0xf]
    %v8108 = vld [vmem:[%s8102 + $0x14] sm:$0xf]
    %v8109 = vld [vmem:[%s8102 + $0x18] sm:$0xf]
    %v8110 = vld [vmem:[%s8102 + $0x1c] sm:$0xf]
    %v8111 = vld [vmem:[%s8102 + $0x20] sm:$0xf]
    %v8112 = vld [vmem:[%s8102 + $0x24] sm:$0xf]
    %v8123 = vunpack.c.l.b16 %v8103
    %v8124 = vunpack.c.l.b16 %v8104
    %v8125 = vunpack.c.l.b16 %v8105
    %v8126 = vunpack.c.l.b16 %v8106
    %v8127 = vunpack.c.l.b16 %v8107
    %v8128 = vunpack.c.l.b16 %v8108
    %v8129 = vunpack.c.l.b16 %v8109
    %v8130 = vunpack.c.l.b16 %v8110
    %v8131 = vunpack.c.l.b16 %v8111
    %v8132 = vunpack.c.l.b16 %v8112
    %v8133 = vpack.c.b16 %v8124, %v8123
    %v8134 = vpack.c.b16 %v8126, %v8125
    %v8135 = vpack.c.b16 %v8128, %v8127
    %v8136 = vpack.c.b16 %v8130, %v8129
    %v8137 = vpack.c.b16 %v8132, %v8131
    %v8144 = vsel %vm7985, %v7932, 0
    %8146 = vmatprep.subr.bf16.mxu0 0
    %8147 = vmatpush1.bf16.msra.mxu0 %v8133
    %8148 = vmatprep.subr.bf16.mxu0 0
    %8149 = vmatpush1.bf16.msra.mxu0 %v8134
    %8150 = vmatprep.subr.bf16.mxu0 0
    %8151 = vmatpush1.bf16.msra.mxu0 %v8135
    %8152 = vmatprep.subr.bf16.mxu0 0
    %8153 = vmatpush1.bf16.msra.mxu0 %v8136
    %8154 = vmatprep.subr.bf16.mxu0 0
    %8155 = vmatpush1.bf16.msra.mxu0 %v8137
    %8156 = vmatprep.subr.bf16.mxu0 0
    %8157 = vmatpush1.bf16.msra.mxu0 0
    %8158 = vmatprep.subr.bf16.mxu0 0
    %8159 = vmatpush1.bf16.msra.mxu0 0
    %8160 = vmatprep.subr.bf16.mxu0 0
    %8161 = vmatpush1.bf16.msra.mxu0 0
    %8162 = vmatprep.subr.bf16.mxu0 0
    %8163 = vmatpush1.bf16.msra.mxu0 0
    %8164 = vmatprep.subr.bf16.mxu0 0
    %8165 = vmatpush1.bf16.msra.mxu0 0
    %8166 = vmatprep.subr.bf16.mxu0 0
    %8167 = vmatpush1.bf16.msra.mxu0 0
    %8168 = vmatprep.subr.bf16.mxu0 0
    %8169 = vmatpush1.bf16.msra.mxu0 0
    %8170 = vmatprep.subr.bf16.mxu0 0
    %8171 = vmatpush1.bf16.msra.mxu0 0
    %8172 = vmatprep.subr.bf16.mxu0 0
    %8173 = vmatpush1.bf16.msra.mxu0 0
    %8174 = vmatprep.subr.bf16.mxu0 0
    %8175 = vmatpush1.bf16.msra.mxu0 0
    %8176 = vmatprep.subr.bf16.mxu0 0
    %8177 = vmatpush1.bf16.msra.mxu0 0
    %8178 = vmatprep.mubr.bf16.mxu0 0
    %8179 = vmatmul.mubr.bf16.gmra.mrb[0].mxu0 %v8144
    %v8180 = vpop.f32.mrb[0].mxu0
    %v8181 = vadd.f32 0.0, %v8180
    %v8182 = vpop.f32.mrb[0].mxu0
    %v8183 = vpop.f32.mrb[0].mxu0
    %v8184 = vpop.f32.mrb[0].mxu0
    %8185 = vdwg.mxu0
    %v8186 = vadd.f32 %v8097, %v8181
    %s8187 = scalar_lea.vmem %s5, 120
    %v8188 = vld [vmem:[%s8187] sm:$0xf]
    %v8189 = vld [vmem:[%s8187 + $0x4] sm:$0xf]
    %v8190 = vld [vmem:[%s8187 + $0x8] sm:$0xf]
    %v8191 = vld [vmem:[%s8187 + $0xc] sm:$0xf]
    %v8192 = vld [vmem:[%s8187 + $0x10] sm:$0xf]
    %v8193 = vld [vmem:[%s8187 + $0x14] sm:$0xf]
    %v8194 = vld [vmem:[%s8187 + $0x18] sm:$0xf]
    %v8195 = vld [vmem:[%s8187 + $0x1c] sm:$0xf]
    %v8196 = vld [vmem:[%s8187 + $0x20] sm:$0xf]
    %v8197 = vld [vmem:[%s8187 + $0x24] sm:$0xf]
    %v8208 = vunpack.c.l.b16 %v8188
    %v8209 = vunpack.c.l.b16 %v8189
    %v8210 = vunpack.c.l.b16 %v8190
    %v8211 = vunpack.c.l.b16 %v8191
    %v8212 = vunpack.c.l.b16 %v8192
    %v8213 = vunpack.c.l.b16 %v8193
    %v8214 = vunpack.c.l.b16 %v8194
    %v8215 = vunpack.c.l.b16 %v8195
    %v8216 = vunpack.c.l.b16 %v8196
    %v8217 = vunpack.c.l.b16 %v8197
    %v8218 = vpack.c.b16 %v8209, %v8208
    %v8219 = vpack.c.b16 %v8211, %v8210
    %v8220 = vpack.c.b16 %v8213, %v8212
    %v8221 = vpack.c.b16 %v8215, %v8214
    %v8222 = vpack.c.b16 %v8217, %v8216
    %v8229 = vsel %vm7985, %v7933, 0
    %8231 = vmatprep.subr.bf16.mxu0 0
    %8232 = vmatpush1.bf16.msra.mxu0 %v8218
    %8233 = vmatprep.subr.bf16.mxu0 0
    %8234 = vmatpush1.bf16.msra.mxu0 %v8219
    %8235 = vmatprep.subr.bf16.mxu0 0
    %8236 = vmatpush1.bf16.msra.mxu0 %v8220
    %8237 = vmatprep.subr.bf16.mxu0 0
    %8238 = vmatpush1.bf16.msra.mxu0 %v8221
    %8239 = vmatprep.subr.bf16.mxu0 0
    %8240 = vmatpush1.bf16.msra.mxu0 %v8222
    %8241 = vmatprep.subr.bf16.mxu0 0
    %8242 = vmatpush1.bf16.msra.mxu0 0
    %8243 = vmatprep.subr.bf16.mxu0 0
    %8244 = vmatpush1.bf16.msra.mxu0 0
    %8245 = vmatprep.subr.bf16.mxu0 0
    %8246 = vmatpush1.bf16.msra.mxu0 0
    %8247 = vmatprep.subr.bf16.mxu0 0
    %8248 = vmatpush1.bf16.msra.mxu0 0
    %8249 = vmatprep.subr.bf16.mxu0 0
    %8250 = vmatpush1.bf16.msra.mxu0 0
    %8251 = vmatprep.subr.bf16.mxu0 0
    %8252 = vmatpush1.bf16.msra.mxu0 0
    %8253 = vmatprep.subr.bf16.mxu0 0
    %8254 = vmatpush1.bf16.msra.mxu0 0
    %8255 = vmatprep.subr.bf16.mxu0 0
    %8256 = vmatpush1.bf16.msra.mxu0 0
    %8257 = vmatprep.subr.bf16.mxu0 0
    %8258 = vmatpush1.bf16.msra.mxu0 0
    %8259 = vmatprep.subr.bf16.mxu0 0
    %8260 = vmatpush1.bf16.msra.mxu0 0
    %8261 = vmatprep.subr.bf16.mxu0 0
    %8262 = vmatpush1.bf16.msra.mxu0 0
    %8263 = vmatprep.mubr.bf16.mxu0 0
    %8264 = vmatmul.mubr.bf16.gmra.mrb[0].mxu0 %v8229
    %v8265 = vpop.f32.mrb[0].mxu0
    %v8266 = vadd.f32 0.0, %v8265
    %v8267 = vpop.f32.mrb[0].mxu0
    %v8268 = vpop.f32.mrb[0].mxu0
    %v8269 = vpop.f32.mrb[0].mxu0
    %8270 = vdwg.mxu0
    %v8271 = vadd.f32 %v8186, %v8266
    %v8272 = vld [vmem:[%s6] sm:$0x1]
    %v8274 = vlaneseq
    %v8275 = vshrl.u32 %v8274, 7
    %v8276 = vsub.s32 0, %v8275
    %v8277 = vrot.slane %v8272, %v8276
    %v8279 = vadd.f32 %v8271, %v8277
    %v8280 = vmax.f32 %v8279, 0.0
    %v8281 = vpack.c.bf16 %v8280, %v8280
    %v8282 = vld [vmem:[%s7] sm:$0xf]
    %v8283 = vld [vmem:[%s7 + $0x4] sm:$0xf]
    %v8284 = vld [vmem:[%s7 + $0x8] sm:$0xf]
    %v8285 = vld [vmem:[%s7 + $0xc] sm:$0xf]
    %v8286 = vld [vmem:[%s7 + $0x10] sm:$0xf]
    %v8287 = vld [vmem:[%s7 + $0x14] sm:$0xf]
    %v8288 = vld [vmem:[%s7 + $0x18] sm:$0x1]
    %v8289 = vld [vmem:[%s8] sm:$0x1]
    %v8291 = vlaneseq
    %v8292 = vshrl.u32 %v8291, 7
    %v8293 = vsub.s32 0, %v8292
    %v8294 = vrot.slane %v8289, %v8293
    %v8303 = vunpack.c.l.b16 %v8282
    %v8304 = vunpack.c.l.b16 %v8283
    %v8305 = vunpack.c.l.b16 %v8284
    %v8306 = vunpack.c.l.b16 %v8285
    %v8307 = vunpack.c.l.b16 %v8286
    %v8308 = vunpack.c.l.b16 %v8287
    %v8309 = vunpack.c.l.b16 %v8288
    %v8310 = vpack.c.b16 %v8304, %v8303
    %v8311 = vpack.c.b16 %v8306, %v8305
    %v8312 = vpack.c.b16 %v8308, %v8307
    %v8313 = vpack.c.b16 %v8309, %v8309
    %vm8317 = vcmask 408576
    %v8319 = vsel %vm8317, %v8281, 0
    %vm8321 = vcmask 1040384
    %v8323 = vsel %vm8321, %v8313, 0
    %8325 = vmatprep.subr.bf16.mxu0 0
    %8326 = vmatpush1.bf16.msra.mxu0 %v8310
    %8327 = vmatprep.subr.bf16.mxu0 0
    %8328 = vmatpush1.bf16.msra.mxu0 %v8311
    %8329 = vmatprep.subr.bf16.mxu0 0
    %8330 = vmatpush1.bf16.msra.mxu0 %v8312
    %8331 = vmatprep.subr.bf16.mxu0 0
    %8332 = vmatpush1.bf16.msra.mxu0 %v8323
    %8333 = vmatprep.subr.bf16.mxu0 0
    %8334 = vmatpush1.bf16.msra.mxu0 0
    %8335 = vmatprep.subr.bf16.mxu0 0
    %8336 = vmatpush1.bf16.msra.mxu0 0
    %8337 = vmatprep.subr.bf16.mxu0 0
    %8338 = vmatpush1.bf16.msra.mxu0 0
    %8339 = vmatprep.subr.bf16.mxu0 0
    %8340 = vmatpush1.bf16.msra.mxu0 0
    %8341 = vmatprep.subr.bf16.mxu0 0
    %8342 = vmatpush1.bf16.msra.mxu0 0
    %8343 = vmatprep.subr.bf16.mxu0 0
    %8344 = vmatpush1.bf16.msra.mxu0 0
    %8345 = vmatprep.subr.bf16.mxu0 0
    %8346 = vmatpush1.bf16.msra.mxu0 0
    %8347 = vmatprep.subr.bf16.mxu0 0
    %8348 = vmatpush1.bf16.msra.mxu0 0
    %8349 = vmatprep.subr.bf16.mxu0 0
    %8350 = vmatpush1.bf16.msra.mxu0 0
    %8351 = vmatprep.subr.bf16.mxu0 0
    %8352 = vmatpush1.bf16.msra.mxu0 0
    %8353 = vmatprep.subr.bf16.mxu0 0
    %8354 = vmatpush1.bf16.msra.mxu0 0
    %8355 = vmatprep.subr.bf16.mxu0 0
    %8356 = vmatpush1.bf16.msra.mxu0 0
    %8357 = vmatprep.mubr.bf16.mxu0 0
    %8358 = vmatmul.mubr.bf16.gmra.mrb[0].mxu0 %v8319
    %v8359 = vpop.f32.mrb[0].mxu0
    %v8360 = vadd.f32 %v8294, %v8359
    %v8361 = vpop.f32.mrb[0].mxu0
    %v8362 = vpop.f32.mrb[0].mxu0
    %v8363 = vpop.f32.mrb[0].mxu0
    %8364 = vdwg.mxu0
    %vm8365 = vcmask 74752
    %v8366 = vsel %vm8365, %v8360, -inf
    %8367 = vmax.xlane.f32.xlu0 %v8366
    %v8368 = vpop.xlane.xlu0 %8367
    %v8369 = vsub.f32 %v8360, %v8368
    %v8370 = vmul.f32 %v8369, 1.442695
    %v8371 = vpow.pop %v8370
    %v8372 = vsel %vm8365, %v8371, 0.0
    %8373 = vadd.xlane.f32.xlu0 %v8372
    %v8374 = vpop.xlane.xlu0 %8373
    %v8375 = vlog2.pop %v8374
    %v8376 = vmul.f32 %v8375, 0.6931472
    %v8377 = vsub.f32 %v8369, %v8376
    %8378 = vst.msk [vmem:[#allocation2] sm:$0x3] %vm8365, %v8377
    // Predicated region
    $region38: #{cnn_forward.1} parent=1 // pred_check
      _
    $region39: #{cnn_forward.1} parent=1 // pred_check_branch
      %8380 = sbr.rel (0) target = $region41
    $region40: #{cnn_forward.1} parent=1 // pred_region
      %s8382 = ssub.s32 32, 32
      %8383 = vsyncadd [#allocation3], %s8382
      %s8385 = sshll.u32 [#allocation2], 4
      %s8386 = int_to_ptr.vmem [resolvable:$true] %s8385
      %8388 = dma.vmem_to_hbm [thread:$0]  %s8386, 32, %s9, [#allocation3]
    $region41: #{cnn_forward.1} parent=1 // pred_fallthru
      _
    // Predicated region
    $region42: #{cnn_forward.1} parent=1 // pred_check
      _
    $region43: #{cnn_forward.1} parent=1 // pred_check_branch
      %8390 = sbr.rel (0) target = $region45
    $region44: #{cnn_forward.1} parent=1 // pred_region
      %8391 = dma.done [#allocation3], 32
    $region45: #{cnn_forward.1} parent=1 // pred_fallthru
      _
    %8392 = vsyncpa [#allocation3], 1

</llo_original>
